<compile_context>
chip_gen: v7x
topology: tpu7x:2x2x1
jax: 0.10.0
libtpu: 0.0.40
codegen_flags: <defaults>
</compile_context>

<pallas_src>
import functools

import jax
import jax.numpy as jnp
from jax.experimental import pallas as pl
from jax.experimental.pallas import tpu as pltpu

EPS = 1e-5


# ---------------------------------------------------------------------------
# The single fused Pallas kernel (runs once per batch tile of the grid)
# ---------------------------------------------------------------------------
def _fused_forward_kernel(
    xm_ref, xl_ref,
    mw0, ms0, mw1, ms1, mw2, ms2, mw3, ms3,          # MetaNetwork  (folded, bf16 / f32 shift)
    lw0, ls0, lw1, ls1, lw2, ls2, lw3, ls3,          # MetalNetwork (folded)
    fw0, fs0, fw1, fs1, fw2, fb2,                    # FC head      (folded)
    o_ref, *, tile_b):
    """Activations live in a position-major (L*Bv, C) layout, carried in bf16."""

    def conv(act, bv, l_in, w_ref, s_ref, out_dtype=jnp.bfloat16):
        # act: (l_in*bv, Cin) bf16; w_ref: (k, Cin, Cout) bf16; s_ref: (1, Cout) f32
        k = w_ref.shape[0]
        lo = l_in - k + 1
        z = None
        for j in range(k):                       # tap-sum: y = sum_j X_j @ W_j
            xj = act[j * bv:(j + lo) * bv, :]
            d = jnp.dot(xj, w_ref[j], preferred_element_type=jnp.float32)
            z = d if z is None else z + d
        z = jnp.maximum(z + s_ref[...], 0.0)     # folded conv-bias + BN shift, then ReLU
        return z.astype(out_dtype), lo

    # ---- shared MetaNetwork on the stacked [meta_0; meta_1] tile (bv = 2*tile_b) ----
    bv = 2 * tile_b
    a = xm_ref[...].astype(jnp.bfloat16)
    a, l = conv(a, bv, 4, mw0, ms0)              # (3*bv, 1024)
    a, l = conv(a, bv, l, mw1, ms1)              # (2*bv, 512)
    a, l = conv(a, bv, l, mw2, ms2)              # (bv,   128)
    a, _ = conv(a, bv, l, mw3, ms3, out_dtype=jnp.float32)   # (bv, 64)
    meta = a                                     # rows [0:tile_b]=meta_0, [tile_b:]=meta_1

    # ---- MetalNetwork (bv = tile_b) ----
    m = xl_ref[...].astype(jnp.bfloat16)
    m, l = conv(m, tile_b, 2, lw0, ls0)          # (2*tile_b, 1024)
    m, l = conv(m, tile_b, l, lw1, ls1)          # (2*tile_b, 512)
    m, l = conv(m, tile_b, l, lw2, ls2)          # (tile_b,   128)
    m, _ = conv(m, tile_b, l, lw3, ls3, out_dtype=jnp.float32)   # (tile_b, 64)
    metal = m

    # ---- FC head: concat([meta_0, meta_1, metal]) fused into one K=192 matmul ----
    feat = jnp.concatenate(
        [meta[0:tile_b, :], meta[tile_b:2 * tile_b, :], metal], axis=-1
    ).astype(jnp.bfloat16)                                           # (tile_b, 192)
    z = jnp.dot(feat, fw0[...], preferred_element_type=jnp.float32)
    z = jnp.maximum(z + fs0[...], 0.0).astype(jnp.bfloat16)          # (tile_b, 1024)
    z = jnp.dot(z, fw1[...], preferred_element_type=jnp.float32) + fs1[...]
    z = jnp.maximum(z, 0.0)                                          # (tile_b, 512) f32
    out = jnp.sum(z * fw2[...], axis=-1, keepdims=True) + fb2[...]   # fc_2 (N=1)
    o_ref[...] = out.astype(o_ref.dtype)


# ---------------------------------------------------------------------------
# Parameter folding (done ONCE at prep time): BN + conv bias into the weights
# ---------------------------------------------------------------------------
def _bn_scale_shift(bn):
    scale = bn["gamma"] / jnp.sqrt(bn["var"] + EPS)
    shift = bn["beta"] - bn["mean"] * scale
    return scale, shift


def _fold_conv(w, b, bn):
    # w: (Cout, Cin, k) PyTorch layout; returns ((k, Cin_pad, Cout) bf16, (1, Cout) f32)
    scale, shift = _bn_scale_shift(bn)
    cout, cin, _ = w.shape
    wf = jnp.transpose(w, (2, 1, 0)) * scale[None, None, :]
    cin_p = ((cin + 7) // 8) * 8
    if cin_p != cin:                          # zero-pad the 7-channel input to 8
        wf = jnp.pad(wf, ((0, 0), (0, cin_p - cin), (0, 0)))
    sf = (b * scale + shift).reshape(1, cout)
    return wf.astype(jnp.bfloat16), sf.astype(jnp.float32)


def _fold_linear(w, b, bn):
    # w: (fan_in, fan_out)
    scale, shift = _bn_scale_shift(bn)
    wf = (w * scale[None, :]).astype(jnp.bfloat16)
    sf = (b * scale + shift).reshape(1, -1).astype(jnp.float32)
    return wf, sf


def prepare_params(P):
    K = {}
    for name in ("meta", "metal"):
        prm = P[name]
        for i in range(4):
            w, s = _fold_conv(prm[f"conv{i}_w"], prm[f"conv{i}_b"], prm[f"bn{i}"])
            K[f"{name}_w{i}"] = w
            K[f"{name}_s{i}"] = s
    K["fw0"], K["fs0"] = _fold_linear(P["fc0_w"], P["fc0_b"], P["bn_0"])
    K["fw1"], K["fs1"] = _fold_linear(P["fc1_w"], P["fc1_b"], P["bn_1"])
    K["fw2"] = P["fc2_w"].reshape(1, -1).astype(jnp.float32)   # (1, 512), kept f32
    K["fb2"] = P["fc2_b"].reshape(1, 1).astype(jnp.float32)
    return K


_WEIGHT_NAMES = (
    "meta_w0", "meta_s0", "meta_w1", "meta_s1",
    "meta_w2", "meta_s2", "meta_w3", "meta_s3",
    "metal_w0", "metal_s0", "metal_w1", "metal_s1",
    "metal_w2", "metal_s2", "metal_w3", "metal_s3",
    "fw0", "fs0", "fw1", "fs1", "fw2", "fb2",
)


def _resident_spec(shape):
    """Full-array block whose index never changes -> DMA'd once, stays in VMEM."""
    nd = len(shape)
    return pl.BlockSpec(shape, lambda i: (0,) * nd)


# ---------------------------------------------------------------------------
# Forward wrapper (tiny XLA glue + one gridded pallas_call)
# ---------------------------------------------------------------------------
def model_forward(x, K, tile_b=8):
    # x: (B, 7, 8) float32, PyTorch (N, C, L) convention
    B = x.shape[0]
    num_tiles = -(-B // tile_b)
    b_pad = num_tiles * tile_b
    if b_pad != B:
        x = jnp.pad(x, ((0, b_pad - B), (0, 0), (0, 0)))

    idx0 = jnp.array([0, 1, 2, 6])
    idx1 = jnp.array([3, 4, 5, 7])
    idx2 = jnp.array([6, 7])
    c_p = 8   # channels padded 7 -> 8

    # Meta input, laid out so each grid tile is one contiguous row block:
    #   (tiles, L=4, which_meta=2, tile_b, C) -> flat (tiles*4*2*tile_b, 8)
    xm = jnp.stack([x[:, :, idx0], x[:, :, idx1]], axis=0)        # (2, Bp, 7, 4)
    xm = xm.reshape(2, num_tiles, tile_b, 7, 4)
    xm = jnp.transpose(xm, (1, 4, 0, 2, 3))                       # (tiles, 4, 2, tb, 7)
    xm = jnp.pad(xm, ((0, 0),) * 4 + ((0, c_p - 7),))
    xm = xm.reshape(num_tiles * 4 * 2 * tile_b, c_p).astype(jnp.float32)

    # Metal input: (tiles, L=2, tile_b, C) -> flat (tiles*2*tile_b, 8)
    xl = x[:, :, idx2]                                            # (Bp, 7, 2)
    xl = xl.reshape(num_tiles, tile_b, 7, 2)
    xl = jnp.transpose(xl, (0, 3, 1, 2))                          # (tiles, 2, tb, 7)
    xl = jnp.pad(xl, ((0, 0),) * 3 + ((0, c_p - 7),))
    xl = xl.reshape(num_tiles * 2 * tile_b, c_p).astype(jnp.float32)

    weights = [K[n] for n in _WEIGHT_NAMES]

    in_specs = [
        pl.BlockSpec((4 * 2 * tile_b, c_p), lambda i: (i, 0)),    # xm: streamed per tile
        pl.BlockSpec((2 * tile_b, c_p), lambda i: (i, 0)),        # xl: streamed per tile
    ] + [_resident_spec(w.shape) for w in weights]                # weights: resident

    kern = functools.partial(_fused_forward_kernel, tile_b=tile_b)
    out = pl.pallas_call(
        kern,
        grid=(num_tiles,),
        in_specs=in_specs,
        out_specs=pl.BlockSpec((tile_b, 1), lambda i: (i, 0)),
        out_shape=jax.ShapeDtypeStruct((b_pad, 1), jnp.float32),
        compiler_params=pltpu.CompilerParams(
            # "arbitrary": do NOT megacore-shard a weight-DMA-bound kernel (v7x).
            dimension_semantics=("arbitrary",),
            vmem_limit_bytes=32 * 1024 * 1024,
        ),
    )(xm, xl, *weights)
    return out[:B]  # (B, 1)


# ---------------------------------------------------------------------------
# Deterministic synthetic parameters (PyTorch-like fan-in init, eval-mode BN)
# ---------------------------------------------------------------------------
def init_conv(key, cout, cin, k):
    k1, k2 = jax.random.split(key)
    bound = 1.0 / float(cin * k) ** 0.5
    w = jax.random.uniform(k1, (cout, cin, k), jnp.float32, -bound, bound)
    b = jax.random.uniform(k2, (cout,), jnp.float32, -bound, bound)
    return w, b


def init_bn(key, c):
    k1, k2, k3, k4 = jax.random.split(key, 4)
    return dict(
        gamma=1.0 + 0.1 * jax.random.normal(k1, (c,), jnp.float32),
        beta=0.1 * jax.random.normal(k2, (c,), jnp.float32),
        mean=0.05 * jax.random.normal(k3, (c,), jnp.float32),
        var=1.0 + 0.1 * jax.random.uniform(k4, (c,), jnp.float32),
    )


def init_feature_net(key, ksizes):
    chans = [(7, 1024), (1024, 512), (512, 128), (128, 64)]
    prm = {}
    keys = jax.random.split(key, 8)
    for i, ((cin, cout), k) in enumerate(zip(chans, ksizes)):
        w, b = init_conv(keys[2 * i], cout, cin, k)
        prm[f"conv{i}_w"] = w
        prm[f"conv{i}_b"] = b
        prm[f"bn{i}"] = init_bn(keys[2 * i + 1], cout)
    return prm


def init_linear(key, fan_in, fan_out):
    k1, k2 = jax.random.split(key)
    bound = 1.0 / float(fan_in) ** 0.5
    w = jax.random.uniform(k1, (fan_in, fan_out), jnp.float32, -bound, bound)
    b = jax.random.uniform(k2, (fan_out,), jnp.float32, -bound, bound)
    return w, b


def init_model(key):
    keys = jax.random.split(key, 7)
    P = {
        "meta": init_feature_net(keys[0], ksizes=(2, 2, 2, 1)),
        "metal": init_feature_net(keys[1], ksizes=(1, 1, 2, 1)),
    }
    P["fc0_w"], P["fc0_b"] = init_linear(keys[2], 192, 1024)
    P["fc1_w"], P["fc1_b"] = init_linear(keys[3], 1024, 512)
    P["fc2_w"], P["fc2_b"] = init_linear(keys[4], 512, 1)
    P["bn_0"] = init_bn(keys[5], 1024)
    P["bn_1"] = init_bn(keys[6], 512)
    return P


if __name__ == "__main__":
    # BatchNorm layers are implemented in eval mode (running stats folded into the
    # weights), the standard choice for an inference kernel.
    key = jax.random.PRNGKey(0)
    kp, kx = jax.random.split(key)
    raw_params = init_model(kp)
    params = prepare_params(raw_params)          # one-time fold -> bf16 kernel weights
    B = 32                                       # 4 batch tiles of 8 -> weight DMA amortized
    x = jax.random.normal(kx, (B, 7, 8), dtype=jnp.float32)   # (B, C=7, L=8)

    fwd = jax.jit(model_forward, static_argnames=("tile_b",))
    out = fwd(x, params, tile_b=8)
    out = jax.block_until_ready(out)
    assert out.shape == (B, 1), out.shape
    print("KERNEL_OK")
</pallas_src>

<mosaic_0001>
module attributes {stable_mosaic.version = 11 : i64} {
  func.func @_fused_forward_kernel(%arg0: i32, %arg1: memref<64x8xf32, #tpu.memory_space<vmem>>, %arg2: memref<16x8xf32, #tpu.memory_space<vmem>>, %arg3: memref<2x8x1024xbf16, #tpu.memory_space<vmem>>, %arg4: memref<1x1024xf32, #tpu.memory_space<vmem>>, %arg5: memref<2x1024x512xbf16, #tpu.memory_space<vmem>>, %arg6: memref<1x512xf32, #tpu.memory_space<vmem>>, %arg7: memref<2x512x128xbf16, #tpu.memory_space<vmem>>, %arg8: memref<1x128xf32, #tpu.memory_space<vmem>>, %arg9: memref<1x128x64xbf16, #tpu.memory_space<vmem>>, %arg10: memref<1x64xf32, #tpu.memory_space<vmem>>, %arg11: memref<1x8x1024xbf16, #tpu.memory_space<vmem>>, %arg12: memref<1x1024xf32, #tpu.memory_space<vmem>>, %arg13: memref<1x1024x512xbf16, #tpu.memory_space<vmem>>, %arg14: memref<1x512xf32, #tpu.memory_space<vmem>>, %arg15: memref<2x512x128xbf16, #tpu.memory_space<vmem>>, %arg16: memref<1x128xf32, #tpu.memory_space<vmem>>, %arg17: memref<1x128x64xbf16, #tpu.memory_space<vmem>>, %arg18: memref<1x64xf32, #tpu.memory_space<vmem>>, %arg19: memref<192x1024xbf16, #tpu.memory_space<vmem>>, %arg20: memref<1x1024xf32, #tpu.memory_space<vmem>>, %arg21: memref<1024x512xbf16, #tpu.memory_space<vmem>>, %arg22: memref<1x512xf32, #tpu.memory_space<vmem>>, %arg23: memref<1x512xf32, #tpu.memory_space<vmem>>, %arg24: memref<1x1xf32, #tpu.memory_space<vmem>>, %arg25: memref<8x1xf32, #tpu.memory_space<vmem>>) attributes {dimension_semantics = [#tpu.dimension_semantics<arbitrary>], iteration_bounds = array<i64: 4>, scalar_prefetch = 0 : i64, scratch_operands = 0 : i64, tpu.core_type = #tpu.core_type<tc>, window_params = [{transform_indices = @transform_0, window_bounds = array<i64: 64, 8>}, {transform_indices = @transform_1, window_bounds = array<i64: 16, 8>}, {pipeline_mode = #tpu.pipeline_mode<synchronous>, transform_indices = @transform_2, window_bounds = array<i64: 2, 8, 1024>}, {pipeline_mode = #tpu.pipeline_mode<synchronous>, transform_indices = @transform_3, window_bounds = array<i64: 1, 1024>}, {pipeline_mode = #tpu.pipeline_mode<synchronous>, transform_indices = @transform_4, window_bounds = array<i64: 2, 1024, 512>}, {pipeline_mode = #tpu.pipeline_mode<synchronous>, transform_indices = @transform_5, window_bounds = array<i64: 1, 512>}, {pipeline_mode = #tpu.pipeline_mode<synchronous>, transform_indices = @transform_6, window_bounds = array<i64: 2, 512, 128>}, {pipeline_mode = #tpu.pipeline_mode<synchronous>, transform_indices = @transform_7, window_bounds = array<i64: 1, 128>}, {pipeline_mode = #tpu.pipeline_mode<synchronous>, transform_indices = @transform_8, window_bounds = array<i64: 1, 128, 64>}, {pipeline_mode = #tpu.pipeline_mode<synchronous>, transform_indices = @transform_9, window_bounds = array<i64: 1, 64>}, {pipeline_mode = #tpu.pipeline_mode<synchronous>, transform_indices = @transform_10, window_bounds = array<i64: 1, 8, 1024>}, {pipeline_mode = #tpu.pipeline_mode<synchronous>, transform_indices = @transform_11, window_bounds = array<i64: 1, 1024>}, {pipeline_mode = #tpu.pipeline_mode<synchronous>, transform_indices = @transform_12, window_bounds = array<i64: 1, 1024, 512>}, {pipeline_mode = #tpu.pipeline_mode<synchronous>, transform_indices = @transform_13, window_bounds = array<i64: 1, 512>}, {pipeline_mode = #tpu.pipeline_mode<synchronous>, transform_indices = @transform_14, window_bounds = array<i64: 2, 512, 128>}, {pipeline_mode = #tpu.pipeline_mode<synchronous>, transform_indices = @transform_15, window_bounds = array<i64: 1, 128>}, {pipeline_mode = #tpu.pipeline_mode<synchronous>, transform_indices = @transform_16, window_bounds = array<i64: 1, 128, 64>}, {pipeline_mode = #tpu.pipeline_mode<synchronous>, transform_indices = @transform_17, window_bounds = array<i64: 1, 64>}, {pipeline_mode = #tpu.pipeline_mode<synchronous>, transform_indices = @transform_18, window_bounds = array<i64: 192, 1024>}, {pipeline_mode = #tpu.pipeline_mode<synchronous>, transform_indices = @transform_19, window_bounds = array<i64: 1, 1024>}, {pipeline_mode = #tpu.pipeline_mode<synchronous>, transform_indices = @transform_20, window_bounds = array<i64: 1024, 512>}, {pipeline_mode = #tpu.pipeline_mode<synchronous>, transform_indices = @transform_21, window_bounds = array<i64: 1, 512>}, {pipeline_mode = #tpu.pipeline_mode<synchronous>, transform_indices = @transform_22, window_bounds = array<i64: 1, 512>}, {pipeline_mode = #tpu.pipeline_mode<synchronous>, transform_indices = @transform_23, window_bounds = array<i64: 1, 1>}, {transform_indices = @transform_24, window_bounds = array<i64: 8, 1>}]} {
    %c0 = arith.constant 0 : index
    %c0_0 = arith.constant 0 : index
    %0 = vector.load %arg1[%c0, %c0_0] : memref<64x8xf32, #tpu.memory_space<vmem>>, vector<64x8xf32>
    %1 = arith.truncf %0 : vector<64x8xf32> to vector<64x8xbf16>
    %2 = vector.extract_strided_slice %1 {offsets = [0, 0], sizes = [48, 8], strides = [1, 1]} : vector<64x8xbf16> to vector<48x8xbf16>
    %c0_1 = arith.constant 0 : index
    %c0_2 = arith.constant 0 : index
    %c0_3 = arith.constant 0 : index
    %3 = vector.load %arg3[%c0_1, %c0_2, %c0_3] : memref<2x8x1024xbf16, #tpu.memory_space<vmem>>, vector<1x8x1024xbf16>
    %4 = vector.shape_cast %3 : vector<1x8x1024xbf16> to vector<8x1024xbf16>
    %cst = arith.constant dense<0.000000e+00> : vector<48x1024xf32>
    %5 = tpu.matmul %2, %4, %cst {dimension_numbers = #tpu.dot_dimension_numbers<[1], [0], [0], [1], [0, 0, 1, 1], [], []>} : vector<48x8xbf16>, vector<8x1024xbf16>, vector<48x1024xf32> -> vector<48x1024xf32>
    %6 = vector.extract_strided_slice %1 {offsets = [16, 0], sizes = [48, 8], strides = [1, 1]} : vector<64x8xbf16> to vector<48x8xbf16>
    %c1 = arith.constant 1 : index
    %c0_4 = arith.constant 0 : index
    %c0_5 = arith.constant 0 : index
    %7 = vector.load %arg3[%c1, %c0_4, %c0_5] : memref<2x8x1024xbf16, #tpu.memory_space<vmem>>, vector<1x8x1024xbf16>
    %8 = vector.shape_cast %7 : vector<1x8x1024xbf16> to vector<8x1024xbf16>
    %cst_6 = arith.constant dense<0.000000e+00> : vector<48x1024xf32>
    %9 = tpu.matmul %6, %8, %cst_6 {dimension_numbers = #tpu.dot_dimension_numbers<[1], [0], [0], [1], [0, 0, 1, 1], [], []>} : vector<48x8xbf16>, vector<8x1024xbf16>, vector<48x1024xf32> -> vector<48x1024xf32>
    %10 = arith.addf %5, %9 : vector<48x1024xf32>
    %c0_7 = arith.constant 0 : index
    %c0_8 = arith.constant 0 : index
    %11 = vector.load %arg4[%c0_7, %c0_8] : memref<1x1024xf32, #tpu.memory_space<vmem>>, vector<1x1024xf32>
    %12 = vector.broadcast %11 : vector<1x1024xf32> to vector<48x1024xf32>
    %13 = arith.addf %10, %12 : vector<48x1024xf32>
    %cst_9 = arith.constant 0.000000e+00 : f32
    %14 = vector.broadcast %cst_9 : f32 to vector<48x1024xf32>
    %15 = arith.maximumf %13, %14 : vector<48x1024xf32>
    %16 = arith.truncf %15 : vector<48x1024xf32> to vector<48x1024xbf16>
    %17 = vector.extract_strided_slice %16 {offsets = [0, 0], sizes = [32, 1024], strides = [1, 1]} : vector<48x1024xbf16> to vector<32x1024xbf16>
    %c0_10 = arith.constant 0 : index
    %c0_11 = arith.constant 0 : index
    %c0_12 = arith.constant 0 : index
    %18 = vector.load %arg5[%c0_10, %c0_11, %c0_12] : memref<2x1024x512xbf16, #tpu.memory_space<vmem>>, vector<1x1024x512xbf16>
    %19 = vector.shape_cast %18 : vector<1x1024x512xbf16> to vector<1024x512xbf16>
    %cst_13 = arith.constant dense<0.000000e+00> : vector<32x512xf32>
    %20 = tpu.matmul %17, %19, %cst_13 {dimension_numbers = #tpu.dot_dimension_numbers<[1], [0], [0], [1], [0, 0, 1, 1], [], []>} : vector<32x1024xbf16>, vector<1024x512xbf16>, vector<32x512xf32> -> vector<32x512xf32>
    %21 = vector.extract_strided_slice %16 {offsets = [16, 0], sizes = [32, 1024], strides = [1, 1]} : vector<48x1024xbf16> to vector<32x1024xbf16>
    %c1_14 = arith.constant 1 : index
    %c0_15 = arith.constant 0 : index
    %c0_16 = arith.constant 0 : index
    %22 = vector.load %arg5[%c1_14, %c0_15, %c0_16] : memref<2x1024x512xbf16, #tpu.memory_space<vmem>>, vector<1x1024x512xbf16>
    %23 = vector.shape_cast %22 : vector<1x1024x512xbf16> to vector<1024x512xbf16>
    %cst_17 = arith.constant dense<0.000000e+00> : vector<32x512xf32>
    %24 = tpu.matmul %21, %23, %cst_17 {dimension_numbers = #tpu.dot_dimension_numbers<[1], [0], [0], [1], [0, 0, 1, 1], [], []>} : vector<32x1024xbf16>, vector<1024x512xbf16>, vector<32x512xf32> -> vector<32x512xf32>
    %25 = arith.addf %20, %24 : vector<32x512xf32>
    %c0_18 = arith.constant 0 : index
    %c0_19 = arith.constant 0 : index
    %26 = vector.load %arg6[%c0_18, %c0_19] : memref<1x512xf32, #tpu.memory_space<vmem>>, vector<1x512xf32>
    %27 = vector.broadcast %26 : vector<1x512xf32> to vector<32x512xf32>
    %28 = arith.addf %25, %27 : vector<32x512xf32>
    %cst_20 = arith.constant 0.000000e+00 : f32
    %29 = vector.broadcast %cst_20 : f32 to vector<32x512xf32>
    %30 = arith.maximumf %28, %29 : vector<32x512xf32>
    %31 = arith.truncf %30 : vector<32x512xf32> to vector<32x512xbf16>
    %32 = vector.extract_strided_slice %31 {offsets = [0, 0], sizes = [16, 512], strides = [1, 1]} : vector<32x512xbf16> to vector<16x512xbf16>
    %c0_21 = arith.constant 0 : index
    %c0_22 = arith.constant 0 : index
    %c0_23 = arith.constant 0 : index
    %33 = vector.load %arg7[%c0_21, %c0_22, %c0_23] : memref<2x512x128xbf16, #tpu.memory_space<vmem>>, vector<1x512x128xbf16>
    %34 = vector.shape_cast %33 : vector<1x512x128xbf16> to vector<512x128xbf16>
    %cst_24 = arith.constant dense<0.000000e+00> : vector<16x128xf32>
    %35 = tpu.matmul %32, %34, %cst_24 {dimension_numbers = #tpu.dot_dimension_numbers<[1], [0], [0], [1], [0, 0, 1, 1], [], []>} : vector<16x512xbf16>, vector<512x128xbf16>, vector<16x128xf32> -> vector<16x128xf32>
    %36 = vector.extract_strided_slice %31 {offsets = [16, 0], sizes = [16, 512], strides = [1, 1]} : vector<32x512xbf16> to vector<16x512xbf16>
    %c1_25 = arith.constant 1 : index
    %c0_26 = arith.constant 0 : index
    %c0_27 = arith.constant 0 : index
    %37 = vector.load %arg7[%c1_25, %c0_26, %c0_27] : memref<2x512x128xbf16, #tpu.memory_space<vmem>>, vector<1x512x128xbf16>
    %38 = vector.shape_cast %37 : vector<1x512x128xbf16> to vector<512x128xbf16>
    %cst_28 = arith.constant dense<0.000000e+00> : vector<16x128xf32>
    %39 = tpu.matmul %36, %38, %cst_28 {dimension_numbers = #tpu.dot_dimension_numbers<[1], [0], [0], [1], [0, 0, 1, 1], [], []>} : vector<16x512xbf16>, vector<512x128xbf16>, vector<16x128xf32> -> vector<16x128xf32>
    %40 = arith.addf %35, %39 : vector<16x128xf32>
    %c0_29 = arith.constant 0 : index
    %c0_30 = arith.constant 0 : index
    %41 = vector.load %arg8[%c0_29, %c0_30] : memref<1x128xf32, #tpu.memory_space<vmem>>, vector<1x128xf32>
    %42 = vector.broadcast %41 : vector<1x128xf32> to vector<16x128xf32>
    %43 = arith.addf %40, %42 : vector<16x128xf32>
    %cst_31 = arith.constant 0.000000e+00 : f32
    %44 = vector.broadcast %cst_31 : f32 to vector<16x128xf32>
    %45 = arith.maximumf %43, %44 : vector<16x128xf32>
    %46 = arith.truncf %45 : vector<16x128xf32> to vector<16x128xbf16>
    %c0_32 = arith.constant 0 : index
    %c0_33 = arith.constant 0 : index
    %c0_34 = arith.constant 0 : index
    %47 = vector.load %arg9[%c0_32, %c0_33, %c0_34] : memref<1x128x64xbf16, #tpu.memory_space<vmem>>, vector<1x128x64xbf16>
    %48 = vector.shape_cast %47 : vector<1x128x64xbf16> to vector<128x64xbf16>
    %cst_35 = arith.constant dense<0.000000e+00> : vector<16x64xf32>
    %49 = tpu.matmul %46, %48, %cst_35 {dimension_numbers = #tpu.dot_dimension_numbers<[1], [0], [0], [1], [0, 0, 1, 1], [], []>} : vector<16x128xbf16>, vector<128x64xbf16>, vector<16x64xf32> -> vector<16x64xf32>
    %c0_36 = arith.constant 0 : index
    %c0_37 = arith.constant 0 : index
    %50 = vector.load %arg10[%c0_36, %c0_37] : memref<1x64xf32, #tpu.memory_space<vmem>>, vector<1x64xf32>
    %51 = vector.broadcast %50 : vector<1x64xf32> to vector<16x64xf32>
    %52 = arith.addf %49, %51 : vector<16x64xf32>
    %cst_38 = arith.constant 0.000000e+00 : f32
    %53 = vector.broadcast %cst_38 : f32 to vector<16x64xf32>
    %54 = arith.maximumf %52, %53 : vector<16x64xf32>
    %c0_39 = arith.constant 0 : index
    %c0_40 = arith.constant 0 : index
    %55 = vector.load %arg2[%c0_39, %c0_40] : memref<16x8xf32, #tpu.memory_space<vmem>>, vector<16x8xf32>
    %56 = arith.truncf %55 : vector<16x8xf32> to vector<16x8xbf16>
    %c0_41 = arith.constant 0 : index
    %c0_42 = arith.constant 0 : index
    %c0_43 = arith.constant 0 : index
    %57 = vector.load %arg11[%c0_41, %c0_42, %c0_43] : memref<1x8x1024xbf16, #tpu.memory_space<vmem>>, vector<1x8x1024xbf16>
    %58 = vector.shape_cast %57 : vector<1x8x1024xbf16> to vector<8x1024xbf16>
    %cst_44 = arith.constant dense<0.000000e+00> : vector<16x1024xf32>
    %59 = tpu.matmul %56, %58, %cst_44 {dimension_numbers = #tpu.dot_dimension_numbers<[1], [0], [0], [1], [0, 0, 1, 1], [], []>} : vector<16x8xbf16>, vector<8x1024xbf16>, vector<16x1024xf32> -> vector<16x1024xf32>
    %c0_45 = arith.constant 0 : index
    %c0_46 = arith.constant 0 : index
    %60 = vector.load %arg12[%c0_45, %c0_46] : memref<1x1024xf32, #tpu.memory_space<vmem>>, vector<1x1024xf32>
    %61 = vector.broadcast %60 : vector<1x1024xf32> to vector<16x1024xf32>
    %62 = arith.addf %59, %61 : vector<16x1024xf32>
    %cst_47 = arith.constant 0.000000e+00 : f32
    %63 = vector.broadcast %cst_47 : f32 to vector<16x1024xf32>
    %64 = arith.maximumf %62, %63 : vector<16x1024xf32>
    %65 = arith.truncf %64 : vector<16x1024xf32> to vector<16x1024xbf16>
    %c0_48 = arith.constant 0 : index
    %c0_49 = arith.constant 0 : index
    %c0_50 = arith.constant 0 : index
    %66 = vector.load %arg13[%c0_48, %c0_49, %c0_50] : memref<1x1024x512xbf16, #tpu.memory_space<vmem>>, vector<1x1024x512xbf16>
    %67 = vector.shape_cast %66 : vector<1x1024x512xbf16> to vector<1024x512xbf16>
    %cst_51 = arith.constant dense<0.000000e+00> : vector<16x512xf32>
    %68 = tpu.matmul %65, %67, %cst_51 {dimension_numbers = #tpu.dot_dimension_numbers<[1], [0], [0], [1], [0, 0, 1, 1], [], []>} : vector<16x1024xbf16>, vector<1024x512xbf16>, vector<16x512xf32> -> vector<16x512xf32>
    %c0_52 = arith.constant 0 : index
    %c0_53 = arith.constant 0 : index
    %69 = vector.load %arg14[%c0_52, %c0_53] : memref<1x512xf32, #tpu.memory_space<vmem>>, vector<1x512xf32>
    %70 = vector.broadcast %69 : vector<1x512xf32> to vector<16x512xf32>
    %71 = arith.addf %68, %70 : vector<16x512xf32>
    %cst_54 = arith.constant 0.000000e+00 : f32
    %72 = vector.broadcast %cst_54 : f32 to vector<16x512xf32>
    %73 = arith.maximumf %71, %72 : vector<16x512xf32>
    %74 = arith.truncf %73 : vector<16x512xf32> to vector<16x512xbf16>
    %75 = vector.extract_strided_slice %74 {offsets = [0, 0], sizes = [8, 512], strides = [1, 1]} : vector<16x512xbf16> to vector<8x512xbf16>
    %c0_55 = arith.constant 0 : index
    %c0_56 = arith.constant 0 : index
    %c0_57 = arith.constant 0 : index
    %76 = vector.load %arg15[%c0_55, %c0_56, %c0_57] : memref<2x512x128xbf16, #tpu.memory_space<vmem>>, vector<1x512x128xbf16>
    %77 = vector.shape_cast %76 : vector<1x512x128xbf16> to vector<512x128xbf16>
    %cst_58 = arith.constant dense<0.000000e+00> : vector<8x128xf32>
    %78 = tpu.matmul %75, %77, %cst_58 {dimension_numbers = #tpu.dot_dimension_numbers<[1], [0], [0], [1], [0, 0, 1, 1], [], []>} : vector<8x512xbf16>, vector<512x128xbf16>, vector<8x128xf32> -> vector<8x128xf32>
    %79 = vector.extract_strided_slice %74 {offsets = [8, 0], sizes = [8, 512], strides = [1, 1]} : vector<16x512xbf16> to vector<8x512xbf16>
    %c1_59 = arith.constant 1 : index
    %c0_60 = arith.constant 0 : index
    %c0_61 = arith.constant 0 : index
    %80 = vector.load %arg15[%c1_59, %c0_60, %c0_61] : memref<2x512x128xbf16, #tpu.memory_space<vmem>>, vector<1x512x128xbf16>
    %81 = vector.shape_cast %80 : vector<1x512x128xbf16> to vector<512x128xbf16>
    %cst_62 = arith.constant dense<0.000000e+00> : vector<8x128xf32>
    %82 = tpu.matmul %79, %81, %cst_62 {dimension_numbers = #tpu.dot_dimension_numbers<[1], [0], [0], [1], [0, 0, 1, 1], [], []>} : vector<8x512xbf16>, vector<512x128xbf16>, vector<8x128xf32> -> vector<8x128xf32>
    %83 = arith.addf %78, %82 : vector<8x128xf32>
    %c0_63 = arith.constant 0 : index
    %c0_64 = arith.constant 0 : index
    %84 = vector.load %arg16[%c0_63, %c0_64] : memref<1x128xf32, #tpu.memory_space<vmem>>, vector<1x128xf32>
    %85 = vector.broadcast %84 : vector<1x128xf32> to vector<8x128xf32>
    %86 = arith.addf %83, %85 : vector<8x128xf32>
    %cst_65 = arith.constant 0.000000e+00 : f32
    %87 = vector.broadcast %cst_65 : f32 to vector<8x128xf32>
    %88 = arith.maximumf %86, %87 : vector<8x128xf32>
    %89 = arith.truncf %88 : vector<8x128xf32> to vector<8x128xbf16>
    %c0_66 = arith.constant 0 : index
    %c0_67 = arith.constant 0 : index
    %c0_68 = arith.constant 0 : index
    %90 = vector.load %arg17[%c0_66, %c0_67, %c0_68] : memref<1x128x64xbf16, #tpu.memory_space<vmem>>, vector<1x128x64xbf16>
    %91 = vector.shape_cast %90 : vector<1x128x64xbf16> to vector<128x64xbf16>
    %cst_69 = arith.constant dense<0.000000e+00> : vector<8x64xf32>
    %92 = tpu.matmul %89, %91, %cst_69 {dimension_numbers = #tpu.dot_dimension_numbers<[1], [0], [0], [1], [0, 0, 1, 1], [], []>} : vector<8x128xbf16>, vector<128x64xbf16>, vector<8x64xf32> -> vector<8x64xf32>
    %c0_70 = arith.constant 0 : index
    %c0_71 = arith.constant 0 : index
    %93 = vector.load %arg18[%c0_70, %c0_71] : memref<1x64xf32, #tpu.memory_space<vmem>>, vector<1x64xf32>
    %94 = vector.broadcast %93 : vector<1x64xf32> to vector<8x64xf32>
    %95 = arith.addf %92, %94 : vector<8x64xf32>
    %cst_72 = arith.constant 0.000000e+00 : f32
    %96 = vector.broadcast %cst_72 : f32 to vector<8x64xf32>
    %97 = arith.maximumf %95, %96 : vector<8x64xf32>
    %98 = vector.extract_strided_slice %54 {offsets = [0, 0], sizes = [8, 64], strides = [1, 1]} : vector<16x64xf32> to vector<8x64xf32>
    %99 = vector.extract_strided_slice %54 {offsets = [8, 0], sizes = [8, 64], strides = [1, 1]} : vector<16x64xf32> to vector<8x64xf32>
    %100 = tpu.concatenate %98, %99, %97 in 1 : vector<8x64xf32>, vector<8x64xf32>, vector<8x64xf32> -> vector<8x192xf32>
    %101 = arith.truncf %100 : vector<8x192xf32> to vector<8x192xbf16>
    %c0_73 = arith.constant 0 : index
    %c0_74 = arith.constant 0 : index
    %102 = vector.load %arg19[%c0_73, %c0_74] : memref<192x1024xbf16, #tpu.memory_space<vmem>>, vector<192x1024xbf16>
    %cst_75 = arith.constant dense<0.000000e+00> : vector<8x1024xf32>
    %103 = tpu.matmul %101, %102, %cst_75 {dimension_numbers = #tpu.dot_dimension_numbers<[1], [0], [0], [1], [0, 0, 1, 1], [], []>} : vector<8x192xbf16>, vector<192x1024xbf16>, vector<8x1024xf32> -> vector<8x1024xf32>
    %c0_76 = arith.constant 0 : index
    %c0_77 = arith.constant 0 : index
    %104 = vector.load %arg20[%c0_76, %c0_77] : memref<1x1024xf32, #tpu.memory_space<vmem>>, vector<1x1024xf32>
    %105 = vector.broadcast %104 : vector<1x1024xf32> to vector<8x1024xf32>
    %106 = arith.addf %103, %105 : vector<8x1024xf32>
    %cst_78 = arith.constant 0.000000e+00 : f32
    %107 = vector.broadcast %cst_78 : f32 to vector<8x1024xf32>
    %108 = arith.maximumf %106, %107 : vector<8x1024xf32>
    %109 = arith.truncf %108 : vector<8x1024xf32> to vector<8x1024xbf16>
    %c0_79 = arith.constant 0 : index
    %c0_80 = arith.constant 0 : index
    %110 = vector.load %arg21[%c0_79, %c0_80] : memref<1024x512xbf16, #tpu.memory_space<vmem>>, vector<1024x512xbf16>
    %cst_81 = arith.constant dense<0.000000e+00> : vector<8x512xf32>
    %111 = tpu.matmul %109, %110, %cst_81 {dimension_numbers = #tpu.dot_dimension_numbers<[1], [0], [0], [1], [0, 0, 1, 1], [], []>} : vector<8x1024xbf16>, vector<1024x512xbf16>, vector<8x512xf32> -> vector<8x512xf32>
    %c0_82 = arith.constant 0 : index
    %c0_83 = arith.constant 0 : index
    %112 = vector.load %arg22[%c0_82, %c0_83] : memref<1x512xf32, #tpu.memory_space<vmem>>, vector<1x512xf32>
    %113 = vector.broadcast %112 : vector<1x512xf32> to vector<8x512xf32>
    %114 = arith.addf %111, %113 : vector<8x512xf32>
    %cst_84 = arith.constant 0.000000e+00 : f32
    %115 = vector.broadcast %cst_84 : f32 to vector<8x512xf32>
    %116 = arith.maximumf %114, %115 : vector<8x512xf32>
    %c0_85 = arith.constant 0 : index
    %c0_86 = arith.constant 0 : index
    %117 = vector.load %arg23[%c0_85, %c0_86] : memref<1x512xf32, #tpu.memory_space<vmem>>, vector<1x512xf32>
    %118 = vector.broadcast %117 : vector<1x512xf32> to vector<8x512xf32>
    %119 = arith.mulf %116, %118 : vector<8x512xf32>
    %cst_87 = arith.constant dense<0.000000e+00> : vector<8xf32>
    %120 = vector.multi_reduction <add>, %119, %cst_87 [1] : vector<8x512xf32> to vector<8xf32>
    %121 = vector.shape_cast %120 : vector<8xf32> to vector<8x1xf32>
    %c0_88 = arith.constant 0 : index
    %c0_89 = arith.constant 0 : index
    %122 = vector.load %arg24[%c0_88, %c0_89] : memref<1x1xf32, #tpu.memory_space<vmem>>, vector<1x1xf32>
    %123 = vector.broadcast %122 : vector<1x1xf32> to vector<8x1xf32>
    %124 = arith.addf %121, %123 : vector<8x1xf32>
    %c0_90 = arith.constant 0 : index
    %c0_91 = arith.constant 0 : index
    %125 = vector.load %arg25[%c0_90, %c0_91] : memref<8x1xf32, #tpu.memory_space<vmem>>, vector<8x1xf32>
    tpu.vector_store %arg25[%c0_90, %c0_91], %124 {strides = array<i32>} : memref<8x1xf32, #tpu.memory_space<vmem>>, vector<8x1xf32>,
    return
  }
  func.func @transform_0(%arg0: i32) -> (i32, i32) {
    %c0_i32 = arith.constant 0 : i32
    %c0_i32_0 = arith.constant 0 : i32
    return %arg0, %c0_i32 : i32, i32
  }
  func.func @transform_1(%arg0: i32) -> (i32, i32) {
    %c0_i32 = arith.constant 0 : i32
    %c0_i32_0 = arith.constant 0 : i32
    return %arg0, %c0_i32 : i32, i32
  }
  func.func @transform_2(%arg0: i32) -> (i32, i32, i32) {
    %c0_i32 = arith.constant 0 : i32
    %c0_i32_0 = arith.constant 0 : i32
    %c0_i32_1 = arith.constant 0 : i32
    %c0_i32_2 = arith.constant 0 : i32
    return %c0_i32, %c0_i32_0, %c0_i32_1 : i32, i32, i32
  }
  func.func @transform_3(%arg0: i32) -> (i32, i32) {
    %c0_i32 = arith.constant 0 : i32
    %c0_i32_0 = arith.constant 0 : i32
    %c0_i32_1 = arith.constant 0 : i32
    return %c0_i32, %c0_i32_0 : i32, i32
  }
  func.func @transform_4(%arg0: i32) -> (i32, i32, i32) {
    %c0_i32 = arith.constant 0 : i32
    %c0_i32_0 = arith.constant 0 : i32
    %c0_i32_1 = arith.constant 0 : i32
    %c0_i32_2 = arith.constant 0 : i32
    return %c0_i32, %c0_i32_0, %c0_i32_1 : i32, i32, i32
  }
  func.func @transform_5(%arg0: i32) -> (i32, i32) {
    %c0_i32 = arith.constant 0 : i32
    %c0_i32_0 = arith.constant 0 : i32
    %c0_i32_1 = arith.constant 0 : i32
    return %c0_i32, %c0_i32_0 : i32, i32
  }
  func.func @transform_6(%arg0: i32) -> (i32, i32, i32) {
    %c0_i32 = arith.constant 0 : i32
    %c0_i32_0 = arith.constant 0 : i32
    %c0_i32_1 = arith.constant 0 : i32
    %c0_i32_2 = arith.constant 0 : i32
    return %c0_i32, %c0_i32_0, %c0_i32_1 : i32, i32, i32
  }
  func.func @transform_7(%arg0: i32) -> (i32, i32) {
    %c0_i32 = arith.constant 0 : i32
    %c0_i32_0 = arith.constant 0 : i32
    %c0_i32_1 = arith.constant 0 : i32
    return %c0_i32, %c0_i32_0 : i32, i32
  }
  func.func @transform_8(%arg0: i32) -> (i32, i32, i32) {
    %c0_i32 = arith.constant 0 : i32
    %c0_i32_0 = arith.constant 0 : i32
    %c0_i32_1 = arith.constant 0 : i32
    %c0_i32_2 = arith.constant 0 : i32
    return %c0_i32, %c0_i32_0, %c0_i32_1 : i32, i32, i32
  }
  func.func @transform_9(%arg0: i32) -> (i32, i32) {
    %c0_i32 = arith.constant 0 : i32
    %c0_i32_0 = arith.constant 0 : i32
    %c0_i32_1 = arith.constant 0 : i32
    return %c0_i32, %c0_i32_0 : i32, i32
  }
  func.func @transform_10(%arg0: i32) -> (i32, i32, i32) {
    %c0_i32 = arith.constant 0 : i32
    %c0_i32_0 = arith.constant 0 : i32
    %c0_i32_1 = arith.constant 0 : i32
    %c0_i32_2 = arith.constant 0 : i32
    return %c0_i32, %c0_i32_0, %c0_i32_1 : i32, i32, i32
  }
  func.func @transform_11(%arg0: i32) -> (i32, i32) {
    %c0_i32 = arith.constant 0 : i32
    %c0_i32_0 = arith.constant 0 : i32
    %c0_i32_1 = arith.constant 0 : i32
    return %c0_i32, %c0_i32_0 : i32, i32
  }
  func.func @transform_12(%arg0: i32) -> (i32, i32, i32) {
    %c0_i32 = arith.constant 0 : i32
    %c0_i32_0 = arith.constant 0 : i32
    %c0_i32_1 = arith.constant 0 : i32
    %c0_i32_2 = arith.constant 0 : i32
    return %c0_i32, %c0_i32_0, %c0_i32_1 : i32, i32, i32
  }
  func.func @transform_13(%arg0: i32) -> (i32, i32) {
    %c0_i32 = arith.constant 0 : i32
    %c0_i32_0 = arith.constant 0 : i32
    %c0_i32_1 = arith.constant 0 : i32
    return %c0_i32, %c0_i32_0 : i32, i32
  }
  func.func @transform_14(%arg0: i32) -> (i32, i32, i32) {
    %c0_i32 = arith.constant 0 : i32
    %c0_i32_0 = arith.constant 0 : i32
    %c0_i32_1 = arith.constant 0 : i32
    %c0_i32_2 = arith.constant 0 : i32
    return %c0_i32, %c0_i32_0, %c0_i32_1 : i32, i32, i32
  }
  func.func @transform_15(%arg0: i32) -> (i32, i32) {
    %c0_i32 = arith.constant 0 : i32
    %c0_i32_0 = arith.constant 0 : i32
    %c0_i32_1 = arith.constant 0 : i32
    return %c0_i32, %c0_i32_0 : i32, i32
  }
  func.func @transform_16(%arg0: i32) -> (i32, i32, i32) {
    %c0_i32 = arith.constant 0 : i32
    %c0_i32_0 = arith.constant 0 : i32
    %c0_i32_1 = arith.constant 0 : i32
    %c0_i32_2 = arith.constant 0 : i32
    return %c0_i32, %c0_i32_0, %c0_i32_1 : i32, i32, i32
  }
  func.func @transform_17(%arg0: i32) -> (i32, i32) {
    %c0_i32 = arith.constant 0 : i32
    %c0_i32_0 = arith.constant 0 : i32
    %c0_i32_1 = arith.constant 0 : i32
    return %c0_i32, %c0_i32_0 : i32, i32
  }
  func.func @transform_18(%arg0: i32) -> (i32, i32) {
    %c0_i32 = arith.constant 0 : i32
    %c0_i32_0 = arith.constant 0 : i32
    %c0_i32_1 = arith.constant 0 : i32
    return %c0_i32, %c0_i32_0 : i32, i32
  }
  func.func @transform_19(%arg0: i32) -> (i32, i32) {
    %c0_i32 = arith.constant 0 : i32
    %c0_i32_0 = arith.constant 0 : i32
    %c0_i32_1 = arith.constant 0 : i32
    return %c0_i32, %c0_i32_0 : i32, i32
  }
  func.func @transform_20(%arg0: i32) -> (i32, i32) {
    %c0_i32 = arith.constant 0 : i32
    %c0_i32_0 = arith.constant 0 : i32
    %c0_i32_1 = arith.constant 0 : i32
    return %c0_i32, %c0_i32_0 : i32, i32
  }
  func.func @transform_21(%arg0: i32) -> (i32, i32) {
    %c0_i32 = arith.constant 0 : i32
    %c0_i32_0 = arith.constant 0 : i32
    %c0_i32_1 = arith.constant 0 : i32
    return %c0_i32, %c0_i32_0 : i32, i32
  }
  func.func @transform_22(%arg0: i32) -> (i32, i32) {
    %c0_i32 = arith.constant 0 : i32
    %c0_i32_0 = arith.constant 0 : i32
    %c0_i32_1 = arith.constant 0 : i32
    return %c0_i32, %c0_i32_0 : i32, i32
  }
  func.func @transform_23(%arg0: i32) -> (i32, i32) {
    %c0_i32 = arith.constant 0 : i32
    %c0_i32_0 = arith.constant 0 : i32
    %c0_i32_1 = arith.constant 0 : i32
    return %c0_i32, %c0_i32_0 : i32, i32
  }
  func.func @transform_24(%arg0: i32) -> (i32, i32) {
    %c0_i32 = arith.constant 0 : i32
    %c0_i32_0 = arith.constant 0 : i32
    return %arg0, %c0_i32 : i32, i32
  }
}

</mosaic_0001>

<llo_original>
// kernel: model_forward.1
$region0: #{model_forward.1}
  #allocation0 [shape = 'u32[]', space=smem, size = 0x4, offset = 0x4, fixed_abs, tag = 'smem constant byte address 0x4 - core index']
  #allocation1 [shape = 'u32[144,128]{1,0:T(1,128)}', space=vmem, size = 0x12000, scoped, tag = 'internal scratch']
  #allocation2 [shape = 'f32[1,1]{1,0:T(1,128)S(1)}', space=vmem, size = 0x200, scoped, tag = 'scoped memory for model_forward.1']
  %s0 = inlined_call_operand.vmem [shape: f32[256,8], index: 0, kind: input, shape index: {}]
  %s1 = inlined_call_operand.vmem [shape: f32[64,8], index: 1, kind: input, shape index: {}]
  %s2 = inlined_call_operand.hbm [shape: bf16[2,8,1024], index: 2, kind: input, shape index: {}]
  %s3 = inlined_call_operand.vmem [shape: f32[1,1024], index: 3, kind: input, shape index: {}]
  %s4 = inlined_call_operand.vmem [shape: bf16[2,1024,512], index: 4, kind: input, shape index: {}]
  %s5 = inlined_call_operand.vmem [shape: f32[1,512], index: 5, kind: input, shape index: {}]
  %s6 = inlined_call_operand.hbm [shape: bf16[2,512,128], index: 6, kind: input, shape index: {}]
  %s7 = inlined_call_operand.vmem [shape: f32[1,128], index: 7, kind: input, shape index: {}]
  %s8 = inlined_call_operand.vmem [shape: bf16[1,128,64], index: 8, kind: input, shape index: {}]
  %s9 = inlined_call_operand.vmem [shape: f32[1,64], index: 9, kind: input, shape index: {}]
  %s10 = inlined_call_operand.hbm [shape: bf16[1,8,1024], index: 10, kind: input, shape index: {}]
  %s11 = inlined_call_operand.vmem [shape: f32[1,1024], index: 11, kind: input, shape index: {}]
  %s12 = inlined_call_operand.hbm [shape: bf16[1,1024,512], index: 12, kind: input, shape index: {}]
  %s13 = inlined_call_operand.vmem [shape: f32[1,512], index: 13, kind: input, shape index: {}]
  %s14 = inlined_call_operand.hbm [shape: bf16[2,512,128], index: 14, kind: input, shape index: {}]
  %s15 = inlined_call_operand.vmem [shape: f32[1,128], index: 15, kind: input, shape index: {}]
  %s16 = inlined_call_operand.vmem [shape: bf16[1,128,64], index: 16, kind: input, shape index: {}]
  %s17 = inlined_call_operand.vmem [shape: f32[1,64], index: 17, kind: input, shape index: {}]
  %s18 = inlined_call_operand.hbm [shape: bf16[192,1024], index: 18, kind: input, shape index: {}]
  %s19 = inlined_call_operand.vmem [shape: f32[1,1024], index: 19, kind: input, shape index: {}]
  %s20 = inlined_call_operand.hbm [shape: bf16[1024,512], index: 20, kind: input, shape index: {}]
  %s21 = inlined_call_operand.vmem [shape: f32[1,512], index: 21, kind: input, shape index: {}]
  %s22 = inlined_call_operand.vmem [shape: f32[1,512], index: 22, kind: input, shape index: {}]
  %s23 = inlined_call_operand.<no memory space> [shape: f32[1,1], index: 23, kind: input, shape index: {}]
  %s24 = inlined_call_operand.vmem [shape: f32[32,1], index: 24, kind: output, shape index: {}]
  %s25 = sld [smem:[#allocation0]]
  $region157: #{model_forward.1} parent=0
    _
  %s27 = ssub.s32 1, %s25
  %s28 = scalar_select 0, %s27, %s25
  %v29 = vstv %s23
  %30 = vst [vmem:[#allocation2] sm:$0x1] %v29
  $region1: #{model_forward.1} parent=0
    #allocation3 [shape = 'u8[32768]{0}', space=vmem, size = 0x8000, scoped, tag = 'input window, operand 2, single buffered']
    #allocation4 [shape = 's32[2]{0}', space=sflag, size = 0x8, scoped, tag = 'scoped memory for model_forward.1']
    #allocation5 [shape = 'u8[262144]{0}', space=vmem, size = 0x40000, scoped, tag = 'input window, operand 6, single buffered']
    #allocation6 [shape = 's32[1]{0}', space=sflag, size = 0x4, scoped, tag = 'scoped memory for model_forward.1']
    #allocation7 [shape = 'u8[16384]{0}', space=vmem, size = 0x4000, scoped, tag = 'input window, operand 10, single buffered']
    #allocation8 [shape = 'u8[1048576]{0}', space=vmem, size = 0x100000, scoped, tag = 'input window, operand 12, single buffered']
    #allocation9 [shape = 's32[1]{0}', space=sflag, size = 0x4, scoped, tag = 'scoped memory for model_forward.1']
    #allocation10 [shape = 'u8[262144]{0}', space=vmem, size = 0x40000, scoped, tag = 'input window, operand 14, single buffered']
    #allocation11 [shape = 'u8[393216]{0}', space=vmem, size = 0x60000, scoped, tag = 'input window, operand 18, single buffered']
    #allocation12 [shape = 's32[1]{0}', space=sflag, size = 0x4, scoped, tag = 'scoped memory for model_forward.1']
    #allocation13 [shape = 'u8[1048576]{0}', space=vmem, size = 0x100000, scoped, tag = 'input window, operand 20, single buffered']
    %31 = vsyncpa [#allocation4], 0
    %32 = vsyncpa [#allocation6], 0
    %33 = vsyncpa [#allocation9], 0
    %34 = vsyncpa [#allocation12], 0
    loop: start=0, step=1, limit=6
    $region2: #{model_forward.1} parent=1 // loop_pre_header
      _
    $region3: #{model_forward.1} parent=1 // loop_header
      %s36 = sphi 0, %s40
      %p37 = scmp.ge.s32.totalorder %s36, 6
      %s46 = sphi 0, %s48
      %s49 = sphi 0, %s46
      %s50 = sphi 0, %s49
      %s66 = sphi 0, %s50
      %s72 = sphi 0, %s74
      %s75 = sphi 0, %s72
      %s76 = sphi 0, %s75
      %s92 = sphi 0, %s76
      %s96 = sphi 0, %s96
      %s98 = sphi 0, %s96
      %s99 = sphi 0, %s98
      %s113 = sphi 0, %s99
      %s117 = sphi 0, %s117
      %s119 = sphi 0, %s117
      %s120 = sphi 0, %s119
      %s134 = sphi 0, %s120
      %s138 = sphi 0, %s138
      %s140 = sphi 0, %s138
      %s141 = sphi 0, %s140
      %s155 = sphi 0, %s141
      %s159 = sphi 0, %s159
      %s161 = sphi 0, %s159
      %s162 = sphi 0, %s161
      %s176 = sphi 0, %s162
      %s180 = sphi 0, %s180
      %s182 = sphi 0, %s180
      %s183 = sphi 0, %s182
      %s197 = sphi 0, %s183
      %s201 = sphi 0, %s201
      %s203 = sphi 0, %s201
      %s204 = sphi 0, %s203
      %s218 = sphi 0, %s204
      %s222 = sphi 0, %s222
      %s224 = sphi 0, %s222
      %s225 = sphi 0, %s224
      %s239 = sphi 0, %s225
      %s243 = sphi 0, %s243
      %s245 = sphi 0, %s243
      %s246 = sphi 0, %s245
      %s260 = sphi 0, %s246
      %s264 = sphi 0, %s264
      %s266 = sphi 0, %s264
      %s267 = sphi 0, %s266
      %s281 = sphi 0, %s267
      %s285 = sphi 0, %s285
      %s287 = sphi 0, %s285
      %s288 = sphi 0, %s287
      %s302 = sphi 0, %s288
      %s306 = sphi 0, %s306
      %s308 = sphi 0, %s306
      %s309 = sphi 0, %s308
      %s323 = sphi 0, %s309
      %s327 = sphi 0, %s327
      %s329 = sphi 0, %s327
      %s330 = sphi 0, %s329
      %s344 = sphi 0, %s330
      %s348 = sphi 0, %s348
      %s350 = sphi 0, %s348
      %s351 = sphi 0, %s350
      %s365 = sphi 0, %s351
      %s369 = sphi 0, %s369
      %s371 = sphi 0, %s369
      %s372 = sphi 0, %s371
      %s386 = sphi 0, %s372
      %s390 = sphi 0, %s390
      %s392 = sphi 0, %s390
      %s393 = sphi 0, %s392
      %s407 = sphi 0, %s393
      %s411 = sphi 0, %s411
      %s413 = sphi 0, %s411
      %s414 = sphi 0, %s413
      %s428 = sphi 0, %s414
      %s432 = sphi 0, %s432
      %s434 = sphi 0, %s432
      %s435 = sphi 0, %s434
      %s449 = sphi 0, %s435
      %s453 = sphi 0, %s453
      %s455 = sphi 0, %s453
      %s456 = sphi 0, %s455
      %s470 = sphi 0, %s456
      %s474 = sphi 0, %s474
      %s476 = sphi 0, %s474
      %s477 = sphi 0, %s476
      %s491 = sphi 0, %s477
      %s495 = sphi 0, %s495
      %s497 = sphi 0, %s495
      %s498 = sphi 0, %s497
      %s512 = sphi 0, %s498
      %s516 = sphi 0, %s516
      %s518 = sphi 0, %s516
      %s519 = sphi 0, %s518
      %s533 = sphi 0, %s519
      %s537 = sphi 0, %s537
      %s539 = sphi 0, %s537
      %s540 = sphi 0, %s539
      %s554 = sphi 0, %s540
      %s560 = sphi 0, %s562
      %s563 = sphi 0, %s560
      %s564 = sphi 0, %s563
      %s580 = sphi 0, %s564
    $region4: #{model_forward.1} parent=1 // loop_header_branch
      %39 = sbr.rel (%p37) target = $region8
    $region5: #{model_forward.1} parent=1 // loop_body
      %s41 = ssub.s32 %s36, 1
      %s42 = ssub.s32 %s36, 2
      %s43 = sadd.s32 %s36, 1
      %s44 = ssub.s32 %s36, %s43
      %p45 = scmp.eq.s32.totalorder %s44, 0
      %s47 = sadd.s32 %s46, 1
      %s48 = scalar_select %p45, %s46, %s47
      %p51 = pneg %p45
      %p52 = scmp.eq.s32.totalorder %s36, 3
      %p53 = por %p51, %p52
      %p54 = scmp.ne.s32.totalorder %s46, %s49
      %p55 = scmp.eq.s32.totalorder %s36, 0
      %p56 = por %p54, %p55
      %p57 = scmp.ne.s32.totalorder %s46, %s49
      %p58 = scmp.eq.s32.totalorder %s41, 3
      %p59 = por %p57, %p58
      %p60 = scmp.ne.s32.totalorder %s49, %s50
      %p61 = scmp.eq.s32.totalorder %s41, 0
      %p62 = por %p60, %p61
      %p63 = scmp.ne.s32.totalorder %s49, %s50
      %p64 = scmp.eq.s32.totalorder %s42, 3
      %p65 = por %p63, %p64
      %p67 = scmp.ne.s32.totalorder %s50, %s66
      %p68 = scmp.eq.s32.totalorder %s42, 0
      %p69 = por %p67, %p68
      %s70 = ssub.s32 %s36, %s43
      %p71 = scmp.eq.s32.totalorder %s70, 0
      %s73 = sadd.s32 %s72, 1
      %s74 = scalar_select %p71, %s72, %s73
      %p77 = pneg %p71
      %p78 = scmp.eq.s32.totalorder %s36, 3
      %p79 = por %p77, %p78
      %p80 = scmp.ne.s32.totalorder %s72, %s75
      %p81 = scmp.eq.s32.totalorder %s36, 0
      %p82 = por %p80, %p81
      %p83 = scmp.ne.s32.totalorder %s72, %s75
      %p84 = scmp.eq.s32.totalorder %s41, 3
      %p85 = por %p83, %p84
      %p86 = scmp.ne.s32.totalorder %s75, %s76
      %p87 = scmp.eq.s32.totalorder %s41, 0
      %p88 = por %p86, %p87
      %p89 = scmp.ne.s32.totalorder %s75, %s76
      %p90 = scmp.eq.s32.totalorder %s42, 3
      %p91 = por %p89, %p90
      %p93 = scmp.ne.s32.totalorder %s76, %s92
      %p94 = scmp.eq.s32.totalorder %s42, 0
      %p95 = por %p93, %p94
      %s97 = sadd.s32 %s96, 1
      %p100 = scmp.eq.s32.totalorder %s36, 3
      %p101 = scmp.ne.s32.totalorder %s96, %s98
      %p102 = scmp.eq.s32.totalorder %s36, 0
      %p103 = por %p101, %p102
      %p104 = scmp.ne.s32.totalorder %s96, %s98
      %p105 = scmp.eq.s32.totalorder %s41, 3
      %p106 = por %p104, %p105
      %p107 = scmp.ne.s32.totalorder %s98, %s99
      %p108 = scmp.eq.s32.totalorder %s41, 0
      %p109 = por %p107, %p108
      %p110 = scmp.ne.s32.totalorder %s98, %s99
      %p111 = scmp.eq.s32.totalorder %s42, 3
      %p112 = por %p110, %p111
      %p114 = scmp.ne.s32.totalorder %s99, %s113
      %p115 = scmp.eq.s32.totalorder %s42, 0
      %p116 = por %p114, %p115
      %s118 = sadd.s32 %s117, 1
      %p121 = scmp.eq.s32.totalorder %s36, 3
      %p122 = scmp.ne.s32.totalorder %s117, %s119
      %p123 = scmp.eq.s32.totalorder %s36, 0
      %p124 = por %p122, %p123
      %p125 = scmp.ne.s32.totalorder %s117, %s119
      %p126 = scmp.eq.s32.totalorder %s41, 3
      %p127 = por %p125, %p126
      %p128 = scmp.ne.s32.totalorder %s119, %s120
      %p129 = scmp.eq.s32.totalorder %s41, 0
      %p130 = por %p128, %p129
      %p131 = scmp.ne.s32.totalorder %s119, %s120
      %p132 = scmp.eq.s32.totalorder %s42, 3
      %p133 = por %p131, %p132
      %p135 = scmp.ne.s32.totalorder %s120, %s134
      %p136 = scmp.eq.s32.totalorder %s42, 0
      %p137 = por %p135, %p136
      %s139 = sadd.s32 %s138, 1
      %p142 = scmp.eq.s32.totalorder %s36, 3
      %p143 = scmp.ne.s32.totalorder %s138, %s140
      %p144 = scmp.eq.s32.totalorder %s36, 0
      %p145 = por %p143, %p144
      %p146 = scmp.ne.s32.totalorder %s138, %s140
      %p147 = scmp.eq.s32.totalorder %s41, 3
      %p148 = por %p146, %p147
      %p149 = scmp.ne.s32.totalorder %s140, %s141
      %p150 = scmp.eq.s32.totalorder %s41, 0
      %p151 = por %p149, %p150
      %p152 = scmp.ne.s32.totalorder %s140, %s141
      %p153 = scmp.eq.s32.totalorder %s42, 3
      %p154 = por %p152, %p153
      %p156 = scmp.ne.s32.totalorder %s141, %s155
      %p157 = scmp.eq.s32.totalorder %s42, 0
      %p158 = por %p156, %p157
      %s160 = sadd.s32 %s159, 1
      %p163 = scmp.eq.s32.totalorder %s36, 3
      %p164 = scmp.ne.s32.totalorder %s159, %s161
      %p165 = scmp.eq.s32.totalorder %s36, 0
      %p166 = por %p164, %p165
      %p167 = scmp.ne.s32.totalorder %s159, %s161
      %p168 = scmp.eq.s32.totalorder %s41, 3
      %p169 = por %p167, %p168
      %p170 = scmp.ne.s32.totalorder %s161, %s162
      %p171 = scmp.eq.s32.totalorder %s41, 0
      %p172 = por %p170, %p171
      %p173 = scmp.ne.s32.totalorder %s161, %s162
      %p174 = scmp.eq.s32.totalorder %s42, 3
      %p175 = por %p173, %p174
      %p177 = scmp.ne.s32.totalorder %s162, %s176
      %p178 = scmp.eq.s32.totalorder %s42, 0
      %p179 = por %p177, %p178
      %s181 = sadd.s32 %s180, 1
      %p184 = scmp.eq.s32.totalorder %s36, 3
      %p185 = scmp.ne.s32.totalorder %s180, %s182
      %p186 = scmp.eq.s32.totalorder %s36, 0
      %p187 = por %p185, %p186
      %p188 = scmp.ne.s32.totalorder %s180, %s182
      %p189 = scmp.eq.s32.totalorder %s41, 3
      %p190 = por %p188, %p189
      %p191 = scmp.ne.s32.totalorder %s182, %s183
      %p192 = scmp.eq.s32.totalorder %s41, 0
      %p193 = por %p191, %p192
      %p194 = scmp.ne.s32.totalorder %s182, %s183
      %p195 = scmp.eq.s32.totalorder %s42, 3
      %p196 = por %p194, %p195
      %p198 = scmp.ne.s32.totalorder %s183, %s197
      %p199 = scmp.eq.s32.totalorder %s42, 0
      %p200 = por %p198, %p199
      %s202 = sadd.s32 %s201, 1
      %p205 = scmp.eq.s32.totalorder %s36, 3
      %p206 = scmp.ne.s32.totalorder %s201, %s203
      %p207 = scmp.eq.s32.totalorder %s36, 0
      %p208 = por %p206, %p207
      %p209 = scmp.ne.s32.totalorder %s201, %s203
      %p210 = scmp.eq.s32.totalorder %s41, 3
      %p211 = por %p209, %p210
      %p212 = scmp.ne.s32.totalorder %s203, %s204
      %p213 = scmp.eq.s32.totalorder %s41, 0
      %p214 = por %p212, %p213
      %p215 = scmp.ne.s32.totalorder %s203, %s204
      %p216 = scmp.eq.s32.totalorder %s42, 3
      %p217 = por %p215, %p216
      %p219 = scmp.ne.s32.totalorder %s204, %s218
      %p220 = scmp.eq.s32.totalorder %s42, 0
      %p221 = por %p219, %p220
      %s223 = sadd.s32 %s222, 1
      %p226 = scmp.eq.s32.totalorder %s36, 3
      %p227 = scmp.ne.s32.totalorder %s222, %s224
      %p228 = scmp.eq.s32.totalorder %s36, 0
      %p229 = por %p227, %p228
      %p230 = scmp.ne.s32.totalorder %s222, %s224
      %p231 = scmp.eq.s32.totalorder %s41, 3
      %p232 = por %p230, %p231
      %p233 = scmp.ne.s32.totalorder %s224, %s225
      %p234 = scmp.eq.s32.totalorder %s41, 0
      %p235 = por %p233, %p234
      %p236 = scmp.ne.s32.totalorder %s224, %s225
      %p237 = scmp.eq.s32.totalorder %s42, 3
      %p238 = por %p236, %p237
      %p240 = scmp.ne.s32.totalorder %s225, %s239
      %p241 = scmp.eq.s32.totalorder %s42, 0
      %p242 = por %p240, %p241
      %s244 = sadd.s32 %s243, 1
      %p247 = scmp.eq.s32.totalorder %s36, 3
      %p248 = scmp.ne.s32.totalorder %s243, %s245
      %p249 = scmp.eq.s32.totalorder %s36, 0
      %p250 = por %p248, %p249
      %p251 = scmp.ne.s32.totalorder %s243, %s245
      %p252 = scmp.eq.s32.totalorder %s41, 3
      %p253 = por %p251, %p252
      %p254 = scmp.ne.s32.totalorder %s245, %s246
      %p255 = scmp.eq.s32.totalorder %s41, 0
      %p256 = por %p254, %p255
      %p257 = scmp.ne.s32.totalorder %s245, %s246
      %p258 = scmp.eq.s32.totalorder %s42, 3
      %p259 = por %p257, %p258
      %p261 = scmp.ne.s32.totalorder %s246, %s260
      %p262 = scmp.eq.s32.totalorder %s42, 0
      %p263 = por %p261, %p262
      %s265 = sadd.s32 %s264, 1
      %p268 = scmp.eq.s32.totalorder %s36, 3
      %p269 = scmp.ne.s32.totalorder %s264, %s266
      %p270 = scmp.eq.s32.totalorder %s36, 0
      %p271 = por %p269, %p270
      %p272 = scmp.ne.s32.totalorder %s264, %s266
      %p273 = scmp.eq.s32.totalorder %s41, 3
      %p274 = por %p272, %p273
      %p275 = scmp.ne.s32.totalorder %s266, %s267
      %p276 = scmp.eq.s32.totalorder %s41, 0
      %p277 = por %p275, %p276
      %p278 = scmp.ne.s32.totalorder %s266, %s267
      %p279 = scmp.eq.s32.totalorder %s42, 3
      %p280 = por %p278, %p279
      %p282 = scmp.ne.s32.totalorder %s267, %s281
      %p283 = scmp.eq.s32.totalorder %s42, 0
      %p284 = por %p282, %p283
      %s286 = sadd.s32 %s285, 1
      %p289 = scmp.eq.s32.totalorder %s36, 3
      %p290 = scmp.ne.s32.totalorder %s285, %s287
      %p291 = scmp.eq.s32.totalorder %s36, 0
      %p292 = por %p290, %p291
      %p293 = scmp.ne.s32.totalorder %s285, %s287
      %p294 = scmp.eq.s32.totalorder %s41, 3
      %p295 = por %p293, %p294
      %p296 = scmp.ne.s32.totalorder %s287, %s288
      %p297 = scmp.eq.s32.totalorder %s41, 0
      %p298 = por %p296, %p297
      %p299 = scmp.ne.s32.totalorder %s287, %s288
      %p300 = scmp.eq.s32.totalorder %s42, 3
      %p301 = por %p299, %p300
      %p303 = scmp.ne.s32.totalorder %s288, %s302
      %p304 = scmp.eq.s32.totalorder %s42, 0
      %p305 = por %p303, %p304
      %s307 = sadd.s32 %s306, 1
      %p310 = scmp.eq.s32.totalorder %s36, 3
      %p311 = scmp.ne.s32.totalorder %s306, %s308
      %p312 = scmp.eq.s32.totalorder %s36, 0
      %p313 = por %p311, %p312
      %p314 = scmp.ne.s32.totalorder %s306, %s308
      %p315 = scmp.eq.s32.totalorder %s41, 3
      %p316 = por %p314, %p315
      %p317 = scmp.ne.s32.totalorder %s308, %s309
      %p318 = scmp.eq.s32.totalorder %s41, 0
      %p319 = por %p317, %p318
      %p320 = scmp.ne.s32.totalorder %s308, %s309
      %p321 = scmp.eq.s32.totalorder %s42, 3
      %p322 = por %p320, %p321
      %p324 = scmp.ne.s32.totalorder %s309, %s323
      %p325 = scmp.eq.s32.totalorder %s42, 0
      %p326 = por %p324, %p325
      %s328 = sadd.s32 %s327, 1
      %p331 = scmp.eq.s32.totalorder %s36, 3
      %p332 = scmp.ne.s32.totalorder %s327, %s329
      %p333 = scmp.eq.s32.totalorder %s36, 0
      %p334 = por %p332, %p333
      %p335 = scmp.ne.s32.totalorder %s327, %s329
      %p336 = scmp.eq.s32.totalorder %s41, 3
      %p337 = por %p335, %p336
      %p338 = scmp.ne.s32.totalorder %s329, %s330
      %p339 = scmp.eq.s32.totalorder %s41, 0
      %p340 = por %p338, %p339
      %p341 = scmp.ne.s32.totalorder %s329, %s330
      %p342 = scmp.eq.s32.totalorder %s42, 3
      %p343 = por %p341, %p342
      %p345 = scmp.ne.s32.totalorder %s330, %s344
      %p346 = scmp.eq.s32.totalorder %s42, 0
      %p347 = por %p345, %p346
      %s349 = sadd.s32 %s348, 1
      %p352 = scmp.eq.s32.totalorder %s36, 3
      %p353 = scmp.ne.s32.totalorder %s348, %s350
      %p354 = scmp.eq.s32.totalorder %s36, 0
      %p355 = por %p353, %p354
      %p356 = scmp.ne.s32.totalorder %s348, %s350
      %p357 = scmp.eq.s32.totalorder %s41, 3
      %p358 = por %p356, %p357
      %p359 = scmp.ne.s32.totalorder %s350, %s351
      %p360 = scmp.eq.s32.totalorder %s41, 0
      %p361 = por %p359, %p360
      %p362 = scmp.ne.s32.totalorder %s350, %s351
      %p363 = scmp.eq.s32.totalorder %s42, 3
      %p364 = por %p362, %p363
      %p366 = scmp.ne.s32.totalorder %s351, %s365
      %p367 = scmp.eq.s32.totalorder %s42, 0
      %p368 = por %p366, %p367
      %s370 = sadd.s32 %s369, 1
      %p373 = scmp.eq.s32.totalorder %s36, 3
      %p374 = scmp.ne.s32.totalorder %s369, %s371
      %p375 = scmp.eq.s32.totalorder %s36, 0
      %p376 = por %p374, %p375
      %p377 = scmp.ne.s32.totalorder %s369, %s371
      %p378 = scmp.eq.s32.totalorder %s41, 3
      %p379 = por %p377, %p378
      %p380 = scmp.ne.s32.totalorder %s371, %s372
      %p381 = scmp.eq.s32.totalorder %s41, 0
      %p382 = por %p380, %p381
      %p383 = scmp.ne.s32.totalorder %s371, %s372
      %p384 = scmp.eq.s32.totalorder %s42, 3
      %p385 = por %p383, %p384
      %p387 = scmp.ne.s32.totalorder %s372, %s386
      %p388 = scmp.eq.s32.totalorder %s42, 0
      %p389 = por %p387, %p388
      %s391 = sadd.s32 %s390, 1
      %p394 = scmp.eq.s32.totalorder %s36, 3
      %p395 = scmp.ne.s32.totalorder %s390, %s392
      %p396 = scmp.eq.s32.totalorder %s36, 0
      %p397 = por %p395, %p396
      %p398 = scmp.ne.s32.totalorder %s390, %s392
      %p399 = scmp.eq.s32.totalorder %s41, 3
      %p400 = por %p398, %p399
      %p401 = scmp.ne.s32.totalorder %s392, %s393
      %p402 = scmp.eq.s32.totalorder %s41, 0
      %p403 = por %p401, %p402
      %p404 = scmp.ne.s32.totalorder %s392, %s393
      %p405 = scmp.eq.s32.totalorder %s42, 3
      %p406 = por %p404, %p405
      %p408 = scmp.ne.s32.totalorder %s393, %s407
      %p409 = scmp.eq.s32.totalorder %s42, 0
      %p410 = por %p408, %p409
      %s412 = sadd.s32 %s411, 1
      %p415 = scmp.eq.s32.totalorder %s36, 3
      %p416 = scmp.ne.s32.totalorder %s411, %s413
      %p417 = scmp.eq.s32.totalorder %s36, 0
      %p418 = por %p416, %p417
      %p419 = scmp.ne.s32.totalorder %s411, %s413
      %p420 = scmp.eq.s32.totalorder %s41, 3
      %p421 = por %p419, %p420
      %p422 = scmp.ne.s32.totalorder %s413, %s414
      %p423 = scmp.eq.s32.totalorder %s41, 0
      %p424 = por %p422, %p423
      %p425 = scmp.ne.s32.totalorder %s413, %s414
      %p426 = scmp.eq.s32.totalorder %s42, 3
      %p427 = por %p425, %p426
      %p429 = scmp.ne.s32.totalorder %s414, %s428
      %p430 = scmp.eq.s32.totalorder %s42, 0
      %p431 = por %p429, %p430
      %s433 = sadd.s32 %s432, 1
      %p436 = scmp.eq.s32.totalorder %s36, 3
      %p437 = scmp.ne.s32.totalorder %s432, %s434
      %p438 = scmp.eq.s32.totalorder %s36, 0
      %p439 = por %p437, %p438
      %p440 = scmp.ne.s32.totalorder %s432, %s434
      %p441 = scmp.eq.s32.totalorder %s41, 3
      %p442 = por %p440, %p441
      %p443 = scmp.ne.s32.totalorder %s434, %s435
      %p444 = scmp.eq.s32.totalorder %s41, 0
      %p445 = por %p443, %p444
      %p446 = scmp.ne.s32.totalorder %s434, %s435
      %p447 = scmp.eq.s32.totalorder %s42, 3
      %p448 = por %p446, %p447
      %p450 = scmp.ne.s32.totalorder %s435, %s449
      %p451 = scmp.eq.s32.totalorder %s42, 0
      %p452 = por %p450, %p451
      %s454 = sadd.s32 %s453, 1
      %p457 = scmp.eq.s32.totalorder %s36, 3
      %p458 = scmp.ne.s32.totalorder %s453, %s455
      %p459 = scmp.eq.s32.totalorder %s36, 0
      %p460 = por %p458, %p459
      %p461 = scmp.ne.s32.totalorder %s453, %s455
      %p462 = scmp.eq.s32.totalorder %s41, 3
      %p463 = por %p461, %p462
      %p464 = scmp.ne.s32.totalorder %s455, %s456
      %p465 = scmp.eq.s32.totalorder %s41, 0
      %p466 = por %p464, %p465
      %p467 = scmp.ne.s32.totalorder %s455, %s456
      %p468 = scmp.eq.s32.totalorder %s42, 3
      %p469 = por %p467, %p468
      %p471 = scmp.ne.s32.totalorder %s456, %s470
      %p472 = scmp.eq.s32.totalorder %s42, 0
      %p473 = por %p471, %p472
      %s475 = sadd.s32 %s474, 1
      %p478 = scmp.eq.s32.totalorder %s36, 3
      %p479 = scmp.ne.s32.totalorder %s474, %s476
      %p480 = scmp.eq.s32.totalorder %s36, 0
      %p481 = por %p479, %p480
      %p482 = scmp.ne.s32.totalorder %s474, %s476
      %p483 = scmp.eq.s32.totalorder %s41, 3
      %p484 = por %p482, %p483
      %p485 = scmp.ne.s32.totalorder %s476, %s477
      %p486 = scmp.eq.s32.totalorder %s41, 0
      %p487 = por %p485, %p486
      %p488 = scmp.ne.s32.totalorder %s476, %s477
      %p489 = scmp.eq.s32.totalorder %s42, 3
      %p490 = por %p488, %p489
      %p492 = scmp.ne.s32.totalorder %s477, %s491
      %p493 = scmp.eq.s32.totalorder %s42, 0
      %p494 = por %p492, %p493
      %s496 = sadd.s32 %s495, 1
      %p499 = scmp.eq.s32.totalorder %s36, 3
      %p500 = scmp.ne.s32.totalorder %s495, %s497
      %p501 = scmp.eq.s32.totalorder %s36, 0
      %p502 = por %p500, %p501
      %p503 = scmp.ne.s32.totalorder %s495, %s497
      %p504 = scmp.eq.s32.totalorder %s41, 3
      %p505 = por %p503, %p504
      %p506 = scmp.ne.s32.totalorder %s497, %s498
      %p507 = scmp.eq.s32.totalorder %s41, 0
      %p508 = por %p506, %p507
      %p509 = scmp.ne.s32.totalorder %s497, %s498
      %p510 = scmp.eq.s32.totalorder %s42, 3
      %p511 = por %p509, %p510
      %p513 = scmp.ne.s32.totalorder %s498, %s512
      %p514 = scmp.eq.s32.totalorder %s42, 0
      %p515 = por %p513, %p514
      %s517 = sadd.s32 %s516, 1
      %p520 = scmp.eq.s32.totalorder %s36, 3
      %p521 = scmp.ne.s32.totalorder %s516, %s518
      %p522 = scmp.eq.s32.totalorder %s36, 0
      %p523 = por %p521, %p522
      %p524 = scmp.ne.s32.totalorder %s516, %s518
      %p525 = scmp.eq.s32.totalorder %s41, 3
      %p526 = por %p524, %p525
      %p527 = scmp.ne.s32.totalorder %s518, %s519
      %p528 = scmp.eq.s32.totalorder %s41, 0
      %p529 = por %p527, %p528
      %p530 = scmp.ne.s32.totalorder %s518, %s519
      %p531 = scmp.eq.s32.totalorder %s42, 3
      %p532 = por %p530, %p531
      %p534 = scmp.ne.s32.totalorder %s519, %s533
      %p535 = scmp.eq.s32.totalorder %s42, 0
      %p536 = por %p534, %p535
      %s538 = sadd.s32 %s537, 1
      %p541 = scmp.eq.s32.totalorder %s36, 3
      %p542 = scmp.ne.s32.totalorder %s537, %s539
      %p543 = scmp.eq.s32.totalorder %s36, 0
      %p544 = por %p542, %p543
      %p545 = scmp.ne.s32.totalorder %s537, %s539
      %p546 = scmp.eq.s32.totalorder %s41, 3
      %p547 = por %p545, %p546
      %p548 = scmp.ne.s32.totalorder %s539, %s540
      %p549 = scmp.eq.s32.totalorder %s41, 0
      %p550 = por %p548, %p549
      %p551 = scmp.ne.s32.totalorder %s539, %s540
      %p552 = scmp.eq.s32.totalorder %s42, 3
      %p553 = por %p551, %p552
      %p555 = scmp.ne.s32.totalorder %s540, %s554
      %p556 = scmp.eq.s32.totalorder %s42, 0
      %p557 = por %p555, %p556
      %s558 = ssub.s32 %s36, %s43
      %p559 = scmp.eq.s32.totalorder %s558, 0
      %s561 = sadd.s32 %s560, 1
      %s562 = scalar_select %p559, %s560, %s561
      %p565 = pneg %p559
      %p566 = scmp.eq.s32.totalorder %s36, 3
      %p567 = por %p565, %p566
      %p568 = scmp.ne.s32.totalorder %s560, %s563
      %p569 = scmp.eq.s32.totalorder %s36, 0
      %p570 = por %p568, %p569
      %p571 = scmp.ne.s32.totalorder %s560, %s563
      %p572 = scmp.eq.s32.totalorder %s41, 3
      %p573 = por %p571, %p572
      %p574 = scmp.ne.s32.totalorder %s563, %s564
      %p575 = scmp.eq.s32.totalorder %s41, 0
      %p576 = por %p574, %p575
      %p577 = scmp.ne.s32.totalorder %s563, %s564
      %p578 = scmp.eq.s32.totalorder %s42, 3
      %p579 = por %p577, %p578
      %p581 = scmp.ne.s32.totalorder %s564, %s580
      %p582 = scmp.eq.s32.totalorder %s42, 0
      %p583 = por %p581, %p582
      %p584 = scmp.le.s32.totalorder 1, %s36
      %p585 = scmp.lt.s32.totalorder %s36, 5
      %p586 = pnand %p584, %p585
      %p587 = pneg %p586
      // Predicated region
      $region9: #{model_forward.1} parent=5 // pred_check
        _
      $region10: #{model_forward.1} parent=5 // pred_check_branch
        %589 = sbr.rel (%p586) target = $region12
      $region11: #{model_forward.1} parent=5 // pred_region
        %s590 = ssub.s32 %s36, 1
        // Predicated region
        $region13: #{model_forward.1} parent=11 // pred_check
          %p591 = pneg %p109
        $region14: #{model_forward.1} parent=11 // pred_check_branch
          %593 = sbr.rel (%p591) target = $region16
        $region15: #{model_forward.1} parent=11 // pred_region
          %s595 = ssub.s32 1024, 1024
          %596 = vsyncadd [#allocation4], %s595
          %s597 = sshll.u32 [#allocation3], 4
          %s598 = int_to_ptr.vmem [resolvable:$true] %s597
          %603 = dma.hbm_to_vmem [thread:$0]  %s2, 1024, %s598, [#allocation4], 512, 512, 32
        $region16: #{model_forward.1} parent=11 // pred_fallthru
          _
        // Predicated region
        $region17: #{model_forward.1} parent=11 // pred_check
          %p604 = pneg %p130
        $region18: #{model_forward.1} parent=11 // pred_check_branch
          %606 = sbr.rel (%p604) target = $region20
        $region19: #{model_forward.1} parent=11 // pred_region
          _
        $region20: #{model_forward.1} parent=11 // pred_fallthru
          _
        // Predicated region
        $region21: #{model_forward.1} parent=11 // pred_check
          %p607 = pneg %p151
        $region22: #{model_forward.1} parent=11 // pred_check_branch
          %609 = sbr.rel (%p607) target = $region24
        $region23: #{model_forward.1} parent=11 // pred_region
          _
        $region24: #{model_forward.1} parent=11 // pred_fallthru
          _
        // Predicated region
        $region25: #{model_forward.1} parent=11 // pred_check
          %p610 = pneg %p172
        $region26: #{model_forward.1} parent=11 // pred_check_branch
          %612 = sbr.rel (%p610) target = $region28
        $region27: #{model_forward.1} parent=11 // pred_region
          _
        $region28: #{model_forward.1} parent=11 // pred_fallthru
          _
        // Predicated region
        $region29: #{model_forward.1} parent=11 // pred_check
          %p613 = pneg %p193
        $region30: #{model_forward.1} parent=11 // pred_check_branch
          %615 = sbr.rel (%p613) target = $region32
        $region31: #{model_forward.1} parent=11 // pred_region
          %s617 = ssub.s32 8192, 8192
          %618 = vsyncadd [#allocation6], %s617
          %s619 = sshll.u32 [#allocation5], 4
          %s620 = int_to_ptr.vmem [resolvable:$true] %s619
          %625 = dma.hbm_to_vmem [thread:$0]  %s6, 8192, %s620, [#allocation6], 64, 64, 4
        $region32: #{model_forward.1} parent=11 // pred_fallthru
          _
        // Predicated region
        $region33: #{model_forward.1} parent=11 // pred_check
          %p626 = pneg %p214
        $region34: #{model_forward.1} parent=11 // pred_check_branch
          %628 = sbr.rel (%p626) target = $region36
        $region35: #{model_forward.1} parent=11 // pred_region
          _
        $region36: #{model_forward.1} parent=11 // pred_fallthru
          _
        // Predicated region
        $region37: #{model_forward.1} parent=11 // pred_check
          %p629 = pneg %p235
        $region38: #{model_forward.1} parent=11 // pred_check_branch
          %631 = sbr.rel (%p629) target = $region40
        $region39: #{model_forward.1} parent=11 // pred_region
          _
        $region40: #{model_forward.1} parent=11 // pred_fallthru
          _
        // Predicated region
        $region41: #{model_forward.1} parent=11 // pred_check
          %p632 = pneg %p256
        $region42: #{model_forward.1} parent=11 // pred_check_branch
          %634 = sbr.rel (%p632) target = $region44
        $region43: #{model_forward.1} parent=11 // pred_region
          _
        $region44: #{model_forward.1} parent=11 // pred_fallthru
          _
        // Predicated region
        $region45: #{model_forward.1} parent=11 // pred_check
          %p635 = pneg %p277
        $region46: #{model_forward.1} parent=11 // pred_check_branch
          %637 = sbr.rel (%p635) target = $region48
        $region47: #{model_forward.1} parent=11 // pred_region
          %s639 = ssub.s32 512, 512
          %640 = vsyncadd [#allocation6], %s639
          %s642 = sshll.u32 [#allocation7], 4
          %s643 = int_to_ptr.vmem [resolvable:$true] %s642
          %645 = dma.hbm_to_vmem [thread:$0]  %s10, 512, %s643, [#allocation6]
        $region48: #{model_forward.1} parent=11 // pred_fallthru
          _
        // Predicated region
        $region49: #{model_forward.1} parent=11 // pred_check
          %p646 = pneg %p298
        $region50: #{model_forward.1} parent=11 // pred_check_branch
          %648 = sbr.rel (%p646) target = $region52
        $region51: #{model_forward.1} parent=11 // pred_region
          _
        $region52: #{model_forward.1} parent=11 // pred_fallthru
          _
        // Predicated region
        $region53: #{model_forward.1} parent=11 // pred_check
          %p649 = pneg %p319
        $region54: #{model_forward.1} parent=11 // pred_check_branch
          %651 = sbr.rel (%p649) target = $region56
        $region55: #{model_forward.1} parent=11 // pred_region
          %s653 = ssub.s32 32768, 32768
          %654 = vsyncadd [#allocation9], %s653
          %s655 = sshll.u32 [#allocation8], 4
          %s656 = int_to_ptr.vmem [resolvable:$true] %s655
          %661 = dma.hbm_to_vmem [thread:$0]  %s12, 32768, %s656, [#allocation9], 256, 256, 16
        $region56: #{model_forward.1} parent=11 // pred_fallthru
          _
        // Predicated region
        $region57: #{model_forward.1} parent=11 // pred_check
          %p662 = pneg %p340
        $region58: #{model_forward.1} parent=11 // pred_check_branch
          %664 = sbr.rel (%p662) target = $region60
        $region59: #{model_forward.1} parent=11 // pred_region
          _
        $region60: #{model_forward.1} parent=11 // pred_fallthru
          _
        // Predicated region
        $region61: #{model_forward.1} parent=11 // pred_check
          %p665 = pneg %p361
        $region62: #{model_forward.1} parent=11 // pred_check_branch
          %667 = sbr.rel (%p665) target = $region64
        $region63: #{model_forward.1} parent=11 // pred_region
          %s669 = ssub.s32 8192, 8192
          %670 = vsyncadd [#allocation9], %s669
          %s671 = sshll.u32 [#allocation10], 4
          %s672 = int_to_ptr.vmem [resolvable:$true] %s671
          %677 = dma.hbm_to_vmem [thread:$0]  %s14, 8192, %s672, [#allocation9], 64, 64, 4
        $region64: #{model_forward.1} parent=11 // pred_fallthru
          _
        // Predicated region
        $region65: #{model_forward.1} parent=11 // pred_check
          %p678 = pneg %p382
        $region66: #{model_forward.1} parent=11 // pred_check_branch
          %680 = sbr.rel (%p678) target = $region68
        $region67: #{model_forward.1} parent=11 // pred_region
          _
        $region68: #{model_forward.1} parent=11 // pred_fallthru
          _
        // Predicated region
        $region69: #{model_forward.1} parent=11 // pred_check
          %p681 = pneg %p403
        $region70: #{model_forward.1} parent=11 // pred_check_branch
          %683 = sbr.rel (%p681) target = $region72
        $region71: #{model_forward.1} parent=11 // pred_region
          _
        $region72: #{model_forward.1} parent=11 // pred_fallthru
          _
        // Predicated region
        $region73: #{model_forward.1} parent=11 // pred_check
          %p684 = pneg %p424
        $region74: #{model_forward.1} parent=11 // pred_check_branch
          %686 = sbr.rel (%p684) target = $region76
        $region75: #{model_forward.1} parent=11 // pred_region
          _
        $region76: #{model_forward.1} parent=11 // pred_fallthru
          _
        // Predicated region
        $region77: #{model_forward.1} parent=11 // pred_check
          %p687 = pneg %p445
        $region78: #{model_forward.1} parent=11 // pred_check_branch
          %689 = sbr.rel (%p687) target = $region80
        $region79: #{model_forward.1} parent=11 // pred_region
          %s691 = ssub.s32 12288, 12288
          %692 = vsyncadd [#allocation12], %s691
          %s693 = sshll.u32 [#allocation11], 4
          %s694 = int_to_ptr.vmem [resolvable:$true] %s693
          %699 = dma.hbm_to_vmem [thread:$0]  %s18, 12288, %s694, [#allocation12], 512, 512, 32
        $region80: #{model_forward.1} parent=11 // pred_fallthru
          _
        // Predicated region
        $region81: #{model_forward.1} parent=11 // pred_check
          %p700 = pneg %p466
        $region82: #{model_forward.1} parent=11 // pred_check_branch
          %702 = sbr.rel (%p700) target = $region84
        $region83: #{model_forward.1} parent=11 // pred_region
          _
        $region84: #{model_forward.1} parent=11 // pred_fallthru
          _
        // Predicated region
        $region85: #{model_forward.1} parent=11 // pred_check
          %p703 = pneg %p487
        $region86: #{model_forward.1} parent=11 // pred_check_branch
          %705 = sbr.rel (%p703) target = $region88
        $region87: #{model_forward.1} parent=11 // pred_region
          %s707 = ssub.s32 32768, 32768
          %708 = vsyncadd [#allocation12], %s707
          %s709 = sshll.u32 [#allocation13], 4
          %s710 = int_to_ptr.vmem [resolvable:$true] %s709
          %715 = dma.hbm_to_vmem [thread:$0]  %s20, 32768, %s710, [#allocation12], 256, 256, 16
        $region88: #{model_forward.1} parent=11 // pred_fallthru
          _
        // Predicated region
        $region89: #{model_forward.1} parent=11 // pred_check
          %p716 = pneg %p508
        $region90: #{model_forward.1} parent=11 // pred_check_branch
          %718 = sbr.rel (%p716) target = $region92
        $region91: #{model_forward.1} parent=11 // pred_region
          _
        $region92: #{model_forward.1} parent=11 // pred_fallthru
          _
        // Predicated region
        $region93: #{model_forward.1} parent=11 // pred_check
          %p719 = pneg %p529
        $region94: #{model_forward.1} parent=11 // pred_check_branch
          %721 = sbr.rel (%p719) target = $region96
        $region95: #{model_forward.1} parent=11 // pred_region
          _
        $region96: #{model_forward.1} parent=11 // pred_fallthru
          _
        // Predicated region
        $region97: #{model_forward.1} parent=11 // pred_check
          %p722 = pneg %p550
        $region98: #{model_forward.1} parent=11 // pred_check_branch
          %724 = sbr.rel (%p722) target = $region100
        $region99: #{model_forward.1} parent=11 // pred_region
          _
        $region100: #{model_forward.1} parent=11 // pred_fallthru
          _
      $region12: #{model_forward.1} parent=5 // pred_fallthru
        _
      %p725 = scmp.lt.s32.totalorder %s36, 4
      // Predicated region
      $region101: #{model_forward.1} parent=5 // pred_check
        %p726 = pneg %p725
      $region102: #{model_forward.1} parent=5 // pred_check_branch
        %728 = sbr.rel (%p726) target = $region104
      $region103: #{model_forward.1} parent=5 // pred_region
        // Predicated region
        $region105: #{model_forward.1} parent=103 // pred_check
          %p729 = pneg %p56
        $region106: #{model_forward.1} parent=103 // pred_check_branch
          %731 = sbr.rel (%p729) target = $region108
        $region107: #{model_forward.1} parent=103 // pred_region
          %s732 = smul.u32 8, %s36
          %p733 = scmp.lt.s32.totalorder %s732, 31
          %s734 = scalar_select %p733, %s732, 31
          %s735 = smul.addr %s734, 8
          %s736 = scalar_lea.vmem %s0, %s735
          %s737 = smul.u32 8, %s36
        $region108: #{model_forward.1} parent=103 // pred_fallthru
          _
        // Predicated region
        $region109: #{model_forward.1} parent=103 // pred_check
          %p738 = pneg %p82
        $region110: #{model_forward.1} parent=103 // pred_check_branch
          %740 = sbr.rel (%p738) target = $region112
        $region111: #{model_forward.1} parent=103 // pred_region
          %s741 = smul.u32 2, %s36
          %p742 = scmp.lt.s32.totalorder %s741, 7
          %s743 = scalar_select %p742, %s741, 7
          %s744 = smul.addr %s743, 8
          %s745 = scalar_lea.vmem %s1, %s744
          %s746 = smul.u32 2, %s36
        $region112: #{model_forward.1} parent=103 // pred_fallthru
          _
      $region104: #{model_forward.1} parent=5 // pred_fallthru
        _
      %p747 = scmp.le.s32.totalorder 1, %s36
      %p748 = scmp.lt.s32.totalorder %s36, 5
      %p749 = pnand %p747, %p748
      %p750 = pneg %p749
      // Predicated region
      $region113: #{model_forward.1} parent=5 // pred_check
        _
      $region114: #{model_forward.1} parent=5 // pred_check_branch
        %752 = sbr.rel (%p749) target = $region116
      $region115: #{model_forward.1} parent=5 // pred_region
        %s753 = ssub.s32 %s36, 1
        // Predicated region
        $region117: #{model_forward.1} parent=115 // pred_check
          %p754 = pneg %p109
        $region118: #{model_forward.1} parent=115 // pred_check_branch
          %756 = sbr.rel (%p754) target = $region120
        $region119: #{model_forward.1} parent=115 // pred_region
          %757 = dma.done [#allocation4], 1024
        $region120: #{model_forward.1} parent=115 // pred_fallthru
          _
        // Predicated region
        $region121: #{model_forward.1} parent=115 // pred_check
          %p758 = pneg %p193
        $region122: #{model_forward.1} parent=115 // pred_check_branch
          %760 = sbr.rel (%p758) target = $region124
        $region123: #{model_forward.1} parent=115 // pred_region
          %761 = dma.done [#allocation6], 8192
        $region124: #{model_forward.1} parent=115 // pred_fallthru
          _
        // Predicated region
        $region125: #{model_forward.1} parent=115 // pred_check
          %p762 = pneg %p277
        $region126: #{model_forward.1} parent=115 // pred_check_branch
          %764 = sbr.rel (%p762) target = $region128
        $region127: #{model_forward.1} parent=115 // pred_region
          %765 = dma.done [#allocation6], 512
        $region128: #{model_forward.1} parent=115 // pred_fallthru
          _
        // Predicated region
        $region129: #{model_forward.1} parent=115 // pred_check
          %p766 = pneg %p319
        $region130: #{model_forward.1} parent=115 // pred_check_branch
          %768 = sbr.rel (%p766) target = $region132
        $region131: #{model_forward.1} parent=115 // pred_region
          %769 = dma.done [#allocation9], 32768
        $region132: #{model_forward.1} parent=115 // pred_fallthru
          _
        // Predicated region
        $region133: #{model_forward.1} parent=115 // pred_check
          %p770 = pneg %p361
        $region134: #{model_forward.1} parent=115 // pred_check_branch
          %772 = sbr.rel (%p770) target = $region136
        $region135: #{model_forward.1} parent=115 // pred_region
          %773 = dma.done [#allocation9], 8192
        $region136: #{model_forward.1} parent=115 // pred_fallthru
          _
        // Predicated region
        $region137: #{model_forward.1} parent=115 // pred_check
          %p774 = pneg %p445
        $region138: #{model_forward.1} parent=115 // pred_check_branch
          %776 = sbr.rel (%p774) target = $region140
        $region139: #{model_forward.1} parent=115 // pred_region
          %777 = dma.done [#allocation12], 12288
        $region140: #{model_forward.1} parent=115 // pred_fallthru
          _
        // Predicated region
        $region141: #{model_forward.1} parent=115 // pred_check
          %p778 = pneg %p487
        $region142: #{model_forward.1} parent=115 // pred_check_branch
          %780 = sbr.rel (%p778) target = $region144
        $region143: #{model_forward.1} parent=115 // pred_region
          %781 = dma.done [#allocation12], 32768
        $region144: #{model_forward.1} parent=115 // pred_fallthru
          _
        %s782 = smul.u32 8, %s41
        %p783 = scmp.lt.s32.totalorder %s782, 31
        %s784 = scalar_select %p783, %s782, 31
        %s785 = smul.addr %s784, 8
        %s786 = scalar_lea.vmem %s0, %s785
        %p787 = pneg %p62
        %p788 = pneg %p59
        %s789 = smul.u32 2, %s41
        %p790 = scmp.lt.s32.totalorder %s789, 7
        %s791 = scalar_select %p790, %s789, 7
        %s792 = smul.addr %s791, 8
        %s793 = scalar_lea.vmem %s1, %s792
        %p794 = pneg %p88
        %p795 = pneg %p85
        %p796 = pneg %p109
        %p797 = pneg %p106
        %p798 = pneg %p130
        %p799 = pneg %p127
        %p800 = pneg %p151
        %p801 = pneg %p148
        %p802 = pneg %p172
        %p803 = pneg %p169
        %p804 = pneg %p193
        %p805 = pneg %p190
        %p806 = pneg %p214
        %p807 = pneg %p211
        %p808 = pneg %p235
        %p809 = pneg %p232
        %p810 = pneg %p256
        %p811 = pneg %p253
        %p812 = pneg %p277
        %p813 = pneg %p274
        %p814 = pneg %p298
        %p815 = pneg %p295
        %p816 = pneg %p319
        %p817 = pneg %p316
        %p818 = pneg %p340
        %p819 = pneg %p337
        %p820 = pneg %p361
        %p821 = pneg %p358
        %p822 = pneg %p382
        %p823 = pneg %p379
        %p824 = pneg %p403
        %p825 = pneg %p400
        %p826 = pneg %p424
        %p827 = pneg %p421
        %p828 = pneg %p445
        %p829 = pneg %p442
        %p830 = pneg %p466
        %p831 = pneg %p463
        %p832 = pneg %p487
        %p833 = pneg %p484
        %p834 = pneg %p508
        %p835 = pneg %p505
        %p836 = pneg %p529
        %p837 = pneg %p526
        %p838 = pneg %p550
        %p839 = pneg %p547
        %p840 = pneg %p576
        %p841 = pneg %p573
        %p842 = scmp.lt.s32.totalorder %s41, 3
        %s843 = scalar_select %p842, %s41, 3
        %s844 = smul.addr %s843, 8
        %s845 = scalar_lea.vmem %s24, %s844
        %s846 = smul.u32 8, %s41
        %p847 = scmp.lt.s32.totalorder %s846, 31
        %s848 = scalar_select %p847, %s846, 31
        %s849 = smul.addr %s848, 8
        %s850 = scalar_lea.vmem %s0, %s849
        %s851 = smul.u32 8, %s41
        %s852 = smul.u32 2, %s41
        %p853 = scmp.lt.s32.totalorder %s852, 7
        %s854 = scalar_select %p853, %s852, 7
        %s855 = smul.addr %s854, 8
        %s856 = scalar_lea.vmem %s1, %s855
        %s857 = smul.u32 2, %s41
        %p858 = scmp.lt.s32.totalorder %s41, 3
        %s859 = scalar_select %p858, %s41, 3
        %s860 = smul.addr %s859, 8
        %s861 = scalar_lea.vmem %s24, %s860
        %v863 = vld [vmem:[%s850] sm:$0xff]
        %v864 = vld [vmem:[%s850 + $0x8] sm:$0xff]
        %v865 = vld [vmem:[%s850 + $0x10] sm:$0xff]
        %v866 = vld [vmem:[%s850 + $0x18] sm:$0xff]
        %v867 = vld [vmem:[%s850 + $0x20] sm:$0xff]
        %v868 = vld [vmem:[%s850 + $0x28] sm:$0xff]
        %v869 = vld [vmem:[%s850 + $0x30] sm:$0xff]
        %v870 = vld [vmem:[%s850 + $0x38] sm:$0xff]
        %v871 = vpack.c.bf16 %v864, %v863
        %v872 = vpack.c.bf16 %v866, %v865
        %v873 = vpack.c.bf16 %v868, %v867
        %v874 = vpack.c.bf16 %v870, %v869
        %v875 = vld [vmem:[#allocation3] sm:$0xff]
        %v876 = vld [vmem:[#allocation3 + $0x8] sm:$0xff]
        %v877 = vld [vmem:[#allocation3 + $0x10] sm:$0xff]
        %v878 = vld [vmem:[#allocation3 + $0x18] sm:$0xff]
        %s879 = scalar_lea.vmem [#allocation3], 32
        %v880 = vld [vmem:[%s879] sm:$0xff]
        %v881 = vld [vmem:[%s879 + $0x8] sm:$0xff]
        %v882 = vld [vmem:[%s879 + $0x10] sm:$0xff]
        %v883 = vld [vmem:[%s879 + $0x18] sm:$0xff]
        %v888 = vunpack.c.l.b16 %v880
        %v889 = vunpack.c.h.b16 %v880
        %v890 = vunpack.c.l.b16 %v881
        %v891 = vunpack.c.h.b16 %v881
        %v892 = vunpack.c.l.b16 %v882
        %v893 = vunpack.c.h.b16 %v882
        %v894 = vunpack.c.l.b16 %v883
        %v895 = vunpack.c.h.b16 %v883
        %v896 = vpack.c.b16 %v888, %v888
        %v897 = vpack.c.b16 %v889, %v889
        %v898 = vpack.c.b16 %v890, %v890
        %v899 = vpack.c.b16 %v891, %v891
        %v900 = vpack.c.b16 %v892, %v892
        %v901 = vpack.c.b16 %v893, %v893
        %v902 = vpack.c.b16 %v894, %v894
        %v903 = vpack.c.b16 %v895, %v895
        %vm904 = vcmask 64512
        %v906 = vsel %vm904, %v872, 0
        %v909 = vsel %vm904, %v873, 0
        %v912 = vsel %vm904, %v874, 0
        %vm914 = vcmask 1043456
        %v916 = vsel %vm914, %v896, 0
        %v919 = vsel %vm914, %v897, 0
        %v922 = vsel %vm914, %v898, 0
        %v925 = vsel %vm914, %v899, 0
        %v928 = vsel %vm914, %v900, 0
        %v931 = vsel %vm914, %v901, 0
        %v934 = vsel %vm914, %v902, 0
        %v937 = vsel %vm914, %v903, 0
        %939 = vmatprep.subr.bf16.mxu0 %v919
        %940 = vmatpush1.bf16.msra.mxu0 %v916
        %941 = vmatprep.subr.bf16.mxu0 0
        %942 = vmatpush1.bf16.msra.mxu0 0
        %943 = vmatprep.subr.bf16.mxu0 0
        %944 = vmatpush1.bf16.msra.mxu0 0
        %945 = vmatprep.subr.bf16.mxu0 0
        %946 = vmatpush1.bf16.msra.mxu0 0
        %947 = vmatprep.subr.bf16.mxu0 0
        %948 = vmatpush1.bf16.msra.mxu0 0
        %949 = vmatprep.subr.bf16.mxu0 0
        %950 = vmatpush1.bf16.msra.mxu0 0
        %951 = vmatprep.subr.bf16.mxu0 0
        %952 = vmatpush1.bf16.msra.mxu0 0
        %953 = vmatprep.subr.bf16.mxu0 0
        %954 = vmatpush1.bf16.msra.mxu0 0
        %955 = vmatprep.subr.bf16.mxu0 0
        %956 = vmatpush1.bf16.msra.mxu0 0
        %957 = vmatprep.subr.bf16.mxu0 0
        %958 = vmatpush1.bf16.msra.mxu0 0
        %959 = vmatprep.subr.bf16.mxu0 0
        %960 = vmatpush1.bf16.msra.mxu0 0
        %961 = vmatprep.subr.bf16.mxu0 0
        %962 = vmatpush1.bf16.msra.mxu0 0
        %963 = vmatprep.subr.bf16.mxu0 0
        %964 = vmatpush1.bf16.msra.mxu0 0
        %965 = vmatprep.subr.bf16.mxu0 0
        %966 = vmatpush1.bf16.msra.mxu0 0
        %967 = vmatprep.subr.bf16.mxu0 0
        %968 = vmatpush1.bf16.msra.mxu0 0
        %969 = vmatprep.subr.bf16.mxu0 0
        %970 = vmatpush1.bf16.msra.mxu0 0
        %971 = vmatprep.mubr.bf16.mxu0 0
        %972 = vmatmul.mubr.bf16.gmra.mrb[0].mxu0 %v906
        %v973 = vpop.f32.mrb[0].mxu0
        %v974 = vadd.f32 0.0, %v973
        %v975 = vpop.f32.mrb[0].mxu0
        %v976 = vadd.f32 0.0, %v975
        %v977 = vpop.f32.mrb[0].mxu0
        %v978 = vadd.f32 0.0, %v977
        %v979 = vpop.f32.mrb[0].mxu0
        %v980 = vadd.f32 0.0, %v979
        %981 = vmatprep.mubr.bf16.mxu0 0
        %982 = vmatmul.mubr.bf16.gmra.mrb[0].mxu0 %v909
        %v983 = vpop.f32.mrb[0].mxu0
        %v984 = vadd.f32 0.0, %v983
        %v985 = vpop.f32.mrb[0].mxu0
        %v986 = vadd.f32 0.0, %v985
        %v987 = vpop.f32.mrb[0].mxu0
        %v988 = vadd.f32 0.0, %v987
        %v989 = vpop.f32.mrb[0].mxu0
        %v990 = vadd.f32 0.0, %v989
        %991 = vmatprep.mubr.bf16.mxu0 0
        %992 = vmatmul.mubr.bf16.gmra.mrb[0].mxu0 %v912
        %v993 = vpop.f32.mrb[0].mxu0
        %v994 = vadd.f32 0.0, %v993
        %v995 = vpop.f32.mrb[0].mxu0
        %v996 = vadd.f32 0.0, %v995
        %v997 = vpop.f32.mrb[0].mxu0
        %v998 = vadd.f32 0.0, %v997
        %v999 = vpop.f32.mrb[0].mxu0
        %v1000 = vadd.f32 0.0, %v999
        %1001 = vdwg.mxu0
        %1002 = vmatprep.subr.bf16.mxu0 %v925
        %1003 = vmatpush1.bf16.msra.mxu0 %v922
        %1004 = vmatprep.subr.bf16.mxu0 0
        %1005 = vmatpush1.bf16.msra.mxu0 0
        %1006 = vmatprep.subr.bf16.mxu0 0
        %1007 = vmatpush1.bf16.msra.mxu0 0
        %1008 = vmatprep.subr.bf16.mxu0 0
        %1009 = vmatpush1.bf16.msra.mxu0 0
        %1010 = vmatprep.subr.bf16.mxu0 0
        %1011 = vmatpush1.bf16.msra.mxu0 0
        %1012 = vmatprep.subr.bf16.mxu0 0
        %1013 = vmatpush1.bf16.msra.mxu0 0
        %1014 = vmatprep.subr.bf16.mxu0 0
        %1015 = vmatpush1.bf16.msra.mxu0 0
        %1016 = vmatprep.subr.bf16.mxu0 0
        %1017 = vmatpush1.bf16.msra.mxu0 0
        %1018 = vmatprep.subr.bf16.mxu0 0
        %1019 = vmatpush1.bf16.msra.mxu0 0
        %1020 = vmatprep.subr.bf16.mxu0 0
        %1021 = vmatpush1.bf16.msra.mxu0 0
        %1022 = vmatprep.subr.bf16.mxu0 0
        %1023 = vmatpush1.bf16.msra.mxu0 0
        %1024 = vmatprep.subr.bf16.mxu0 0
        %1025 = vmatpush1.bf16.msra.mxu0 0
        %1026 = vmatprep.subr.bf16.mxu0 0
        %1027 = vmatpush1.bf16.msra.mxu0 0
        %1028 = vmatprep.subr.bf16.mxu0 0
        %1029 = vmatpush1.bf16.msra.mxu0 0
        %1030 = vmatprep.subr.bf16.mxu0 0
        %1031 = vmatpush1.bf16.msra.mxu0 0
        %1032 = vmatprep.subr.bf16.mxu0 0
        %1033 = vmatpush1.bf16.msra.mxu0 0
        %1034 = vmatprep.mubr.bf16.mxu0 0
        %1035 = vmatmul.mubr.bf16.gmra.mrb[0].mxu0 %v906
        %v1036 = vpop.f32.mrb[0].mxu0
        %v1037 = vadd.f32 0.0, %v1036
        %v1038 = vpop.f32.mrb[0].mxu0
        %v1039 = vadd.f32 0.0, %v1038
        %v1040 = vpop.f32.mrb[0].mxu0
        %v1041 = vadd.f32 0.0, %v1040
        %v1042 = vpop.f32.mrb[0].mxu0
        %v1043 = vadd.f32 0.0, %v1042
        %1044 = vmatprep.mubr.bf16.mxu0 0
        %1045 = vmatmul.mubr.bf16.gmra.mrb[0].mxu0 %v909
        %v1046 = vpop.f32.mrb[0].mxu0
        %v1047 = vadd.f32 0.0, %v1046
        %v1048 = vpop.f32.mrb[0].mxu0
        %v1049 = vadd.f32 0.0, %v1048
        %v1050 = vpop.f32.mrb[0].mxu0
        %v1051 = vadd.f32 0.0, %v1050
        %v1052 = vpop.f32.mrb[0].mxu0
        %v1053 = vadd.f32 0.0, %v1052
        %1054 = vmatprep.mubr.bf16.mxu0 0
        %1055 = vmatmul.mubr.bf16.gmra.mrb[0].mxu0 %v912
        %v1056 = vpop.f32.mrb[0].mxu0
        %v1057 = vadd.f32 0.0, %v1056
        %v1058 = vpop.f32.mrb[0].mxu0
        %v1059 = vadd.f32 0.0, %v1058
        %v1060 = vpop.f32.mrb[0].mxu0
        %v1061 = vadd.f32 0.0, %v1060
        %v1062 = vpop.f32.mrb[0].mxu0
        %v1063 = vadd.f32 0.0, %v1062
        %1064 = vdwg.mxu0
        %1065 = vmatprep.subr.bf16.mxu0 %v931
        %1066 = vmatpush1.bf16.msra.mxu0 %v928
        %1067 = vmatprep.subr.bf16.mxu0 0
        %1068 = vmatpush1.bf16.msra.mxu0 0
        %1069 = vmatprep.subr.bf16.mxu0 0
        %1070 = vmatpush1.bf16.msra.mxu0 0
        %1071 = vmatprep.subr.bf16.mxu0 0
        %1072 = vmatpush1.bf16.msra.mxu0 0
        %1073 = vmatprep.subr.bf16.mxu0 0
        %1074 = vmatpush1.bf16.msra.mxu0 0
        %1075 = vmatprep.subr.bf16.mxu0 0
        %1076 = vmatpush1.bf16.msra.mxu0 0
        %1077 = vmatprep.subr.bf16.mxu0 0
        %1078 = vmatpush1.bf16.msra.mxu0 0
        %1079 = vmatprep.subr.bf16.mxu0 0
        %1080 = vmatpush1.bf16.msra.mxu0 0
        %1081 = vmatprep.subr.bf16.mxu0 0
        %1082 = vmatpush1.bf16.msra.mxu0 0
        %1083 = vmatprep.subr.bf16.mxu0 0
        %1084 = vmatpush1.bf16.msra.mxu0 0
        %1085 = vmatprep.subr.bf16.mxu0 0
        %1086 = vmatpush1.bf16.msra.mxu0 0
        %1087 = vmatprep.subr.bf16.mxu0 0
        %1088 = vmatpush1.bf16.msra.mxu0 0
        %1089 = vmatprep.subr.bf16.mxu0 0
        %1090 = vmatpush1.bf16.msra.mxu0 0
        %1091 = vmatprep.subr.bf16.mxu0 0
        %1092 = vmatpush1.bf16.msra.mxu0 0
        %1093 = vmatprep.subr.bf16.mxu0 0
        %1094 = vmatpush1.bf16.msra.mxu0 0
        %1095 = vmatprep.subr.bf16.mxu0 0
        %1096 = vmatpush1.bf16.msra.mxu0 0
        %1097 = vmatprep.mubr.bf16.mxu0 0
        %1098 = vmatmul.mubr.bf16.gmra.mrb[0].mxu0 %v906
        %v1099 = vpop.f32.mrb[0].mxu0
        %v1100 = vadd.f32 0.0, %v1099
        %v1101 = vpop.f32.mrb[0].mxu0
        %v1102 = vadd.f32 0.0, %v1101
        %v1103 = vpop.f32.mrb[0].mxu0
        %v1104 = vadd.f32 0.0, %v1103
        %v1105 = vpop.f32.mrb[0].mxu0
        %v1106 = vadd.f32 0.0, %v1105
        %1107 = vmatprep.mubr.bf16.mxu0 0
        %1108 = vmatmul.mubr.bf16.gmra.mrb[0].mxu0 %v909
        %v1109 = vpop.f32.mrb[0].mxu0
        %v1110 = vadd.f32 0.0, %v1109
        %v1111 = vpop.f32.mrb[0].mxu0
        %v1112 = vadd.f32 0.0, %v1111
        %v1113 = vpop.f32.mrb[0].mxu0
        %v1114 = vadd.f32 0.0, %v1113
        %v1115 = vpop.f32.mrb[0].mxu0
        %v1116 = vadd.f32 0.0, %v1115
        %1117 = vmatprep.mubr.bf16.mxu0 0
        %1118 = vmatmul.mubr.bf16.gmra.mrb[0].mxu0 %v912
        %v1119 = vpop.f32.mrb[0].mxu0
        %v1120 = vadd.f32 0.0, %v1119
        %v1121 = vpop.f32.mrb[0].mxu0
        %v1122 = vadd.f32 0.0, %v1121
        %v1123 = vpop.f32.mrb[0].mxu0
        %v1124 = vadd.f32 0.0, %v1123
        %v1125 = vpop.f32.mrb[0].mxu0
        %v1126 = vadd.f32 0.0, %v1125
        %1127 = vdwg.mxu0
        %1128 = vmatprep.subr.bf16.mxu0 %v937
        %1129 = vmatpush1.bf16.msra.mxu0 %v934
        %1130 = vmatprep.subr.bf16.mxu0 0
        %1131 = vmatpush1.bf16.msra.mxu0 0
        %1132 = vmatprep.subr.bf16.mxu0 0
        %1133 = vmatpush1.bf16.msra.mxu0 0
        %1134 = vmatprep.subr.bf16.mxu0 0
        %1135 = vmatpush1.bf16.msra.mxu0 0
        %1136 = vmatprep.subr.bf16.mxu0 0
        %1137 = vmatpush1.bf16.msra.mxu0 0
        %1138 = vmatprep.subr.bf16.mxu0 0
        %1139 = vmatpush1.bf16.msra.mxu0 0
        %1140 = vmatprep.subr.bf16.mxu0 0
        %1141 = vmatpush1.bf16.msra.mxu0 0
        %1142 = vmatprep.subr.bf16.mxu0 0
        %1143 = vmatpush1.bf16.msra.mxu0 0
        %1144 = vmatprep.subr.bf16.mxu0 0
        %1145 = vmatpush1.bf16.msra.mxu0 0
        %1146 = vmatprep.subr.bf16.mxu0 0
        %1147 = vmatpush1.bf16.msra.mxu0 0
        %1148 = vmatprep.subr.bf16.mxu0 0
        %1149 = vmatpush1.bf16.msra.mxu0 0
        %1150 = vmatprep.subr.bf16.mxu0 0
        %1151 = vmatpush1.bf16.msra.mxu0 0
        %1152 = vmatprep.subr.bf16.mxu0 0
        %1153 = vmatpush1.bf16.msra.mxu0 0
        %1154 = vmatprep.subr.bf16.mxu0 0
        %1155 = vmatpush1.bf16.msra.mxu0 0
        %1156 = vmatprep.subr.bf16.mxu0 0
        %1157 = vmatpush1.bf16.msra.mxu0 0
        %1158 = vmatprep.subr.bf16.mxu0 0
        %1159 = vmatpush1.bf16.msra.mxu0 0
        %1160 = vmatprep.mubr.bf16.mxu0 0
        %1161 = vmatmul.mubr.bf16.gmra.mrb[0].mxu0 %v906
        %v1162 = vpop.f32.mrb[0].mxu0
        %v1163 = vadd.f32 0.0, %v1162
        %v1164 = vpop.f32.mrb[0].mxu0
        %v1165 = vadd.f32 0.0, %v1164
        %v1166 = vpop.f32.mrb[0].mxu0
        %v1167 = vadd.f32 0.0, %v1166
        %v1168 = vpop.f32.mrb[0].mxu0
        %v1169 = vadd.f32 0.0, %v1168
        %1170 = vmatprep.mubr.bf16.mxu0 0
        %1171 = vmatmul.mubr.bf16.gmra.mrb[0].mxu0 %v909
        %v1172 = vpop.f32.mrb[0].mxu0
        %v1173 = vadd.f32 0.0, %v1172
        %v1174 = vpop.f32.mrb[0].mxu0
        %v1175 = vadd.f32 0.0, %v1174
        %v1176 = vpop.f32.mrb[0].mxu0
        %v1177 = vadd.f32 0.0, %v1176
        %v1178 = vpop.f32.mrb[0].mxu0
        %v1179 = vadd.f32 0.0, %v1178
        %1180 = vmatprep.mubr.bf16.mxu0 0
        %1181 = vmatmul.mubr.bf16.gmra.mrb[0].mxu0 %v912
        %v1182 = vpop.f32.mrb[0].mxu0
        %v1183 = vadd.f32 0.0, %v1182
        %v1184 = vpop.f32.mrb[0].mxu0
        %v1185 = vadd.f32 0.0, %v1184
        %v1186 = vpop.f32.mrb[0].mxu0
        %v1187 = vadd.f32 0.0, %v1186
        %v1188 = vpop.f32.mrb[0].mxu0
        %v1189 = vadd.f32 0.0, %v1188
        %1190 = vdwg.mxu0
        %v1195 = vunpack.c.l.b16 %v875
        %v1196 = vunpack.c.h.b16 %v875
        %v1197 = vunpack.c.l.b16 %v876
        %v1198 = vunpack.c.h.b16 %v876
        %v1199 = vunpack.c.l.b16 %v877
        %v1200 = vunpack.c.h.b16 %v877
        %v1201 = vunpack.c.l.b16 %v878
        %v1202 = vunpack.c.h.b16 %v878
        %v1203 = vpack.c.b16 %v1195, %v1195
        %v1204 = vpack.c.b16 %v1196, %v1196
        %v1205 = vpack.c.b16 %v1197, %v1197
        %v1206 = vpack.c.b16 %v1198, %v1198
        %v1207 = vpack.c.b16 %v1199, %v1199
        %v1208 = vpack.c.b16 %v1200, %v1200
        %v1209 = vpack.c.b16 %v1201, %v1201
        %v1210 = vpack.c.b16 %v1202, %v1202
        %v1212 = vsel %vm904, %v871, 0
        %v1215 = vsel %vm914, %v1203, 0
        %v1218 = vsel %vm914, %v1204, 0
        %v1221 = vsel %vm914, %v1205, 0
        %v1224 = vsel %vm914, %v1206, 0
        %v1227 = vsel %vm914, %v1207, 0
        %v1230 = vsel %vm914, %v1208, 0
        %v1233 = vsel %vm914, %v1209, 0
        %v1236 = vsel %vm914, %v1210, 0
        %1238 = vmatprep.subr.bf16.mxu0 %v1218
        %1239 = vmatpush1.bf16.msra.mxu0 %v1215
        %1240 = vmatprep.subr.bf16.mxu0 0
        %1241 = vmatpush1.bf16.msra.mxu0 0
        %1242 = vmatprep.subr.bf16.mxu0 0
        %1243 = vmatpush1.bf16.msra.mxu0 0
        %1244 = vmatprep.subr.bf16.mxu0 0
        %1245 = vmatpush1.bf16.msra.mxu0 0
        %1246 = vmatprep.subr.bf16.mxu0 0
        %1247 = vmatpush1.bf16.msra.mxu0 0
        %1248 = vmatprep.subr.bf16.mxu0 0
        %1249 = vmatpush1.bf16.msra.mxu0 0
        %1250 = vmatprep.subr.bf16.mxu0 0
        %1251 = vmatpush1.bf16.msra.mxu0 0
        %1252 = vmatprep.subr.bf16.mxu0 0
        %1253 = vmatpush1.bf16.msra.mxu0 0
        %1254 = vmatprep.subr.bf16.mxu0 0
        %1255 = vmatpush1.bf16.msra.mxu0 0
        %1256 = vmatprep.subr.bf16.mxu0 0
        %1257 = vmatpush1.bf16.msra.mxu0 0
        %1258 = vmatprep.subr.bf16.mxu0 0
        %1259 = vmatpush1.bf16.msra.mxu0 0
        %1260 = vmatprep.subr.bf16.mxu0 0
        %1261 = vmatpush1.bf16.msra.mxu0 0
        %1262 = vmatprep.subr.bf16.mxu0 0
        %1263 = vmatpush1.bf16.msra.mxu0 0
        %1264 = vmatprep.subr.bf16.mxu0 0
        %1265 = vmatpush1.bf16.msra.mxu0 0
        %1266 = vmatprep.subr.bf16.mxu0 0
        %1267 = vmatpush1.bf16.msra.mxu0 0
        %1268 = vmatprep.subr.bf16.mxu0 0
        %1269 = vmatpush1.bf16.msra.mxu0 0
        %1270 = vmatprep.mubr.bf16.mxu0 0
        %1271 = vmatmul.mubr.bf16.gmra.mrb[0].mxu0 %v1212
        %v1272 = vpop.f32.mrb[0].mxu0
        %v1273 = vadd.f32 %v974, %v1272
        %v1274 = vpop.f32.mrb[0].mxu0
        %v1275 = vadd.f32 %v976, %v1274
        %v1276 = vpop.f32.mrb[0].mxu0
        %v1277 = vadd.f32 %v978, %v1276
        %v1278 = vpop.f32.mrb[0].mxu0
        %v1279 = vadd.f32 %v980, %v1278
        %1280 = vmatprep.mubr.bf16.mxu0 0
        %1281 = vmatmul.mubr.bf16.gmra.mrb[0].mxu0 %v906
        %v1282 = vpop.f32.mrb[0].mxu0
        %v1283 = vadd.f32 %v984, %v1282
        %v1284 = vpop.f32.mrb[0].mxu0
        %v1285 = vadd.f32 %v986, %v1284
        %v1286 = vpop.f32.mrb[0].mxu0
        %v1287 = vadd.f32 %v988, %v1286
        %v1288 = vpop.f32.mrb[0].mxu0
        %v1289 = vadd.f32 %v990, %v1288
        %1290 = vmatprep.mubr.bf16.mxu0 0
        %1291 = vmatmul.mubr.bf16.gmra.mrb[0].mxu0 %v909
        %v1292 = vpop.f32.mrb[0].mxu0
        %v1293 = vadd.f32 %v994, %v1292
        %v1294 = vpop.f32.mrb[0].mxu0
        %v1295 = vadd.f32 %v996, %v1294
        %v1296 = vpop.f32.mrb[0].mxu0
        %v1297 = vadd.f32 %v998, %v1296
        %v1298 = vpop.f32.mrb[0].mxu0
        %v1299 = vadd.f32 %v1000, %v1298
        %1300 = vdwg.mxu0
        %1301 = vmatprep.subr.bf16.mxu0 %v1224
        %1302 = vmatpush1.bf16.msra.mxu0 %v1221
        %1303 = vmatprep.subr.bf16.mxu0 0
        %1304 = vmatpush1.bf16.msra.mxu0 0
        %1305 = vmatprep.subr.bf16.mxu0 0
        %1306 = vmatpush1.bf16.msra.mxu0 0
        %1307 = vmatprep.subr.bf16.mxu0 0
        %1308 = vmatpush1.bf16.msra.mxu0 0
        %1309 = vmatprep.subr.bf16.mxu0 0
        %1310 = vmatpush1.bf16.msra.mxu0 0
        %1311 = vmatprep.subr.bf16.mxu0 0
        %1312 = vmatpush1.bf16.msra.mxu0 0
        %1313 = vmatprep.subr.bf16.mxu0 0
        %1314 = vmatpush1.bf16.msra.mxu0 0
        %1315 = vmatprep.subr.bf16.mxu0 0
        %1316 = vmatpush1.bf16.msra.mxu0 0
        %1317 = vmatprep.subr.bf16.mxu0 0
        %1318 = vmatpush1.bf16.msra.mxu0 0
        %1319 = vmatprep.subr.bf16.mxu0 0
        %1320 = vmatpush1.bf16.msra.mxu0 0
        %1321 = vmatprep.subr.bf16.mxu0 0
        %1322 = vmatpush1.bf16.msra.mxu0 0
        %1323 = vmatprep.subr.bf16.mxu0 0
        %1324 = vmatpush1.bf16.msra.mxu0 0
        %1325 = vmatprep.subr.bf16.mxu0 0
        %1326 = vmatpush1.bf16.msra.mxu0 0
        %1327 = vmatprep.subr.bf16.mxu0 0
        %1328 = vmatpush1.bf16.msra.mxu0 0
        %1329 = vmatprep.subr.bf16.mxu0 0
        %1330 = vmatpush1.bf16.msra.mxu0 0
        %1331 = vmatprep.subr.bf16.mxu0 0
        %1332 = vmatpush1.bf16.msra.mxu0 0
        %1333 = vmatprep.mubr.bf16.mxu0 0
        %1334 = vmatmul.mubr.bf16.gmra.mrb[0].mxu0 %v1212
        %v1335 = vpop.f32.mrb[0].mxu0
        %v1336 = vadd.f32 %v1037, %v1335
        %v1337 = vpop.f32.mrb[0].mxu0
        %v1338 = vadd.f32 %v1039, %v1337
        %v1339 = vpop.f32.mrb[0].mxu0
        %v1340 = vadd.f32 %v1041, %v1339
        %v1341 = vpop.f32.mrb[0].mxu0
        %v1342 = vadd.f32 %v1043, %v1341
        %1343 = vmatprep.mubr.bf16.mxu0 0
        %1344 = vmatmul.mubr.bf16.gmra.mrb[0].mxu0 %v906
        %v1345 = vpop.f32.mrb[0].mxu0
        %v1346 = vadd.f32 %v1047, %v1345
        %v1347 = vpop.f32.mrb[0].mxu0
        %v1348 = vadd.f32 %v1049, %v1347
        %v1349 = vpop.f32.mrb[0].mxu0
        %v1350 = vadd.f32 %v1051, %v1349
        %v1351 = vpop.f32.mrb[0].mxu0
        %v1352 = vadd.f32 %v1053, %v1351
        %1353 = vmatprep.mubr.bf16.mxu0 0
        %1354 = vmatmul.mubr.bf16.gmra.mrb[0].mxu0 %v909
        %v1355 = vpop.f32.mrb[0].mxu0
        %v1356 = vadd.f32 %v1057, %v1355
        %v1357 = vpop.f32.mrb[0].mxu0
        %v1358 = vadd.f32 %v1059, %v1357
        %v1359 = vpop.f32.mrb[0].mxu0
        %v1360 = vadd.f32 %v1061, %v1359
        %v1361 = vpop.f32.mrb[0].mxu0
        %v1362 = vadd.f32 %v1063, %v1361
        %1363 = vdwg.mxu0
        %1364 = vmatprep.subr.bf16.mxu0 %v1230
        %1365 = vmatpush1.bf16.msra.mxu0 %v1227
        %1366 = vmatprep.subr.bf16.mxu0 0
        %1367 = vmatpush1.bf16.msra.mxu0 0
        %1368 = vmatprep.subr.bf16.mxu0 0
        %1369 = vmatpush1.bf16.msra.mxu0 0
        %1370 = vmatprep.subr.bf16.mxu0 0
        %1371 = vmatpush1.bf16.msra.mxu0 0
        %1372 = vmatprep.subr.bf16.mxu0 0
        %1373 = vmatpush1.bf16.msra.mxu0 0
        %1374 = vmatprep.subr.bf16.mxu0 0
        %1375 = vmatpush1.bf16.msra.mxu0 0
        %1376 = vmatprep.subr.bf16.mxu0 0
        %1377 = vmatpush1.bf16.msra.mxu0 0
        %1378 = vmatprep.subr.bf16.mxu0 0
        %1379 = vmatpush1.bf16.msra.mxu0 0
        %1380 = vmatprep.subr.bf16.mxu0 0
        %1381 = vmatpush1.bf16.msra.mxu0 0
        %1382 = vmatprep.subr.bf16.mxu0 0
        %1383 = vmatpush1.bf16.msra.mxu0 0
        %1384 = vmatprep.subr.bf16.mxu0 0
        %1385 = vmatpush1.bf16.msra.mxu0 0
        %1386 = vmatprep.subr.bf16.mxu0 0
        %1387 = vmatpush1.bf16.msra.mxu0 0
        %1388 = vmatprep.subr.bf16.mxu0 0
        %1389 = vmatpush1.bf16.msra.mxu0 0
        %1390 = vmatprep.subr.bf16.mxu0 0
        %1391 = vmatpush1.bf16.msra.mxu0 0
        %1392 = vmatprep.subr.bf16.mxu0 0
        %1393 = vmatpush1.bf16.msra.mxu0 0
        %1394 = vmatprep.subr.bf16.mxu0 0
        %1395 = vmatpush1.bf16.msra.mxu0 0
        %1396 = vmatprep.mubr.bf16.mxu0 0
        %1397 = vmatmul.mubr.bf16.gmra.mrb[0].mxu0 %v1212
        %v1398 = vpop.f32.mrb[0].mxu0
        %v1399 = vadd.f32 %v1100, %v1398
        %v1400 = vpop.f32.mrb[0].mxu0
        %v1401 = vadd.f32 %v1102, %v1400
        %v1402 = vpop.f32.mrb[0].mxu0
        %v1403 = vadd.f32 %v1104, %v1402
        %v1404 = vpop.f32.mrb[0].mxu0
        %v1405 = vadd.f32 %v1106, %v1404
        %1406 = vmatprep.mubr.bf16.mxu0 0
        %1407 = vmatmul.mubr.bf16.gmra.mrb[0].mxu0 %v906
        %v1408 = vpop.f32.mrb[0].mxu0
        %v1409 = vadd.f32 %v1110, %v1408
        %v1410 = vpop.f32.mrb[0].mxu0
        %v1411 = vadd.f32 %v1112, %v1410
        %v1412 = vpop.f32.mrb[0].mxu0
        %v1413 = vadd.f32 %v1114, %v1412
        %v1414 = vpop.f32.mrb[0].mxu0
        %v1415 = vadd.f32 %v1116, %v1414
        %1416 = vmatprep.mubr.bf16.mxu0 0
        %1417 = vmatmul.mubr.bf16.gmra.mrb[0].mxu0 %v909
        %v1418 = vpop.f32.mrb[0].mxu0
        %v1419 = vadd.f32 %v1120, %v1418
        %v1420 = vpop.f32.mrb[0].mxu0
        %v1421 = vadd.f32 %v1122, %v1420
        %v1422 = vpop.f32.mrb[0].mxu0
        %v1423 = vadd.f32 %v1124, %v1422
        %v1424 = vpop.f32.mrb[0].mxu0
        %v1425 = vadd.f32 %v1126, %v1424
        %1426 = vdwg.mxu0
        %1427 = vmatprep.subr.bf16.mxu0 %v1236
        %1428 = vmatpush1.bf16.msra.mxu0 %v1233
        %1429 = vmatprep.subr.bf16.mxu0 0
        %1430 = vmatpush1.bf16.msra.mxu0 0
        %1431 = vmatprep.subr.bf16.mxu0 0
        %1432 = vmatpush1.bf16.msra.mxu0 0
        %1433 = vmatprep.subr.bf16.mxu0 0
        %1434 = vmatpush1.bf16.msra.mxu0 0
        %1435 = vmatprep.subr.bf16.mxu0 0
        %1436 = vmatpush1.bf16.msra.mxu0 0
        %1437 = vmatprep.subr.bf16.mxu0 0
        %1438 = vmatpush1.bf16.msra.mxu0 0
        %1439 = vmatprep.subr.bf16.mxu0 0
        %1440 = vmatpush1.bf16.msra.mxu0 0
        %1441 = vmatprep.subr.bf16.mxu0 0
        %1442 = vmatpush1.bf16.msra.mxu0 0
        %1443 = vmatprep.subr.bf16.mxu0 0
        %1444 = vmatpush1.bf16.msra.mxu0 0
        %1445 = vmatprep.subr.bf16.mxu0 0
        %1446 = vmatpush1.bf16.msra.mxu0 0
        %1447 = vmatprep.subr.bf16.mxu0 0
        %1448 = vmatpush1.bf16.msra.mxu0 0
        %1449 = vmatprep.subr.bf16.mxu0 0
        %1450 = vmatpush1.bf16.msra.mxu0 0
        %1451 = vmatprep.subr.bf16.mxu0 0
        %1452 = vmatpush1.bf16.msra.mxu0 0
        %1453 = vmatprep.subr.bf16.mxu0 0
        %1454 = vmatpush1.bf16.msra.mxu0 0
        %1455 = vmatprep.subr.bf16.mxu0 0
        %1456 = vmatpush1.bf16.msra.mxu0 0
        %1457 = vmatprep.subr.bf16.mxu0 0
        %1458 = vmatpush1.bf16.msra.mxu0 0
        %1459 = vmatprep.mubr.bf16.mxu0 0
        %1460 = vmatmul.mubr.bf16.gmra.mrb[0].mxu0 %v1212
        %v1461 = vpop.f32.mrb[0].mxu0
        %v1462 = vadd.f32 %v1163, %v1461
        %v1463 = vpop.f32.mrb[0].mxu0
        %v1464 = vadd.f32 %v1165, %v1463
        %v1465 = vpop.f32.mrb[0].mxu0
        %v1466 = vadd.f32 %v1167, %v1465
        %v1467 = vpop.f32.mrb[0].mxu0
        %v1468 = vadd.f32 %v1169, %v1467
        %1469 = vmatprep.mubr.bf16.mxu0 0
        %1470 = vmatmul.mubr.bf16.gmra.mrb[0].mxu0 %v906
        %v1471 = vpop.f32.mrb[0].mxu0
        %v1472 = vadd.f32 %v1173, %v1471
        %v1473 = vpop.f32.mrb[0].mxu0
        %v1474 = vadd.f32 %v1175, %v1473
        %v1475 = vpop.f32.mrb[0].mxu0
        %v1476 = vadd.f32 %v1177, %v1475
        %v1477 = vpop.f32.mrb[0].mxu0
        %v1478 = vadd.f32 %v1179, %v1477
        %1479 = vmatprep.mubr.bf16.mxu0 0
        %1480 = vmatmul.mubr.bf16.gmra.mrb[0].mxu0 %v909
        %v1481 = vpop.f32.mrb[0].mxu0
        %v1482 = vadd.f32 %v1183, %v1481
        %v1483 = vpop.f32.mrb[0].mxu0
        %v1484 = vadd.f32 %v1185, %v1483
        %v1485 = vpop.f32.mrb[0].mxu0
        %v1486 = vadd.f32 %v1187, %v1485
        %v1487 = vpop.f32.mrb[0].mxu0
        %v1488 = vadd.f32 %v1189, %v1487
        %1489 = vdwg.mxu0
        %v1490 = vld [vmem:[%s3] sm:$0xff]
        %v1492 = vlaneseq
        %v1493 = vshrl.u32 %v1492, 7
        %v1494 = vsub.s32 0, %v1493
        %v1495 = vrot.slane %v1490, %v1494
        %v1496 = vlaneseq
        %v1497 = vshrl.u32 %v1496, 7
        %v1498 = vsub.s32 1, %v1497
        %v1499 = vrot.slane %v1490, %v1498
        %v1500 = vlaneseq
        %v1501 = vshrl.u32 %v1500, 7
        %v1502 = vsub.s32 2, %v1501
        %v1503 = vrot.slane %v1490, %v1502
        %v1504 = vlaneseq
        %v1505 = vshrl.u32 %v1504, 7
        %v1506 = vsub.s32 3, %v1505
        %v1507 = vrot.slane %v1490, %v1506
        %v1508 = vlaneseq
        %v1509 = vshrl.u32 %v1508, 7
        %v1510 = vsub.s32 4, %v1509
        %v1511 = vrot.slane %v1490, %v1510
        %v1512 = vlaneseq
        %v1513 = vshrl.u32 %v1512, 7
        %v1514 = vsub.s32 5, %v1513
        %v1515 = vrot.slane %v1490, %v1514
        %v1516 = vlaneseq
        %v1517 = vshrl.u32 %v1516, 7
        %v1518 = vsub.s32 6, %v1517
        %v1519 = vrot.slane %v1490, %v1518
        %v1520 = vlaneseq
        %v1521 = vshrl.u32 %v1520, 7
        %v1522 = vsub.s32 7, %v1521
        %v1523 = vrot.slane %v1490, %v1522
        %v1532 = vadd.f32 %v1273, %v1495
        %v1533 = vadd.f32 %v1275, %v1499
        %v1534 = vadd.f32 %v1336, %v1503
        %v1535 = vadd.f32 %v1338, %v1507
        %v1536 = vadd.f32 %v1399, %v1511
        %v1537 = vadd.f32 %v1401, %v1515
        %v1538 = vadd.f32 %v1462, %v1519
        %v1539 = vadd.f32 %v1464, %v1523
        %v1540 = vadd.f32 %v1277, %v1495
        %v1541 = vadd.f32 %v1279, %v1499
        %v1542 = vadd.f32 %v1340, %v1503
        %v1543 = vadd.f32 %v1342, %v1507
        %v1544 = vadd.f32 %v1403, %v1511
        %v1545 = vadd.f32 %v1405, %v1515
        %v1546 = vadd.f32 %v1466, %v1519
        %v1547 = vadd.f32 %v1468, %v1523
        %v1548 = vadd.f32 %v1283, %v1495
        %v1549 = vadd.f32 %v1285, %v1499
        %v1550 = vadd.f32 %v1346, %v1503
        %v1551 = vadd.f32 %v1348, %v1507
        %v1552 = vadd.f32 %v1409, %v1511
        %v1553 = vadd.f32 %v1411, %v1515
        %v1554 = vadd.f32 %v1472, %v1519
        %v1555 = vadd.f32 %v1474, %v1523
        %v1556 = vadd.f32 %v1287, %v1495
        %v1557 = vadd.f32 %v1289, %v1499
        %v1558 = vadd.f32 %v1350, %v1503
        %v1559 = vadd.f32 %v1352, %v1507
        %v1560 = vadd.f32 %v1413, %v1511
        %v1561 = vadd.f32 %v1415, %v1515
        %v1562 = vadd.f32 %v1476, %v1519
        %v1563 = vadd.f32 %v1478, %v1523
        %v1564 = vadd.f32 %v1293, %v1495
        %v1565 = vadd.f32 %v1295, %v1499
        %v1566 = vadd.f32 %v1356, %v1503
        %v1567 = vadd.f32 %v1358, %v1507
        %v1568 = vadd.f32 %v1419, %v1511
        %v1569 = vadd.f32 %v1421, %v1515
        %v1570 = vadd.f32 %v1482, %v1519
        %v1571 = vadd.f32 %v1484, %v1523
        %v1572 = vadd.f32 %v1297, %v1495
        %v1573 = vadd.f32 %v1299, %v1499
        %v1574 = vadd.f32 %v1360, %v1503
        %v1575 = vadd.f32 %v1362, %v1507
        %v1576 = vadd.f32 %v1423, %v1511
        %v1577 = vadd.f32 %v1425, %v1515
        %v1578 = vadd.f32 %v1486, %v1519
        %v1579 = vadd.f32 %v1488, %v1523
        %v1580 = vmax.f32 %v1532, 0.0
        %v1581 = vmax.f32 %v1533, 0.0
        %v1582 = vmax.f32 %v1534, 0.0
        %v1583 = vmax.f32 %v1535, 0.0
        %v1584 = vmax.f32 %v1536, 0.0
        %v1585 = vmax.f32 %v1537, 0.0
        %v1586 = vmax.f32 %v1538, 0.0
        %v1587 = vmax.f32 %v1539, 0.0
        %v1588 = vmax.f32 %v1540, 0.0
        %v1589 = vmax.f32 %v1541, 0.0
        %v1590 = vmax.f32 %v1542, 0.0
        %v1591 = vmax.f32 %v1543, 0.0
        %v1592 = vmax.f32 %v1544, 0.0
        %v1593 = vmax.f32 %v1545, 0.0
        %v1594 = vmax.f32 %v1546, 0.0
        %v1595 = vmax.f32 %v1547, 0.0
        %v1596 = vmax.f32 %v1548, 0.0
        %v1597 = vmax.f32 %v1549, 0.0
        %v1598 = vmax.f32 %v1550, 0.0
        %v1599 = vmax.f32 %v1551, 0.0
        %v1600 = vmax.f32 %v1552, 0.0
        %v1601 = vmax.f32 %v1553, 0.0
        %v1602 = vmax.f32 %v1554, 0.0
        %v1603 = vmax.f32 %v1555, 0.0
        %v1604 = vmax.f32 %v1556, 0.0
        %v1605 = vmax.f32 %v1557, 0.0
        %v1606 = vmax.f32 %v1558, 0.0
        %v1607 = vmax.f32 %v1559, 0.0
        %v1608 = vmax.f32 %v1560, 0.0
        %v1609 = vmax.f32 %v1561, 0.0
        %v1610 = vmax.f32 %v1562, 0.0
        %v1611 = vmax.f32 %v1563, 0.0
        %v1612 = vmax.f32 %v1564, 0.0
        %v1613 = vmax.f32 %v1565, 0.0
        %v1614 = vmax.f32 %v1566, 0.0
        %v1615 = vmax.f32 %v1567, 0.0
        %v1616 = vmax.f32 %v1568, 0.0
        %v1617 = vmax.f32 %v1569, 0.0
        %v1618 = vmax.f32 %v1570, 0.0
        %v1619 = vmax.f32 %v1571, 0.0
        %v1620 = vmax.f32 %v1572, 0.0
        %v1621 = vmax.f32 %v1573, 0.0
        %v1622 = vmax.f32 %v1574, 0.0
        %v1623 = vmax.f32 %v1575, 0.0
        %v1624 = vmax.f32 %v1576, 0.0
        %v1625 = vmax.f32 %v1577, 0.0
        %v1626 = vmax.f32 %v1578, 0.0
        %v1627 = vmax.f32 %v1579, 0.0
        %v1628 = vpack.c.bf16 %v1588, %v1580
        %v1629 = vpack.c.bf16 %v1589, %v1581
        %v1630 = vpack.c.bf16 %v1590, %v1582
        %v1631 = vpack.c.bf16 %v1591, %v1583
        %v1632 = vpack.c.bf16 %v1592, %v1584
        %v1633 = vpack.c.bf16 %v1593, %v1585
        %v1634 = vpack.c.bf16 %v1594, %v1586
        %v1635 = vpack.c.bf16 %v1595, %v1587
        %v1636 = vpack.c.bf16 %v1604, %v1596
        %v1637 = vpack.c.bf16 %v1605, %v1597
        %v1638 = vpack.c.bf16 %v1606, %v1598
        %v1639 = vpack.c.bf16 %v1607, %v1599
        %v1640 = vpack.c.bf16 %v1608, %v1600
        %v1641 = vpack.c.bf16 %v1609, %v1601
        %v1642 = vpack.c.bf16 %v1610, %v1602
        %v1643 = vpack.c.bf16 %v1611, %v1603
        %v1644 = vpack.c.bf16 %v1620, %v1612
        %v1645 = vpack.c.bf16 %v1621, %v1613
        %v1646 = vpack.c.bf16 %v1622, %v1614
        %v1647 = vpack.c.bf16 %v1623, %v1615
        %v1648 = vpack.c.bf16 %v1624, %v1616
        %v1649 = vpack.c.bf16 %v1625, %v1617
        %v1650 = vpack.c.bf16 %v1626, %v1618
        %v1651 = vpack.c.bf16 %v1627, %v1619
        %v1652 = vld [vmem:[%s4] sm:$0xff]
        %v1653 = vld [vmem:[%s4 + $0x8] sm:$0xff]
        %v1654 = vld [vmem:[%s4 + $0x10] sm:$0xff]
        %v1655 = vld [vmem:[%s4 + $0x18] sm:$0xff]
        %v1656 = vld [vmem:[%s4 + $0x20] sm:$0xff]
        %v1657 = vld [vmem:[%s4 + $0x28] sm:$0xff]
        %v1658 = vld [vmem:[%s4 + $0x30] sm:$0xff]
        %v1659 = vld [vmem:[%s4 + $0x38] sm:$0xff]
        %v1660 = vld [vmem:[%s4 + $0x40] sm:$0xff]
        %v1661 = vld [vmem:[%s4 + $0x48] sm:$0xff]
        %v1662 = vld [vmem:[%s4 + $0x50] sm:$0xff]
        %v1663 = vld [vmem:[%s4 + $0x58] sm:$0xff]
        %v1664 = vld [vmem:[%s4 + $0x60] sm:$0xff]
        %v1665 = vld [vmem:[%s4 + $0x68] sm:$0xff]
        %v1666 = vld [vmem:[%s4 + $0x70] sm:$0xff]
        %v1667 = vld [vmem:[%s4 + $0x78] sm:$0xff]
        %v1668 = vld [vmem:[%s4 + $0x80] sm:$0xff]
        %v1669 = vld [vmem:[%s4 + $0x88] sm:$0xff]
        %v1670 = vld [vmem:[%s4 + $0x90] sm:$0xff]
        %v1671 = vld [vmem:[%s4 + $0x98] sm:$0xff]
        %v1672 = vld [vmem:[%s4 + $0xa0] sm:$0xff]
        %v1673 = vld [vmem:[%s4 + $0xa8] sm:$0xff]
        %v1674 = vld [vmem:[%s4 + $0xb0] sm:$0xff]
        %v1675 = vld [vmem:[%s4 + $0xb8] sm:$0xff]
        %v1676 = vld [vmem:[%s4 + $0xc0] sm:$0xff]
        %v1677 = vld [vmem:[%s4 + $0xc8] sm:$0xff]
        %v1678 = vld [vmem:[%s4 + $0xd0] sm:$0xff]
        %v1679 = vld [vmem:[%s4 + $0xd8] sm:$0xff]
        %v1680 = vld [vmem:[%s4 + $0xe0] sm:$0xff]
        %v1681 = vld [vmem:[%s4 + $0xe8] sm:$0xff]
        %v1682 = vld [vmem:[%s4 + $0xf0] sm:$0xff]
        %v1683 = vld [vmem:[%s4 + $0xf8] sm:$0xff]
        %v1684 = vld [vmem:[%s4 + $0x100] sm:$0xff]
        %v1685 = vld [vmem:[%s4 + $0x108] sm:$0xff]
        %v1686 = vld [vmem:[%s4 + $0x110] sm:$0xff]
        %v1687 = vld [vmem:[%s4 + $0x118] sm:$0xff]
        %v1688 = vld [vmem:[%s4 + $0x120] sm:$0xff]
        %v1689 = vld [vmem:[%s4 + $0x128] sm:$0xff]
        %v1690 = vld [vmem:[%s4 + $0x130] sm:$0xff]
        %v1691 = vld [vmem:[%s4 + $0x138] sm:$0xff]
        %v1692 = vld [vmem:[%s4 + $0x140] sm:$0xff]
        %v1693 = vld [vmem:[%s4 + $0x148] sm:$0xff]
        %v1694 = vld [vmem:[%s4 + $0x150] sm:$0xff]
        %v1695 = vld [vmem:[%s4 + $0x158] sm:$0xff]
        %v1696 = vld [vmem:[%s4 + $0x160] sm:$0xff]
        %v1697 = vld [vmem:[%s4 + $0x168] sm:$0xff]
        %v1698 = vld [vmem:[%s4 + $0x170] sm:$0xff]
        %v1699 = vld [vmem:[%s4 + $0x178] sm:$0xff]
        %v1700 = vld [vmem:[%s4 + $0x180] sm:$0xff]
        %v1701 = vld [vmem:[%s4 + $0x188] sm:$0xff]
        %v1702 = vld [vmem:[%s4 + $0x190] sm:$0xff]
        %v1703 = vld [vmem:[%s4 + $0x198] sm:$0xff]
        %v1704 = vld [vmem:[%s4 + $0x1a0] sm:$0xff]
        %v1705 = vld [vmem:[%s4 + $0x1a8] sm:$0xff]
        %v1706 = vld [vmem:[%s4 + $0x1b0] sm:$0xff]
        %v1707 = vld [vmem:[%s4 + $0x1b8] sm:$0xff]
        %v1708 = vld [vmem:[%s4 + $0x1c0] sm:$0xff]
        %v1709 = vld [vmem:[%s4 + $0x1c8] sm:$0xff]
        %v1710 = vld [vmem:[%s4 + $0x1d0] sm:$0xff]
        %v1711 = vld [vmem:[%s4 + $0x1d8] sm:$0xff]
        %v1712 = vld [vmem:[%s4 + $0x1e0] sm:$0xff]
        %v1713 = vld [vmem:[%s4 + $0x1e8] sm:$0xff]
        %v1714 = vld [vmem:[%s4 + $0x1f0] sm:$0xff]
        %v1715 = vld [vmem:[%s4 + $0x1f8] sm:$0xff]
        %v1716 = vld [vmem:[%s4 + $0x200] sm:$0xff]
        %v1717 = vld [vmem:[%s4 + $0x208] sm:$0xff]
        %v1718 = vld [vmem:[%s4 + $0x210] sm:$0xff]
        %v1719 = vld [vmem:[%s4 + $0x218] sm:$0xff]
        %v1720 = vld [vmem:[%s4 + $0x220] sm:$0xff]
        %v1721 = vld [vmem:[%s4 + $0x228] sm:$0xff]
        %v1722 = vld [vmem:[%s4 + $0x230] sm:$0xff]
        %v1723 = vld [vmem:[%s4 + $0x238] sm:$0xff]
        %v1724 = vld [vmem:[%s4 + $0x240] sm:$0xff]
        %v1725 = vld [vmem:[%s4 + $0x248] sm:$0xff]
        %v1726 = vld [vmem:[%s4 + $0x250] sm:$0xff]
        %v1727 = vld [vmem:[%s4 + $0x258] sm:$0xff]
        %v1728 = vld [vmem:[%s4 + $0x260] sm:$0xff]
        %v1729 = vld [vmem:[%s4 + $0x268] sm:$0xff]
        %v1730 = vld [vmem:[%s4 + $0x270] sm:$0xff]
        %v1731 = vld [vmem:[%s4 + $0x278] sm:$0xff]
        %v1732 = vld [vmem:[%s4 + $0x280] sm:$0xff]
        %v1733 = vld [vmem:[%s4 + $0x288] sm:$0xff]
        %v1734 = vld [vmem:[%s4 + $0x290] sm:$0xff]
        %v1735 = vld [vmem:[%s4 + $0x298] sm:$0xff]
        %v1736 = vld [vmem:[%s4 + $0x2a0] sm:$0xff]
        %v1737 = vld [vmem:[%s4 + $0x2a8] sm:$0xff]
        %v1738 = vld [vmem:[%s4 + $0x2b0] sm:$0xff]
        %v1739 = vld [vmem:[%s4 + $0x2b8] sm:$0xff]
        %v1740 = vld [vmem:[%s4 + $0x2c0] sm:$0xff]
        %v1741 = vld [vmem:[%s4 + $0x2c8] sm:$0xff]
        %v1742 = vld [vmem:[%s4 + $0x2d0] sm:$0xff]
        %v1743 = vld [vmem:[%s4 + $0x2d8] sm:$0xff]
        %v1744 = vld [vmem:[%s4 + $0x2e0] sm:$0xff]
        %v1745 = vld [vmem:[%s4 + $0x2e8] sm:$0xff]
        %v1746 = vld [vmem:[%s4 + $0x2f0] sm:$0xff]
        %v1747 = vld [vmem:[%s4 + $0x2f8] sm:$0xff]
        %v1748 = vld [vmem:[%s4 + $0x300] sm:$0xff]
        %v1749 = vld [vmem:[%s4 + $0x308] sm:$0xff]
        %v1750 = vld [vmem:[%s4 + $0x310] sm:$0xff]
        %v1751 = vld [vmem:[%s4 + $0x318] sm:$0xff]
        %v1752 = vld [vmem:[%s4 + $0x320] sm:$0xff]
        %v1753 = vld [vmem:[%s4 + $0x328] sm:$0xff]
        %v1754 = vld [vmem:[%s4 + $0x330] sm:$0xff]
        %v1755 = vld [vmem:[%s4 + $0x338] sm:$0xff]
        %v1756 = vld [vmem:[%s4 + $0x340] sm:$0xff]
        %v1757 = vld [vmem:[%s4 + $0x348] sm:$0xff]
        %v1758 = vld [vmem:[%s4 + $0x350] sm:$0xff]
        %v1759 = vld [vmem:[%s4 + $0x358] sm:$0xff]
        %v1760 = vld [vmem:[%s4 + $0x360] sm:$0xff]
        %v1761 = vld [vmem:[%s4 + $0x368] sm:$0xff]
        %v1762 = vld [vmem:[%s4 + $0x370] sm:$0xff]
        %v1763 = vld [vmem:[%s4 + $0x378] sm:$0xff]
        %v1764 = vld [vmem:[%s4 + $0x380] sm:$0xff]
        %v1765 = vld [vmem:[%s4 + $0x388] sm:$0xff]
        %v1766 = vld [vmem:[%s4 + $0x390] sm:$0xff]
        %v1767 = vld [vmem:[%s4 + $0x398] sm:$0xff]
        %v1768 = vld [vmem:[%s4 + $0x3a0] sm:$0xff]
        %v1769 = vld [vmem:[%s4 + $0x3a8] sm:$0xff]
        %v1770 = vld [vmem:[%s4 + $0x3b0] sm:$0xff]
        %v1771 = vld [vmem:[%s4 + $0x3b8] sm:$0xff]
        %v1772 = vld [vmem:[%s4 + $0x3c0] sm:$0xff]
        %v1773 = vld [vmem:[%s4 + $0x3c8] sm:$0xff]
        %v1774 = vld [vmem:[%s4 + $0x3d0] sm:$0xff]
        %v1775 = vld [vmem:[%s4 + $0x3d8] sm:$0xff]
        %v1776 = vld [vmem:[%s4 + $0x3e0] sm:$0xff]
        %v1777 = vld [vmem:[%s4 + $0x3e8] sm:$0xff]
        %v1778 = vld [vmem:[%s4 + $0x3f0] sm:$0xff]
        %v1779 = vld [vmem:[%s4 + $0x3f8] sm:$0xff]
        %v1780 = vld [vmem:[%s4 + $0x400] sm:$0xff]
        %v1781 = vld [vmem:[%s4 + $0x408] sm:$0xff]
        %v1782 = vld [vmem:[%s4 + $0x410] sm:$0xff]
        %v1783 = vld [vmem:[%s4 + $0x418] sm:$0xff]
        %v1784 = vld [vmem:[%s4 + $0x420] sm:$0xff]
        %v1785 = vld [vmem:[%s4 + $0x428] sm:$0xff]
        %v1786 = vld [vmem:[%s4 + $0x430] sm:$0xff]
        %v1787 = vld [vmem:[%s4 + $0x438] sm:$0xff]
        %v1788 = vld [vmem:[%s4 + $0x440] sm:$0xff]
        %v1789 = vld [vmem:[%s4 + $0x448] sm:$0xff]
        %v1790 = vld [vmem:[%s4 + $0x450] sm:$0xff]
        %v1791 = vld [vmem:[%s4 + $0x458] sm:$0xff]
        %v1792 = vld [vmem:[%s4 + $0x460] sm:$0xff]
        %v1793 = vld [vmem:[%s4 + $0x468] sm:$0xff]
        %v1794 = vld [vmem:[%s4 + $0x470] sm:$0xff]
        %v1795 = vld [vmem:[%s4 + $0x478] sm:$0xff]
        %v1796 = vld [vmem:[%s4 + $0x480] sm:$0xff]
        %v1797 = vld [vmem:[%s4 + $0x488] sm:$0xff]
        %v1798 = vld [vmem:[%s4 + $0x490] sm:$0xff]
        %v1799 = vld [vmem:[%s4 + $0x498] sm:$0xff]
        %v1800 = vld [vmem:[%s4 + $0x4a0] sm:$0xff]
        %v1801 = vld [vmem:[%s4 + $0x4a8] sm:$0xff]
        %v1802 = vld [vmem:[%s4 + $0x4b0] sm:$0xff]
        %v1803 = vld [vmem:[%s4 + $0x4b8] sm:$0xff]
        %v1804 = vld [vmem:[%s4 + $0x4c0] sm:$0xff]
        %v1805 = vld [vmem:[%s4 + $0x4c8] sm:$0xff]
        %v1806 = vld [vmem:[%s4 + $0x4d0] sm:$0xff]
        %v1807 = vld [vmem:[%s4 + $0x4d8] sm:$0xff]
        %v1808 = vld [vmem:[%s4 + $0x4e0] sm:$0xff]
        %v1809 = vld [vmem:[%s4 + $0x4e8] sm:$0xff]
        %v1810 = vld [vmem:[%s4 + $0x4f0] sm:$0xff]
        %v1811 = vld [vmem:[%s4 + $0x4f8] sm:$0xff]
        %v1812 = vld [vmem:[%s4 + $0x500] sm:$0xff]
        %v1813 = vld [vmem:[%s4 + $0x508] sm:$0xff]
        %v1814 = vld [vmem:[%s4 + $0x510] sm:$0xff]
        %v1815 = vld [vmem:[%s4 + $0x518] sm:$0xff]
        %v1816 = vld [vmem:[%s4 + $0x520] sm:$0xff]
        %v1817 = vld [vmem:[%s4 + $0x528] sm:$0xff]
        %v1818 = vld [vmem:[%s4 + $0x530] sm:$0xff]
        %v1819 = vld [vmem:[%s4 + $0x538] sm:$0xff]
        %v1820 = vld [vmem:[%s4 + $0x540] sm:$0xff]
        %v1821 = vld [vmem:[%s4 + $0x548] sm:$0xff]
        %v1822 = vld [vmem:[%s4 + $0x550] sm:$0xff]
        %v1823 = vld [vmem:[%s4 + $0x558] sm:$0xff]
        %v1824 = vld [vmem:[%s4 + $0x560] sm:$0xff]
        %v1825 = vld [vmem:[%s4 + $0x568] sm:$0xff]
        %v1826 = vld [vmem:[%s4 + $0x570] sm:$0xff]
        %v1827 = vld [vmem:[%s4 + $0x578] sm:$0xff]
        %v1828 = vld [vmem:[%s4 + $0x580] sm:$0xff]
        %v1829 = vld [vmem:[%s4 + $0x588] sm:$0xff]
        %v1830 = vld [vmem:[%s4 + $0x590] sm:$0xff]
        %v1831 = vld [vmem:[%s4 + $0x598] sm:$0xff]
        %v1832 = vld [vmem:[%s4 + $0x5a0] sm:$0xff]
        %v1833 = vld [vmem:[%s4 + $0x5a8] sm:$0xff]
        %v1834 = vld [vmem:[%s4 + $0x5b0] sm:$0xff]
        %v1835 = vld [vmem:[%s4 + $0x5b8] sm:$0xff]
        %v1836 = vld [vmem:[%s4 + $0x5c0] sm:$0xff]
        %v1837 = vld [vmem:[%s4 + $0x5c8] sm:$0xff]
        %v1838 = vld [vmem:[%s4 + $0x5d0] sm:$0xff]
        %v1839 = vld [vmem:[%s4 + $0x5d8] sm:$0xff]
        %v1840 = vld [vmem:[%s4 + $0x5e0] sm:$0xff]
        %v1841 = vld [vmem:[%s4 + $0x5e8] sm:$0xff]
        %v1842 = vld [vmem:[%s4 + $0x5f0] sm:$0xff]
        %v1843 = vld [vmem:[%s4 + $0x5f8] sm:$0xff]
        %v1844 = vld [vmem:[%s4 + $0x600] sm:$0xff]
        %v1845 = vld [vmem:[%s4 + $0x608] sm:$0xff]
        %v1846 = vld [vmem:[%s4 + $0x610] sm:$0xff]
        %v1847 = vld [vmem:[%s4 + $0x618] sm:$0xff]
        %v1848 = vld [vmem:[%s4 + $0x620] sm:$0xff]
        %v1849 = vld [vmem:[%s4 + $0x628] sm:$0xff]
        %v1850 = vld [vmem:[%s4 + $0x630] sm:$0xff]
        %v1851 = vld [vmem:[%s4 + $0x638] sm:$0xff]
        %v1852 = vld [vmem:[%s4 + $0x640] sm:$0xff]
        %v1853 = vld [vmem:[%s4 + $0x648] sm:$0xff]
        %v1854 = vld [vmem:[%s4 + $0x650] sm:$0xff]
        %v1855 = vld [vmem:[%s4 + $0x658] sm:$0xff]
        %v1856 = vld [vmem:[%s4 + $0x660] sm:$0xff]
        %v1857 = vld [vmem:[%s4 + $0x668] sm:$0xff]
        %v1858 = vld [vmem:[%s4 + $0x670] sm:$0xff]
        %v1859 = vld [vmem:[%s4 + $0x678] sm:$0xff]
        %v1860 = vld [vmem:[%s4 + $0x680] sm:$0xff]
        %v1861 = vld [vmem:[%s4 + $0x688] sm:$0xff]
        %v1862 = vld [vmem:[%s4 + $0x690] sm:$0xff]
        %v1863 = vld [vmem:[%s4 + $0x698] sm:$0xff]
        %v1864 = vld [vmem:[%s4 + $0x6a0] sm:$0xff]
        %v1865 = vld [vmem:[%s4 + $0x6a8] sm:$0xff]
        %v1866 = vld [vmem:[%s4 + $0x6b0] sm:$0xff]
        %v1867 = vld [vmem:[%s4 + $0x6b8] sm:$0xff]
        %v1868 = vld [vmem:[%s4 + $0x6c0] sm:$0xff]
        %v1869 = vld [vmem:[%s4 + $0x6c8] sm:$0xff]
        %v1870 = vld [vmem:[%s4 + $0x6d0] sm:$0xff]
        %v1871 = vld [vmem:[%s4 + $0x6d8] sm:$0xff]
        %v1872 = vld [vmem:[%s4 + $0x6e0] sm:$0xff]
        %v1873 = vld [vmem:[%s4 + $0x6e8] sm:$0xff]
        %v1874 = vld [vmem:[%s4 + $0x6f0] sm:$0xff]
        %v1875 = vld [vmem:[%s4 + $0x6f8] sm:$0xff]
        %v1876 = vld [vmem:[%s4 + $0x700] sm:$0xff]
        %v1877 = vld [vmem:[%s4 + $0x708] sm:$0xff]
        %v1878 = vld [vmem:[%s4 + $0x710] sm:$0xff]
        %v1879 = vld [vmem:[%s4 + $0x718] sm:$0xff]
        %v1880 = vld [vmem:[%s4 + $0x720] sm:$0xff]
        %v1881 = vld [vmem:[%s4 + $0x728] sm:$0xff]
        %v1882 = vld [vmem:[%s4 + $0x730] sm:$0xff]
        %v1883 = vld [vmem:[%s4 + $0x738] sm:$0xff]
        %v1884 = vld [vmem:[%s4 + $0x740] sm:$0xff]
        %v1885 = vld [vmem:[%s4 + $0x748] sm:$0xff]
        %v1886 = vld [vmem:[%s4 + $0x750] sm:$0xff]
        %v1887 = vld [vmem:[%s4 + $0x758] sm:$0xff]
        %v1888 = vld [vmem:[%s4 + $0x760] sm:$0xff]
        %v1889 = vld [vmem:[%s4 + $0x768] sm:$0xff]
        %v1890 = vld [vmem:[%s4 + $0x770] sm:$0xff]
        %v1891 = vld [vmem:[%s4 + $0x778] sm:$0xff]
        %v1892 = vld [vmem:[%s4 + $0x780] sm:$0xff]
        %v1893 = vld [vmem:[%s4 + $0x788] sm:$0xff]
        %v1894 = vld [vmem:[%s4 + $0x790] sm:$0xff]
        %v1895 = vld [vmem:[%s4 + $0x798] sm:$0xff]
        %v1896 = vld [vmem:[%s4 + $0x7a0] sm:$0xff]
        %v1897 = vld [vmem:[%s4 + $0x7a8] sm:$0xff]
        %v1898 = vld [vmem:[%s4 + $0x7b0] sm:$0xff]
        %v1899 = vld [vmem:[%s4 + $0x7b8] sm:$0xff]
        %v1900 = vld [vmem:[%s4 + $0x7c0] sm:$0xff]
        %v1901 = vld [vmem:[%s4 + $0x7c8] sm:$0xff]
        %v1902 = vld [vmem:[%s4 + $0x7d0] sm:$0xff]
        %v1903 = vld [vmem:[%s4 + $0x7d8] sm:$0xff]
        %v1904 = vld [vmem:[%s4 + $0x7e0] sm:$0xff]
        %v1905 = vld [vmem:[%s4 + $0x7e8] sm:$0xff]
        %v1906 = vld [vmem:[%s4 + $0x7f0] sm:$0xff]
        %v1907 = vld [vmem:[%s4 + $0x7f8] sm:$0xff]
        %s1908 = scalar_lea.vmem %s4, 2048
        %v1909 = vld [vmem:[%s1908] sm:$0xff]
        %v1910 = vld [vmem:[%s1908 + $0x8] sm:$0xff]
        %v1911 = vld [vmem:[%s1908 + $0x10] sm:$0xff]
        %v1912 = vld [vmem:[%s1908 + $0x18] sm:$0xff]
        %v1913 = vld [vmem:[%s1908 + $0x20] sm:$0xff]
        %v1914 = vld [vmem:[%s1908 + $0x28] sm:$0xff]
        %v1915 = vld [vmem:[%s1908 + $0x30] sm:$0xff]
        %v1916 = vld [vmem:[%s1908 + $0x38] sm:$0xff]
        %v1917 = vld [vmem:[%s1908 + $0x40] sm:$0xff]
        %v1918 = vld [vmem:[%s1908 + $0x48] sm:$0xff]
        %v1919 = vld [vmem:[%s1908 + $0x50] sm:$0xff]
        %v1920 = vld [vmem:[%s1908 + $0x58] sm:$0xff]
        %v1921 = vld [vmem:[%s1908 + $0x60] sm:$0xff]
        %v1922 = vld [vmem:[%s1908 + $0x68] sm:$0xff]
        %v1923 = vld [vmem:[%s1908 + $0x70] sm:$0xff]
        %v1924 = vld [vmem:[%s1908 + $0x78] sm:$0xff]
        %v1925 = vld [vmem:[%s1908 + $0x80] sm:$0xff]
        %v1926 = vld [vmem:[%s1908 + $0x88] sm:$0xff]
        %v1927 = vld [vmem:[%s1908 + $0x90] sm:$0xff]
        %v1928 = vld [vmem:[%s1908 + $0x98] sm:$0xff]
        %v1929 = vld [vmem:[%s1908 + $0xa0] sm:$0xff]
        %v1930 = vld [vmem:[%s1908 + $0xa8] sm:$0xff]
        %v1931 = vld [vmem:[%s1908 + $0xb0] sm:$0xff]
        %v1932 = vld [vmem:[%s1908 + $0xb8] sm:$0xff]
        %v1933 = vld [vmem:[%s1908 + $0xc0] sm:$0xff]
        %v1934 = vld [vmem:[%s1908 + $0xc8] sm:$0xff]
        %v1935 = vld [vmem:[%s1908 + $0xd0] sm:$0xff]
        %v1936 = vld [vmem:[%s1908 + $0xd8] sm:$0xff]
        %v1937 = vld [vmem:[%s1908 + $0xe0] sm:$0xff]
        %v1938 = vld [vmem:[%s1908 + $0xe8] sm:$0xff]
        %v1939 = vld [vmem:[%s1908 + $0xf0] sm:$0xff]
        %v1940 = vld [vmem:[%s1908 + $0xf8] sm:$0xff]
        %v1941 = vld [vmem:[%s1908 + $0x100] sm:$0xff]
        %v1942 = vld [vmem:[%s1908 + $0x108] sm:$0xff]
        %v1943 = vld [vmem:[%s1908 + $0x110] sm:$0xff]
        %v1944 = vld [vmem:[%s1908 + $0x118] sm:$0xff]
        %v1945 = vld [vmem:[%s1908 + $0x120] sm:$0xff]
        %v1946 = vld [vmem:[%s1908 + $0x128] sm:$0xff]
        %v1947 = vld [vmem:[%s1908 + $0x130] sm:$0xff]
        %v1948 = vld [vmem:[%s1908 + $0x138] sm:$0xff]
        %v1949 = vld [vmem:[%s1908 + $0x140] sm:$0xff]
        %v1950 = vld [vmem:[%s1908 + $0x148] sm:$0xff]
        %v1951 = vld [vmem:[%s1908 + $0x150] sm:$0xff]
        %v1952 = vld [vmem:[%s1908 + $0x158] sm:$0xff]
        %v1953 = vld [vmem:[%s1908 + $0x160] sm:$0xff]
        %v1954 = vld [vmem:[%s1908 + $0x168] sm:$0xff]
        %v1955 = vld [vmem:[%s1908 + $0x170] sm:$0xff]
        %v1956 = vld [vmem:[%s1908 + $0x178] sm:$0xff]
        %v1957 = vld [vmem:[%s1908 + $0x180] sm:$0xff]
        %v1958 = vld [vmem:[%s1908 + $0x188] sm:$0xff]
        %v1959 = vld [vmem:[%s1908 + $0x190] sm:$0xff]
        %v1960 = vld [vmem:[%s1908 + $0x198] sm:$0xff]
        %v1961 = vld [vmem:[%s1908 + $0x1a0] sm:$0xff]
        %v1962 = vld [vmem:[%s1908 + $0x1a8] sm:$0xff]
        %v1963 = vld [vmem:[%s1908 + $0x1b0] sm:$0xff]
        %v1964 = vld [vmem:[%s1908 + $0x1b8] sm:$0xff]
        %v1965 = vld [vmem:[%s1908 + $0x1c0] sm:$0xff]
        %v1966 = vld [vmem:[%s1908 + $0x1c8] sm:$0xff]
        %v1967 = vld [vmem:[%s1908 + $0x1d0] sm:$0xff]
        %v1968 = vld [vmem:[%s1908 + $0x1d8] sm:$0xff]
        %v1969 = vld [vmem:[%s1908 + $0x1e0] sm:$0xff]
        %v1970 = vld [vmem:[%s1908 + $0x1e8] sm:$0xff]
        %v1971 = vld [vmem:[%s1908 + $0x1f0] sm:$0xff]
        %v1972 = vld [vmem:[%s1908 + $0x1f8] sm:$0xff]
        %v1973 = vld [vmem:[%s1908 + $0x200] sm:$0xff]
        %v1974 = vld [vmem:[%s1908 + $0x208] sm:$0xff]
        %v1975 = vld [vmem:[%s1908 + $0x210] sm:$0xff]
        %v1976 = vld [vmem:[%s1908 + $0x218] sm:$0xff]
        %v1977 = vld [vmem:[%s1908 + $0x220] sm:$0xff]
        %v1978 = vld [vmem:[%s1908 + $0x228] sm:$0xff]
        %v1979 = vld [vmem:[%s1908 + $0x230] sm:$0xff]
        %v1980 = vld [vmem:[%s1908 + $0x238] sm:$0xff]
        %v1981 = vld [vmem:[%s1908 + $0x240] sm:$0xff]
        %v1982 = vld [vmem:[%s1908 + $0x248] sm:$0xff]
        %v1983 = vld [vmem:[%s1908 + $0x250] sm:$0xff]
        %v1984 = vld [vmem:[%s1908 + $0x258] sm:$0xff]
        %v1985 = vld [vmem:[%s1908 + $0x260] sm:$0xff]
        %v1986 = vld [vmem:[%s1908 + $0x268] sm:$0xff]
        %v1987 = vld [vmem:[%s1908 + $0x270] sm:$0xff]
        %v1988 = vld [vmem:[%s1908 + $0x278] sm:$0xff]
        %v1989 = vld [vmem:[%s1908 + $0x280] sm:$0xff]
        %v1990 = vld [vmem:[%s1908 + $0x288] sm:$0xff]
        %v1991 = vld [vmem:[%s1908 + $0x290] sm:$0xff]
        %v1992 = vld [vmem:[%s1908 + $0x298] sm:$0xff]
        %v1993 = vld [vmem:[%s1908 + $0x2a0] sm:$0xff]
        %v1994 = vld [vmem:[%s1908 + $0x2a8] sm:$0xff]
        %v1995 = vld [vmem:[%s1908 + $0x2b0] sm:$0xff]
        %v1996 = vld [vmem:[%s1908 + $0x2b8] sm:$0xff]
        %v1997 = vld [vmem:[%s1908 + $0x2c0] sm:$0xff]
        %v1998 = vld [vmem:[%s1908 + $0x2c8] sm:$0xff]
        %v1999 = vld [vmem:[%s1908 + $0x2d0] sm:$0xff]
        %v2000 = vld [vmem:[%s1908 + $0x2d8] sm:$0xff]
        %v2001 = vld [vmem:[%s1908 + $0x2e0] sm:$0xff]
        %v2002 = vld [vmem:[%s1908 + $0x2e8] sm:$0xff]
        %v2003 = vld [vmem:[%s1908 + $0x2f0] sm:$0xff]
        %v2004 = vld [vmem:[%s1908 + $0x2f8] sm:$0xff]
        %v2005 = vld [vmem:[%s1908 + $0x300] sm:$0xff]
        %v2006 = vld [vmem:[%s1908 + $0x308] sm:$0xff]
        %v2007 = vld [vmem:[%s1908 + $0x310] sm:$0xff]
        %v2008 = vld [vmem:[%s1908 + $0x318] sm:$0xff]
        %v2009 = vld [vmem:[%s1908 + $0x320] sm:$0xff]
        %v2010 = vld [vmem:[%s1908 + $0x328] sm:$0xff]
        %v2011 = vld [vmem:[%s1908 + $0x330] sm:$0xff]
        %v2012 = vld [vmem:[%s1908 + $0x338] sm:$0xff]
        %v2013 = vld [vmem:[%s1908 + $0x340] sm:$0xff]
        %v2014 = vld [vmem:[%s1908 + $0x348] sm:$0xff]
        %v2015 = vld [vmem:[%s1908 + $0x350] sm:$0xff]
        %v2016 = vld [vmem:[%s1908 + $0x358] sm:$0xff]
        %v2017 = vld [vmem:[%s1908 + $0x360] sm:$0xff]
        %v2018 = vld [vmem:[%s1908 + $0x368] sm:$0xff]
        %v2019 = vld [vmem:[%s1908 + $0x370] sm:$0xff]
        %v2020 = vld [vmem:[%s1908 + $0x378] sm:$0xff]
        %v2021 = vld [vmem:[%s1908 + $0x380] sm:$0xff]
        %v2022 = vld [vmem:[%s1908 + $0x388] sm:$0xff]
        %v2023 = vld [vmem:[%s1908 + $0x390] sm:$0xff]
        %v2024 = vld [vmem:[%s1908 + $0x398] sm:$0xff]
        %v2025 = vld [vmem:[%s1908 + $0x3a0] sm:$0xff]
        %v2026 = vld [vmem:[%s1908 + $0x3a8] sm:$0xff]
        %v2027 = vld [vmem:[%s1908 + $0x3b0] sm:$0xff]
        %v2028 = vld [vmem:[%s1908 + $0x3b8] sm:$0xff]
        %v2029 = vld [vmem:[%s1908 + $0x3c0] sm:$0xff]
        %v2030 = vld [vmem:[%s1908 + $0x3c8] sm:$0xff]
        %v2031 = vld [vmem:[%s1908 + $0x3d0] sm:$0xff]
        %v2032 = vld [vmem:[%s1908 + $0x3d8] sm:$0xff]
        %v2033 = vld [vmem:[%s1908 + $0x3e0] sm:$0xff]
        %v2034 = vld [vmem:[%s1908 + $0x3e8] sm:$0xff]
        %v2035 = vld [vmem:[%s1908 + $0x3f0] sm:$0xff]
        %v2036 = vld [vmem:[%s1908 + $0x3f8] sm:$0xff]
        %v2037 = vld [vmem:[%s1908 + $0x400] sm:$0xff]
        %v2038 = vld [vmem:[%s1908 + $0x408] sm:$0xff]
        %v2039 = vld [vmem:[%s1908 + $0x410] sm:$0xff]
        %v2040 = vld [vmem:[%s1908 + $0x418] sm:$0xff]
        %v2041 = vld [vmem:[%s1908 + $0x420] sm:$0xff]
        %v2042 = vld [vmem:[%s1908 + $0x428] sm:$0xff]
        %v2043 = vld [vmem:[%s1908 + $0x430] sm:$0xff]
        %v2044 = vld [vmem:[%s1908 + $0x438] sm:$0xff]
        %v2045 = vld [vmem:[%s1908 + $0x440] sm:$0xff]
        %v2046 = vld [vmem:[%s1908 + $0x448] sm:$0xff]
        %v2047 = vld [vmem:[%s1908 + $0x450] sm:$0xff]
        %v2048 = vld [vmem:[%s1908 + $0x458] sm:$0xff]
        %v2049 = vld [vmem:[%s1908 + $0x460] sm:$0xff]
        %v2050 = vld [vmem:[%s1908 + $0x468] sm:$0xff]
        %v2051 = vld [vmem:[%s1908 + $0x470] sm:$0xff]
        %v2052 = vld [vmem:[%s1908 + $0x478] sm:$0xff]
        %v2053 = vld [vmem:[%s1908 + $0x480] sm:$0xff]
        %v2054 = vld [vmem:[%s1908 + $0x488] sm:$0xff]
        %v2055 = vld [vmem:[%s1908 + $0x490] sm:$0xff]
        %v2056 = vld [vmem:[%s1908 + $0x498] sm:$0xff]
        %v2057 = vld [vmem:[%s1908 + $0x4a0] sm:$0xff]
        %v2058 = vld [vmem:[%s1908 + $0x4a8] sm:$0xff]
        %v2059 = vld [vmem:[%s1908 + $0x4b0] sm:$0xff]
        %v2060 = vld [vmem:[%s1908 + $0x4b8] sm:$0xff]
        %v2061 = vld [vmem:[%s1908 + $0x4c0] sm:$0xff]
        %v2062 = vld [vmem:[%s1908 + $0x4c8] sm:$0xff]
        %v2063 = vld [vmem:[%s1908 + $0x4d0] sm:$0xff]
        %v2064 = vld [vmem:[%s1908 + $0x4d8] sm:$0xff]
        %v2065 = vld [vmem:[%s1908 + $0x4e0] sm:$0xff]
        %v2066 = vld [vmem:[%s1908 + $0x4e8] sm:$0xff]
        %v2067 = vld [vmem:[%s1908 + $0x4f0] sm:$0xff]
        %v2068 = vld [vmem:[%s1908 + $0x4f8] sm:$0xff]
        %v2069 = vld [vmem:[%s1908 + $0x500] sm:$0xff]
        %v2070 = vld [vmem:[%s1908 + $0x508] sm:$0xff]
        %v2071 = vld [vmem:[%s1908 + $0x510] sm:$0xff]
        %v2072 = vld [vmem:[%s1908 + $0x518] sm:$0xff]
        %v2073 = vld [vmem:[%s1908 + $0x520] sm:$0xff]
        %v2074 = vld [vmem:[%s1908 + $0x528] sm:$0xff]
        %v2075 = vld [vmem:[%s1908 + $0x530] sm:$0xff]
        %v2076 = vld [vmem:[%s1908 + $0x538] sm:$0xff]
        %v2077 = vld [vmem:[%s1908 + $0x540] sm:$0xff]
        %v2078 = vld [vmem:[%s1908 + $0x548] sm:$0xff]
        %v2079 = vld [vmem:[%s1908 + $0x550] sm:$0xff]
        %v2080 = vld [vmem:[%s1908 + $0x558] sm:$0xff]
        %v2081 = vld [vmem:[%s1908 + $0x560] sm:$0xff]
        %v2082 = vld [vmem:[%s1908 + $0x568] sm:$0xff]
        %v2083 = vld [vmem:[%s1908 + $0x570] sm:$0xff]
        %v2084 = vld [vmem:[%s1908 + $0x578] sm:$0xff]
        %v2085 = vld [vmem:[%s1908 + $0x580] sm:$0xff]
        %v2086 = vld [vmem:[%s1908 + $0x588] sm:$0xff]
        %v2087 = vld [vmem:[%s1908 + $0x590] sm:$0xff]
        %v2088 = vld [vmem:[%s1908 + $0x598] sm:$0xff]
        %v2089 = vld [vmem:[%s1908 + $0x5a0] sm:$0xff]
        %v2090 = vld [vmem:[%s1908 + $0x5a8] sm:$0xff]
        %v2091 = vld [vmem:[%s1908 + $0x5b0] sm:$0xff]
        %v2092 = vld [vmem:[%s1908 + $0x5b8] sm:$0xff]
        %v2093 = vld [vmem:[%s1908 + $0x5c0] sm:$0xff]
        %v2094 = vld [vmem:[%s1908 + $0x5c8] sm:$0xff]
        %v2095 = vld [vmem:[%s1908 + $0x5d0] sm:$0xff]
        %v2096 = vld [vmem:[%s1908 + $0x5d8] sm:$0xff]
        %v2097 = vld [vmem:[%s1908 + $0x5e0] sm:$0xff]
        %v2098 = vld [vmem:[%s1908 + $0x5e8] sm:$0xff]
        %v2099 = vld [vmem:[%s1908 + $0x5f0] sm:$0xff]
        %v2100 = vld [vmem:[%s1908 + $0x5f8] sm:$0xff]
        %v2101 = vld [vmem:[%s1908 + $0x600] sm:$0xff]
        %v2102 = vld [vmem:[%s1908 + $0x608] sm:$0xff]
        %v2103 = vld [vmem:[%s1908 + $0x610] sm:$0xff]
        %v2104 = vld [vmem:[%s1908 + $0x618] sm:$0xff]
        %v2105 = vld [vmem:[%s1908 + $0x620] sm:$0xff]
        %v2106 = vld [vmem:[%s1908 + $0x628] sm:$0xff]
        %v2107 = vld [vmem:[%s1908 + $0x630] sm:$0xff]
        %v2108 = vld [vmem:[%s1908 + $0x638] sm:$0xff]
        %v2109 = vld [vmem:[%s1908 + $0x640] sm:$0xff]
        %v2110 = vld [vmem:[%s1908 + $0x648] sm:$0xff]
        %v2111 = vld [vmem:[%s1908 + $0x650] sm:$0xff]
        %v2112 = vld [vmem:[%s1908 + $0x658] sm:$0xff]
        %v2113 = vld [vmem:[%s1908 + $0x660] sm:$0xff]
        %v2114 = vld [vmem:[%s1908 + $0x668] sm:$0xff]
        %v2115 = vld [vmem:[%s1908 + $0x670] sm:$0xff]
        %v2116 = vld [vmem:[%s1908 + $0x678] sm:$0xff]
        %v2117 = vld [vmem:[%s1908 + $0x680] sm:$0xff]
        %v2118 = vld [vmem:[%s1908 + $0x688] sm:$0xff]
        %v2119 = vld [vmem:[%s1908 + $0x690] sm:$0xff]
        %v2120 = vld [vmem:[%s1908 + $0x698] sm:$0xff]
        %v2121 = vld [vmem:[%s1908 + $0x6a0] sm:$0xff]
        %v2122 = vld [vmem:[%s1908 + $0x6a8] sm:$0xff]
        %v2123 = vld [vmem:[%s1908 + $0x6b0] sm:$0xff]
        %v2124 = vld [vmem:[%s1908 + $0x6b8] sm:$0xff]
        %v2125 = vld [vmem:[%s1908 + $0x6c0] sm:$0xff]
        %v2126 = vld [vmem:[%s1908 + $0x6c8] sm:$0xff]
        %v2127 = vld [vmem:[%s1908 + $0x6d0] sm:$0xff]
        %v2128 = vld [vmem:[%s1908 + $0x6d8] sm:$0xff]
        %v2129 = vld [vmem:[%s1908 + $0x6e0] sm:$0xff]
        %v2130 = vld [vmem:[%s1908 + $0x6e8] sm:$0xff]
        %v2131 = vld [vmem:[%s1908 + $0x6f0] sm:$0xff]
        %v2132 = vld [vmem:[%s1908 + $0x6f8] sm:$0xff]
        %v2133 = vld [vmem:[%s1908 + $0x700] sm:$0xff]
        %v2134 = vld [vmem:[%s1908 + $0x708] sm:$0xff]
        %v2135 = vld [vmem:[%s1908 + $0x710] sm:$0xff]
        %v2136 = vld [vmem:[%s1908 + $0x718] sm:$0xff]
        %v2137 = vld [vmem:[%s1908 + $0x720] sm:$0xff]
        %v2138 = vld [vmem:[%s1908 + $0x728] sm:$0xff]
        %v2139 = vld [vmem:[%s1908 + $0x730] sm:$0xff]
        %v2140 = vld [vmem:[%s1908 + $0x738] sm:$0xff]
        %v2141 = vld [vmem:[%s1908 + $0x740] sm:$0xff]
        %v2142 = vld [vmem:[%s1908 + $0x748] sm:$0xff]
        %v2143 = vld [vmem:[%s1908 + $0x750] sm:$0xff]
        %v2144 = vld [vmem:[%s1908 + $0x758] sm:$0xff]
        %v2145 = vld [vmem:[%s1908 + $0x760] sm:$0xff]
        %v2146 = vld [vmem:[%s1908 + $0x768] sm:$0xff]
        %v2147 = vld [vmem:[%s1908 + $0x770] sm:$0xff]
        %v2148 = vld [vmem:[%s1908 + $0x778] sm:$0xff]
        %v2149 = vld [vmem:[%s1908 + $0x780] sm:$0xff]
        %v2150 = vld [vmem:[%s1908 + $0x788] sm:$0xff]
        %v2151 = vld [vmem:[%s1908 + $0x790] sm:$0xff]
        %v2152 = vld [vmem:[%s1908 + $0x798] sm:$0xff]
        %v2153 = vld [vmem:[%s1908 + $0x7a0] sm:$0xff]
        %v2154 = vld [vmem:[%s1908 + $0x7a8] sm:$0xff]
        %v2155 = vld [vmem:[%s1908 + $0x7b0] sm:$0xff]
        %v2156 = vld [vmem:[%s1908 + $0x7b8] sm:$0xff]
        %v2157 = vld [vmem:[%s1908 + $0x7c0] sm:$0xff]
        %v2158 = vld [vmem:[%s1908 + $0x7c8] sm:$0xff]
        %v2159 = vld [vmem:[%s1908 + $0x7d0] sm:$0xff]
        %v2160 = vld [vmem:[%s1908 + $0x7d8] sm:$0xff]
        %v2161 = vld [vmem:[%s1908 + $0x7e0] sm:$0xff]
        %v2162 = vld [vmem:[%s1908 + $0x7e8] sm:$0xff]
        %v2163 = vld [vmem:[%s1908 + $0x7f0] sm:$0xff]
        %v2164 = vld [vmem:[%s1908 + $0x7f8] sm:$0xff]
        %v2421 = vunpack.c.l.b16 %v1909
        %v2422 = vunpack.c.h.b16 %v1909
        %v2423 = vunpack.c.l.b16 %v1910
        %v2424 = vunpack.c.h.b16 %v1910
        %v2425 = vunpack.c.l.b16 %v1911
        %v2426 = vunpack.c.h.b16 %v1911
        %v2427 = vunpack.c.l.b16 %v1912
        %v2428 = vunpack.c.h.b16 %v1912
        %v2429 = vunpack.c.l.b16 %v1913
        %v2430 = vunpack.c.h.b16 %v1913
        %v2431 = vunpack.c.l.b16 %v1914
        %v2432 = vunpack.c.h.b16 %v1914
        %v2433 = vunpack.c.l.b16 %v1915
        %v2434 = vunpack.c.h.b16 %v1915
        %v2435 = vunpack.c.l.b16 %v1916
        %v2436 = vunpack.c.h.b16 %v1916
        %v2437 = vunpack.c.l.b16 %v1917
        %v2438 = vunpack.c.h.b16 %v1917
        %v2439 = vunpack.c.l.b16 %v1918
        %v2440 = vunpack.c.h.b16 %v1918
        %v2441 = vunpack.c.l.b16 %v1919
        %v2442 = vunpack.c.h.b16 %v1919
        %v2443 = vunpack.c.l.b16 %v1920
        %v2444 = vunpack.c.h.b16 %v1920
        %v2445 = vunpack.c.l.b16 %v1921
        %v2446 = vunpack.c.h.b16 %v1921
        %v2447 = vunpack.c.l.b16 %v1922
        %v2448 = vunpack.c.h.b16 %v1922
        %v2449 = vunpack.c.l.b16 %v1923
        %v2450 = vunpack.c.h.b16 %v1923
        %v2451 = vunpack.c.l.b16 %v1924
        %v2452 = vunpack.c.h.b16 %v1924
        %v2453 = vunpack.c.l.b16 %v1925
        %v2454 = vunpack.c.h.b16 %v1925
        %v2455 = vunpack.c.l.b16 %v1926
        %v2456 = vunpack.c.h.b16 %v1926
        %v2457 = vunpack.c.l.b16 %v1927
        %v2458 = vunpack.c.h.b16 %v1927
        %v2459 = vunpack.c.l.b16 %v1928
        %v2460 = vunpack.c.h.b16 %v1928
        %v2461 = vunpack.c.l.b16 %v1929
        %v2462 = vunpack.c.h.b16 %v1929
        %v2463 = vunpack.c.l.b16 %v1930
        %v2464 = vunpack.c.h.b16 %v1930
        %v2465 = vunpack.c.l.b16 %v1931
        %v2466 = vunpack.c.h.b16 %v1931
        %v2467 = vunpack.c.l.b16 %v1932
        %v2468 = vunpack.c.h.b16 %v1932
        %v2469 = vunpack.c.l.b16 %v1933
        %v2470 = vunpack.c.h.b16 %v1933
        %v2471 = vunpack.c.l.b16 %v1934
        %v2472 = vunpack.c.h.b16 %v1934
        %v2473 = vunpack.c.l.b16 %v1935
        %v2474 = vunpack.c.h.b16 %v1935
        %v2475 = vunpack.c.l.b16 %v1936
        %v2476 = vunpack.c.h.b16 %v1936
        %v2477 = vunpack.c.l.b16 %v1937
        %v2478 = vunpack.c.h.b16 %v1937
        %v2479 = vunpack.c.l.b16 %v1938
        %v2480 = vunpack.c.h.b16 %v1938
        %v2481 = vunpack.c.l.b16 %v1939
        %v2482 = vunpack.c.h.b16 %v1939
        %v2483 = vunpack.c.l.b16 %v1940
        %v2484 = vunpack.c.h.b16 %v1940
        %v2485 = vunpack.c.l.b16 %v1941
        %v2486 = vunpack.c.h.b16 %v1941
        %v2487 = vunpack.c.l.b16 %v1942
        %v2488 = vunpack.c.h.b16 %v1942
        %v2489 = vunpack.c.l.b16 %v1943
        %v2490 = vunpack.c.h.b16 %v1943
        %v2491 = vunpack.c.l.b16 %v1944
        %v2492 = vunpack.c.h.b16 %v1944
        %v2493 = vunpack.c.l.b16 %v1945
        %v2494 = vunpack.c.h.b16 %v1945
        %v2495 = vunpack.c.l.b16 %v1946
        %v2496 = vunpack.c.h.b16 %v1946
        %v2497 = vunpack.c.l.b16 %v1947
        %v2498 = vunpack.c.h.b16 %v1947
        %v2499 = vunpack.c.l.b16 %v1948
        %v2500 = vunpack.c.h.b16 %v1948
        %v2501 = vunpack.c.l.b16 %v1949
        %v2502 = vunpack.c.h.b16 %v1949
        %v2503 = vunpack.c.l.b16 %v1950
        %v2504 = vunpack.c.h.b16 %v1950
        %v2505 = vunpack.c.l.b16 %v1951
        %v2506 = vunpack.c.h.b16 %v1951
        %v2507 = vunpack.c.l.b16 %v1952
        %v2508 = vunpack.c.h.b16 %v1952
        %v2509 = vunpack.c.l.b16 %v1953
        %v2510 = vunpack.c.h.b16 %v1953
        %v2511 = vunpack.c.l.b16 %v1954
        %v2512 = vunpack.c.h.b16 %v1954
        %v2513 = vunpack.c.l.b16 %v1955
        %v2514 = vunpack.c.h.b16 %v1955
        %v2515 = vunpack.c.l.b16 %v1956
        %v2516 = vunpack.c.h.b16 %v1956
        %v2517 = vunpack.c.l.b16 %v1957
        %v2518 = vunpack.c.h.b16 %v1957
        %v2519 = vunpack.c.l.b16 %v1958
        %v2520 = vunpack.c.h.b16 %v1958
        %v2521 = vunpack.c.l.b16 %v1959
        %v2522 = vunpack.c.h.b16 %v1959
        %v2523 = vunpack.c.l.b16 %v1960
        %v2524 = vunpack.c.h.b16 %v1960
        %v2525 = vunpack.c.l.b16 %v1961
        %v2526 = vunpack.c.h.b16 %v1961
        %v2527 = vunpack.c.l.b16 %v1962
        %v2528 = vunpack.c.h.b16 %v1962
        %v2529 = vunpack.c.l.b16 %v1963
        %v2530 = vunpack.c.h.b16 %v1963
        %v2531 = vunpack.c.l.b16 %v1964
        %v2532 = vunpack.c.h.b16 %v1964
        %v2533 = vunpack.c.l.b16 %v1965
        %v2534 = vunpack.c.h.b16 %v1965
        %v2535 = vunpack.c.l.b16 %v1966
        %v2536 = vunpack.c.h.b16 %v1966
        %v2537 = vunpack.c.l.b16 %v1967
        %v2538 = vunpack.c.h.b16 %v1967
        %v2539 = vunpack.c.l.b16 %v1968
        %v2540 = vunpack.c.h.b16 %v1968
        %v2541 = vunpack.c.l.b16 %v1969
        %v2542 = vunpack.c.h.b16 %v1969
        %v2543 = vunpack.c.l.b16 %v1970
        %v2544 = vunpack.c.h.b16 %v1970
        %v2545 = vunpack.c.l.b16 %v1971
        %v2546 = vunpack.c.h.b16 %v1971
        %v2547 = vunpack.c.l.b16 %v1972
        %v2548 = vunpack.c.h.b16 %v1972
        %v2549 = vunpack.c.l.b16 %v1973
        %v2550 = vunpack.c.h.b16 %v1973
        %v2551 = vunpack.c.l.b16 %v1974
        %v2552 = vunpack.c.h.b16 %v1974
        %v2553 = vunpack.c.l.b16 %v1975
        %v2554 = vunpack.c.h.b16 %v1975
        %v2555 = vunpack.c.l.b16 %v1976
        %v2556 = vunpack.c.h.b16 %v1976
        %v2557 = vunpack.c.l.b16 %v1977
        %v2558 = vunpack.c.h.b16 %v1977
        %v2559 = vunpack.c.l.b16 %v1978
        %v2560 = vunpack.c.h.b16 %v1978
        %v2561 = vunpack.c.l.b16 %v1979
        %v2562 = vunpack.c.h.b16 %v1979
        %v2563 = vunpack.c.l.b16 %v1980
        %v2564 = vunpack.c.h.b16 %v1980
        %v2565 = vunpack.c.l.b16 %v1981
        %v2566 = vunpack.c.h.b16 %v1981
        %v2567 = vunpack.c.l.b16 %v1982
        %v2568 = vunpack.c.h.b16 %v1982
        %v2569 = vunpack.c.l.b16 %v1983
        %v2570 = vunpack.c.h.b16 %v1983
        %v2571 = vunpack.c.l.b16 %v1984
        %v2572 = vunpack.c.h.b16 %v1984
        %v2573 = vunpack.c.l.b16 %v1985
        %v2574 = vunpack.c.h.b16 %v1985
        %v2575 = vunpack.c.l.b16 %v1986
        %v2576 = vunpack.c.h.b16 %v1986
        %v2577 = vunpack.c.l.b16 %v1987
        %v2578 = vunpack.c.h.b16 %v1987
        %v2579 = vunpack.c.l.b16 %v1988
        %v2580 = vunpack.c.h.b16 %v1988
        %v2581 = vunpack.c.l.b16 %v1989
        %v2582 = vunpack.c.h.b16 %v1989
        %v2583 = vunpack.c.l.b16 %v1990
        %v2584 = vunpack.c.h.b16 %v1990
        %v2585 = vunpack.c.l.b16 %v1991
        %v2586 = vunpack.c.h.b16 %v1991
        %v2587 = vunpack.c.l.b16 %v1992
        %v2588 = vunpack.c.h.b16 %v1992
        %v2589 = vunpack.c.l.b16 %v1993
        %v2590 = vunpack.c.h.b16 %v1993
        %v2591 = vunpack.c.l.b16 %v1994
        %v2592 = vunpack.c.h.b16 %v1994
        %v2593 = vunpack.c.l.b16 %v1995
        %v2594 = vunpack.c.h.b16 %v1995
        %v2595 = vunpack.c.l.b16 %v1996
        %v2596 = vunpack.c.h.b16 %v1996
        %v2597 = vunpack.c.l.b16 %v1997
        %v2598 = vunpack.c.h.b16 %v1997
        %v2599 = vunpack.c.l.b16 %v1998
        %v2600 = vunpack.c.h.b16 %v1998
        %v2601 = vunpack.c.l.b16 %v1999
        %v2602 = vunpack.c.h.b16 %v1999
        %v2603 = vunpack.c.l.b16 %v2000
        %v2604 = vunpack.c.h.b16 %v2000
        %v2605 = vunpack.c.l.b16 %v2001
        %v2606 = vunpack.c.h.b16 %v2001
        %v2607 = vunpack.c.l.b16 %v2002
        %v2608 = vunpack.c.h.b16 %v2002
        %v2609 = vunpack.c.l.b16 %v2003
        %v2610 = vunpack.c.h.b16 %v2003
        %v2611 = vunpack.c.l.b16 %v2004
        %v2612 = vunpack.c.h.b16 %v2004
        %v2613 = vunpack.c.l.b16 %v2005
        %v2614 = vunpack.c.h.b16 %v2005
        %v2615 = vunpack.c.l.b16 %v2006
        %v2616 = vunpack.c.h.b16 %v2006
        %v2617 = vunpack.c.l.b16 %v2007
        %v2618 = vunpack.c.h.b16 %v2007
        %v2619 = vunpack.c.l.b16 %v2008
        %v2620 = vunpack.c.h.b16 %v2008
        %v2621 = vunpack.c.l.b16 %v2009
        %v2622 = vunpack.c.h.b16 %v2009
        %v2623 = vunpack.c.l.b16 %v2010
        %v2624 = vunpack.c.h.b16 %v2010
        %v2625 = vunpack.c.l.b16 %v2011
        %v2626 = vunpack.c.h.b16 %v2011
        %v2627 = vunpack.c.l.b16 %v2012
        %v2628 = vunpack.c.h.b16 %v2012
        %v2629 = vunpack.c.l.b16 %v2013
        %v2630 = vunpack.c.h.b16 %v2013
        %v2631 = vunpack.c.l.b16 %v2014
        %v2632 = vunpack.c.h.b16 %v2014
        %v2633 = vunpack.c.l.b16 %v2015
        %v2634 = vunpack.c.h.b16 %v2015
        %v2635 = vunpack.c.l.b16 %v2016
        %v2636 = vunpack.c.h.b16 %v2016
        %v2637 = vunpack.c.l.b16 %v2017
        %v2638 = vunpack.c.h.b16 %v2017
        %v2639 = vunpack.c.l.b16 %v2018
        %v2640 = vunpack.c.h.b16 %v2018
        %v2641 = vunpack.c.l.b16 %v2019
        %v2642 = vunpack.c.h.b16 %v2019
        %v2643 = vunpack.c.l.b16 %v2020
        %v2644 = vunpack.c.h.b16 %v2020
        %v2645 = vunpack.c.l.b16 %v2021
        %v2646 = vunpack.c.h.b16 %v2021
        %v2647 = vunpack.c.l.b16 %v2022
        %v2648 = vunpack.c.h.b16 %v2022
        %v2649 = vunpack.c.l.b16 %v2023
        %v2650 = vunpack.c.h.b16 %v2023
        %v2651 = vunpack.c.l.b16 %v2024
        %v2652 = vunpack.c.h.b16 %v2024
        %v2653 = vunpack.c.l.b16 %v2025
        %v2654 = vunpack.c.h.b16 %v2025
        %v2655 = vunpack.c.l.b16 %v2026
        %v2656 = vunpack.c.h.b16 %v2026
        %v2657 = vunpack.c.l.b16 %v2027
        %v2658 = vunpack.c.h.b16 %v2027
        %v2659 = vunpack.c.l.b16 %v2028
        %v2660 = vunpack.c.h.b16 %v2028
        %v2661 = vunpack.c.l.b16 %v2029
        %v2662 = vunpack.c.h.b16 %v2029
        %v2663 = vunpack.c.l.b16 %v2030
        %v2664 = vunpack.c.h.b16 %v2030
        %v2665 = vunpack.c.l.b16 %v2031
        %v2666 = vunpack.c.h.b16 %v2031
        %v2667 = vunpack.c.l.b16 %v2032
        %v2668 = vunpack.c.h.b16 %v2032
        %v2669 = vunpack.c.l.b16 %v2033
        %v2670 = vunpack.c.h.b16 %v2033
        %v2671 = vunpack.c.l.b16 %v2034
        %v2672 = vunpack.c.h.b16 %v2034
        %v2673 = vunpack.c.l.b16 %v2035
        %v2674 = vunpack.c.h.b16 %v2035
        %v2675 = vunpack.c.l.b16 %v2036
        %v2676 = vunpack.c.h.b16 %v2036
        %v2677 = vunpack.c.l.b16 %v2037
        %v2678 = vunpack.c.h.b16 %v2037
        %v2679 = vunpack.c.l.b16 %v2038
        %v2680 = vunpack.c.h.b16 %v2038
        %v2681 = vunpack.c.l.b16 %v2039
        %v2682 = vunpack.c.h.b16 %v2039
        %v2683 = vunpack.c.l.b16 %v2040
        %v2684 = vunpack.c.h.b16 %v2040
        %v2685 = vunpack.c.l.b16 %v2041
        %v2686 = vunpack.c.h.b16 %v2041
        %v2687 = vunpack.c.l.b16 %v2042
        %v2688 = vunpack.c.h.b16 %v2042
        %v2689 = vunpack.c.l.b16 %v2043
        %v2690 = vunpack.c.h.b16 %v2043
        %v2691 = vunpack.c.l.b16 %v2044
        %v2692 = vunpack.c.h.b16 %v2044
        %v2693 = vunpack.c.l.b16 %v2045
        %v2694 = vunpack.c.h.b16 %v2045
        %v2695 = vunpack.c.l.b16 %v2046
        %v2696 = vunpack.c.h.b16 %v2046
        %v2697 = vunpack.c.l.b16 %v2047
        %v2698 = vunpack.c.h.b16 %v2047
        %v2699 = vunpack.c.l.b16 %v2048
        %v2700 = vunpack.c.h.b16 %v2048
        %v2701 = vunpack.c.l.b16 %v2049
        %v2702 = vunpack.c.h.b16 %v2049
        %v2703 = vunpack.c.l.b16 %v2050
        %v2704 = vunpack.c.h.b16 %v2050
        %v2705 = vunpack.c.l.b16 %v2051
        %v2706 = vunpack.c.h.b16 %v2051
        %v2707 = vunpack.c.l.b16 %v2052
        %v2708 = vunpack.c.h.b16 %v2052
        %v2709 = vunpack.c.l.b16 %v2053
        %v2710 = vunpack.c.h.b16 %v2053
        %v2711 = vunpack.c.l.b16 %v2054
        %v2712 = vunpack.c.h.b16 %v2054
        %v2713 = vunpack.c.l.b16 %v2055
        %v2714 = vunpack.c.h.b16 %v2055
        %v2715 = vunpack.c.l.b16 %v2056
        %v2716 = vunpack.c.h.b16 %v2056
        %v2717 = vunpack.c.l.b16 %v2057
        %v2718 = vunpack.c.h.b16 %v2057
        %v2719 = vunpack.c.l.b16 %v2058
        %v2720 = vunpack.c.h.b16 %v2058
        %v2721 = vunpack.c.l.b16 %v2059
        %v2722 = vunpack.c.h.b16 %v2059
        %v2723 = vunpack.c.l.b16 %v2060
        %v2724 = vunpack.c.h.b16 %v2060
        %v2725 = vunpack.c.l.b16 %v2061
        %v2726 = vunpack.c.h.b16 %v2061
        %v2727 = vunpack.c.l.b16 %v2062
        %v2728 = vunpack.c.h.b16 %v2062
        %v2729 = vunpack.c.l.b16 %v2063
        %v2730 = vunpack.c.h.b16 %v2063
        %v2731 = vunpack.c.l.b16 %v2064
        %v2732 = vunpack.c.h.b16 %v2064
        %v2733 = vunpack.c.l.b16 %v2065
        %v2734 = vunpack.c.h.b16 %v2065
        %v2735 = vunpack.c.l.b16 %v2066
        %v2736 = vunpack.c.h.b16 %v2066
        %v2737 = vunpack.c.l.b16 %v2067
        %v2738 = vunpack.c.h.b16 %v2067
        %v2739 = vunpack.c.l.b16 %v2068
        %v2740 = vunpack.c.h.b16 %v2068
        %v2741 = vunpack.c.l.b16 %v2069
        %v2742 = vunpack.c.h.b16 %v2069
        %v2743 = vunpack.c.l.b16 %v2070
        %v2744 = vunpack.c.h.b16 %v2070
        %v2745 = vunpack.c.l.b16 %v2071
        %v2746 = vunpack.c.h.b16 %v2071
        %v2747 = vunpack.c.l.b16 %v2072
        %v2748 = vunpack.c.h.b16 %v2072
        %v2749 = vunpack.c.l.b16 %v2073
        %v2750 = vunpack.c.h.b16 %v2073
        %v2751 = vunpack.c.l.b16 %v2074
        %v2752 = vunpack.c.h.b16 %v2074
        %v2753 = vunpack.c.l.b16 %v2075
        %v2754 = vunpack.c.h.b16 %v2075
        %v2755 = vunpack.c.l.b16 %v2076
        %v2756 = vunpack.c.h.b16 %v2076
        %v2757 = vunpack.c.l.b16 %v2077
        %v2758 = vunpack.c.h.b16 %v2077
        %v2759 = vunpack.c.l.b16 %v2078
        %v2760 = vunpack.c.h.b16 %v2078
        %v2761 = vunpack.c.l.b16 %v2079
        %v2762 = vunpack.c.h.b16 %v2079
        %v2763 = vunpack.c.l.b16 %v2080
        %v2764 = vunpack.c.h.b16 %v2080
        %v2765 = vunpack.c.l.b16 %v2081
        %v2766 = vunpack.c.h.b16 %v2081
        %v2767 = vunpack.c.l.b16 %v2082
        %v2768 = vunpack.c.h.b16 %v2082
        %v2769 = vunpack.c.l.b16 %v2083
        %v2770 = vunpack.c.h.b16 %v2083
        %v2771 = vunpack.c.l.b16 %v2084
        %v2772 = vunpack.c.h.b16 %v2084
        %v2773 = vunpack.c.l.b16 %v2085
        %v2774 = vunpack.c.h.b16 %v2085
        %v2775 = vunpack.c.l.b16 %v2086
        %v2776 = vunpack.c.h.b16 %v2086
        %v2777 = vunpack.c.l.b16 %v2087
        %v2778 = vunpack.c.h.b16 %v2087
        %v2779 = vunpack.c.l.b16 %v2088
        %v2780 = vunpack.c.h.b16 %v2088
        %v2781 = vunpack.c.l.b16 %v2089
        %v2782 = vunpack.c.h.b16 %v2089
        %v2783 = vunpack.c.l.b16 %v2090
        %v2784 = vunpack.c.h.b16 %v2090
        %v2785 = vunpack.c.l.b16 %v2091
        %v2786 = vunpack.c.h.b16 %v2091
        %v2787 = vunpack.c.l.b16 %v2092
        %v2788 = vunpack.c.h.b16 %v2092
        %v2789 = vunpack.c.l.b16 %v2093
        %v2790 = vunpack.c.h.b16 %v2093
        %v2791 = vunpack.c.l.b16 %v2094
        %v2792 = vunpack.c.h.b16 %v2094
        %v2793 = vunpack.c.l.b16 %v2095
        %v2794 = vunpack.c.h.b16 %v2095
        %v2795 = vunpack.c.l.b16 %v2096
        %v2796 = vunpack.c.h.b16 %v2096
        %v2797 = vunpack.c.l.b16 %v2097
        %v2798 = vunpack.c.h.b16 %v2097
        %v2799 = vunpack.c.l.b16 %v2098
        %v2800 = vunpack.c.h.b16 %v2098
        %v2801 = vunpack.c.l.b16 %v2099
        %v2802 = vunpack.c.h.b16 %v2099
        %v2803 = vunpack.c.l.b16 %v2100
        %v2804 = vunpack.c.h.b16 %v2100
        %v2805 = vunpack.c.l.b16 %v2101
        %v2806 = vunpack.c.h.b16 %v2101
        %v2807 = vunpack.c.l.b16 %v2102
        %v2808 = vunpack.c.h.b16 %v2102
        %v2809 = vunpack.c.l.b16 %v2103
        %v2810 = vunpack.c.h.b16 %v2103
        %v2811 = vunpack.c.l.b16 %v2104
        %v2812 = vunpack.c.h.b16 %v2104
        %v2813 = vunpack.c.l.b16 %v2105
        %v2814 = vunpack.c.h.b16 %v2105
        %v2815 = vunpack.c.l.b16 %v2106
        %v2816 = vunpack.c.h.b16 %v2106
        %v2817 = vunpack.c.l.b16 %v2107
        %v2818 = vunpack.c.h.b16 %v2107
        %v2819 = vunpack.c.l.b16 %v2108
        %v2820 = vunpack.c.h.b16 %v2108
        %v2821 = vunpack.c.l.b16 %v2109
        %v2822 = vunpack.c.h.b16 %v2109
        %v2823 = vunpack.c.l.b16 %v2110
        %v2824 = vunpack.c.h.b16 %v2110
        %v2825 = vunpack.c.l.b16 %v2111
        %v2826 = vunpack.c.h.b16 %v2111
        %v2827 = vunpack.c.l.b16 %v2112
        %v2828 = vunpack.c.h.b16 %v2112
        %v2829 = vunpack.c.l.b16 %v2113
        %v2830 = vunpack.c.h.b16 %v2113
        %v2831 = vunpack.c.l.b16 %v2114
        %v2832 = vunpack.c.h.b16 %v2114
        %v2833 = vunpack.c.l.b16 %v2115
        %v2834 = vunpack.c.h.b16 %v2115
        %v2835 = vunpack.c.l.b16 %v2116
        %v2836 = vunpack.c.h.b16 %v2116
        %v2837 = vunpack.c.l.b16 %v2117
        %v2838 = vunpack.c.h.b16 %v2117
        %v2839 = vunpack.c.l.b16 %v2118
        %v2840 = vunpack.c.h.b16 %v2118
        %v2841 = vunpack.c.l.b16 %v2119
        %v2842 = vunpack.c.h.b16 %v2119
        %v2843 = vunpack.c.l.b16 %v2120
        %v2844 = vunpack.c.h.b16 %v2120
        %v2845 = vunpack.c.l.b16 %v2121
        %v2846 = vunpack.c.h.b16 %v2121
        %v2847 = vunpack.c.l.b16 %v2122
        %v2848 = vunpack.c.h.b16 %v2122
        %v2849 = vunpack.c.l.b16 %v2123
        %v2850 = vunpack.c.h.b16 %v2123
        %v2851 = vunpack.c.l.b16 %v2124
        %v2852 = vunpack.c.h.b16 %v2124
        %v2853 = vunpack.c.l.b16 %v2125
        %v2854 = vunpack.c.h.b16 %v2125
        %v2855 = vunpack.c.l.b16 %v2126
        %v2856 = vunpack.c.h.b16 %v2126
        %v2857 = vunpack.c.l.b16 %v2127
        %v2858 = vunpack.c.h.b16 %v2127
        %v2859 = vunpack.c.l.b16 %v2128
        %v2860 = vunpack.c.h.b16 %v2128
        %v2861 = vunpack.c.l.b16 %v2129
        %v2862 = vunpack.c.h.b16 %v2129
        %v2863 = vunpack.c.l.b16 %v2130
        %v2864 = vunpack.c.h.b16 %v2130
        %v2865 = vunpack.c.l.b16 %v2131
        %v2866 = vunpack.c.h.b16 %v2131
        %v2867 = vunpack.c.l.b16 %v2132
        %v2868 = vunpack.c.h.b16 %v2132
        %v2869 = vunpack.c.l.b16 %v2133
        %v2870 = vunpack.c.h.b16 %v2133
        %v2871 = vunpack.c.l.b16 %v2134
        %v2872 = vunpack.c.h.b16 %v2134
        %v2873 = vunpack.c.l.b16 %v2135
        %v2874 = vunpack.c.h.b16 %v2135
        %v2875 = vunpack.c.l.b16 %v2136
        %v2876 = vunpack.c.h.b16 %v2136
        %v2877 = vunpack.c.l.b16 %v2137
        %v2878 = vunpack.c.h.b16 %v2137
        %v2879 = vunpack.c.l.b16 %v2138
        %v2880 = vunpack.c.h.b16 %v2138
        %v2881 = vunpack.c.l.b16 %v2139
        %v2882 = vunpack.c.h.b16 %v2139
        %v2883 = vunpack.c.l.b16 %v2140
        %v2884 = vunpack.c.h.b16 %v2140
        %v2885 = vunpack.c.l.b16 %v2141
        %v2886 = vunpack.c.h.b16 %v2141
        %v2887 = vunpack.c.l.b16 %v2142
        %v2888 = vunpack.c.h.b16 %v2142
        %v2889 = vunpack.c.l.b16 %v2143
        %v2890 = vunpack.c.h.b16 %v2143
        %v2891 = vunpack.c.l.b16 %v2144
        %v2892 = vunpack.c.h.b16 %v2144
        %v2893 = vunpack.c.l.b16 %v2145
        %v2894 = vunpack.c.h.b16 %v2145
        %v2895 = vunpack.c.l.b16 %v2146
        %v2896 = vunpack.c.h.b16 %v2146
        %v2897 = vunpack.c.l.b16 %v2147
        %v2898 = vunpack.c.h.b16 %v2147
        %v2899 = vunpack.c.l.b16 %v2148
        %v2900 = vunpack.c.h.b16 %v2148
        %v2901 = vunpack.c.l.b16 %v2149
        %v2902 = vunpack.c.h.b16 %v2149
        %v2903 = vunpack.c.l.b16 %v2150
        %v2904 = vunpack.c.h.b16 %v2150
        %v2905 = vunpack.c.l.b16 %v2151
        %v2906 = vunpack.c.h.b16 %v2151
        %v2907 = vunpack.c.l.b16 %v2152
        %v2908 = vunpack.c.h.b16 %v2152
        %v2909 = vunpack.c.l.b16 %v2153
        %v2910 = vunpack.c.h.b16 %v2153
        %v2911 = vunpack.c.l.b16 %v2154
        %v2912 = vunpack.c.h.b16 %v2154
        %v2913 = vunpack.c.l.b16 %v2155
        %v2914 = vunpack.c.h.b16 %v2155
        %v2915 = vunpack.c.l.b16 %v2156
        %v2916 = vunpack.c.h.b16 %v2156
        %v2917 = vunpack.c.l.b16 %v2157
        %v2918 = vunpack.c.h.b16 %v2157
        %v2919 = vunpack.c.l.b16 %v2158
        %v2920 = vunpack.c.h.b16 %v2158
        %v2921 = vunpack.c.l.b16 %v2159
        %v2922 = vunpack.c.h.b16 %v2159
        %v2923 = vunpack.c.l.b16 %v2160
        %v2924 = vunpack.c.h.b16 %v2160
        %v2925 = vunpack.c.l.b16 %v2161
        %v2926 = vunpack.c.h.b16 %v2161
        %v2927 = vunpack.c.l.b16 %v2162
        %v2928 = vunpack.c.h.b16 %v2162
        %v2929 = vunpack.c.l.b16 %v2163
        %v2930 = vunpack.c.h.b16 %v2163
        %v2931 = vunpack.c.l.b16 %v2164
        %v2932 = vunpack.c.h.b16 %v2164
        %v2933 = vpack.c.b16 %v2425, %v2421
        %v2934 = vpack.c.b16 %v2426, %v2422
        %v2935 = vpack.c.b16 %v2427, %v2423
        %v2936 = vpack.c.b16 %v2428, %v2424
        %v2937 = vpack.c.b16 %v2433, %v2429
        %v2938 = vpack.c.b16 %v2434, %v2430
        %v2939 = vpack.c.b16 %v2435, %v2431
        %v2940 = vpack.c.b16 %v2436, %v2432
        %v2941 = vpack.c.b16 %v2441, %v2437
        %v2942 = vpack.c.b16 %v2442, %v2438
        %v2943 = vpack.c.b16 %v2443, %v2439
        %v2944 = vpack.c.b16 %v2444, %v2440
        %v2945 = vpack.c.b16 %v2449, %v2445
        %v2946 = vpack.c.b16 %v2450, %v2446
        %v2947 = vpack.c.b16 %v2451, %v2447
        %v2948 = vpack.c.b16 %v2452, %v2448
        %v2949 = vpack.c.b16 %v2457, %v2453
        %v2950 = vpack.c.b16 %v2458, %v2454
        %v2951 = vpack.c.b16 %v2459, %v2455
        %v2952 = vpack.c.b16 %v2460, %v2456
        %v2953 = vpack.c.b16 %v2465, %v2461
        %v2954 = vpack.c.b16 %v2466, %v2462
        %v2955 = vpack.c.b16 %v2467, %v2463
        %v2956 = vpack.c.b16 %v2468, %v2464
        %v2957 = vpack.c.b16 %v2473, %v2469
        %v2958 = vpack.c.b16 %v2474, %v2470
        %v2959 = vpack.c.b16 %v2475, %v2471
        %v2960 = vpack.c.b16 %v2476, %v2472
        %v2961 = vpack.c.b16 %v2481, %v2477
        %v2962 = vpack.c.b16 %v2482, %v2478
        %v2963 = vpack.c.b16 %v2483, %v2479
        %v2964 = vpack.c.b16 %v2484, %v2480
        %v2965 = vpack.c.b16 %v2489, %v2485
        %v2966 = vpack.c.b16 %v2490, %v2486
        %v2967 = vpack.c.b16 %v2491, %v2487
        %v2968 = vpack.c.b16 %v2492, %v2488
        %v2969 = vpack.c.b16 %v2497, %v2493
        %v2970 = vpack.c.b16 %v2498, %v2494
        %v2971 = vpack.c.b16 %v2499, %v2495
        %v2972 = vpack.c.b16 %v2500, %v2496
        %v2973 = vpack.c.b16 %v2505, %v2501
        %v2974 = vpack.c.b16 %v2506, %v2502
        %v2975 = vpack.c.b16 %v2507, %v2503
        %v2976 = vpack.c.b16 %v2508, %v2504
        %v2977 = vpack.c.b16 %v2513, %v2509
        %v2978 = vpack.c.b16 %v2514, %v2510
        %v2979 = vpack.c.b16 %v2515, %v2511
        %v2980 = vpack.c.b16 %v2516, %v2512
        %v2981 = vpack.c.b16 %v2521, %v2517
        %v2982 = vpack.c.b16 %v2522, %v2518
        %v2983 = vpack.c.b16 %v2523, %v2519
        %v2984 = vpack.c.b16 %v2524, %v2520
        %v2985 = vpack.c.b16 %v2529, %v2525
        %v2986 = vpack.c.b16 %v2530, %v2526
        %v2987 = vpack.c.b16 %v2531, %v2527
        %v2988 = vpack.c.b16 %v2532, %v2528
        %v2989 = vpack.c.b16 %v2537, %v2533
        %v2990 = vpack.c.b16 %v2538, %v2534
        %v2991 = vpack.c.b16 %v2539, %v2535
        %v2992 = vpack.c.b16 %v2540, %v2536
        %v2993 = vpack.c.b16 %v2545, %v2541
        %v2994 = vpack.c.b16 %v2546, %v2542
        %v2995 = vpack.c.b16 %v2547, %v2543
        %v2996 = vpack.c.b16 %v2548, %v2544
        %v2997 = vpack.c.b16 %v2553, %v2549
        %v2998 = vpack.c.b16 %v2554, %v2550
        %v2999 = vpack.c.b16 %v2555, %v2551
        %v3000 = vpack.c.b16 %v2556, %v2552
        %v3001 = vpack.c.b16 %v2561, %v2557
        %v3002 = vpack.c.b16 %v2562, %v2558
        %v3003 = vpack.c.b16 %v2563, %v2559
        %v3004 = vpack.c.b16 %v2564, %v2560
        %v3005 = vpack.c.b16 %v2569, %v2565
        %v3006 = vpack.c.b16 %v2570, %v2566
        %v3007 = vpack.c.b16 %v2571, %v2567
        %v3008 = vpack.c.b16 %v2572, %v2568
        %v3009 = vpack.c.b16 %v2577, %v2573
        %v3010 = vpack.c.b16 %v2578, %v2574
        %v3011 = vpack.c.b16 %v2579, %v2575
        %v3012 = vpack.c.b16 %v2580, %v2576
        %v3013 = vpack.c.b16 %v2585, %v2581
        %v3014 = vpack.c.b16 %v2586, %v2582
        %v3015 = vpack.c.b16 %v2587, %v2583
        %v3016 = vpack.c.b16 %v2588, %v2584
        %v3017 = vpack.c.b16 %v2593, %v2589
        %v3018 = vpack.c.b16 %v2594, %v2590
        %v3019 = vpack.c.b16 %v2595, %v2591
        %v3020 = vpack.c.b16 %v2596, %v2592
        %v3021 = vpack.c.b16 %v2601, %v2597
        %v3022 = vpack.c.b16 %v2602, %v2598
        %v3023 = vpack.c.b16 %v2603, %v2599
        %v3024 = vpack.c.b16 %v2604, %v2600
        %v3025 = vpack.c.b16 %v2609, %v2605
        %v3026 = vpack.c.b16 %v2610, %v2606
        %v3027 = vpack.c.b16 %v2611, %v2607
        %v3028 = vpack.c.b16 %v2612, %v2608
        %v3029 = vpack.c.b16 %v2617, %v2613
        %v3030 = vpack.c.b16 %v2618, %v2614
        %v3031 = vpack.c.b16 %v2619, %v2615
        %v3032 = vpack.c.b16 %v2620, %v2616
        %v3033 = vpack.c.b16 %v2625, %v2621
        %v3034 = vpack.c.b16 %v2626, %v2622
        %v3035 = vpack.c.b16 %v2627, %v2623
        %v3036 = vpack.c.b16 %v2628, %v2624
        %v3037 = vpack.c.b16 %v2633, %v2629
        %v3038 = vpack.c.b16 %v2634, %v2630
        %v3039 = vpack.c.b16 %v2635, %v2631
        %v3040 = vpack.c.b16 %v2636, %v2632
        %v3041 = vpack.c.b16 %v2641, %v2637
        %v3042 = vpack.c.b16 %v2642, %v2638
        %v3043 = vpack.c.b16 %v2643, %v2639
        %v3044 = vpack.c.b16 %v2644, %v2640
        %v3045 = vpack.c.b16 %v2649, %v2645
        %v3046 = vpack.c.b16 %v2650, %v2646
        %v3047 = vpack.c.b16 %v2651, %v2647
        %v3048 = vpack.c.b16 %v2652, %v2648
        %v3049 = vpack.c.b16 %v2657, %v2653
        %v3050 = vpack.c.b16 %v2658, %v2654
        %v3051 = vpack.c.b16 %v2659, %v2655
        %v3052 = vpack.c.b16 %v2660, %v2656
        %v3053 = vpack.c.b16 %v2665, %v2661
        %v3054 = vpack.c.b16 %v2666, %v2662
        %v3055 = vpack.c.b16 %v2667, %v2663
        %v3056 = vpack.c.b16 %v2668, %v2664
        %v3057 = vpack.c.b16 %v2673, %v2669
        %v3058 = vpack.c.b16 %v2674, %v2670
        %v3059 = vpack.c.b16 %v2675, %v2671
        %v3060 = vpack.c.b16 %v2676, %v2672
        %v3061 = vpack.c.b16 %v2681, %v2677
        %v3062 = vpack.c.b16 %v2682, %v2678
        %v3063 = vpack.c.b16 %v2683, %v2679
        %v3064 = vpack.c.b16 %v2684, %v2680
        %v3065 = vpack.c.b16 %v2689, %v2685
        %v3066 = vpack.c.b16 %v2690, %v2686
        %v3067 = vpack.c.b16 %v2691, %v2687
        %v3068 = vpack.c.b16 %v2692, %v2688
        %v3069 = vpack.c.b16 %v2697, %v2693
        %v3070 = vpack.c.b16 %v2698, %v2694
        %v3071 = vpack.c.b16 %v2699, %v2695
        %v3072 = vpack.c.b16 %v2700, %v2696
        %v3073 = vpack.c.b16 %v2705, %v2701
        %v3074 = vpack.c.b16 %v2706, %v2702
        %v3075 = vpack.c.b16 %v2707, %v2703
        %v3076 = vpack.c.b16 %v2708, %v2704
        %v3077 = vpack.c.b16 %v2713, %v2709
        %v3078 = vpack.c.b16 %v2714, %v2710
        %v3079 = vpack.c.b16 %v2715, %v2711
        %v3080 = vpack.c.b16 %v2716, %v2712
        %v3081 = vpack.c.b16 %v2721, %v2717
        %v3082 = vpack.c.b16 %v2722, %v2718
        %v3083 = vpack.c.b16 %v2723, %v2719
        %v3084 = vpack.c.b16 %v2724, %v2720
        %v3085 = vpack.c.b16 %v2729, %v2725
        %v3086 = vpack.c.b16 %v2730, %v2726
        %v3087 = vpack.c.b16 %v2731, %v2727
        %v3088 = vpack.c.b16 %v2732, %v2728
        %v3089 = vpack.c.b16 %v2737, %v2733
        %v3090 = vpack.c.b16 %v2738, %v2734
        %v3091 = vpack.c.b16 %v2739, %v2735
        %v3092 = vpack.c.b16 %v2740, %v2736
        %v3093 = vpack.c.b16 %v2745, %v2741
        %v3094 = vpack.c.b16 %v2746, %v2742
        %v3095 = vpack.c.b16 %v2747, %v2743
        %v3096 = vpack.c.b16 %v2748, %v2744
        %v3097 = vpack.c.b16 %v2753, %v2749
        %v3098 = vpack.c.b16 %v2754, %v2750
        %v3099 = vpack.c.b16 %v2755, %v2751
        %v3100 = vpack.c.b16 %v2756, %v2752
        %v3101 = vpack.c.b16 %v2761, %v2757
        %v3102 = vpack.c.b16 %v2762, %v2758
        %v3103 = vpack.c.b16 %v2763, %v2759
        %v3104 = vpack.c.b16 %v2764, %v2760
        %v3105 = vpack.c.b16 %v2769, %v2765
        %v3106 = vpack.c.b16 %v2770, %v2766
        %v3107 = vpack.c.b16 %v2771, %v2767
        %v3108 = vpack.c.b16 %v2772, %v2768
        %v3109 = vpack.c.b16 %v2777, %v2773
        %v3110 = vpack.c.b16 %v2778, %v2774
        %v3111 = vpack.c.b16 %v2779, %v2775
        %v3112 = vpack.c.b16 %v2780, %v2776
        %v3113 = vpack.c.b16 %v2785, %v2781
        %v3114 = vpack.c.b16 %v2786, %v2782
        %v3115 = vpack.c.b16 %v2787, %v2783
        %v3116 = vpack.c.b16 %v2788, %v2784
        %v3117 = vpack.c.b16 %v2793, %v2789
        %v3118 = vpack.c.b16 %v2794, %v2790
        %v3119 = vpack.c.b16 %v2795, %v2791
        %v3120 = vpack.c.b16 %v2796, %v2792
        %v3121 = vpack.c.b16 %v2801, %v2797
        %v3122 = vpack.c.b16 %v2802, %v2798
        %v3123 = vpack.c.b16 %v2803, %v2799
        %v3124 = vpack.c.b16 %v2804, %v2800
        %v3125 = vpack.c.b16 %v2809, %v2805
        %v3126 = vpack.c.b16 %v2810, %v2806
        %v3127 = vpack.c.b16 %v2811, %v2807
        %v3128 = vpack.c.b16 %v2812, %v2808
        %v3129 = vpack.c.b16 %v2817, %v2813
        %v3130 = vpack.c.b16 %v2818, %v2814
        %v3131 = vpack.c.b16 %v2819, %v2815
        %v3132 = vpack.c.b16 %v2820, %v2816
        %v3133 = vpack.c.b16 %v2825, %v2821
        %v3134 = vpack.c.b16 %v2826, %v2822
        %v3135 = vpack.c.b16 %v2827, %v2823
        %v3136 = vpack.c.b16 %v2828, %v2824
        %v3137 = vpack.c.b16 %v2833, %v2829
        %v3138 = vpack.c.b16 %v2834, %v2830
        %v3139 = vpack.c.b16 %v2835, %v2831
        %v3140 = vpack.c.b16 %v2836, %v2832
        %v3141 = vpack.c.b16 %v2841, %v2837
        %v3142 = vpack.c.b16 %v2842, %v2838
        %v3143 = vpack.c.b16 %v2843, %v2839
        %v3144 = vpack.c.b16 %v2844, %v2840
        %v3145 = vpack.c.b16 %v2849, %v2845
        %v3146 = vpack.c.b16 %v2850, %v2846
        %v3147 = vpack.c.b16 %v2851, %v2847
        %v3148 = vpack.c.b16 %v2852, %v2848
        %v3149 = vpack.c.b16 %v2857, %v2853
        %v3150 = vpack.c.b16 %v2858, %v2854
        %v3151 = vpack.c.b16 %v2859, %v2855
        %v3152 = vpack.c.b16 %v2860, %v2856
        %v3153 = vpack.c.b16 %v2865, %v2861
        %v3154 = vpack.c.b16 %v2866, %v2862
        %v3155 = vpack.c.b16 %v2867, %v2863
        %v3156 = vpack.c.b16 %v2868, %v2864
        %v3157 = vpack.c.b16 %v2873, %v2869
        %v3158 = vpack.c.b16 %v2874, %v2870
        %v3159 = vpack.c.b16 %v2875, %v2871
        %v3160 = vpack.c.b16 %v2876, %v2872
        %v3161 = vpack.c.b16 %v2881, %v2877
        %v3162 = vpack.c.b16 %v2882, %v2878
        %v3163 = vpack.c.b16 %v2883, %v2879
        %v3164 = vpack.c.b16 %v2884, %v2880
        %v3165 = vpack.c.b16 %v2889, %v2885
        %v3166 = vpack.c.b16 %v2890, %v2886
        %v3167 = vpack.c.b16 %v2891, %v2887
        %v3168 = vpack.c.b16 %v2892, %v2888
        %v3169 = vpack.c.b16 %v2897, %v2893
        %v3170 = vpack.c.b16 %v2898, %v2894
        %v3171 = vpack.c.b16 %v2899, %v2895
        %v3172 = vpack.c.b16 %v2900, %v2896
        %v3173 = vpack.c.b16 %v2905, %v2901
        %v3174 = vpack.c.b16 %v2906, %v2902
        %v3175 = vpack.c.b16 %v2907, %v2903
        %v3176 = vpack.c.b16 %v2908, %v2904
        %v3177 = vpack.c.b16 %v2913, %v2909
        %v3178 = vpack.c.b16 %v2914, %v2910
        %v3179 = vpack.c.b16 %v2915, %v2911
        %v3180 = vpack.c.b16 %v2916, %v2912
        %v3181 = vpack.c.b16 %v2921, %v2917
        %v3182 = vpack.c.b16 %v2922, %v2918
        %v3183 = vpack.c.b16 %v2923, %v2919
        %v3184 = vpack.c.b16 %v2924, %v2920
        %v3185 = vpack.c.b16 %v2929, %v2925
        %v3186 = vpack.c.b16 %v2930, %v2926
        %v3187 = vpack.c.b16 %v2931, %v2927
        %v3188 = vpack.c.b16 %v2932, %v2928
        %3445 = vmatprep.subr.bf16.mxu0 %v2934
        %3446 = vmatpush1.bf16.msra.mxu0 %v2933
        %3447 = vmatprep.subr.bf16.mxu0 %v2938
        %3448 = vmatpush1.bf16.msra.mxu0 %v2937
        %3449 = vmatprep.subr.bf16.mxu0 %v2942
        %3450 = vmatpush1.bf16.msra.mxu0 %v2941
        %3451 = vmatprep.subr.bf16.mxu0 %v2946
        %3452 = vmatpush1.bf16.msra.mxu0 %v2945
        %3453 = vmatprep.subr.bf16.mxu0 %v2950
        %3454 = vmatpush1.bf16.msra.mxu0 %v2949
        %3455 = vmatprep.subr.bf16.mxu0 %v2954
        %3456 = vmatpush1.bf16.msra.mxu0 %v2953
        %3457 = vmatprep.subr.bf16.mxu0 %v2958
        %3458 = vmatpush1.bf16.msra.mxu0 %v2957
        %3459 = vmatprep.subr.bf16.mxu0 %v2962
        %3460 = vmatpush1.bf16.msra.mxu0 %v2961
        %3461 = vmatprep.subr.bf16.mxu0 %v2966
        %3462 = vmatpush1.bf16.msra.mxu0 %v2965
        %3463 = vmatprep.subr.bf16.mxu0 %v2970
        %3464 = vmatpush1.bf16.msra.mxu0 %v2969
        %3465 = vmatprep.subr.bf16.mxu0 %v2974
        %3466 = vmatpush1.bf16.msra.mxu0 %v2973
        %3467 = vmatprep.subr.bf16.mxu0 %v2978
        %3468 = vmatpush1.bf16.msra.mxu0 %v2977
        %3469 = vmatprep.subr.bf16.mxu0 %v2982
        %3470 = vmatpush1.bf16.msra.mxu0 %v2981
        %3471 = vmatprep.subr.bf16.mxu0 %v2986
        %3472 = vmatpush1.bf16.msra.mxu0 %v2985
        %3473 = vmatprep.subr.bf16.mxu0 %v2990
        %3474 = vmatpush1.bf16.msra.mxu0 %v2989
        %3475 = vmatprep.subr.bf16.mxu0 %v2994
        %3476 = vmatpush1.bf16.msra.mxu0 %v2993
        %3477 = vmatprep.mubr.bf16.mxu0 %v1637
        %3478 = vmatmul.mubr.bf16.gmra.mrb[0].mxu0 %v1636
        %v3479 = vpop.f32.mrb[0].mxu0
        %v3480 = vadd.f32 0.0, %v3479
        %v3481 = vpop.f32.mrb[0].mxu0
        %v3482 = vadd.f32 0.0, %v3481
        %v3483 = vpop.f32.mrb[0].mxu0
        %v3484 = vadd.f32 0.0, %v3483
        %v3485 = vpop.f32.mrb[0].mxu0
        %v3486 = vadd.f32 0.0, %v3485
        %3487 = vmatprep.mubr.bf16.mxu0 %v1645
        %3488 = vmatmul.mubr.bf16.gmra.mrb[0].mxu0 %v1644
        %v3489 = vpop.f32.mrb[0].mxu0
        %v3490 = vadd.f32 0.0, %v3489
        %v3491 = vpop.f32.mrb[0].mxu0
        %v3492 = vadd.f32 0.0, %v3491
        %v3493 = vpop.f32.mrb[0].mxu0
        %v3494 = vadd.f32 0.0, %v3493
        %v3495 = vpop.f32.mrb[0].mxu0
        %v3496 = vadd.f32 0.0, %v3495
        %3497 = vdwg.mxu0
        %3498 = vmatprep.subr.bf16.mxu0 %v2998
        %3499 = vmatpush1.bf16.msra.mxu0 %v2997
        %3500 = vmatprep.subr.bf16.mxu0 %v3002
        %3501 = vmatpush1.bf16.msra.mxu0 %v3001
        %3502 = vmatprep.subr.bf16.mxu0 %v3006
        %3503 = vmatpush1.bf16.msra.mxu0 %v3005
        %3504 = vmatprep.subr.bf16.mxu0 %v3010
        %3505 = vmatpush1.bf16.msra.mxu0 %v3009
        %3506 = vmatprep.subr.bf16.mxu0 %v3014
        %3507 = vmatpush1.bf16.msra.mxu0 %v3013
        %3508 = vmatprep.subr.bf16.mxu0 %v3018
        %3509 = vmatpush1.bf16.msra.mxu0 %v3017
        %3510 = vmatprep.subr.bf16.mxu0 %v3022
        %3511 = vmatpush1.bf16.msra.mxu0 %v3021
        %3512 = vmatprep.subr.bf16.mxu0 %v3026
        %3513 = vmatpush1.bf16.msra.mxu0 %v3025
        %3514 = vmatprep.subr.bf16.mxu0 %v3030
        %3515 = vmatpush1.bf16.msra.mxu0 %v3029
        %3516 = vmatprep.subr.bf16.mxu0 %v3034
        %3517 = vmatpush1.bf16.msra.mxu0 %v3033
        %3518 = vmatprep.subr.bf16.mxu0 %v3038
        %3519 = vmatpush1.bf16.msra.mxu0 %v3037
        %3520 = vmatprep.subr.bf16.mxu0 %v3042
        %3521 = vmatpush1.bf16.msra.mxu0 %v3041
        %3522 = vmatprep.subr.bf16.mxu0 %v3046
        %3523 = vmatpush1.bf16.msra.mxu0 %v3045
        %3524 = vmatprep.subr.bf16.mxu0 %v3050
        %3525 = vmatpush1.bf16.msra.mxu0 %v3049
        %3526 = vmatprep.subr.bf16.mxu0 %v3054
        %3527 = vmatpush1.bf16.msra.mxu0 %v3053
        %3528 = vmatprep.subr.bf16.mxu0 %v3058
        %3529 = vmatpush1.bf16.msra.mxu0 %v3057
        %3530 = vmatprep.mubr.bf16.mxu0 %v1639
        %3531 = vmatmul.mubr.bf16.gmra.mrb[0].mxu0 %v1638
        %v3532 = vpop.f32.mrb[0].mxu0
        %v3533 = vadd.f32 %v3480, %v3532
        %v3534 = vpop.f32.mrb[0].mxu0
        %v3535 = vadd.f32 %v3482, %v3534
        %v3536 = vpop.f32.mrb[0].mxu0
        %v3537 = vadd.f32 %v3484, %v3536
        %v3538 = vpop.f32.mrb[0].mxu0
        %v3539 = vadd.f32 %v3486, %v3538
        %3540 = vmatprep.mubr.bf16.mxu0 %v1647
        %3541 = vmatmul.mubr.bf16.gmra.mrb[0].mxu0 %v1646
        %v3542 = vpop.f32.mrb[0].mxu0
        %v3543 = vadd.f32 %v3490, %v3542
        %v3544 = vpop.f32.mrb[0].mxu0
        %v3545 = vadd.f32 %v3492, %v3544
        %v3546 = vpop.f32.mrb[0].mxu0
        %v3547 = vadd.f32 %v3494, %v3546
        %v3548 = vpop.f32.mrb[0].mxu0
        %v3549 = vadd.f32 %v3496, %v3548
        %3550 = vdwg.mxu0
        %3551 = vmatprep.subr.bf16.mxu0 %v3062
        %3552 = vmatpush1.bf16.msra.mxu0 %v3061
        %3553 = vmatprep.subr.bf16.mxu0 %v3066
        %3554 = vmatpush1.bf16.msra.mxu0 %v3065
        %3555 = vmatprep.subr.bf16.mxu0 %v3070
        %3556 = vmatpush1.bf16.msra.mxu0 %v3069
        %3557 = vmatprep.subr.bf16.mxu0 %v3074
        %3558 = vmatpush1.bf16.msra.mxu0 %v3073
        %3559 = vmatprep.subr.bf16.mxu0 %v3078
        %3560 = vmatpush1.bf16.msra.mxu0 %v3077
        %3561 = vmatprep.subr.bf16.mxu0 %v3082
        %3562 = vmatpush1.bf16.msra.mxu0 %v3081
        %3563 = vmatprep.subr.bf16.mxu0 %v3086
        %3564 = vmatpush1.bf16.msra.mxu0 %v3085
        %3565 = vmatprep.subr.bf16.mxu0 %v3090
        %3566 = vmatpush1.bf16.msra.mxu0 %v3089
        %3567 = vmatprep.subr.bf16.mxu0 %v3094
        %3568 = vmatpush1.bf16.msra.mxu0 %v3093
        %3569 = vmatprep.subr.bf16.mxu0 %v3098
        %3570 = vmatpush1.bf16.msra.mxu0 %v3097
        %3571 = vmatprep.subr.bf16.mxu0 %v3102
        %3572 = vmatpush1.bf16.msra.mxu0 %v3101
        %3573 = vmatprep.subr.bf16.mxu0 %v3106
        %3574 = vmatpush1.bf16.msra.mxu0 %v3105
        %3575 = vmatprep.subr.bf16.mxu0 %v3110
        %3576 = vmatpush1.bf16.msra.mxu0 %v3109
        %3577 = vmatprep.subr.bf16.mxu0 %v3114
        %3578 = vmatpush1.bf16.msra.mxu0 %v3113
        %3579 = vmatprep.subr.bf16.mxu0 %v3118
        %3580 = vmatpush1.bf16.msra.mxu0 %v3117
        %3581 = vmatprep.subr.bf16.mxu0 %v3122
        %3582 = vmatpush1.bf16.msra.mxu0 %v3121
        %3583 = vmatprep.mubr.bf16.mxu0 %v1641
        %3584 = vmatmul.mubr.bf16.gmra.mrb[0].mxu0 %v1640
        %v3585 = vpop.f32.mrb[0].mxu0
        %v3586 = vadd.f32 %v3533, %v3585
        %v3587 = vpop.f32.mrb[0].mxu0
        %v3588 = vadd.f32 %v3535, %v3587
        %v3589 = vpop.f32.mrb[0].mxu0
        %v3590 = vadd.f32 %v3537, %v3589
        %v3591 = vpop.f32.mrb[0].mxu0
        %v3592 = vadd.f32 %v3539, %v3591
        %3593 = vmatprep.mubr.bf16.mxu0 %v1649
        %3594 = vmatmul.mubr.bf16.gmra.mrb[0].mxu0 %v1648
        %v3595 = vpop.f32.mrb[0].mxu0
        %v3596 = vadd.f32 %v3543, %v3595
        %v3597 = vpop.f32.mrb[0].mxu0
        %v3598 = vadd.f32 %v3545, %v3597
        %v3599 = vpop.f32.mrb[0].mxu0
        %v3600 = vadd.f32 %v3547, %v3599
        %v3601 = vpop.f32.mrb[0].mxu0
        %v3602 = vadd.f32 %v3549, %v3601
        %3603 = vdwg.mxu0
        %3604 = vmatprep.subr.bf16.mxu0 %v3126
        %3605 = vmatpush1.bf16.msra.mxu0 %v3125
        %3606 = vmatprep.subr.bf16.mxu0 %v3130
        %3607 = vmatpush1.bf16.msra.mxu0 %v3129
        %3608 = vmatprep.subr.bf16.mxu0 %v3134
        %3609 = vmatpush1.bf16.msra.mxu0 %v3133
        %3610 = vmatprep.subr.bf16.mxu0 %v3138
        %3611 = vmatpush1.bf16.msra.mxu0 %v3137
        %3612 = vmatprep.subr.bf16.mxu0 %v3142
        %3613 = vmatpush1.bf16.msra.mxu0 %v3141
        %3614 = vmatprep.subr.bf16.mxu0 %v3146
        %3615 = vmatpush1.bf16.msra.mxu0 %v3145
        %3616 = vmatprep.subr.bf16.mxu0 %v3150
        %3617 = vmatpush1.bf16.msra.mxu0 %v3149
        %3618 = vmatprep.subr.bf16.mxu0 %v3154
        %3619 = vmatpush1.bf16.msra.mxu0 %v3153
        %3620 = vmatprep.subr.bf16.mxu0 %v3158
        %3621 = vmatpush1.bf16.msra.mxu0 %v3157
        %3622 = vmatprep.subr.bf16.mxu0 %v3162
        %3623 = vmatpush1.bf16.msra.mxu0 %v3161
        %3624 = vmatprep.subr.bf16.mxu0 %v3166
        %3625 = vmatpush1.bf16.msra.mxu0 %v3165
        %3626 = vmatprep.subr.bf16.mxu0 %v3170
        %3627 = vmatpush1.bf16.msra.mxu0 %v3169
        %3628 = vmatprep.subr.bf16.mxu0 %v3174
        %3629 = vmatpush1.bf16.msra.mxu0 %v3173
        %3630 = vmatprep.subr.bf16.mxu0 %v3178
        %3631 = vmatpush1.bf16.msra.mxu0 %v3177
        %3632 = vmatprep.subr.bf16.mxu0 %v3182
        %3633 = vmatpush1.bf16.msra.mxu0 %v3181
        %3634 = vmatprep.subr.bf16.mxu0 %v3186
        %3635 = vmatpush1.bf16.msra.mxu0 %v3185
        %3636 = vmatprep.mubr.bf16.mxu0 %v1643
        %3637 = vmatmul.mubr.bf16.gmra.mrb[0].mxu0 %v1642
        %v3638 = vpop.f32.mrb[0].mxu0
        %v3639 = vadd.f32 %v3586, %v3638
        %v3640 = vpop.f32.mrb[0].mxu0
        %v3641 = vadd.f32 %v3588, %v3640
        %v3642 = vpop.f32.mrb[0].mxu0
        %v3643 = vadd.f32 %v3590, %v3642
        %v3644 = vpop.f32.mrb[0].mxu0
        %v3645 = vadd.f32 %v3592, %v3644
        %3646 = vmatprep.mubr.bf16.mxu0 %v1651
        %3647 = vmatmul.mubr.bf16.gmra.mrb[0].mxu0 %v1650
        %v3648 = vpop.f32.mrb[0].mxu0
        %v3649 = vadd.f32 %v3596, %v3648
        %v3650 = vpop.f32.mrb[0].mxu0
        %v3651 = vadd.f32 %v3598, %v3650
        %v3652 = vpop.f32.mrb[0].mxu0
        %v3653 = vadd.f32 %v3600, %v3652
        %v3654 = vpop.f32.mrb[0].mxu0
        %v3655 = vadd.f32 %v3602, %v3654
        %3656 = vdwg.mxu0
        %3657 = vmatprep.subr.bf16.mxu0 %v2936
        %3658 = vmatpush1.bf16.msra.mxu0 %v2935
        %3659 = vmatprep.subr.bf16.mxu0 %v2940
        %3660 = vmatpush1.bf16.msra.mxu0 %v2939
        %3661 = vmatprep.subr.bf16.mxu0 %v2944
        %3662 = vmatpush1.bf16.msra.mxu0 %v2943
        %3663 = vmatprep.subr.bf16.mxu0 %v2948
        %3664 = vmatpush1.bf16.msra.mxu0 %v2947
        %3665 = vmatprep.subr.bf16.mxu0 %v2952
        %3666 = vmatpush1.bf16.msra.mxu0 %v2951
        %3667 = vmatprep.subr.bf16.mxu0 %v2956
        %3668 = vmatpush1.bf16.msra.mxu0 %v2955
        %3669 = vmatprep.subr.bf16.mxu0 %v2960
        %3670 = vmatpush1.bf16.msra.mxu0 %v2959
        %3671 = vmatprep.subr.bf16.mxu0 %v2964
        %3672 = vmatpush1.bf16.msra.mxu0 %v2963
        %3673 = vmatprep.subr.bf16.mxu0 %v2968
        %3674 = vmatpush1.bf16.msra.mxu0 %v2967
        %3675 = vmatprep.subr.bf16.mxu0 %v2972
        %3676 = vmatpush1.bf16.msra.mxu0 %v2971
        %3677 = vmatprep.subr.bf16.mxu0 %v2976
        %3678 = vmatpush1.bf16.msra.mxu0 %v2975
        %3679 = vmatprep.subr.bf16.mxu0 %v2980
        %3680 = vmatpush1.bf16.msra.mxu0 %v2979
        %3681 = vmatprep.subr.bf16.mxu0 %v2984
        %3682 = vmatpush1.bf16.msra.mxu0 %v2983
        %3683 = vmatprep.subr.bf16.mxu0 %v2988
        %3684 = vmatpush1.bf16.msra.mxu0 %v2987
        %3685 = vmatprep.subr.bf16.mxu0 %v2992
        %3686 = vmatpush1.bf16.msra.mxu0 %v2991
        %3687 = vmatprep.subr.bf16.mxu0 %v2996
        %3688 = vmatpush1.bf16.msra.mxu0 %v2995
        %3689 = vmatprep.mubr.bf16.mxu0 %v1637
        %3690 = vmatmul.mubr.bf16.gmra.mrb[0].mxu0 %v1636
        %v3691 = vpop.f32.mrb[0].mxu0
        %v3692 = vadd.f32 0.0, %v3691
        %v3693 = vpop.f32.mrb[0].mxu0
        %v3694 = vadd.f32 0.0, %v3693
        %v3695 = vpop.f32.mrb[0].mxu0
        %v3696 = vadd.f32 0.0, %v3695
        %v3697 = vpop.f32.mrb[0].mxu0
        %v3698 = vadd.f32 0.0, %v3697
        %3699 = vmatprep.mubr.bf16.mxu0 %v1645
        %3700 = vmatmul.mubr.bf16.gmra.mrb[0].mxu0 %v1644
        %v3701 = vpop.f32.mrb[0].mxu0
        %v3702 = vadd.f32 0.0, %v3701
        %v3703 = vpop.f32.mrb[0].mxu0
        %v3704 = vadd.f32 0.0, %v3703
        %v3705 = vpop.f32.mrb[0].mxu0
        %v3706 = vadd.f32 0.0, %v3705
        %v3707 = vpop.f32.mrb[0].mxu0
        %v3708 = vadd.f32 0.0, %v3707
        %3709 = vdwg.mxu0
        %3710 = vmatprep.subr.bf16.mxu0 %v3000
        %3711 = vmatpush1.bf16.msra.mxu0 %v2999
        %3712 = vmatprep.subr.bf16.mxu0 %v3004
        %3713 = vmatpush1.bf16.msra.mxu0 %v3003
        %3714 = vmatprep.subr.bf16.mxu0 %v3008
        %3715 = vmatpush1.bf16.msra.mxu0 %v3007
        %3716 = vmatprep.subr.bf16.mxu0 %v3012
        %3717 = vmatpush1.bf16.msra.mxu0 %v3011
        %3718 = vmatprep.subr.bf16.mxu0 %v3016
        %3719 = vmatpush1.bf16.msra.mxu0 %v3015
        %3720 = vmatprep.subr.bf16.mxu0 %v3020
        %3721 = vmatpush1.bf16.msra.mxu0 %v3019
        %3722 = vmatprep.subr.bf16.mxu0 %v3024
        %3723 = vmatpush1.bf16.msra.mxu0 %v3023
        %3724 = vmatprep.subr.bf16.mxu0 %v3028
        %3725 = vmatpush1.bf16.msra.mxu0 %v3027
        %3726 = vmatprep.subr.bf16.mxu0 %v3032
        %3727 = vmatpush1.bf16.msra.mxu0 %v3031
        %3728 = vmatprep.subr.bf16.mxu0 %v3036
        %3729 = vmatpush1.bf16.msra.mxu0 %v3035
        %3730 = vmatprep.subr.bf16.mxu0 %v3040
        %3731 = vmatpush1.bf16.msra.mxu0 %v3039
        %3732 = vmatprep.subr.bf16.mxu0 %v3044
        %3733 = vmatpush1.bf16.msra.mxu0 %v3043
        %3734 = vmatprep.subr.bf16.mxu0 %v3048
        %3735 = vmatpush1.bf16.msra.mxu0 %v3047
        %3736 = vmatprep.subr.bf16.mxu0 %v3052
        %3737 = vmatpush1.bf16.msra.mxu0 %v3051
        %3738 = vmatprep.subr.bf16.mxu0 %v3056
        %3739 = vmatpush1.bf16.msra.mxu0 %v3055
        %3740 = vmatprep.subr.bf16.mxu0 %v3060
        %3741 = vmatpush1.bf16.msra.mxu0 %v3059
        %3742 = vmatprep.mubr.bf16.mxu0 %v1639
        %3743 = vmatmul.mubr.bf16.gmra.mrb[0].mxu0 %v1638
        %v3744 = vpop.f32.mrb[0].mxu0
        %v3745 = vadd.f32 %v3692, %v3744
        %v3746 = vpop.f32.mrb[0].mxu0
        %v3747 = vadd.f32 %v3694, %v3746
        %v3748 = vpop.f32.mrb[0].mxu0
        %v3749 = vadd.f32 %v3696, %v3748
        %v3750 = vpop.f32.mrb[0].mxu0
        %v3751 = vadd.f32 %v3698, %v3750
        %3752 = vmatprep.mubr.bf16.mxu0 %v1647
        %3753 = vmatmul.mubr.bf16.gmra.mrb[0].mxu0 %v1646
        %v3754 = vpop.f32.mrb[0].mxu0
        %v3755 = vadd.f32 %v3702, %v3754
        %v3756 = vpop.f32.mrb[0].mxu0
        %v3757 = vadd.f32 %v3704, %v3756
        %v3758 = vpop.f32.mrb[0].mxu0
        %v3759 = vadd.f32 %v3706, %v3758
        %v3760 = vpop.f32.mrb[0].mxu0
        %v3761 = vadd.f32 %v3708, %v3760
        %3762 = vdwg.mxu0
        %3763 = vmatprep.subr.bf16.mxu0 %v3064
        %3764 = vmatpush1.bf16.msra.mxu0 %v3063
        %3765 = vmatprep.subr.bf16.mxu0 %v3068
        %3766 = vmatpush1.bf16.msra.mxu0 %v3067
        %3767 = vmatprep.subr.bf16.mxu0 %v3072
        %3768 = vmatpush1.bf16.msra.mxu0 %v3071
        %3769 = vmatprep.subr.bf16.mxu0 %v3076
        %3770 = vmatpush1.bf16.msra.mxu0 %v3075
        %3771 = vmatprep.subr.bf16.mxu0 %v3080
        %3772 = vmatpush1.bf16.msra.mxu0 %v3079
        %3773 = vmatprep.subr.bf16.mxu0 %v3084
        %3774 = vmatpush1.bf16.msra.mxu0 %v3083
        %3775 = vmatprep.subr.bf16.mxu0 %v3088
        %3776 = vmatpush1.bf16.msra.mxu0 %v3087
        %3777 = vmatprep.subr.bf16.mxu0 %v3092
        %3778 = vmatpush1.bf16.msra.mxu0 %v3091
        %3779 = vmatprep.subr.bf16.mxu0 %v3096
        %3780 = vmatpush1.bf16.msra.mxu0 %v3095
        %3781 = vmatprep.subr.bf16.mxu0 %v3100
        %3782 = vmatpush1.bf16.msra.mxu0 %v3099
        %3783 = vmatprep.subr.bf16.mxu0 %v3104
        %3784 = vmatpush1.bf16.msra.mxu0 %v3103
        %3785 = vmatprep.subr.bf16.mxu0 %v3108
        %3786 = vmatpush1.bf16.msra.mxu0 %v3107
        %3787 = vmatprep.subr.bf16.mxu0 %v3112
        %3788 = vmatpush1.bf16.msra.mxu0 %v3111
        %3789 = vmatprep.subr.bf16.mxu0 %v3116
        %3790 = vmatpush1.bf16.msra.mxu0 %v3115
        %3791 = vmatprep.subr.bf16.mxu0 %v3120
        %3792 = vmatpush1.bf16.msra.mxu0 %v3119
        %3793 = vmatprep.subr.bf16.mxu0 %v3124
        %3794 = vmatpush1.bf16.msra.mxu0 %v3123
        %3795 = vmatprep.mubr.bf16.mxu0 %v1641
        %3796 = vmatmul.mubr.bf16.gmra.mrb[0].mxu0 %v1640
        %v3797 = vpop.f32.mrb[0].mxu0
        %v3798 = vadd.f32 %v3745, %v3797
        %v3799 = vpop.f32.mrb[0].mxu0
        %v3800 = vadd.f32 %v3747, %v3799
        %v3801 = vpop.f32.mrb[0].mxu0
        %v3802 = vadd.f32 %v3749, %v3801
        %v3803 = vpop.f32.mrb[0].mxu0
        %v3804 = vadd.f32 %v3751, %v3803
        %3805 = vmatprep.mubr.bf16.mxu0 %v1649
        %3806 = vmatmul.mubr.bf16.gmra.mrb[0].mxu0 %v1648
        %v3807 = vpop.f32.mrb[0].mxu0
        %v3808 = vadd.f32 %v3755, %v3807
        %v3809 = vpop.f32.mrb[0].mxu0
        %v3810 = vadd.f32 %v3757, %v3809
        %v3811 = vpop.f32.mrb[0].mxu0
        %v3812 = vadd.f32 %v3759, %v3811
        %v3813 = vpop.f32.mrb[0].mxu0
        %v3814 = vadd.f32 %v3761, %v3813
        %3815 = vdwg.mxu0
        %3816 = vmatprep.subr.bf16.mxu0 %v3128
        %3817 = vmatpush1.bf16.msra.mxu0 %v3127
        %3818 = vmatprep.subr.bf16.mxu0 %v3132
        %3819 = vmatpush1.bf16.msra.mxu0 %v3131
        %3820 = vmatprep.subr.bf16.mxu0 %v3136
        %3821 = vmatpush1.bf16.msra.mxu0 %v3135
        %3822 = vmatprep.subr.bf16.mxu0 %v3140
        %3823 = vmatpush1.bf16.msra.mxu0 %v3139
        %3824 = vmatprep.subr.bf16.mxu0 %v3144
        %3825 = vmatpush1.bf16.msra.mxu0 %v3143
        %3826 = vmatprep.subr.bf16.mxu0 %v3148
        %3827 = vmatpush1.bf16.msra.mxu0 %v3147
        %3828 = vmatprep.subr.bf16.mxu0 %v3152
        %3829 = vmatpush1.bf16.msra.mxu0 %v3151
        %3830 = vmatprep.subr.bf16.mxu0 %v3156
        %3831 = vmatpush1.bf16.msra.mxu0 %v3155
        %3832 = vmatprep.subr.bf16.mxu0 %v3160
        %3833 = vmatpush1.bf16.msra.mxu0 %v3159
        %3834 = vmatprep.subr.bf16.mxu0 %v3164
        %3835 = vmatpush1.bf16.msra.mxu0 %v3163
        %3836 = vmatprep.subr.bf16.mxu0 %v3168
        %3837 = vmatpush1.bf16.msra.mxu0 %v3167
        %3838 = vmatprep.subr.bf16.mxu0 %v3172
        %3839 = vmatpush1.bf16.msra.mxu0 %v3171
        %3840 = vmatprep.subr.bf16.mxu0 %v3176
        %3841 = vmatpush1.bf16.msra.mxu0 %v3175
        %3842 = vmatprep.subr.bf16.mxu0 %v3180
        %3843 = vmatpush1.bf16.msra.mxu0 %v3179
        %3844 = vmatprep.subr.bf16.mxu0 %v3184
        %3845 = vmatpush1.bf16.msra.mxu0 %v3183
        %3846 = vmatprep.subr.bf16.mxu0 %v3188
        %3847 = vmatpush1.bf16.msra.mxu0 %v3187
        %3848 = vmatprep.mubr.bf16.mxu0 %v1643
        %3849 = vmatmul.mubr.bf16.gmra.mrb[0].mxu0 %v1642
        %v3850 = vpop.f32.mrb[0].mxu0
        %v3851 = vadd.f32 %v3798, %v3850
        %v3852 = vpop.f32.mrb[0].mxu0
        %v3853 = vadd.f32 %v3800, %v3852
        %v3854 = vpop.f32.mrb[0].mxu0
        %v3855 = vadd.f32 %v3802, %v3854
        %v3856 = vpop.f32.mrb[0].mxu0
        %v3857 = vadd.f32 %v3804, %v3856
        %3858 = vmatprep.mubr.bf16.mxu0 %v1651
        %3859 = vmatmul.mubr.bf16.gmra.mrb[0].mxu0 %v1650
        %v3860 = vpop.f32.mrb[0].mxu0
        %v3861 = vadd.f32 %v3808, %v3860
        %v3862 = vpop.f32.mrb[0].mxu0
        %v3863 = vadd.f32 %v3810, %v3862
        %v3864 = vpop.f32.mrb[0].mxu0
        %v3865 = vadd.f32 %v3812, %v3864
        %v3866 = vpop.f32.mrb[0].mxu0
        %v3867 = vadd.f32 %v3814, %v3866
        %3868 = vdwg.mxu0
        %v4125 = vunpack.c.l.b16 %v1652
        %v4126 = vunpack.c.h.b16 %v1652
        %v4127 = vunpack.c.l.b16 %v1653
        %v4128 = vunpack.c.h.b16 %v1653
        %v4129 = vunpack.c.l.b16 %v1654
        %v4130 = vunpack.c.h.b16 %v1654
        %v4131 = vunpack.c.l.b16 %v1655
        %v4132 = vunpack.c.h.b16 %v1655
        %v4133 = vunpack.c.l.b16 %v1656
        %v4134 = vunpack.c.h.b16 %v1656
        %v4135 = vunpack.c.l.b16 %v1657
        %v4136 = vunpack.c.h.b16 %v1657
        %v4137 = vunpack.c.l.b16 %v1658
        %v4138 = vunpack.c.h.b16 %v1658
        %v4139 = vunpack.c.l.b16 %v1659
        %v4140 = vunpack.c.h.b16 %v1659
        %v4141 = vunpack.c.l.b16 %v1660
        %v4142 = vunpack.c.h.b16 %v1660
        %v4143 = vunpack.c.l.b16 %v1661
        %v4144 = vunpack.c.h.b16 %v1661
        %v4145 = vunpack.c.l.b16 %v1662
        %v4146 = vunpack.c.h.b16 %v1662
        %v4147 = vunpack.c.l.b16 %v1663
        %v4148 = vunpack.c.h.b16 %v1663
        %v4149 = vunpack.c.l.b16 %v1664
        %v4150 = vunpack.c.h.b16 %v1664
        %v4151 = vunpack.c.l.b16 %v1665
        %v4152 = vunpack.c.h.b16 %v1665
        %v4153 = vunpack.c.l.b16 %v1666
        %v4154 = vunpack.c.h.b16 %v1666
        %v4155 = vunpack.c.l.b16 %v1667
        %v4156 = vunpack.c.h.b16 %v1667
        %v4157 = vunpack.c.l.b16 %v1668
        %v4158 = vunpack.c.h.b16 %v1668
        %v4159 = vunpack.c.l.b16 %v1669
        %v4160 = vunpack.c.h.b16 %v1669
        %v4161 = vunpack.c.l.b16 %v1670
        %v4162 = vunpack.c.h.b16 %v1670
        %v4163 = vunpack.c.l.b16 %v1671
        %v4164 = vunpack.c.h.b16 %v1671
        %v4165 = vunpack.c.l.b16 %v1672
        %v4166 = vunpack.c.h.b16 %v1672
        %v4167 = vunpack.c.l.b16 %v1673
        %v4168 = vunpack.c.h.b16 %v1673
        %v4169 = vunpack.c.l.b16 %v1674
        %v4170 = vunpack.c.h.b16 %v1674
        %v4171 = vunpack.c.l.b16 %v1675
        %v4172 = vunpack.c.h.b16 %v1675
        %v4173 = vunpack.c.l.b16 %v1676
        %v4174 = vunpack.c.h.b16 %v1676
        %v4175 = vunpack.c.l.b16 %v1677
        %v4176 = vunpack.c.h.b16 %v1677
        %v4177 = vunpack.c.l.b16 %v1678
        %v4178 = vunpack.c.h.b16 %v1678
        %v4179 = vunpack.c.l.b16 %v1679
        %v4180 = vunpack.c.h.b16 %v1679
        %v4181 = vunpack.c.l.b16 %v1680
        %v4182 = vunpack.c.h.b16 %v1680
        %v4183 = vunpack.c.l.b16 %v1681
        %v4184 = vunpack.c.h.b16 %v1681
        %v4185 = vunpack.c.l.b16 %v1682
        %v4186 = vunpack.c.h.b16 %v1682
        %v4187 = vunpack.c.l.b16 %v1683
        %v4188 = vunpack.c.h.b16 %v1683
        %v4189 = vunpack.c.l.b16 %v1684
        %v4190 = vunpack.c.h.b16 %v1684
        %v4191 = vunpack.c.l.b16 %v1685
        %v4192 = vunpack.c.h.b16 %v1685
        %v4193 = vunpack.c.l.b16 %v1686
        %v4194 = vunpack.c.h.b16 %v1686
        %v4195 = vunpack.c.l.b16 %v1687
        %v4196 = vunpack.c.h.b16 %v1687
        %v4197 = vunpack.c.l.b16 %v1688
        %v4198 = vunpack.c.h.b16 %v1688
        %v4199 = vunpack.c.l.b16 %v1689
        %v4200 = vunpack.c.h.b16 %v1689
        %v4201 = vunpack.c.l.b16 %v1690
        %v4202 = vunpack.c.h.b16 %v1690
        %v4203 = vunpack.c.l.b16 %v1691
        %v4204 = vunpack.c.h.b16 %v1691
        %v4205 = vunpack.c.l.b16 %v1692
        %v4206 = vunpack.c.h.b16 %v1692
        %v4207 = vunpack.c.l.b16 %v1693
        %v4208 = vunpack.c.h.b16 %v1693
        %v4209 = vunpack.c.l.b16 %v1694
        %v4210 = vunpack.c.h.b16 %v1694
        %v4211 = vunpack.c.l.b16 %v1695
        %v4212 = vunpack.c.h.b16 %v1695
        %v4213 = vunpack.c.l.b16 %v1696
        %v4214 = vunpack.c.h.b16 %v1696
        %v4215 = vunpack.c.l.b16 %v1697
        %v4216 = vunpack.c.h.b16 %v1697
        %v4217 = vunpack.c.l.b16 %v1698
        %v4218 = vunpack.c.h.b16 %v1698
        %v4219 = vunpack.c.l.b16 %v1699
        %v4220 = vunpack.c.h.b16 %v1699
        %v4221 = vunpack.c.l.b16 %v1700
        %v4222 = vunpack.c.h.b16 %v1700
        %v4223 = vunpack.c.l.b16 %v1701
        %v4224 = vunpack.c.h.b16 %v1701
        %v4225 = vunpack.c.l.b16 %v1702
        %v4226 = vunpack.c.h.b16 %v1702
        %v4227 = vunpack.c.l.b16 %v1703
        %v4228 = vunpack.c.h.b16 %v1703
        %v4229 = vunpack.c.l.b16 %v1704
        %v4230 = vunpack.c.h.b16 %v1704
        %v4231 = vunpack.c.l.b16 %v1705
        %v4232 = vunpack.c.h.b16 %v1705
        %v4233 = vunpack.c.l.b16 %v1706
        %v4234 = vunpack.c.h.b16 %v1706
        %v4235 = vunpack.c.l.b16 %v1707
        %v4236 = vunpack.c.h.b16 %v1707
        %v4237 = vunpack.c.l.b16 %v1708
        %v4238 = vunpack.c.h.b16 %v1708
        %v4239 = vunpack.c.l.b16 %v1709
        %v4240 = vunpack.c.h.b16 %v1709
        %v4241 = vunpack.c.l.b16 %v1710
        %v4242 = vunpack.c.h.b16 %v1710
        %v4243 = vunpack.c.l.b16 %v1711
        %v4244 = vunpack.c.h.b16 %v1711
        %v4245 = vunpack.c.l.b16 %v1712
        %v4246 = vunpack.c.h.b16 %v1712
        %v4247 = vunpack.c.l.b16 %v1713
        %v4248 = vunpack.c.h.b16 %v1713
        %v4249 = vunpack.c.l.b16 %v1714
        %v4250 = vunpack.c.h.b16 %v1714
        %v4251 = vunpack.c.l.b16 %v1715
        %v4252 = vunpack.c.h.b16 %v1715
        %v4253 = vunpack.c.l.b16 %v1716
        %v4254 = vunpack.c.h.b16 %v1716
        %v4255 = vunpack.c.l.b16 %v1717
        %v4256 = vunpack.c.h.b16 %v1717
        %v4257 = vunpack.c.l.b16 %v1718
        %v4258 = vunpack.c.h.b16 %v1718
        %v4259 = vunpack.c.l.b16 %v1719
        %v4260 = vunpack.c.h.b16 %v1719
        %v4261 = vunpack.c.l.b16 %v1720
        %v4262 = vunpack.c.h.b16 %v1720
        %v4263 = vunpack.c.l.b16 %v1721
        %v4264 = vunpack.c.h.b16 %v1721
        %v4265 = vunpack.c.l.b16 %v1722
        %v4266 = vunpack.c.h.b16 %v1722
        %v4267 = vunpack.c.l.b16 %v1723
        %v4268 = vunpack.c.h.b16 %v1723
        %v4269 = vunpack.c.l.b16 %v1724
        %v4270 = vunpack.c.h.b16 %v1724
        %v4271 = vunpack.c.l.b16 %v1725
        %v4272 = vunpack.c.h.b16 %v1725
        %v4273 = vunpack.c.l.b16 %v1726
        %v4274 = vunpack.c.h.b16 %v1726
        %v4275 = vunpack.c.l.b16 %v1727
        %v4276 = vunpack.c.h.b16 %v1727
        %v4277 = vunpack.c.l.b16 %v1728
        %v4278 = vunpack.c.h.b16 %v1728
        %v4279 = vunpack.c.l.b16 %v1729
        %v4280 = vunpack.c.h.b16 %v1729
        %v4281 = vunpack.c.l.b16 %v1730
        %v4282 = vunpack.c.h.b16 %v1730
        %v4283 = vunpack.c.l.b16 %v1731
        %v4284 = vunpack.c.h.b16 %v1731
        %v4285 = vunpack.c.l.b16 %v1732
        %v4286 = vunpack.c.h.b16 %v1732
        %v4287 = vunpack.c.l.b16 %v1733
        %v4288 = vunpack.c.h.b16 %v1733
        %v4289 = vunpack.c.l.b16 %v1734
        %v4290 = vunpack.c.h.b16 %v1734
        %v4291 = vunpack.c.l.b16 %v1735
        %v4292 = vunpack.c.h.b16 %v1735
        %v4293 = vunpack.c.l.b16 %v1736
        %v4294 = vunpack.c.h.b16 %v1736
        %v4295 = vunpack.c.l.b16 %v1737
        %v4296 = vunpack.c.h.b16 %v1737
        %v4297 = vunpack.c.l.b16 %v1738
        %v4298 = vunpack.c.h.b16 %v1738
        %v4299 = vunpack.c.l.b16 %v1739
        %v4300 = vunpack.c.h.b16 %v1739
        %v4301 = vunpack.c.l.b16 %v1740
        %v4302 = vunpack.c.h.b16 %v1740
        %v4303 = vunpack.c.l.b16 %v1741
        %v4304 = vunpack.c.h.b16 %v1741
        %v4305 = vunpack.c.l.b16 %v1742
        %v4306 = vunpack.c.h.b16 %v1742
        %v4307 = vunpack.c.l.b16 %v1743
        %v4308 = vunpack.c.h.b16 %v1743
        %v4309 = vunpack.c.l.b16 %v1744
        %v4310 = vunpack.c.h.b16 %v1744
        %v4311 = vunpack.c.l.b16 %v1745
        %v4312 = vunpack.c.h.b16 %v1745
        %v4313 = vunpack.c.l.b16 %v1746
        %v4314 = vunpack.c.h.b16 %v1746
        %v4315 = vunpack.c.l.b16 %v1747
        %v4316 = vunpack.c.h.b16 %v1747
        %v4317 = vunpack.c.l.b16 %v1748
        %v4318 = vunpack.c.h.b16 %v1748
        %v4319 = vunpack.c.l.b16 %v1749
        %v4320 = vunpack.c.h.b16 %v1749
        %v4321 = vunpack.c.l.b16 %v1750
        %v4322 = vunpack.c.h.b16 %v1750
        %v4323 = vunpack.c.l.b16 %v1751
        %v4324 = vunpack.c.h.b16 %v1751
        %v4325 = vunpack.c.l.b16 %v1752
        %v4326 = vunpack.c.h.b16 %v1752
        %v4327 = vunpack.c.l.b16 %v1753
        %v4328 = vunpack.c.h.b16 %v1753
        %v4329 = vunpack.c.l.b16 %v1754
        %v4330 = vunpack.c.h.b16 %v1754
        %v4331 = vunpack.c.l.b16 %v1755
        %v4332 = vunpack.c.h.b16 %v1755
        %v4333 = vunpack.c.l.b16 %v1756
        %v4334 = vunpack.c.h.b16 %v1756
        %v4335 = vunpack.c.l.b16 %v1757
        %v4336 = vunpack.c.h.b16 %v1757
        %v4337 = vunpack.c.l.b16 %v1758
        %v4338 = vunpack.c.h.b16 %v1758
        %v4339 = vunpack.c.l.b16 %v1759
        %v4340 = vunpack.c.h.b16 %v1759
        %v4341 = vunpack.c.l.b16 %v1760
        %v4342 = vunpack.c.h.b16 %v1760
        %v4343 = vunpack.c.l.b16 %v1761
        %v4344 = vunpack.c.h.b16 %v1761
        %v4345 = vunpack.c.l.b16 %v1762
        %v4346 = vunpack.c.h.b16 %v1762
        %v4347 = vunpack.c.l.b16 %v1763
        %v4348 = vunpack.c.h.b16 %v1763
        %v4349 = vunpack.c.l.b16 %v1764
        %v4350 = vunpack.c.h.b16 %v1764
        %v4351 = vunpack.c.l.b16 %v1765
        %v4352 = vunpack.c.h.b16 %v1765
        %v4353 = vunpack.c.l.b16 %v1766
        %v4354 = vunpack.c.h.b16 %v1766
        %v4355 = vunpack.c.l.b16 %v1767
        %v4356 = vunpack.c.h.b16 %v1767
        %v4357 = vunpack.c.l.b16 %v1768
        %v4358 = vunpack.c.h.b16 %v1768
        %v4359 = vunpack.c.l.b16 %v1769
        %v4360 = vunpack.c.h.b16 %v1769
        %v4361 = vunpack.c.l.b16 %v1770
        %v4362 = vunpack.c.h.b16 %v1770
        %v4363 = vunpack.c.l.b16 %v1771
        %v4364 = vunpack.c.h.b16 %v1771
        %v4365 = vunpack.c.l.b16 %v1772
        %v4366 = vunpack.c.h.b16 %v1772
        %v4367 = vunpack.c.l.b16 %v1773
        %v4368 = vunpack.c.h.b16 %v1773
        %v4369 = vunpack.c.l.b16 %v1774
        %v4370 = vunpack.c.h.b16 %v1774
        %v4371 = vunpack.c.l.b16 %v1775
        %v4372 = vunpack.c.h.b16 %v1775
        %v4373 = vunpack.c.l.b16 %v1776
        %v4374 = vunpack.c.h.b16 %v1776
        %v4375 = vunpack.c.l.b16 %v1777
        %v4376 = vunpack.c.h.b16 %v1777
        %v4377 = vunpack.c.l.b16 %v1778
        %v4378 = vunpack.c.h.b16 %v1778
        %v4379 = vunpack.c.l.b16 %v1779
        %v4380 = vunpack.c.h.b16 %v1779
        %v4381 = vunpack.c.l.b16 %v1780
        %v4382 = vunpack.c.h.b16 %v1780
        %v4383 = vunpack.c.l.b16 %v1781
        %v4384 = vunpack.c.h.b16 %v1781
        %v4385 = vunpack.c.l.b16 %v1782
        %v4386 = vunpack.c.h.b16 %v1782
        %v4387 = vunpack.c.l.b16 %v1783
        %v4388 = vunpack.c.h.b16 %v1783
        %v4389 = vunpack.c.l.b16 %v1784
        %v4390 = vunpack.c.h.b16 %v1784
        %v4391 = vunpack.c.l.b16 %v1785
        %v4392 = vunpack.c.h.b16 %v1785
        %v4393 = vunpack.c.l.b16 %v1786
        %v4394 = vunpack.c.h.b16 %v1786
        %v4395 = vunpack.c.l.b16 %v1787
        %v4396 = vunpack.c.h.b16 %v1787
        %v4397 = vunpack.c.l.b16 %v1788
        %v4398 = vunpack.c.h.b16 %v1788
        %v4399 = vunpack.c.l.b16 %v1789
        %v4400 = vunpack.c.h.b16 %v1789
        %v4401 = vunpack.c.l.b16 %v1790
        %v4402 = vunpack.c.h.b16 %v1790
        %v4403 = vunpack.c.l.b16 %v1791
        %v4404 = vunpack.c.h.b16 %v1791
        %v4405 = vunpack.c.l.b16 %v1792
        %v4406 = vunpack.c.h.b16 %v1792
        %v4407 = vunpack.c.l.b16 %v1793
        %v4408 = vunpack.c.h.b16 %v1793
        %v4409 = vunpack.c.l.b16 %v1794
        %v4410 = vunpack.c.h.b16 %v1794
        %v4411 = vunpack.c.l.b16 %v1795
        %v4412 = vunpack.c.h.b16 %v1795
        %v4413 = vunpack.c.l.b16 %v1796
        %v4414 = vunpack.c.h.b16 %v1796
        %v4415 = vunpack.c.l.b16 %v1797
        %v4416 = vunpack.c.h.b16 %v1797
        %v4417 = vunpack.c.l.b16 %v1798
        %v4418 = vunpack.c.h.b16 %v1798
        %v4419 = vunpack.c.l.b16 %v1799
        %v4420 = vunpack.c.h.b16 %v1799
        %v4421 = vunpack.c.l.b16 %v1800
        %v4422 = vunpack.c.h.b16 %v1800
        %v4423 = vunpack.c.l.b16 %v1801
        %v4424 = vunpack.c.h.b16 %v1801
        %v4425 = vunpack.c.l.b16 %v1802
        %v4426 = vunpack.c.h.b16 %v1802
        %v4427 = vunpack.c.l.b16 %v1803
        %v4428 = vunpack.c.h.b16 %v1803
        %v4429 = vunpack.c.l.b16 %v1804
        %v4430 = vunpack.c.h.b16 %v1804
        %v4431 = vunpack.c.l.b16 %v1805
        %v4432 = vunpack.c.h.b16 %v1805
        %v4433 = vunpack.c.l.b16 %v1806
        %v4434 = vunpack.c.h.b16 %v1806
        %v4435 = vunpack.c.l.b16 %v1807
        %v4436 = vunpack.c.h.b16 %v1807
        %v4437 = vunpack.c.l.b16 %v1808
        %v4438 = vunpack.c.h.b16 %v1808
        %v4439 = vunpack.c.l.b16 %v1809
        %v4440 = vunpack.c.h.b16 %v1809
        %v4441 = vunpack.c.l.b16 %v1810
        %v4442 = vunpack.c.h.b16 %v1810
        %v4443 = vunpack.c.l.b16 %v1811
        %v4444 = vunpack.c.h.b16 %v1811
        %v4445 = vunpack.c.l.b16 %v1812
        %v4446 = vunpack.c.h.b16 %v1812
        %v4447 = vunpack.c.l.b16 %v1813
        %v4448 = vunpack.c.h.b16 %v1813
        %v4449 = vunpack.c.l.b16 %v1814
        %v4450 = vunpack.c.h.b16 %v1814
        %v4451 = vunpack.c.l.b16 %v1815
        %v4452 = vunpack.c.h.b16 %v1815
        %v4453 = vunpack.c.l.b16 %v1816
        %v4454 = vunpack.c.h.b16 %v1816
        %v4455 = vunpack.c.l.b16 %v1817
        %v4456 = vunpack.c.h.b16 %v1817
        %v4457 = vunpack.c.l.b16 %v1818
        %v4458 = vunpack.c.h.b16 %v1818
        %v4459 = vunpack.c.l.b16 %v1819
        %v4460 = vunpack.c.h.b16 %v1819
        %v4461 = vunpack.c.l.b16 %v1820
        %v4462 = vunpack.c.h.b16 %v1820
        %v4463 = vunpack.c.l.b16 %v1821
        %v4464 = vunpack.c.h.b16 %v1821
        %v4465 = vunpack.c.l.b16 %v1822
        %v4466 = vunpack.c.h.b16 %v1822
        %v4467 = vunpack.c.l.b16 %v1823
        %v4468 = vunpack.c.h.b16 %v1823
        %v4469 = vunpack.c.l.b16 %v1824
        %v4470 = vunpack.c.h.b16 %v1824
        %v4471 = vunpack.c.l.b16 %v1825
        %v4472 = vunpack.c.h.b16 %v1825
        %v4473 = vunpack.c.l.b16 %v1826
        %v4474 = vunpack.c.h.b16 %v1826
        %v4475 = vunpack.c.l.b16 %v1827
        %v4476 = vunpack.c.h.b16 %v1827
        %v4477 = vunpack.c.l.b16 %v1828
        %v4478 = vunpack.c.h.b16 %v1828
        %v4479 = vunpack.c.l.b16 %v1829
        %v4480 = vunpack.c.h.b16 %v1829
        %v4481 = vunpack.c.l.b16 %v1830
        %v4482 = vunpack.c.h.b16 %v1830
        %v4483 = vunpack.c.l.b16 %v1831
        %v4484 = vunpack.c.h.b16 %v1831
        %v4485 = vunpack.c.l.b16 %v1832
        %v4486 = vunpack.c.h.b16 %v1832
        %v4487 = vunpack.c.l.b16 %v1833
        %v4488 = vunpack.c.h.b16 %v1833
        %v4489 = vunpack.c.l.b16 %v1834
        %v4490 = vunpack.c.h.b16 %v1834
        %v4491 = vunpack.c.l.b16 %v1835
        %v4492 = vunpack.c.h.b16 %v1835
        %v4493 = vunpack.c.l.b16 %v1836
        %v4494 = vunpack.c.h.b16 %v1836
        %v4495 = vunpack.c.l.b16 %v1837
        %v4496 = vunpack.c.h.b16 %v1837
        %v4497 = vunpack.c.l.b16 %v1838
        %v4498 = vunpack.c.h.b16 %v1838
        %v4499 = vunpack.c.l.b16 %v1839
        %v4500 = vunpack.c.h.b16 %v1839
        %v4501 = vunpack.c.l.b16 %v1840
        %v4502 = vunpack.c.h.b16 %v1840
        %v4503 = vunpack.c.l.b16 %v1841
        %v4504 = vunpack.c.h.b16 %v1841
        %v4505 = vunpack.c.l.b16 %v1842
        %v4506 = vunpack.c.h.b16 %v1842
        %v4507 = vunpack.c.l.b16 %v1843
        %v4508 = vunpack.c.h.b16 %v1843
        %v4509 = vunpack.c.l.b16 %v1844
        %v4510 = vunpack.c.h.b16 %v1844
        %v4511 = vunpack.c.l.b16 %v1845
        %v4512 = vunpack.c.h.b16 %v1845
        %v4513 = vunpack.c.l.b16 %v1846
        %v4514 = vunpack.c.h.b16 %v1846
        %v4515 = vunpack.c.l.b16 %v1847
        %v4516 = vunpack.c.h.b16 %v1847
        %v4517 = vunpack.c.l.b16 %v1848
        %v4518 = vunpack.c.h.b16 %v1848
        %v4519 = vunpack.c.l.b16 %v1849
        %v4520 = vunpack.c.h.b16 %v1849
        %v4521 = vunpack.c.l.b16 %v1850
        %v4522 = vunpack.c.h.b16 %v1850
        %v4523 = vunpack.c.l.b16 %v1851
        %v4524 = vunpack.c.h.b16 %v1851
        %v4525 = vunpack.c.l.b16 %v1852
        %v4526 = vunpack.c.h.b16 %v1852
        %v4527 = vunpack.c.l.b16 %v1853
        %v4528 = vunpack.c.h.b16 %v1853
        %v4529 = vunpack.c.l.b16 %v1854
        %v4530 = vunpack.c.h.b16 %v1854
        %v4531 = vunpack.c.l.b16 %v1855
        %v4532 = vunpack.c.h.b16 %v1855
        %v4533 = vunpack.c.l.b16 %v1856
        %v4534 = vunpack.c.h.b16 %v1856
        %v4535 = vunpack.c.l.b16 %v1857
        %v4536 = vunpack.c.h.b16 %v1857
        %v4537 = vunpack.c.l.b16 %v1858
        %v4538 = vunpack.c.h.b16 %v1858
        %v4539 = vunpack.c.l.b16 %v1859
        %v4540 = vunpack.c.h.b16 %v1859
        %v4541 = vunpack.c.l.b16 %v1860
        %v4542 = vunpack.c.h.b16 %v1860
        %v4543 = vunpack.c.l.b16 %v1861
        %v4544 = vunpack.c.h.b16 %v1861
        %v4545 = vunpack.c.l.b16 %v1862
        %v4546 = vunpack.c.h.b16 %v1862
        %v4547 = vunpack.c.l.b16 %v1863
        %v4548 = vunpack.c.h.b16 %v1863
        %v4549 = vunpack.c.l.b16 %v1864
        %v4550 = vunpack.c.h.b16 %v1864
        %v4551 = vunpack.c.l.b16 %v1865
        %v4552 = vunpack.c.h.b16 %v1865
        %v4553 = vunpack.c.l.b16 %v1866
        %v4554 = vunpack.c.h.b16 %v1866
        %v4555 = vunpack.c.l.b16 %v1867
        %v4556 = vunpack.c.h.b16 %v1867
        %v4557 = vunpack.c.l.b16 %v1868
        %v4558 = vunpack.c.h.b16 %v1868
        %v4559 = vunpack.c.l.b16 %v1869
        %v4560 = vunpack.c.h.b16 %v1869
        %v4561 = vunpack.c.l.b16 %v1870
        %v4562 = vunpack.c.h.b16 %v1870
        %v4563 = vunpack.c.l.b16 %v1871
        %v4564 = vunpack.c.h.b16 %v1871
        %v4565 = vunpack.c.l.b16 %v1872
        %v4566 = vunpack.c.h.b16 %v1872
        %v4567 = vunpack.c.l.b16 %v1873
        %v4568 = vunpack.c.h.b16 %v1873
        %v4569 = vunpack.c.l.b16 %v1874
        %v4570 = vunpack.c.h.b16 %v1874
        %v4571 = vunpack.c.l.b16 %v1875
        %v4572 = vunpack.c.h.b16 %v1875
        %v4573 = vunpack.c.l.b16 %v1876
        %v4574 = vunpack.c.h.b16 %v1876
        %v4575 = vunpack.c.l.b16 %v1877
        %v4576 = vunpack.c.h.b16 %v1877
        %v4577 = vunpack.c.l.b16 %v1878
        %v4578 = vunpack.c.h.b16 %v1878
        %v4579 = vunpack.c.l.b16 %v1879
        %v4580 = vunpack.c.h.b16 %v1879
        %v4581 = vunpack.c.l.b16 %v1880
        %v4582 = vunpack.c.h.b16 %v1880
        %v4583 = vunpack.c.l.b16 %v1881
        %v4584 = vunpack.c.h.b16 %v1881
        %v4585 = vunpack.c.l.b16 %v1882
        %v4586 = vunpack.c.h.b16 %v1882
        %v4587 = vunpack.c.l.b16 %v1883
        %v4588 = vunpack.c.h.b16 %v1883
        %v4589 = vunpack.c.l.b16 %v1884
        %v4590 = vunpack.c.h.b16 %v1884
        %v4591 = vunpack.c.l.b16 %v1885
        %v4592 = vunpack.c.h.b16 %v1885
        %v4593 = vunpack.c.l.b16 %v1886
        %v4594 = vunpack.c.h.b16 %v1886
        %v4595 = vunpack.c.l.b16 %v1887
        %v4596 = vunpack.c.h.b16 %v1887
        %v4597 = vunpack.c.l.b16 %v1888
        %v4598 = vunpack.c.h.b16 %v1888
        %v4599 = vunpack.c.l.b16 %v1889
        %v4600 = vunpack.c.h.b16 %v1889
        %v4601 = vunpack.c.l.b16 %v1890
        %v4602 = vunpack.c.h.b16 %v1890
        %v4603 = vunpack.c.l.b16 %v1891
        %v4604 = vunpack.c.h.b16 %v1891
        %v4605 = vunpack.c.l.b16 %v1892
        %v4606 = vunpack.c.h.b16 %v1892
        %v4607 = vunpack.c.l.b16 %v1893
        %v4608 = vunpack.c.h.b16 %v1893
        %v4609 = vunpack.c.l.b16 %v1894
        %v4610 = vunpack.c.h.b16 %v1894
        %v4611 = vunpack.c.l.b16 %v1895
        %v4612 = vunpack.c.h.b16 %v1895
        %v4613 = vunpack.c.l.b16 %v1896
        %v4614 = vunpack.c.h.b16 %v1896
        %v4615 = vunpack.c.l.b16 %v1897
        %v4616 = vunpack.c.h.b16 %v1897
        %v4617 = vunpack.c.l.b16 %v1898
        %v4618 = vunpack.c.h.b16 %v1898
        %v4619 = vunpack.c.l.b16 %v1899
        %v4620 = vunpack.c.h.b16 %v1899
        %v4621 = vunpack.c.l.b16 %v1900
        %v4622 = vunpack.c.h.b16 %v1900
        %v4623 = vunpack.c.l.b16 %v1901
        %v4624 = vunpack.c.h.b16 %v1901
        %v4625 = vunpack.c.l.b16 %v1902
        %v4626 = vunpack.c.h.b16 %v1902
        %v4627 = vunpack.c.l.b16 %v1903
        %v4628 = vunpack.c.h.b16 %v1903
        %v4629 = vunpack.c.l.b16 %v1904
        %v4630 = vunpack.c.h.b16 %v1904
        %v4631 = vunpack.c.l.b16 %v1905
        %v4632 = vunpack.c.h.b16 %v1905
        %v4633 = vunpack.c.l.b16 %v1906
        %v4634 = vunpack.c.h.b16 %v1906
        %v4635 = vunpack.c.l.b16 %v1907
        %v4636 = vunpack.c.h.b16 %v1907
        %v4637 = vpack.c.b16 %v4129, %v4125
        %v4638 = vpack.c.b16 %v4130, %v4126
        %v4639 = vpack.c.b16 %v4131, %v4127
        %v4640 = vpack.c.b16 %v4132, %v4128
        %v4641 = vpack.c.b16 %v4137, %v4133
        %v4642 = vpack.c.b16 %v4138, %v4134
        %v4643 = vpack.c.b16 %v4139, %v4135
        %v4644 = vpack.c.b16 %v4140, %v4136
        %v4645 = vpack.c.b16 %v4145, %v4141
        %v4646 = vpack.c.b16 %v4146, %v4142
        %v4647 = vpack.c.b16 %v4147, %v4143
        %v4648 = vpack.c.b16 %v4148, %v4144
        %v4649 = vpack.c.b16 %v4153, %v4149
        %v4650 = vpack.c.b16 %v4154, %v4150
        %v4651 = vpack.c.b16 %v4155, %v4151
        %v4652 = vpack.c.b16 %v4156, %v4152
        %v4653 = vpack.c.b16 %v4161, %v4157
        %v4654 = vpack.c.b16 %v4162, %v4158
        %v4655 = vpack.c.b16 %v4163, %v4159
        %v4656 = vpack.c.b16 %v4164, %v4160
        %v4657 = vpack.c.b16 %v4169, %v4165
        %v4658 = vpack.c.b16 %v4170, %v4166
        %v4659 = vpack.c.b16 %v4171, %v4167
        %v4660 = vpack.c.b16 %v4172, %v4168
        %v4661 = vpack.c.b16 %v4177, %v4173
        %v4662 = vpack.c.b16 %v4178, %v4174
        %v4663 = vpack.c.b16 %v4179, %v4175
        %v4664 = vpack.c.b16 %v4180, %v4176
        %v4665 = vpack.c.b16 %v4185, %v4181
        %v4666 = vpack.c.b16 %v4186, %v4182
        %v4667 = vpack.c.b16 %v4187, %v4183
        %v4668 = vpack.c.b16 %v4188, %v4184
        %v4669 = vpack.c.b16 %v4193, %v4189
        %v4670 = vpack.c.b16 %v4194, %v4190
        %v4671 = vpack.c.b16 %v4195, %v4191
        %v4672 = vpack.c.b16 %v4196, %v4192
        %v4673 = vpack.c.b16 %v4201, %v4197
        %v4674 = vpack.c.b16 %v4202, %v4198
        %v4675 = vpack.c.b16 %v4203, %v4199
        %v4676 = vpack.c.b16 %v4204, %v4200
        %v4677 = vpack.c.b16 %v4209, %v4205
        %v4678 = vpack.c.b16 %v4210, %v4206
        %v4679 = vpack.c.b16 %v4211, %v4207
        %v4680 = vpack.c.b16 %v4212, %v4208
        %v4681 = vpack.c.b16 %v4217, %v4213
        %v4682 = vpack.c.b16 %v4218, %v4214
        %v4683 = vpack.c.b16 %v4219, %v4215
        %v4684 = vpack.c.b16 %v4220, %v4216
        %v4685 = vpack.c.b16 %v4225, %v4221
        %v4686 = vpack.c.b16 %v4226, %v4222
        %v4687 = vpack.c.b16 %v4227, %v4223
        %v4688 = vpack.c.b16 %v4228, %v4224
        %v4689 = vpack.c.b16 %v4233, %v4229
        %v4690 = vpack.c.b16 %v4234, %v4230
        %v4691 = vpack.c.b16 %v4235, %v4231
        %v4692 = vpack.c.b16 %v4236, %v4232
        %v4693 = vpack.c.b16 %v4241, %v4237
        %v4694 = vpack.c.b16 %v4242, %v4238
        %v4695 = vpack.c.b16 %v4243, %v4239
        %v4696 = vpack.c.b16 %v4244, %v4240
        %v4697 = vpack.c.b16 %v4249, %v4245
        %v4698 = vpack.c.b16 %v4250, %v4246
        %v4699 = vpack.c.b16 %v4251, %v4247
        %v4700 = vpack.c.b16 %v4252, %v4248
        %v4701 = vpack.c.b16 %v4257, %v4253
        %v4702 = vpack.c.b16 %v4258, %v4254
        %v4703 = vpack.c.b16 %v4259, %v4255
        %v4704 = vpack.c.b16 %v4260, %v4256
        %v4705 = vpack.c.b16 %v4265, %v4261
        %v4706 = vpack.c.b16 %v4266, %v4262
        %v4707 = vpack.c.b16 %v4267, %v4263
        %v4708 = vpack.c.b16 %v4268, %v4264
        %v4709 = vpack.c.b16 %v4273, %v4269
        %v4710 = vpack.c.b16 %v4274, %v4270
        %v4711 = vpack.c.b16 %v4275, %v4271
        %v4712 = vpack.c.b16 %v4276, %v4272
        %v4713 = vpack.c.b16 %v4281, %v4277
        %v4714 = vpack.c.b16 %v4282, %v4278
        %v4715 = vpack.c.b16 %v4283, %v4279
        %v4716 = vpack.c.b16 %v4284, %v4280
        %v4717 = vpack.c.b16 %v4289, %v4285
        %v4718 = vpack.c.b16 %v4290, %v4286
        %v4719 = vpack.c.b16 %v4291, %v4287
        %v4720 = vpack.c.b16 %v4292, %v4288
        %v4721 = vpack.c.b16 %v4297, %v4293
        %v4722 = vpack.c.b16 %v4298, %v4294
        %v4723 = vpack.c.b16 %v4299, %v4295
        %v4724 = vpack.c.b16 %v4300, %v4296
        %v4725 = vpack.c.b16 %v4305, %v4301
        %v4726 = vpack.c.b16 %v4306, %v4302
        %v4727 = vpack.c.b16 %v4307, %v4303
        %v4728 = vpack.c.b16 %v4308, %v4304
        %v4729 = vpack.c.b16 %v4313, %v4309
        %v4730 = vpack.c.b16 %v4314, %v4310
        %v4731 = vpack.c.b16 %v4315, %v4311
        %v4732 = vpack.c.b16 %v4316, %v4312
        %v4733 = vpack.c.b16 %v4321, %v4317
        %v4734 = vpack.c.b16 %v4322, %v4318
        %v4735 = vpack.c.b16 %v4323, %v4319
        %v4736 = vpack.c.b16 %v4324, %v4320
        %v4737 = vpack.c.b16 %v4329, %v4325
        %v4738 = vpack.c.b16 %v4330, %v4326
        %v4739 = vpack.c.b16 %v4331, %v4327
        %v4740 = vpack.c.b16 %v4332, %v4328
        %v4741 = vpack.c.b16 %v4337, %v4333
        %v4742 = vpack.c.b16 %v4338, %v4334
        %v4743 = vpack.c.b16 %v4339, %v4335
        %v4744 = vpack.c.b16 %v4340, %v4336
        %v4745 = vpack.c.b16 %v4345, %v4341
        %v4746 = vpack.c.b16 %v4346, %v4342
        %v4747 = vpack.c.b16 %v4347, %v4343
        %v4748 = vpack.c.b16 %v4348, %v4344
        %v4749 = vpack.c.b16 %v4353, %v4349
        %v4750 = vpack.c.b16 %v4354, %v4350
        %v4751 = vpack.c.b16 %v4355, %v4351
        %v4752 = vpack.c.b16 %v4356, %v4352
        %v4753 = vpack.c.b16 %v4361, %v4357
        %v4754 = vpack.c.b16 %v4362, %v4358
        %v4755 = vpack.c.b16 %v4363, %v4359
        %v4756 = vpack.c.b16 %v4364, %v4360
        %v4757 = vpack.c.b16 %v4369, %v4365
        %v4758 = vpack.c.b16 %v4370, %v4366
        %v4759 = vpack.c.b16 %v4371, %v4367
        %v4760 = vpack.c.b16 %v4372, %v4368
        %v4761 = vpack.c.b16 %v4377, %v4373
        %v4762 = vpack.c.b16 %v4378, %v4374
        %v4763 = vpack.c.b16 %v4379, %v4375
        %v4764 = vpack.c.b16 %v4380, %v4376
        %v4765 = vpack.c.b16 %v4385, %v4381
        %v4766 = vpack.c.b16 %v4386, %v4382
        %v4767 = vpack.c.b16 %v4387, %v4383
        %v4768 = vpack.c.b16 %v4388, %v4384
        %v4769 = vpack.c.b16 %v4393, %v4389
        %v4770 = vpack.c.b16 %v4394, %v4390
        %v4771 = vpack.c.b16 %v4395, %v4391
        %v4772 = vpack.c.b16 %v4396, %v4392
        %v4773 = vpack.c.b16 %v4401, %v4397
        %v4774 = vpack.c.b16 %v4402, %v4398
        %v4775 = vpack.c.b16 %v4403, %v4399
        %v4776 = vpack.c.b16 %v4404, %v4400
        %v4777 = vpack.c.b16 %v4409, %v4405
        %v4778 = vpack.c.b16 %v4410, %v4406
        %v4779 = vpack.c.b16 %v4411, %v4407
        %v4780 = vpack.c.b16 %v4412, %v4408
        %v4781 = vpack.c.b16 %v4417, %v4413
        %v4782 = vpack.c.b16 %v4418, %v4414
        %v4783 = vpack.c.b16 %v4419, %v4415
        %v4784 = vpack.c.b16 %v4420, %v4416
        %v4785 = vpack.c.b16 %v4425, %v4421
        %v4786 = vpack.c.b16 %v4426, %v4422
        %v4787 = vpack.c.b16 %v4427, %v4423
        %v4788 = vpack.c.b16 %v4428, %v4424
        %v4789 = vpack.c.b16 %v4433, %v4429
        %v4790 = vpack.c.b16 %v4434, %v4430
        %v4791 = vpack.c.b16 %v4435, %v4431
        %v4792 = vpack.c.b16 %v4436, %v4432
        %v4793 = vpack.c.b16 %v4441, %v4437
        %v4794 = vpack.c.b16 %v4442, %v4438
        %v4795 = vpack.c.b16 %v4443, %v4439
        %v4796 = vpack.c.b16 %v4444, %v4440
        %v4797 = vpack.c.b16 %v4449, %v4445
        %v4798 = vpack.c.b16 %v4450, %v4446
        %v4799 = vpack.c.b16 %v4451, %v4447
        %v4800 = vpack.c.b16 %v4452, %v4448
        %v4801 = vpack.c.b16 %v4457, %v4453
        %v4802 = vpack.c.b16 %v4458, %v4454
        %v4803 = vpack.c.b16 %v4459, %v4455
        %v4804 = vpack.c.b16 %v4460, %v4456
        %v4805 = vpack.c.b16 %v4465, %v4461
        %v4806 = vpack.c.b16 %v4466, %v4462
        %v4807 = vpack.c.b16 %v4467, %v4463
        %v4808 = vpack.c.b16 %v4468, %v4464
        %v4809 = vpack.c.b16 %v4473, %v4469
        %v4810 = vpack.c.b16 %v4474, %v4470
        %v4811 = vpack.c.b16 %v4475, %v4471
        %v4812 = vpack.c.b16 %v4476, %v4472
        %v4813 = vpack.c.b16 %v4481, %v4477
        %v4814 = vpack.c.b16 %v4482, %v4478
        %v4815 = vpack.c.b16 %v4483, %v4479
        %v4816 = vpack.c.b16 %v4484, %v4480
        %v4817 = vpack.c.b16 %v4489, %v4485
        %v4818 = vpack.c.b16 %v4490, %v4486
        %v4819 = vpack.c.b16 %v4491, %v4487
        %v4820 = vpack.c.b16 %v4492, %v4488
        %v4821 = vpack.c.b16 %v4497, %v4493
        %v4822 = vpack.c.b16 %v4498, %v4494
        %v4823 = vpack.c.b16 %v4499, %v4495
        %v4824 = vpack.c.b16 %v4500, %v4496
        %v4825 = vpack.c.b16 %v4505, %v4501
        %v4826 = vpack.c.b16 %v4506, %v4502
        %v4827 = vpack.c.b16 %v4507, %v4503
        %v4828 = vpack.c.b16 %v4508, %v4504
        %v4829 = vpack.c.b16 %v4513, %v4509
        %v4830 = vpack.c.b16 %v4514, %v4510
        %v4831 = vpack.c.b16 %v4515, %v4511
        %v4832 = vpack.c.b16 %v4516, %v4512
        %v4833 = vpack.c.b16 %v4521, %v4517
        %v4834 = vpack.c.b16 %v4522, %v4518
        %v4835 = vpack.c.b16 %v4523, %v4519
        %v4836 = vpack.c.b16 %v4524, %v4520
        %v4837 = vpack.c.b16 %v4529, %v4525
        %v4838 = vpack.c.b16 %v4530, %v4526
        %v4839 = vpack.c.b16 %v4531, %v4527
        %v4840 = vpack.c.b16 %v4532, %v4528
        %v4841 = vpack.c.b16 %v4537, %v4533
        %v4842 = vpack.c.b16 %v4538, %v4534
        %v4843 = vpack.c.b16 %v4539, %v4535
        %v4844 = vpack.c.b16 %v4540, %v4536
        %v4845 = vpack.c.b16 %v4545, %v4541
        %v4846 = vpack.c.b16 %v4546, %v4542
        %v4847 = vpack.c.b16 %v4547, %v4543
        %v4848 = vpack.c.b16 %v4548, %v4544
        %v4849 = vpack.c.b16 %v4553, %v4549
        %v4850 = vpack.c.b16 %v4554, %v4550
        %v4851 = vpack.c.b16 %v4555, %v4551
        %v4852 = vpack.c.b16 %v4556, %v4552
        %v4853 = vpack.c.b16 %v4561, %v4557
        %v4854 = vpack.c.b16 %v4562, %v4558
        %v4855 = vpack.c.b16 %v4563, %v4559
        %v4856 = vpack.c.b16 %v4564, %v4560
        %v4857 = vpack.c.b16 %v4569, %v4565
        %v4858 = vpack.c.b16 %v4570, %v4566
        %v4859 = vpack.c.b16 %v4571, %v4567
        %v4860 = vpack.c.b16 %v4572, %v4568
        %v4861 = vpack.c.b16 %v4577, %v4573
        %v4862 = vpack.c.b16 %v4578, %v4574
        %v4863 = vpack.c.b16 %v4579, %v4575
        %v4864 = vpack.c.b16 %v4580, %v4576
        %v4865 = vpack.c.b16 %v4585, %v4581
        %v4866 = vpack.c.b16 %v4586, %v4582
        %v4867 = vpack.c.b16 %v4587, %v4583
        %v4868 = vpack.c.b16 %v4588, %v4584
        %v4869 = vpack.c.b16 %v4593, %v4589
        %v4870 = vpack.c.b16 %v4594, %v4590
        %v4871 = vpack.c.b16 %v4595, %v4591
        %v4872 = vpack.c.b16 %v4596, %v4592
        %v4873 = vpack.c.b16 %v4601, %v4597
        %v4874 = vpack.c.b16 %v4602, %v4598
        %v4875 = vpack.c.b16 %v4603, %v4599
        %v4876 = vpack.c.b16 %v4604, %v4600
        %v4877 = vpack.c.b16 %v4609, %v4605
        %v4878 = vpack.c.b16 %v4610, %v4606
        %v4879 = vpack.c.b16 %v4611, %v4607
        %v4880 = vpack.c.b16 %v4612, %v4608
        %v4881 = vpack.c.b16 %v4617, %v4613
        %v4882 = vpack.c.b16 %v4618, %v4614
        %v4883 = vpack.c.b16 %v4619, %v4615
        %v4884 = vpack.c.b16 %v4620, %v4616
        %v4885 = vpack.c.b16 %v4625, %v4621
        %v4886 = vpack.c.b16 %v4626, %v4622
        %v4887 = vpack.c.b16 %v4627, %v4623
        %v4888 = vpack.c.b16 %v4628, %v4624
        %v4889 = vpack.c.b16 %v4633, %v4629
        %v4890 = vpack.c.b16 %v4634, %v4630
        %v4891 = vpack.c.b16 %v4635, %v4631
        %v4892 = vpack.c.b16 %v4636, %v4632
        %5149 = vmatprep.subr.bf16.mxu0 %v4638
        %5150 = vmatpush1.bf16.msra.mxu0 %v4637
        %5151 = vmatprep.subr.bf16.mxu0 %v4642
        %5152 = vmatpush1.bf16.msra.mxu0 %v4641
        %5153 = vmatprep.subr.bf16.mxu0 %v4646
        %5154 = vmatpush1.bf16.msra.mxu0 %v4645
        %5155 = vmatprep.subr.bf16.mxu0 %v4650
        %5156 = vmatpush1.bf16.msra.mxu0 %v4649
        %5157 = vmatprep.subr.bf16.mxu0 %v4654
        %5158 = vmatpush1.bf16.msra.mxu0 %v4653
        %5159 = vmatprep.subr.bf16.mxu0 %v4658
        %5160 = vmatpush1.bf16.msra.mxu0 %v4657
        %5161 = vmatprep.subr.bf16.mxu0 %v4662
        %5162 = vmatpush1.bf16.msra.mxu0 %v4661
        %5163 = vmatprep.subr.bf16.mxu0 %v4666
        %5164 = vmatpush1.bf16.msra.mxu0 %v4665
        %5165 = vmatprep.subr.bf16.mxu0 %v4670
        %5166 = vmatpush1.bf16.msra.mxu0 %v4669
        %5167 = vmatprep.subr.bf16.mxu0 %v4674
        %5168 = vmatpush1.bf16.msra.mxu0 %v4673
        %5169 = vmatprep.subr.bf16.mxu0 %v4678
        %5170 = vmatpush1.bf16.msra.mxu0 %v4677
        %5171 = vmatprep.subr.bf16.mxu0 %v4682
        %5172 = vmatpush1.bf16.msra.mxu0 %v4681
        %5173 = vmatprep.subr.bf16.mxu0 %v4686
        %5174 = vmatpush1.bf16.msra.mxu0 %v4685
        %5175 = vmatprep.subr.bf16.mxu0 %v4690
        %5176 = vmatpush1.bf16.msra.mxu0 %v4689
        %5177 = vmatprep.subr.bf16.mxu0 %v4694
        %5178 = vmatpush1.bf16.msra.mxu0 %v4693
        %5179 = vmatprep.subr.bf16.mxu0 %v4698
        %5180 = vmatpush1.bf16.msra.mxu0 %v4697
        %5181 = vmatprep.mubr.bf16.mxu0 %v1629
        %5182 = vmatmul.mubr.bf16.gmra.mrb[0].mxu0 %v1628
        %v5183 = vpop.f32.mrb[0].mxu0
        %v5184 = vadd.f32 %v3639, %v5183
        %v5185 = vpop.f32.mrb[0].mxu0
        %v5186 = vadd.f32 %v3641, %v5185
        %v5187 = vpop.f32.mrb[0].mxu0
        %v5188 = vadd.f32 %v3643, %v5187
        %v5189 = vpop.f32.mrb[0].mxu0
        %v5190 = vadd.f32 %v3645, %v5189
        %5191 = vmatprep.mubr.bf16.mxu0 %v1637
        %5192 = vmatmul.mubr.bf16.gmra.mrb[0].mxu0 %v1636
        %v5193 = vpop.f32.mrb[0].mxu0
        %v5194 = vadd.f32 %v3649, %v5193
        %v5195 = vpop.f32.mrb[0].mxu0
        %v5196 = vadd.f32 %v3651, %v5195
        %v5197 = vpop.f32.mrb[0].mxu0
        %v5198 = vadd.f32 %v3653, %v5197
        %v5199 = vpop.f32.mrb[0].mxu0
        %v5200 = vadd.f32 %v3655, %v5199
        %5201 = vdwg.mxu0
        %5202 = vmatprep.subr.bf16.mxu0 %v4702
        %5203 = vmatpush1.bf16.msra.mxu0 %v4701
        %5204 = vmatprep.subr.bf16.mxu0 %v4706
        %5205 = vmatpush1.bf16.msra.mxu0 %v4705
        %5206 = vmatprep.subr.bf16.mxu0 %v4710
        %5207 = vmatpush1.bf16.msra.mxu0 %v4709
        %5208 = vmatprep.subr.bf16.mxu0 %v4714
        %5209 = vmatpush1.bf16.msra.mxu0 %v4713
        %5210 = vmatprep.subr.bf16.mxu0 %v4718
        %5211 = vmatpush1.bf16.msra.mxu0 %v4717
        %5212 = vmatprep.subr.bf16.mxu0 %v4722
        %5213 = vmatpush1.bf16.msra.mxu0 %v4721
        %5214 = vmatprep.subr.bf16.mxu0 %v4726
        %5215 = vmatpush1.bf16.msra.mxu0 %v4725
        %5216 = vmatprep.subr.bf16.mxu0 %v4730
        %5217 = vmatpush1.bf16.msra.mxu0 %v4729
        %5218 = vmatprep.subr.bf16.mxu0 %v4734
        %5219 = vmatpush1.bf16.msra.mxu0 %v4733
        %5220 = vmatprep.subr.bf16.mxu0 %v4738
        %5221 = vmatpush1.bf16.msra.mxu0 %v4737
        %5222 = vmatprep.subr.bf16.mxu0 %v4742
        %5223 = vmatpush1.bf16.msra.mxu0 %v4741
        %5224 = vmatprep.subr.bf16.mxu0 %v4746
        %5225 = vmatpush1.bf16.msra.mxu0 %v4745
        %5226 = vmatprep.subr.bf16.mxu0 %v4750
        %5227 = vmatpush1.bf16.msra.mxu0 %v4749
        %5228 = vmatprep.subr.bf16.mxu0 %v4754
        %5229 = vmatpush1.bf16.msra.mxu0 %v4753
        %5230 = vmatprep.subr.bf16.mxu0 %v4758
        %5231 = vmatpush1.bf16.msra.mxu0 %v4757
        %5232 = vmatprep.subr.bf16.mxu0 %v4762
        %5233 = vmatpush1.bf16.msra.mxu0 %v4761
        %5234 = vmatprep.mubr.bf16.mxu0 %v1631
        %5235 = vmatmul.mubr.bf16.gmra.mrb[0].mxu0 %v1630
        %v5236 = vpop.f32.mrb[0].mxu0
        %v5237 = vadd.f32 %v5184, %v5236
        %v5238 = vpop.f32.mrb[0].mxu0
        %v5239 = vadd.f32 %v5186, %v5238
        %v5240 = vpop.f32.mrb[0].mxu0
        %v5241 = vadd.f32 %v5188, %v5240
        %v5242 = vpop.f32.mrb[0].mxu0
        %v5243 = vadd.f32 %v5190, %v5242
        %5244 = vmatprep.mubr.bf16.mxu0 %v1639
        %5245 = vmatmul.mubr.bf16.gmra.mrb[0].mxu0 %v1638
        %v5246 = vpop.f32.mrb[0].mxu0
        %v5247 = vadd.f32 %v5194, %v5246
        %v5248 = vpop.f32.mrb[0].mxu0
        %v5249 = vadd.f32 %v5196, %v5248
        %v5250 = vpop.f32.mrb[0].mxu0
        %v5251 = vadd.f32 %v5198, %v5250
        %v5252 = vpop.f32.mrb[0].mxu0
        %v5253 = vadd.f32 %v5200, %v5252
        %5254 = vdwg.mxu0
        %5255 = vmatprep.subr.bf16.mxu0 %v4766
        %5256 = vmatpush1.bf16.msra.mxu0 %v4765
        %5257 = vmatprep.subr.bf16.mxu0 %v4770
        %5258 = vmatpush1.bf16.msra.mxu0 %v4769
        %5259 = vmatprep.subr.bf16.mxu0 %v4774
        %5260 = vmatpush1.bf16.msra.mxu0 %v4773
        %5261 = vmatprep.subr.bf16.mxu0 %v4778
        %5262 = vmatpush1.bf16.msra.mxu0 %v4777
        %5263 = vmatprep.subr.bf16.mxu0 %v4782
        %5264 = vmatpush1.bf16.msra.mxu0 %v4781
        %5265 = vmatprep.subr.bf16.mxu0 %v4786
        %5266 = vmatpush1.bf16.msra.mxu0 %v4785
        %5267 = vmatprep.subr.bf16.mxu0 %v4790
        %5268 = vmatpush1.bf16.msra.mxu0 %v4789
        %5269 = vmatprep.subr.bf16.mxu0 %v4794
        %5270 = vmatpush1.bf16.msra.mxu0 %v4793
        %5271 = vmatprep.subr.bf16.mxu0 %v4798
        %5272 = vmatpush1.bf16.msra.mxu0 %v4797
        %5273 = vmatprep.subr.bf16.mxu0 %v4802
        %5274 = vmatpush1.bf16.msra.mxu0 %v4801
        %5275 = vmatprep.subr.bf16.mxu0 %v4806
        %5276 = vmatpush1.bf16.msra.mxu0 %v4805
        %5277 = vmatprep.subr.bf16.mxu0 %v4810
        %5278 = vmatpush1.bf16.msra.mxu0 %v4809
        %5279 = vmatprep.subr.bf16.mxu0 %v4814
        %5280 = vmatpush1.bf16.msra.mxu0 %v4813
        %5281 = vmatprep.subr.bf16.mxu0 %v4818
        %5282 = vmatpush1.bf16.msra.mxu0 %v4817
        %5283 = vmatprep.subr.bf16.mxu0 %v4822
        %5284 = vmatpush1.bf16.msra.mxu0 %v4821
        %5285 = vmatprep.subr.bf16.mxu0 %v4826
        %5286 = vmatpush1.bf16.msra.mxu0 %v4825
        %5287 = vmatprep.mubr.bf16.mxu0 %v1633
        %5288 = vmatmul.mubr.bf16.gmra.mrb[0].mxu0 %v1632
        %v5289 = vpop.f32.mrb[0].mxu0
        %v5290 = vadd.f32 %v5237, %v5289
        %v5291 = vpop.f32.mrb[0].mxu0
        %v5292 = vadd.f32 %v5239, %v5291
        %v5293 = vpop.f32.mrb[0].mxu0
        %v5294 = vadd.f32 %v5241, %v5293
        %v5295 = vpop.f32.mrb[0].mxu0
        %v5296 = vadd.f32 %v5243, %v5295
        %5297 = vmatprep.mubr.bf16.mxu0 %v1641
        %5298 = vmatmul.mubr.bf16.gmra.mrb[0].mxu0 %v1640
        %v5299 = vpop.f32.mrb[0].mxu0
        %v5300 = vadd.f32 %v5247, %v5299
        %v5301 = vpop.f32.mrb[0].mxu0
        %v5302 = vadd.f32 %v5249, %v5301
        %v5303 = vpop.f32.mrb[0].mxu0
        %v5304 = vadd.f32 %v5251, %v5303
        %v5305 = vpop.f32.mrb[0].mxu0
        %v5306 = vadd.f32 %v5253, %v5305
        %5307 = vdwg.mxu0
        %5308 = vmatprep.subr.bf16.mxu0 %v4830
        %5309 = vmatpush1.bf16.msra.mxu0 %v4829
        %5310 = vmatprep.subr.bf16.mxu0 %v4834
        %5311 = vmatpush1.bf16.msra.mxu0 %v4833
        %5312 = vmatprep.subr.bf16.mxu0 %v4838
        %5313 = vmatpush1.bf16.msra.mxu0 %v4837
        %5314 = vmatprep.subr.bf16.mxu0 %v4842
        %5315 = vmatpush1.bf16.msra.mxu0 %v4841
        %5316 = vmatprep.subr.bf16.mxu0 %v4846
        %5317 = vmatpush1.bf16.msra.mxu0 %v4845
        %5318 = vmatprep.subr.bf16.mxu0 %v4850
        %5319 = vmatpush1.bf16.msra.mxu0 %v4849
        %5320 = vmatprep.subr.bf16.mxu0 %v4854
        %5321 = vmatpush1.bf16.msra.mxu0 %v4853
        %5322 = vmatprep.subr.bf16.mxu0 %v4858
        %5323 = vmatpush1.bf16.msra.mxu0 %v4857
        %5324 = vmatprep.subr.bf16.mxu0 %v4862
        %5325 = vmatpush1.bf16.msra.mxu0 %v4861
        %5326 = vmatprep.subr.bf16.mxu0 %v4866
        %5327 = vmatpush1.bf16.msra.mxu0 %v4865
        %5328 = vmatprep.subr.bf16.mxu0 %v4870
        %5329 = vmatpush1.bf16.msra.mxu0 %v4869
        %5330 = vmatprep.subr.bf16.mxu0 %v4874
        %5331 = vmatpush1.bf16.msra.mxu0 %v4873
        %5332 = vmatprep.subr.bf16.mxu0 %v4878
        %5333 = vmatpush1.bf16.msra.mxu0 %v4877
        %5334 = vmatprep.subr.bf16.mxu0 %v4882
        %5335 = vmatpush1.bf16.msra.mxu0 %v4881
        %5336 = vmatprep.subr.bf16.mxu0 %v4886
        %5337 = vmatpush1.bf16.msra.mxu0 %v4885
        %5338 = vmatprep.subr.bf16.mxu0 %v4890
        %5339 = vmatpush1.bf16.msra.mxu0 %v4889
        %5340 = vmatprep.mubr.bf16.mxu0 %v1635
        %5341 = vmatmul.mubr.bf16.gmra.mrb[0].mxu0 %v1634
        %v5342 = vpop.f32.mrb[0].mxu0
        %v5343 = vadd.f32 %v5290, %v5342
        %v5344 = vpop.f32.mrb[0].mxu0
        %v5345 = vadd.f32 %v5292, %v5344
        %v5346 = vpop.f32.mrb[0].mxu0
        %v5347 = vadd.f32 %v5294, %v5346
        %v5348 = vpop.f32.mrb[0].mxu0
        %v5349 = vadd.f32 %v5296, %v5348
        %5350 = vmatprep.mubr.bf16.mxu0 %v1643
        %5351 = vmatmul.mubr.bf16.gmra.mrb[0].mxu0 %v1642
        %v5352 = vpop.f32.mrb[0].mxu0
        %v5353 = vadd.f32 %v5300, %v5352
        %v5354 = vpop.f32.mrb[0].mxu0
        %v5355 = vadd.f32 %v5302, %v5354
        %v5356 = vpop.f32.mrb[0].mxu0
        %v5357 = vadd.f32 %v5304, %v5356
        %v5358 = vpop.f32.mrb[0].mxu0
        %v5359 = vadd.f32 %v5306, %v5358
        %5360 = vdwg.mxu0
        %5361 = vmatprep.subr.bf16.mxu0 %v4640
        %5362 = vmatpush1.bf16.msra.mxu0 %v4639
        %5363 = vmatprep.subr.bf16.mxu0 %v4644
        %5364 = vmatpush1.bf16.msra.mxu0 %v4643
        %5365 = vmatprep.subr.bf16.mxu0 %v4648
        %5366 = vmatpush1.bf16.msra.mxu0 %v4647
        %5367 = vmatprep.subr.bf16.mxu0 %v4652
        %5368 = vmatpush1.bf16.msra.mxu0 %v4651
        %5369 = vmatprep.subr.bf16.mxu0 %v4656
        %5370 = vmatpush1.bf16.msra.mxu0 %v4655
        %5371 = vmatprep.subr.bf16.mxu0 %v4660
        %5372 = vmatpush1.bf16.msra.mxu0 %v4659
        %5373 = vmatprep.subr.bf16.mxu0 %v4664
        %5374 = vmatpush1.bf16.msra.mxu0 %v4663
        %5375 = vmatprep.subr.bf16.mxu0 %v4668
        %5376 = vmatpush1.bf16.msra.mxu0 %v4667
        %5377 = vmatprep.subr.bf16.mxu0 %v4672
        %5378 = vmatpush1.bf16.msra.mxu0 %v4671
        %5379 = vmatprep.subr.bf16.mxu0 %v4676
        %5380 = vmatpush1.bf16.msra.mxu0 %v4675
        %5381 = vmatprep.subr.bf16.mxu0 %v4680
        %5382 = vmatpush1.bf16.msra.mxu0 %v4679
        %5383 = vmatprep.subr.bf16.mxu0 %v4684
        %5384 = vmatpush1.bf16.msra.mxu0 %v4683
        %5385 = vmatprep.subr.bf16.mxu0 %v4688
        %5386 = vmatpush1.bf16.msra.mxu0 %v4687
        %5387 = vmatprep.subr.bf16.mxu0 %v4692
        %5388 = vmatpush1.bf16.msra.mxu0 %v4691
        %5389 = vmatprep.subr.bf16.mxu0 %v4696
        %5390 = vmatpush1.bf16.msra.mxu0 %v4695
        %5391 = vmatprep.subr.bf16.mxu0 %v4700
        %5392 = vmatpush1.bf16.msra.mxu0 %v4699
        %5393 = vmatprep.mubr.bf16.mxu0 %v1629
        %5394 = vmatmul.mubr.bf16.gmra.mrb[0].mxu0 %v1628
        %v5395 = vpop.f32.mrb[0].mxu0
        %v5396 = vadd.f32 %v3851, %v5395
        %v5397 = vpop.f32.mrb[0].mxu0
        %v5398 = vadd.f32 %v3853, %v5397
        %v5399 = vpop.f32.mrb[0].mxu0
        %v5400 = vadd.f32 %v3855, %v5399
        %v5401 = vpop.f32.mrb[0].mxu0
        %v5402 = vadd.f32 %v3857, %v5401
        %5403 = vmatprep.mubr.bf16.mxu0 %v1637
        %5404 = vmatmul.mubr.bf16.gmra.mrb[0].mxu0 %v1636
        %v5405 = vpop.f32.mrb[0].mxu0
        %v5406 = vadd.f32 %v3861, %v5405
        %v5407 = vpop.f32.mrb[0].mxu0
        %v5408 = vadd.f32 %v3863, %v5407
        %v5409 = vpop.f32.mrb[0].mxu0
        %v5410 = vadd.f32 %v3865, %v5409
        %v5411 = vpop.f32.mrb[0].mxu0
        %v5412 = vadd.f32 %v3867, %v5411
        %5413 = vdwg.mxu0
        %5414 = vmatprep.subr.bf16.mxu0 %v4704
        %5415 = vmatpush1.bf16.msra.mxu0 %v4703
        %5416 = vmatprep.subr.bf16.mxu0 %v4708
        %5417 = vmatpush1.bf16.msra.mxu0 %v4707
        %5418 = vmatprep.subr.bf16.mxu0 %v4712
        %5419 = vmatpush1.bf16.msra.mxu0 %v4711
        %5420 = vmatprep.subr.bf16.mxu0 %v4716
        %5421 = vmatpush1.bf16.msra.mxu0 %v4715
        %5422 = vmatprep.subr.bf16.mxu0 %v4720
        %5423 = vmatpush1.bf16.msra.mxu0 %v4719
        %5424 = vmatprep.subr.bf16.mxu0 %v4724
        %5425 = vmatpush1.bf16.msra.mxu0 %v4723
        %5426 = vmatprep.subr.bf16.mxu0 %v4728
        %5427 = vmatpush1.bf16.msra.mxu0 %v4727
        %5428 = vmatprep.subr.bf16.mxu0 %v4732
        %5429 = vmatpush1.bf16.msra.mxu0 %v4731
        %5430 = vmatprep.subr.bf16.mxu0 %v4736
        %5431 = vmatpush1.bf16.msra.mxu0 %v4735
        %5432 = vmatprep.subr.bf16.mxu0 %v4740
        %5433 = vmatpush1.bf16.msra.mxu0 %v4739
        %5434 = vmatprep.subr.bf16.mxu0 %v4744
        %5435 = vmatpush1.bf16.msra.mxu0 %v4743
        %5436 = vmatprep.subr.bf16.mxu0 %v4748
        %5437 = vmatpush1.bf16.msra.mxu0 %v4747
        %5438 = vmatprep.subr.bf16.mxu0 %v4752
        %5439 = vmatpush1.bf16.msra.mxu0 %v4751
        %5440 = vmatprep.subr.bf16.mxu0 %v4756
        %5441 = vmatpush1.bf16.msra.mxu0 %v4755
        %5442 = vmatprep.subr.bf16.mxu0 %v4760
        %5443 = vmatpush1.bf16.msra.mxu0 %v4759
        %5444 = vmatprep.subr.bf16.mxu0 %v4764
        %5445 = vmatpush1.bf16.msra.mxu0 %v4763
        %5446 = vmatprep.mubr.bf16.mxu0 %v1631
        %5447 = vmatmul.mubr.bf16.gmra.mrb[0].mxu0 %v1630
        %v5448 = vpop.f32.mrb[0].mxu0
        %v5449 = vadd.f32 %v5396, %v5448
        %v5450 = vpop.f32.mrb[0].mxu0
        %v5451 = vadd.f32 %v5398, %v5450
        %v5452 = vpop.f32.mrb[0].mxu0
        %v5453 = vadd.f32 %v5400, %v5452
        %v5454 = vpop.f32.mrb[0].mxu0
        %v5455 = vadd.f32 %v5402, %v5454
        %5456 = vmatprep.mubr.bf16.mxu0 %v1639
        %5457 = vmatmul.mubr.bf16.gmra.mrb[0].mxu0 %v1638
        %v5458 = vpop.f32.mrb[0].mxu0
        %v5459 = vadd.f32 %v5406, %v5458
        %v5460 = vpop.f32.mrb[0].mxu0
        %v5461 = vadd.f32 %v5408, %v5460
        %v5462 = vpop.f32.mrb[0].mxu0
        %v5463 = vadd.f32 %v5410, %v5462
        %v5464 = vpop.f32.mrb[0].mxu0
        %v5465 = vadd.f32 %v5412, %v5464
        %5466 = vdwg.mxu0
        %5467 = vmatprep.subr.bf16.mxu0 %v4768
        %5468 = vmatpush1.bf16.msra.mxu0 %v4767
        %5469 = vmatprep.subr.bf16.mxu0 %v4772
        %5470 = vmatpush1.bf16.msra.mxu0 %v4771
        %5471 = vmatprep.subr.bf16.mxu0 %v4776
        %5472 = vmatpush1.bf16.msra.mxu0 %v4775
        %5473 = vmatprep.subr.bf16.mxu0 %v4780
        %5474 = vmatpush1.bf16.msra.mxu0 %v4779
        %5475 = vmatprep.subr.bf16.mxu0 %v4784
        %5476 = vmatpush1.bf16.msra.mxu0 %v4783
        %5477 = vmatprep.subr.bf16.mxu0 %v4788
        %5478 = vmatpush1.bf16.msra.mxu0 %v4787
        %5479 = vmatprep.subr.bf16.mxu0 %v4792
        %5480 = vmatpush1.bf16.msra.mxu0 %v4791
        %5481 = vmatprep.subr.bf16.mxu0 %v4796
        %5482 = vmatpush1.bf16.msra.mxu0 %v4795
        %5483 = vmatprep.subr.bf16.mxu0 %v4800
        %5484 = vmatpush1.bf16.msra.mxu0 %v4799
        %5485 = vmatprep.subr.bf16.mxu0 %v4804
        %5486 = vmatpush1.bf16.msra.mxu0 %v4803
        %5487 = vmatprep.subr.bf16.mxu0 %v4808
        %5488 = vmatpush1.bf16.msra.mxu0 %v4807
        %5489 = vmatprep.subr.bf16.mxu0 %v4812
        %5490 = vmatpush1.bf16.msra.mxu0 %v4811
        %5491 = vmatprep.subr.bf16.mxu0 %v4816
        %5492 = vmatpush1.bf16.msra.mxu0 %v4815
        %5493 = vmatprep.subr.bf16.mxu0 %v4820
        %5494 = vmatpush1.bf16.msra.mxu0 %v4819
        %5495 = vmatprep.subr.bf16.mxu0 %v4824
        %5496 = vmatpush1.bf16.msra.mxu0 %v4823
        %5497 = vmatprep.subr.bf16.mxu0 %v4828
        %5498 = vmatpush1.bf16.msra.mxu0 %v4827
        %5499 = vmatprep.mubr.bf16.mxu0 %v1633
        %5500 = vmatmul.mubr.bf16.gmra.mrb[0].mxu0 %v1632
        %v5501 = vpop.f32.mrb[0].mxu0
        %v5502 = vadd.f32 %v5449, %v5501
        %v5503 = vpop.f32.mrb[0].mxu0
        %v5504 = vadd.f32 %v5451, %v5503
        %v5505 = vpop.f32.mrb[0].mxu0
        %v5506 = vadd.f32 %v5453, %v5505
        %v5507 = vpop.f32.mrb[0].mxu0
        %v5508 = vadd.f32 %v5455, %v5507
        %5509 = vmatprep.mubr.bf16.mxu0 %v1641
        %5510 = vmatmul.mubr.bf16.gmra.mrb[0].mxu0 %v1640
        %v5511 = vpop.f32.mrb[0].mxu0
        %v5512 = vadd.f32 %v5459, %v5511
        %v5513 = vpop.f32.mrb[0].mxu0
        %v5514 = vadd.f32 %v5461, %v5513
        %v5515 = vpop.f32.mrb[0].mxu0
        %v5516 = vadd.f32 %v5463, %v5515
        %v5517 = vpop.f32.mrb[0].mxu0
        %v5518 = vadd.f32 %v5465, %v5517
        %5519 = vdwg.mxu0
        %5520 = vmatprep.subr.bf16.mxu0 %v4832
        %5521 = vmatpush1.bf16.msra.mxu0 %v4831
        %5522 = vmatprep.subr.bf16.mxu0 %v4836
        %5523 = vmatpush1.bf16.msra.mxu0 %v4835
        %5524 = vmatprep.subr.bf16.mxu0 %v4840
        %5525 = vmatpush1.bf16.msra.mxu0 %v4839
        %5526 = vmatprep.subr.bf16.mxu0 %v4844
        %5527 = vmatpush1.bf16.msra.mxu0 %v4843
        %5528 = vmatprep.subr.bf16.mxu0 %v4848
        %5529 = vmatpush1.bf16.msra.mxu0 %v4847
        %5530 = vmatprep.subr.bf16.mxu0 %v4852
        %5531 = vmatpush1.bf16.msra.mxu0 %v4851
        %5532 = vmatprep.subr.bf16.mxu0 %v4856
        %5533 = vmatpush1.bf16.msra.mxu0 %v4855
        %5534 = vmatprep.subr.bf16.mxu0 %v4860
        %5535 = vmatpush1.bf16.msra.mxu0 %v4859
        %5536 = vmatprep.subr.bf16.mxu0 %v4864
        %5537 = vmatpush1.bf16.msra.mxu0 %v4863
        %5538 = vmatprep.subr.bf16.mxu0 %v4868
        %5539 = vmatpush1.bf16.msra.mxu0 %v4867
        %5540 = vmatprep.subr.bf16.mxu0 %v4872
        %5541 = vmatpush1.bf16.msra.mxu0 %v4871
        %5542 = vmatprep.subr.bf16.mxu0 %v4876
        %5543 = vmatpush1.bf16.msra.mxu0 %v4875
        %5544 = vmatprep.subr.bf16.mxu0 %v4880
        %5545 = vmatpush1.bf16.msra.mxu0 %v4879
        %5546 = vmatprep.subr.bf16.mxu0 %v4884
        %5547 = vmatpush1.bf16.msra.mxu0 %v4883
        %5548 = vmatprep.subr.bf16.mxu0 %v4888
        %5549 = vmatpush1.bf16.msra.mxu0 %v4887
        %5550 = vmatprep.subr.bf16.mxu0 %v4892
        %5551 = vmatpush1.bf16.msra.mxu0 %v4891
        %5552 = vmatprep.mubr.bf16.mxu0 %v1635
        %5553 = vmatmul.mubr.bf16.gmra.mrb[0].mxu0 %v1634
        %v5554 = vpop.f32.mrb[0].mxu0
        %v5555 = vadd.f32 %v5502, %v5554
        %v5556 = vpop.f32.mrb[0].mxu0
        %v5557 = vadd.f32 %v5504, %v5556
        %v5558 = vpop.f32.mrb[0].mxu0
        %v5559 = vadd.f32 %v5506, %v5558
        %v5560 = vpop.f32.mrb[0].mxu0
        %v5561 = vadd.f32 %v5508, %v5560
        %5562 = vmatprep.mubr.bf16.mxu0 %v1643
        %5563 = vmatmul.mubr.bf16.gmra.mrb[0].mxu0 %v1642
        %v5564 = vpop.f32.mrb[0].mxu0
        %v5565 = vadd.f32 %v5512, %v5564
        %v5566 = vpop.f32.mrb[0].mxu0
        %v5567 = vadd.f32 %v5514, %v5566
        %v5568 = vpop.f32.mrb[0].mxu0
        %v5569 = vadd.f32 %v5516, %v5568
        %v5570 = vpop.f32.mrb[0].mxu0
        %v5571 = vadd.f32 %v5518, %v5570
        %5572 = vdwg.mxu0
        %v5573 = vld [vmem:[%s5] sm:$0xf]
        %v5575 = vlaneseq
        %v5576 = vshrl.u32 %v5575, 7
        %v5577 = vsub.s32 0, %v5576
        %v5578 = vrot.slane %v5573, %v5577
        %v5579 = vlaneseq
        %v5580 = vshrl.u32 %v5579, 7
        %v5581 = vsub.s32 1, %v5580
        %v5582 = vrot.slane %v5573, %v5581
        %v5583 = vlaneseq
        %v5584 = vshrl.u32 %v5583, 7
        %v5585 = vsub.s32 2, %v5584
        %v5586 = vrot.slane %v5573, %v5585
        %v5587 = vlaneseq
        %v5588 = vshrl.u32 %v5587, 7
        %v5589 = vsub.s32 3, %v5588
        %v5590 = vrot.slane %v5573, %v5589
        %v5595 = vadd.f32 %v5343, %v5578
        %v5596 = vadd.f32 %v5345, %v5582
        %v5597 = vadd.f32 %v5555, %v5586
        %v5598 = vadd.f32 %v5557, %v5590
        %v5599 = vadd.f32 %v5347, %v5578
        %v5600 = vadd.f32 %v5349, %v5582
        %v5601 = vadd.f32 %v5559, %v5586
        %v5602 = vadd.f32 %v5561, %v5590
        %v5603 = vadd.f32 %v5353, %v5578
        %v5604 = vadd.f32 %v5355, %v5582
        %v5605 = vadd.f32 %v5565, %v5586
        %v5606 = vadd.f32 %v5567, %v5590
        %v5607 = vadd.f32 %v5357, %v5578
        %v5608 = vadd.f32 %v5359, %v5582
        %v5609 = vadd.f32 %v5569, %v5586
        %v5610 = vadd.f32 %v5571, %v5590
        %v5611 = vmax.f32 %v5595, 0.0
        %v5612 = vmax.f32 %v5596, 0.0
        %v5613 = vmax.f32 %v5597, 0.0
        %v5614 = vmax.f32 %v5598, 0.0
        %v5615 = vmax.f32 %v5599, 0.0
        %v5616 = vmax.f32 %v5600, 0.0
        %v5617 = vmax.f32 %v5601, 0.0
        %v5618 = vmax.f32 %v5602, 0.0
        %v5619 = vmax.f32 %v5603, 0.0
        %v5620 = vmax.f32 %v5604, 0.0
        %v5621 = vmax.f32 %v5605, 0.0
        %v5622 = vmax.f32 %v5606, 0.0
        %v5623 = vmax.f32 %v5607, 0.0
        %v5624 = vmax.f32 %v5608, 0.0
        %v5625 = vmax.f32 %v5609, 0.0
        %v5626 = vmax.f32 %v5610, 0.0
        %v5627 = vpack.c.bf16 %v5615, %v5611
        %v5628 = vpack.c.bf16 %v5616, %v5612
        %v5629 = vpack.c.bf16 %v5617, %v5613
        %v5630 = vpack.c.bf16 %v5618, %v5614
        %v5631 = vpack.c.bf16 %v5623, %v5619
        %v5632 = vpack.c.bf16 %v5624, %v5620
        %v5633 = vpack.c.bf16 %v5625, %v5621
        %v5634 = vpack.c.bf16 %v5626, %v5622
        %v5635 = vld [vmem:[#allocation5] sm:$0xf]
        %v5636 = vld [vmem:[#allocation5 + $0x4] sm:$0xf]
        %v5637 = vld [vmem:[#allocation5 + $0x8] sm:$0xf]
        %v5638 = vld [vmem:[#allocation5 + $0xc] sm:$0xf]
        %v5639 = vld [vmem:[#allocation5 + $0x10] sm:$0xf]
        %v5640 = vld [vmem:[#allocation5 + $0x14] sm:$0xf]
        %v5641 = vld [vmem:[#allocation5 + $0x18] sm:$0xf]
        %v5642 = vld [vmem:[#allocation5 + $0x1c] sm:$0xf]
        %v5643 = vld [vmem:[#allocation5 + $0x20] sm:$0xf]
        %v5644 = vld [vmem:[#allocation5 + $0x24] sm:$0xf]
        %v5645 = vld [vmem:[#allocation5 + $0x28] sm:$0xf]
        %v5646 = vld [vmem:[#allocation5 + $0x2c] sm:$0xf]
        %v5647 = vld [vmem:[#allocation5 + $0x30] sm:$0xf]
        %v5648 = vld [vmem:[#allocation5 + $0x34] sm:$0xf]
        %v5649 = vld [vmem:[#allocation5 + $0x38] sm:$0xf]
        %v5650 = vld [vmem:[#allocation5 + $0x3c] sm:$0xf]
        %v5651 = vld [vmem:[#allocation5 + $0x40] sm:$0xf]
        %v5652 = vld [vmem:[#allocation5 + $0x44] sm:$0xf]
        %v5653 = vld [vmem:[#allocation5 + $0x48] sm:$0xf]
        %v5654 = vld [vmem:[#allocation5 + $0x4c] sm:$0xf]
        %v5655 = vld [vmem:[#allocation5 + $0x50] sm:$0xf]
        %v5656 = vld [vmem:[#allocation5 + $0x54] sm:$0xf]
        %v5657 = vld [vmem:[#allocation5 + $0x58] sm:$0xf]
        %v5658 = vld [vmem:[#allocation5 + $0x5c] sm:$0xf]
        %v5659 = vld [vmem:[#allocation5 + $0x60] sm:$0xf]
        %v5660 = vld [vmem:[#allocation5 + $0x64] sm:$0xf]
        %v5661 = vld [vmem:[#allocation5 + $0x68] sm:$0xf]
        %v5662 = vld [vmem:[#allocation5 + $0x6c] sm:$0xf]
        %v5663 = vld [vmem:[#allocation5 + $0x70] sm:$0xf]
        %v5664 = vld [vmem:[#allocation5 + $0x74] sm:$0xf]
        %v5665 = vld [vmem:[#allocation5 + $0x78] sm:$0xf]
        %v5666 = vld [vmem:[#allocation5 + $0x7c] sm:$0xf]
        %v5667 = vld [vmem:[#allocation5 + $0x80] sm:$0xf]
        %v5668 = vld [vmem:[#allocation5 + $0x84] sm:$0xf]
        %v5669 = vld [vmem:[#allocation5 + $0x88] sm:$0xf]
        %v5670 = vld [vmem:[#allocation5 + $0x8c] sm:$0xf]
        %v5671 = vld [vmem:[#allocation5 + $0x90] sm:$0xf]
        %v5672 = vld [vmem:[#allocation5 + $0x94] sm:$0xf]
        %v5673 = vld [vmem:[#allocation5 + $0x98] sm:$0xf]
        %v5674 = vld [vmem:[#allocation5 + $0x9c] sm:$0xf]
        %v5675 = vld [vmem:[#allocation5 + $0xa0] sm:$0xf]
        %v5676 = vld [vmem:[#allocation5 + $0xa4] sm:$0xf]
        %v5677 = vld [vmem:[#allocation5 + $0xa8] sm:$0xf]
        %v5678 = vld [vmem:[#allocation5 + $0xac] sm:$0xf]
        %v5679 = vld [vmem:[#allocation5 + $0xb0] sm:$0xf]
        %v5680 = vld [vmem:[#allocation5 + $0xb4] sm:$0xf]
        %v5681 = vld [vmem:[#allocation5 + $0xb8] sm:$0xf]
        %v5682 = vld [vmem:[#allocation5 + $0xbc] sm:$0xf]
        %v5683 = vld [vmem:[#allocation5 + $0xc0] sm:$0xf]
        %v5684 = vld [vmem:[#allocation5 + $0xc4] sm:$0xf]
        %v5685 = vld [vmem:[#allocation5 + $0xc8] sm:$0xf]
        %v5686 = vld [vmem:[#allocation5 + $0xcc] sm:$0xf]
        %v5687 = vld [vmem:[#allocation5 + $0xd0] sm:$0xf]
        %v5688 = vld [vmem:[#allocation5 + $0xd4] sm:$0xf]
        %v5689 = vld [vmem:[#allocation5 + $0xd8] sm:$0xf]
        %v5690 = vld [vmem:[#allocation5 + $0xdc] sm:$0xf]
        %v5691 = vld [vmem:[#allocation5 + $0xe0] sm:$0xf]
        %v5692 = vld [vmem:[#allocation5 + $0xe4] sm:$0xf]
        %v5693 = vld [vmem:[#allocation5 + $0xe8] sm:$0xf]
        %v5694 = vld [vmem:[#allocation5 + $0xec] sm:$0xf]
        %v5695 = vld [vmem:[#allocation5 + $0xf0] sm:$0xf]
        %v5696 = vld [vmem:[#allocation5 + $0xf4] sm:$0xf]
        %v5697 = vld [vmem:[#allocation5 + $0xf8] sm:$0xf]
        %v5698 = vld [vmem:[#allocation5 + $0xfc] sm:$0xf]
        %s5699 = scalar_lea.vmem [#allocation5], 256
        %v5700 = vld [vmem:[%s5699] sm:$0xf]
        %v5701 = vld [vmem:[%s5699 + $0x4] sm:$0xf]
        %v5702 = vld [vmem:[%s5699 + $0x8] sm:$0xf]
        %v5703 = vld [vmem:[%s5699 + $0xc] sm:$0xf]
        %v5704 = vld [vmem:[%s5699 + $0x10] sm:$0xf]
        %v5705 = vld [vmem:[%s5699 + $0x14] sm:$0xf]
        %v5706 = vld [vmem:[%s5699 + $0x18] sm:$0xf]
        %v5707 = vld [vmem:[%s5699 + $0x1c] sm:$0xf]
        %v5708 = vld [vmem:[%s5699 + $0x20] sm:$0xf]
        %v5709 = vld [vmem:[%s5699 + $0x24] sm:$0xf]
        %v5710 = vld [vmem:[%s5699 + $0x28] sm:$0xf]
        %v5711 = vld [vmem:[%s5699 + $0x2c] sm:$0xf]
        %v5712 = vld [vmem:[%s5699 + $0x30] sm:$0xf]
        %v5713 = vld [vmem:[%s5699 + $0x34] sm:$0xf]
        %v5714 = vld [vmem:[%s5699 + $0x38] sm:$0xf]
        %v5715 = vld [vmem:[%s5699 + $0x3c] sm:$0xf]
        %v5716 = vld [vmem:[%s5699 + $0x40] sm:$0xf]
        %v5717 = vld [vmem:[%s5699 + $0x44] sm:$0xf]
        %v5718 = vld [vmem:[%s5699 + $0x48] sm:$0xf]
        %v5719 = vld [vmem:[%s5699 + $0x4c] sm:$0xf]
        %v5720 = vld [vmem:[%s5699 + $0x50] sm:$0xf]
        %v5721 = vld [vmem:[%s5699 + $0x54] sm:$0xf]
        %v5722 = vld [vmem:[%s5699 + $0x58] sm:$0xf]
        %v5723 = vld [vmem:[%s5699 + $0x5c] sm:$0xf]
        %v5724 = vld [vmem:[%s5699 + $0x60] sm:$0xf]
        %v5725 = vld [vmem:[%s5699 + $0x64] sm:$0xf]
        %v5726 = vld [vmem:[%s5699 + $0x68] sm:$0xf]
        %v5727 = vld [vmem:[%s5699 + $0x6c] sm:$0xf]
        %v5728 = vld [vmem:[%s5699 + $0x70] sm:$0xf]
        %v5729 = vld [vmem:[%s5699 + $0x74] sm:$0xf]
        %v5730 = vld [vmem:[%s5699 + $0x78] sm:$0xf]
        %v5731 = vld [vmem:[%s5699 + $0x7c] sm:$0xf]
        %v5732 = vld [vmem:[%s5699 + $0x80] sm:$0xf]
        %v5733 = vld [vmem:[%s5699 + $0x84] sm:$0xf]
        %v5734 = vld [vmem:[%s5699 + $0x88] sm:$0xf]
        %v5735 = vld [vmem:[%s5699 + $0x8c] sm:$0xf]
        %v5736 = vld [vmem:[%s5699 + $0x90] sm:$0xf]
        %v5737 = vld [vmem:[%s5699 + $0x94] sm:$0xf]
        %v5738 = vld [vmem:[%s5699 + $0x98] sm:$0xf]
        %v5739 = vld [vmem:[%s5699 + $0x9c] sm:$0xf]
        %v5740 = vld [vmem:[%s5699 + $0xa0] sm:$0xf]
        %v5741 = vld [vmem:[%s5699 + $0xa4] sm:$0xf]
        %v5742 = vld [vmem:[%s5699 + $0xa8] sm:$0xf]
        %v5743 = vld [vmem:[%s5699 + $0xac] sm:$0xf]
        %v5744 = vld [vmem:[%s5699 + $0xb0] sm:$0xf]
        %v5745 = vld [vmem:[%s5699 + $0xb4] sm:$0xf]
        %v5746 = vld [vmem:[%s5699 + $0xb8] sm:$0xf]
        %v5747 = vld [vmem:[%s5699 + $0xbc] sm:$0xf]
        %v5748 = vld [vmem:[%s5699 + $0xc0] sm:$0xf]
        %v5749 = vld [vmem:[%s5699 + $0xc4] sm:$0xf]
        %v5750 = vld [vmem:[%s5699 + $0xc8] sm:$0xf]
        %v5751 = vld [vmem:[%s5699 + $0xcc] sm:$0xf]
        %v5752 = vld [vmem:[%s5699 + $0xd0] sm:$0xf]
        %v5753 = vld [vmem:[%s5699 + $0xd4] sm:$0xf]
        %v5754 = vld [vmem:[%s5699 + $0xd8] sm:$0xf]
        %v5755 = vld [vmem:[%s5699 + $0xdc] sm:$0xf]
        %v5756 = vld [vmem:[%s5699 + $0xe0] sm:$0xf]
        %v5757 = vld [vmem:[%s5699 + $0xe4] sm:$0xf]
        %v5758 = vld [vmem:[%s5699 + $0xe8] sm:$0xf]
        %v5759 = vld [vmem:[%s5699 + $0xec] sm:$0xf]
        %v5760 = vld [vmem:[%s5699 + $0xf0] sm:$0xf]
        %v5761 = vld [vmem:[%s5699 + $0xf4] sm:$0xf]
        %v5762 = vld [vmem:[%s5699 + $0xf8] sm:$0xf]
        %v5763 = vld [vmem:[%s5699 + $0xfc] sm:$0xf]
        %v5828 = vunpack.c.l.b16 %v5700
        %v5829 = vunpack.c.l.b16 %v5701
        %v5830 = vunpack.c.l.b16 %v5702
        %v5831 = vunpack.c.l.b16 %v5703
        %v5832 = vunpack.c.l.b16 %v5704
        %v5833 = vunpack.c.l.b16 %v5705
        %v5834 = vunpack.c.l.b16 %v5706
        %v5835 = vunpack.c.l.b16 %v5707
        %v5836 = vunpack.c.l.b16 %v5708
        %v5837 = vunpack.c.l.b16 %v5709
        %v5838 = vunpack.c.l.b16 %v5710
        %v5839 = vunpack.c.l.b16 %v5711
        %v5840 = vunpack.c.l.b16 %v5712
        %v5841 = vunpack.c.l.b16 %v5713
        %v5842 = vunpack.c.l.b16 %v5714
        %v5843 = vunpack.c.l.b16 %v5715
        %v5844 = vunpack.c.l.b16 %v5716
        %v5845 = vunpack.c.l.b16 %v5717
        %v5846 = vunpack.c.l.b16 %v5718
        %v5847 = vunpack.c.l.b16 %v5719
        %v5848 = vunpack.c.l.b16 %v5720
        %v5849 = vunpack.c.l.b16 %v5721
        %v5850 = vunpack.c.l.b16 %v5722
        %v5851 = vunpack.c.l.b16 %v5723
        %v5852 = vunpack.c.l.b16 %v5724
        %v5853 = vunpack.c.l.b16 %v5725
        %v5854 = vunpack.c.l.b16 %v5726
        %v5855 = vunpack.c.l.b16 %v5727
        %v5856 = vunpack.c.l.b16 %v5728
        %v5857 = vunpack.c.l.b16 %v5729
        %v5858 = vunpack.c.l.b16 %v5730
        %v5859 = vunpack.c.l.b16 %v5731
        %v5860 = vunpack.c.l.b16 %v5732
        %v5861 = vunpack.c.l.b16 %v5733
        %v5862 = vunpack.c.l.b16 %v5734
        %v5863 = vunpack.c.l.b16 %v5735
        %v5864 = vunpack.c.l.b16 %v5736
        %v5865 = vunpack.c.l.b16 %v5737
        %v5866 = vunpack.c.l.b16 %v5738
        %v5867 = vunpack.c.l.b16 %v5739
        %v5868 = vunpack.c.l.b16 %v5740
        %v5869 = vunpack.c.l.b16 %v5741
        %v5870 = vunpack.c.l.b16 %v5742
        %v5871 = vunpack.c.l.b16 %v5743
        %v5872 = vunpack.c.l.b16 %v5744
        %v5873 = vunpack.c.l.b16 %v5745
        %v5874 = vunpack.c.l.b16 %v5746
        %v5875 = vunpack.c.l.b16 %v5747
        %v5876 = vunpack.c.l.b16 %v5748
        %v5877 = vunpack.c.l.b16 %v5749
        %v5878 = vunpack.c.l.b16 %v5750
        %v5879 = vunpack.c.l.b16 %v5751
        %v5880 = vunpack.c.l.b16 %v5752
        %v5881 = vunpack.c.l.b16 %v5753
        %v5882 = vunpack.c.l.b16 %v5754
        %v5883 = vunpack.c.l.b16 %v5755
        %v5884 = vunpack.c.l.b16 %v5756
        %v5885 = vunpack.c.l.b16 %v5757
        %v5886 = vunpack.c.l.b16 %v5758
        %v5887 = vunpack.c.l.b16 %v5759
        %v5888 = vunpack.c.l.b16 %v5760
        %v5889 = vunpack.c.l.b16 %v5761
        %v5890 = vunpack.c.l.b16 %v5762
        %v5891 = vunpack.c.l.b16 %v5763
        %v5892 = vpack.c.b16 %v5829, %v5828
        %v5893 = vpack.c.b16 %v5831, %v5830
        %v5894 = vpack.c.b16 %v5833, %v5832
        %v5895 = vpack.c.b16 %v5835, %v5834
        %v5896 = vpack.c.b16 %v5837, %v5836
        %v5897 = vpack.c.b16 %v5839, %v5838
        %v5898 = vpack.c.b16 %v5841, %v5840
        %v5899 = vpack.c.b16 %v5843, %v5842
        %v5900 = vpack.c.b16 %v5845, %v5844
        %v5901 = vpack.c.b16 %v5847, %v5846
        %v5902 = vpack.c.b16 %v5849, %v5848
        %v5903 = vpack.c.b16 %v5851, %v5850
        %v5904 = vpack.c.b16 %v5853, %v5852
        %v5905 = vpack.c.b16 %v5855, %v5854
        %v5906 = vpack.c.b16 %v5857, %v5856
        %v5907 = vpack.c.b16 %v5859, %v5858
        %v5908 = vpack.c.b16 %v5861, %v5860
        %v5909 = vpack.c.b16 %v5863, %v5862
        %v5910 = vpack.c.b16 %v5865, %v5864
        %v5911 = vpack.c.b16 %v5867, %v5866
        %v5912 = vpack.c.b16 %v5869, %v5868
        %v5913 = vpack.c.b16 %v5871, %v5870
        %v5914 = vpack.c.b16 %v5873, %v5872
        %v5915 = vpack.c.b16 %v5875, %v5874
        %v5916 = vpack.c.b16 %v5877, %v5876
        %v5917 = vpack.c.b16 %v5879, %v5878
        %v5918 = vpack.c.b16 %v5881, %v5880
        %v5919 = vpack.c.b16 %v5883, %v5882
        %v5920 = vpack.c.b16 %v5885, %v5884
        %v5921 = vpack.c.b16 %v5887, %v5886
        %v5922 = vpack.c.b16 %v5889, %v5888
        %v5923 = vpack.c.b16 %v5891, %v5890
        %5956 = vmatprep.subr.bf16.mxu0 0
        %5957 = vmatpush1.bf16.msra.mxu0 %v5892
        %5958 = vmatprep.subr.bf16.mxu0 0
        %5959 = vmatpush1.bf16.msra.mxu0 %v5893
        %5960 = vmatprep.subr.bf16.mxu0 0
        %5961 = vmatpush1.bf16.msra.mxu0 %v5894
        %5962 = vmatprep.subr.bf16.mxu0 0
        %5963 = vmatpush1.bf16.msra.mxu0 %v5895
        %5964 = vmatprep.subr.bf16.mxu0 0
        %5965 = vmatpush1.bf16.msra.mxu0 %v5896
        %5966 = vmatprep.subr.bf16.mxu0 0
        %5967 = vmatpush1.bf16.msra.mxu0 %v5897
        %5968 = vmatprep.subr.bf16.mxu0 0
        %5969 = vmatpush1.bf16.msra.mxu0 %v5898
        %5970 = vmatprep.subr.bf16.mxu0 0
        %5971 = vmatpush1.bf16.msra.mxu0 %v5899
        %5972 = vmatprep.subr.bf16.mxu0 0
        %5973 = vmatpush1.bf16.msra.mxu0 %v5900
        %5974 = vmatprep.subr.bf16.mxu0 0
        %5975 = vmatpush1.bf16.msra.mxu0 %v5901
        %5976 = vmatprep.subr.bf16.mxu0 0
        %5977 = vmatpush1.bf16.msra.mxu0 %v5902
        %5978 = vmatprep.subr.bf16.mxu0 0
        %5979 = vmatpush1.bf16.msra.mxu0 %v5903
        %5980 = vmatprep.subr.bf16.mxu0 0
        %5981 = vmatpush1.bf16.msra.mxu0 %v5904
        %5982 = vmatprep.subr.bf16.mxu0 0
        %5983 = vmatpush1.bf16.msra.mxu0 %v5905
        %5984 = vmatprep.subr.bf16.mxu0 0
        %5985 = vmatpush1.bf16.msra.mxu0 %v5906
        %5986 = vmatprep.subr.bf16.mxu0 0
        %5987 = vmatpush1.bf16.msra.mxu0 %v5907
        %5988 = vmatprep.mubr.bf16.mxu0 %v5632
        %5989 = vmatmul.mubr.bf16.gmra.mrb[0].mxu0 %v5631
        %v5990 = vpop.f32.mrb[0].mxu0
        %v5991 = vadd.f32 0.0, %v5990
        %v5992 = vpop.f32.mrb[0].mxu0
        %v5993 = vpop.f32.mrb[0].mxu0
        %v5994 = vadd.f32 0.0, %v5993
        %v5995 = vpop.f32.mrb[0].mxu0
        %5996 = vdwg.mxu0
        %5997 = vmatprep.subr.bf16.mxu0 0
        %5998 = vmatpush1.bf16.msra.mxu0 %v5908
        %5999 = vmatprep.subr.bf16.mxu0 0
        %6000 = vmatpush1.bf16.msra.mxu0 %v5909
        %6001 = vmatprep.subr.bf16.mxu0 0
        %6002 = vmatpush1.bf16.msra.mxu0 %v5910
        %6003 = vmatprep.subr.bf16.mxu0 0
        %6004 = vmatpush1.bf16.msra.mxu0 %v5911
        %6005 = vmatprep.subr.bf16.mxu0 0
        %6006 = vmatpush1.bf16.msra.mxu0 %v5912
        %6007 = vmatprep.subr.bf16.mxu0 0
        %6008 = vmatpush1.bf16.msra.mxu0 %v5913
        %6009 = vmatprep.subr.bf16.mxu0 0
        %6010 = vmatpush1.bf16.msra.mxu0 %v5914
        %6011 = vmatprep.subr.bf16.mxu0 0
        %6012 = vmatpush1.bf16.msra.mxu0 %v5915
        %6013 = vmatprep.subr.bf16.mxu0 0
        %6014 = vmatpush1.bf16.msra.mxu0 %v5916
        %6015 = vmatprep.subr.bf16.mxu0 0
        %6016 = vmatpush1.bf16.msra.mxu0 %v5917
        %6017 = vmatprep.subr.bf16.mxu0 0
        %6018 = vmatpush1.bf16.msra.mxu0 %v5918
        %6019 = vmatprep.subr.bf16.mxu0 0
        %6020 = vmatpush1.bf16.msra.mxu0 %v5919
        %6021 = vmatprep.subr.bf16.mxu0 0
        %6022 = vmatpush1.bf16.msra.mxu0 %v5920
        %6023 = vmatprep.subr.bf16.mxu0 0
        %6024 = vmatpush1.bf16.msra.mxu0 %v5921
        %6025 = vmatprep.subr.bf16.mxu0 0
        %6026 = vmatpush1.bf16.msra.mxu0 %v5922
        %6027 = vmatprep.subr.bf16.mxu0 0
        %6028 = vmatpush1.bf16.msra.mxu0 %v5923
        %6029 = vmatprep.mubr.bf16.mxu0 %v5634
        %6030 = vmatmul.mubr.bf16.gmra.mrb[0].mxu0 %v5633
        %v6031 = vpop.f32.mrb[0].mxu0
        %v6032 = vadd.f32 %v5991, %v6031
        %v6033 = vpop.f32.mrb[0].mxu0
        %v6034 = vpop.f32.mrb[0].mxu0
        %v6035 = vadd.f32 %v5994, %v6034
        %v6036 = vpop.f32.mrb[0].mxu0
        %6037 = vdwg.mxu0
        %v6102 = vunpack.c.l.b16 %v5635
        %v6103 = vunpack.c.l.b16 %v5636
        %v6104 = vunpack.c.l.b16 %v5637
        %v6105 = vunpack.c.l.b16 %v5638
        %v6106 = vunpack.c.l.b16 %v5639
        %v6107 = vunpack.c.l.b16 %v5640
        %v6108 = vunpack.c.l.b16 %v5641
        %v6109 = vunpack.c.l.b16 %v5642
        %v6110 = vunpack.c.l.b16 %v5643
        %v6111 = vunpack.c.l.b16 %v5644
        %v6112 = vunpack.c.l.b16 %v5645
        %v6113 = vunpack.c.l.b16 %v5646
        %v6114 = vunpack.c.l.b16 %v5647
        %v6115 = vunpack.c.l.b16 %v5648
        %v6116 = vunpack.c.l.b16 %v5649
        %v6117 = vunpack.c.l.b16 %v5650
        %v6118 = vunpack.c.l.b16 %v5651
        %v6119 = vunpack.c.l.b16 %v5652
        %v6120 = vunpack.c.l.b16 %v5653
        %v6121 = vunpack.c.l.b16 %v5654
        %v6122 = vunpack.c.l.b16 %v5655
        %v6123 = vunpack.c.l.b16 %v5656
        %v6124 = vunpack.c.l.b16 %v5657
        %v6125 = vunpack.c.l.b16 %v5658
        %v6126 = vunpack.c.l.b16 %v5659
        %v6127 = vunpack.c.l.b16 %v5660
        %v6128 = vunpack.c.l.b16 %v5661
        %v6129 = vunpack.c.l.b16 %v5662
        %v6130 = vunpack.c.l.b16 %v5663
        %v6131 = vunpack.c.l.b16 %v5664
        %v6132 = vunpack.c.l.b16 %v5665
        %v6133 = vunpack.c.l.b16 %v5666
        %v6134 = vunpack.c.l.b16 %v5667
        %v6135 = vunpack.c.l.b16 %v5668
        %v6136 = vunpack.c.l.b16 %v5669
        %v6137 = vunpack.c.l.b16 %v5670
        %v6138 = vunpack.c.l.b16 %v5671
        %v6139 = vunpack.c.l.b16 %v5672
        %v6140 = vunpack.c.l.b16 %v5673
        %v6141 = vunpack.c.l.b16 %v5674
        %v6142 = vunpack.c.l.b16 %v5675
        %v6143 = vunpack.c.l.b16 %v5676
        %v6144 = vunpack.c.l.b16 %v5677
        %v6145 = vunpack.c.l.b16 %v5678
        %v6146 = vunpack.c.l.b16 %v5679
        %v6147 = vunpack.c.l.b16 %v5680
        %v6148 = vunpack.c.l.b16 %v5681
        %v6149 = vunpack.c.l.b16 %v5682
        %v6150 = vunpack.c.l.b16 %v5683
        %v6151 = vunpack.c.l.b16 %v5684
        %v6152 = vunpack.c.l.b16 %v5685
        %v6153 = vunpack.c.l.b16 %v5686
        %v6154 = vunpack.c.l.b16 %v5687
        %v6155 = vunpack.c.l.b16 %v5688
        %v6156 = vunpack.c.l.b16 %v5689
        %v6157 = vunpack.c.l.b16 %v5690
        %v6158 = vunpack.c.l.b16 %v5691
        %v6159 = vunpack.c.l.b16 %v5692
        %v6160 = vunpack.c.l.b16 %v5693
        %v6161 = vunpack.c.l.b16 %v5694
        %v6162 = vunpack.c.l.b16 %v5695
        %v6163 = vunpack.c.l.b16 %v5696
        %v6164 = vunpack.c.l.b16 %v5697
        %v6165 = vunpack.c.l.b16 %v5698
        %v6166 = vpack.c.b16 %v6103, %v6102
        %v6167 = vpack.c.b16 %v6105, %v6104
        %v6168 = vpack.c.b16 %v6107, %v6106
        %v6169 = vpack.c.b16 %v6109, %v6108
        %v6170 = vpack.c.b16 %v6111, %v6110
        %v6171 = vpack.c.b16 %v6113, %v6112
        %v6172 = vpack.c.b16 %v6115, %v6114
        %v6173 = vpack.c.b16 %v6117, %v6116
        %v6174 = vpack.c.b16 %v6119, %v6118
        %v6175 = vpack.c.b16 %v6121, %v6120
        %v6176 = vpack.c.b16 %v6123, %v6122
        %v6177 = vpack.c.b16 %v6125, %v6124
        %v6178 = vpack.c.b16 %v6127, %v6126
        %v6179 = vpack.c.b16 %v6129, %v6128
        %v6180 = vpack.c.b16 %v6131, %v6130
        %v6181 = vpack.c.b16 %v6133, %v6132
        %v6182 = vpack.c.b16 %v6135, %v6134
        %v6183 = vpack.c.b16 %v6137, %v6136
        %v6184 = vpack.c.b16 %v6139, %v6138
        %v6185 = vpack.c.b16 %v6141, %v6140
        %v6186 = vpack.c.b16 %v6143, %v6142
        %v6187 = vpack.c.b16 %v6145, %v6144
        %v6188 = vpack.c.b16 %v6147, %v6146
        %v6189 = vpack.c.b16 %v6149, %v6148
        %v6190 = vpack.c.b16 %v6151, %v6150
        %v6191 = vpack.c.b16 %v6153, %v6152
        %v6192 = vpack.c.b16 %v6155, %v6154
        %v6193 = vpack.c.b16 %v6157, %v6156
        %v6194 = vpack.c.b16 %v6159, %v6158
        %v6195 = vpack.c.b16 %v6161, %v6160
        %v6196 = vpack.c.b16 %v6163, %v6162
        %v6197 = vpack.c.b16 %v6165, %v6164
        %6230 = vmatprep.subr.bf16.mxu0 0
        %6231 = vmatpush1.bf16.msra.mxu0 %v6166
        %6232 = vmatprep.subr.bf16.mxu0 0
        %6233 = vmatpush1.bf16.msra.mxu0 %v6167
        %6234 = vmatprep.subr.bf16.mxu0 0
        %6235 = vmatpush1.bf16.msra.mxu0 %v6168
        %6236 = vmatprep.subr.bf16.mxu0 0
        %6237 = vmatpush1.bf16.msra.mxu0 %v6169
        %6238 = vmatprep.subr.bf16.mxu0 0
        %6239 = vmatpush1.bf16.msra.mxu0 %v6170
        %6240 = vmatprep.subr.bf16.mxu0 0
        %6241 = vmatpush1.bf16.msra.mxu0 %v6171
        %6242 = vmatprep.subr.bf16.mxu0 0
        %6243 = vmatpush1.bf16.msra.mxu0 %v6172
        %6244 = vmatprep.subr.bf16.mxu0 0
        %6245 = vmatpush1.bf16.msra.mxu0 %v6173
        %6246 = vmatprep.subr.bf16.mxu0 0
        %6247 = vmatpush1.bf16.msra.mxu0 %v6174
        %6248 = vmatprep.subr.bf16.mxu0 0
        %6249 = vmatpush1.bf16.msra.mxu0 %v6175
        %6250 = vmatprep.subr.bf16.mxu0 0
        %6251 = vmatpush1.bf16.msra.mxu0 %v6176
        %6252 = vmatprep.subr.bf16.mxu0 0
        %6253 = vmatpush1.bf16.msra.mxu0 %v6177
        %6254 = vmatprep.subr.bf16.mxu0 0
        %6255 = vmatpush1.bf16.msra.mxu0 %v6178
        %6256 = vmatprep.subr.bf16.mxu0 0
        %6257 = vmatpush1.bf16.msra.mxu0 %v6179
        %6258 = vmatprep.subr.bf16.mxu0 0
        %6259 = vmatpush1.bf16.msra.mxu0 %v6180
        %6260 = vmatprep.subr.bf16.mxu0 0
        %6261 = vmatpush1.bf16.msra.mxu0 %v6181
        %6262 = vmatprep.mubr.bf16.mxu0 %v5628
        %6263 = vmatmul.mubr.bf16.gmra.mrb[0].mxu0 %v5627
        %v6264 = vpop.f32.mrb[0].mxu0
        %v6265 = vadd.f32 %v6032, %v6264
        %v6266 = vpop.f32.mrb[0].mxu0
        %v6267 = vpop.f32.mrb[0].mxu0
        %v6268 = vadd.f32 %v6035, %v6267
        %v6269 = vpop.f32.mrb[0].mxu0
        %6270 = vdwg.mxu0
        %6271 = vmatprep.subr.bf16.mxu0 0
        %6272 = vmatpush1.bf16.msra.mxu0 %v6182
        %6273 = vmatprep.subr.bf16.mxu0 0
        %6274 = vmatpush1.bf16.msra.mxu0 %v6183
        %6275 = vmatprep.subr.bf16.mxu0 0
        %6276 = vmatpush1.bf16.msra.mxu0 %v6184
        %6277 = vmatprep.subr.bf16.mxu0 0
        %6278 = vmatpush1.bf16.msra.mxu0 %v6185
        %6279 = vmatprep.subr.bf16.mxu0 0
        %6280 = vmatpush1.bf16.msra.mxu0 %v6186
        %6281 = vmatprep.subr.bf16.mxu0 0
        %6282 = vmatpush1.bf16.msra.mxu0 %v6187
        %6283 = vmatprep.subr.bf16.mxu0 0
        %6284 = vmatpush1.bf16.msra.mxu0 %v6188
        %6285 = vmatprep.subr.bf16.mxu0 0
        %6286 = vmatpush1.bf16.msra.mxu0 %v6189
        %6287 = vmatprep.subr.bf16.mxu0 0
        %6288 = vmatpush1.bf16.msra.mxu0 %v6190
        %6289 = vmatprep.subr.bf16.mxu0 0
        %6290 = vmatpush1.bf16.msra.mxu0 %v6191
        %6291 = vmatprep.subr.bf16.mxu0 0
        %6292 = vmatpush1.bf16.msra.mxu0 %v6192
        %6293 = vmatprep.subr.bf16.mxu0 0
        %6294 = vmatpush1.bf16.msra.mxu0 %v6193
        %6295 = vmatprep.subr.bf16.mxu0 0
        %6296 = vmatpush1.bf16.msra.mxu0 %v6194
        %6297 = vmatprep.subr.bf16.mxu0 0
        %6298 = vmatpush1.bf16.msra.mxu0 %v6195
        %6299 = vmatprep.subr.bf16.mxu0 0
        %6300 = vmatpush1.bf16.msra.mxu0 %v6196
        %6301 = vmatprep.subr.bf16.mxu0 0
        %6302 = vmatpush1.bf16.msra.mxu0 %v6197
        %6303 = vmatprep.mubr.bf16.mxu0 %v5630
        %6304 = vmatmul.mubr.bf16.gmra.mrb[0].mxu0 %v5629
        %v6305 = vpop.f32.mrb[0].mxu0
        %v6306 = vadd.f32 %v6265, %v6305
        %v6307 = vpop.f32.mrb[0].mxu0
        %v6308 = vpop.f32.mrb[0].mxu0
        %v6309 = vadd.f32 %v6268, %v6308
        %v6310 = vpop.f32.mrb[0].mxu0
        %6311 = vdwg.mxu0
        %v6312 = vld [vmem:[%s7] sm:$0x1]
        %v6314 = vlaneseq
        %v6315 = vshrl.u32 %v6314, 7
        %v6316 = vsub.s32 0, %v6315
        %v6317 = vrot.slane %v6312, %v6316
        %v6319 = vadd.f32 %v6306, %v6317
        %v6320 = vadd.f32 %v6309, %v6317
        %v6321 = vmax.f32 %v6319, 0.0
        %v6322 = vmax.f32 %v6320, 0.0
        %v6323 = vpack.c.bf16 %v6322, %v6321
        %v6324 = vld [vmem:[%s8] sm:$0xf]
        %v6325 = vld [vmem:[%s8 + $0x4] sm:$0xf]
        %v6326 = vld [vmem:[%s8 + $0x8] sm:$0xf]
        %v6327 = vld [vmem:[%s8 + $0xc] sm:$0xf]
        %v6328 = vld [vmem:[%s8 + $0x10] sm:$0xf]
        %v6329 = vld [vmem:[%s8 + $0x14] sm:$0xf]
        %v6330 = vld [vmem:[%s8 + $0x18] sm:$0xf]
        %v6331 = vld [vmem:[%s8 + $0x1c] sm:$0xf]
        %v6332 = vld [vmem:[%s8 + $0x20] sm:$0xf]
        %v6333 = vld [vmem:[%s8 + $0x24] sm:$0xf]
        %v6334 = vld [vmem:[%s8 + $0x28] sm:$0xf]
        %v6335 = vld [vmem:[%s8 + $0x2c] sm:$0xf]
        %v6336 = vld [vmem:[%s8 + $0x30] sm:$0xf]
        %v6337 = vld [vmem:[%s8 + $0x34] sm:$0xf]
        %v6338 = vld [vmem:[%s8 + $0x38] sm:$0xf]
        %v6339 = vld [vmem:[%s8 + $0x3c] sm:$0xf]
        %v6340 = vld [vmem:[%s9] sm:$0x1]
        %v6342 = vlaneseq
        %v6343 = vshrl.u32 %v6342, 7
        %v6344 = vsub.s32 0, %v6343
        %v6345 = vrot.slane %v6340, %v6344
        %v6363 = vunpack.c.l.b16 %v6324
        %v6364 = vunpack.c.l.b16 %v6325
        %v6365 = vunpack.c.l.b16 %v6326
        %v6366 = vunpack.c.l.b16 %v6327
        %v6367 = vunpack.c.l.b16 %v6328
        %v6368 = vunpack.c.l.b16 %v6329
        %v6369 = vunpack.c.l.b16 %v6330
        %v6370 = vunpack.c.l.b16 %v6331
        %v6371 = vunpack.c.l.b16 %v6332
        %v6372 = vunpack.c.l.b16 %v6333
        %v6373 = vunpack.c.l.b16 %v6334
        %v6374 = vunpack.c.l.b16 %v6335
        %v6375 = vunpack.c.l.b16 %v6336
        %v6376 = vunpack.c.l.b16 %v6337
        %v6377 = vunpack.c.l.b16 %v6338
        %v6378 = vunpack.c.l.b16 %v6339
        %v6379 = vpack.c.b16 %v6364, %v6363
        %v6380 = vpack.c.b16 %v6366, %v6365
        %v6381 = vpack.c.b16 %v6368, %v6367
        %v6382 = vpack.c.b16 %v6370, %v6369
        %v6383 = vpack.c.b16 %v6372, %v6371
        %v6384 = vpack.c.b16 %v6374, %v6373
        %v6385 = vpack.c.b16 %v6376, %v6375
        %v6386 = vpack.c.b16 %v6378, %v6377
        %6395 = vmatprep.subr.bf16.mxu0 0
        %6396 = vmatpush1.bf16.msra.mxu0 %v6379
        %6397 = vmatprep.subr.bf16.mxu0 0
        %6398 = vmatpush1.bf16.msra.mxu0 %v6380
        %6399 = vmatprep.subr.bf16.mxu0 0
        %6400 = vmatpush1.bf16.msra.mxu0 %v6381
        %6401 = vmatprep.subr.bf16.mxu0 0
        %6402 = vmatpush1.bf16.msra.mxu0 %v6382
        %6403 = vmatprep.subr.bf16.mxu0 0
        %6404 = vmatpush1.bf16.msra.mxu0 %v6383
        %6405 = vmatprep.subr.bf16.mxu0 0
        %6406 = vmatpush1.bf16.msra.mxu0 %v6384
        %6407 = vmatprep.subr.bf16.mxu0 0
        %6408 = vmatpush1.bf16.msra.mxu0 %v6385
        %6409 = vmatprep.subr.bf16.mxu0 0
        %6410 = vmatpush1.bf16.msra.mxu0 %v6386
        %6411 = vmatprep.subr.bf16.mxu0 0
        %6412 = vmatpush1.bf16.msra.mxu0 0
        %6413 = vmatprep.subr.bf16.mxu0 0
        %6414 = vmatpush1.bf16.msra.mxu0 0
        %6415 = vmatprep.subr.bf16.mxu0 0
        %6416 = vmatpush1.bf16.msra.mxu0 0
        %6417 = vmatprep.subr.bf16.mxu0 0
        %6418 = vmatpush1.bf16.msra.mxu0 0
        %6419 = vmatprep.subr.bf16.mxu0 0
        %6420 = vmatpush1.bf16.msra.mxu0 0
        %6421 = vmatprep.subr.bf16.mxu0 0
        %6422 = vmatpush1.bf16.msra.mxu0 0
        %6423 = vmatprep.subr.bf16.mxu0 0
        %6424 = vmatpush1.bf16.msra.mxu0 0
        %6425 = vmatprep.subr.bf16.mxu0 0
        %6426 = vmatpush1.bf16.msra.mxu0 0
        %6427 = vmatprep.mubr.bf16.mxu0 0
        %6428 = vmatmul.mubr.bf16.gmra.mrb[0].mxu0 %v6323
        %v6429 = vpop.f32.mrb[0].mxu0
        %v6430 = vadd.f32 %v6345, %v6429
        %v6431 = vpop.f32.mrb[0].mxu0
        %v6432 = vpop.f32.mrb[0].mxu0
        %v6433 = vadd.f32 %v6345, %v6432
        %v6434 = vpop.f32.mrb[0].mxu0
        %6435 = vdwg.mxu0
        %v6436 = vmax.f32 %v6430, 0.0
        %v6437 = vmax.f32 %v6433, 0.0
        %v6438 = vld [vmem:[%s856] sm:$0xff]
        %v6439 = vld [vmem:[%s856 + $0x8] sm:$0xff]
        %v6440 = vpack.c.bf16 %v6439, %v6438
        %v6441 = vld [vmem:[#allocation7] sm:$0xff]
        %v6442 = vld [vmem:[#allocation7 + $0x8] sm:$0xff]
        %v6443 = vld [vmem:[#allocation7 + $0x10] sm:$0xff]
        %v6444 = vld [vmem:[#allocation7 + $0x18] sm:$0xff]
        %v6445 = vld [vmem:[%s11] sm:$0xff]
        %v6447 = vlaneseq
        %v6448 = vshrl.u32 %v6447, 7
        %v6449 = vsub.s32 0, %v6448
        %v6450 = vrot.slane %v6445, %v6449
        %v6451 = vlaneseq
        %v6452 = vshrl.u32 %v6451, 7
        %v6453 = vsub.s32 1, %v6452
        %v6454 = vrot.slane %v6445, %v6453
        %v6455 = vlaneseq
        %v6456 = vshrl.u32 %v6455, 7
        %v6457 = vsub.s32 2, %v6456
        %v6458 = vrot.slane %v6445, %v6457
        %v6459 = vlaneseq
        %v6460 = vshrl.u32 %v6459, 7
        %v6461 = vsub.s32 3, %v6460
        %v6462 = vrot.slane %v6445, %v6461
        %v6463 = vlaneseq
        %v6464 = vshrl.u32 %v6463, 7
        %v6465 = vsub.s32 4, %v6464
        %v6466 = vrot.slane %v6445, %v6465
        %v6467 = vlaneseq
        %v6468 = vshrl.u32 %v6467, 7
        %v6469 = vsub.s32 5, %v6468
        %v6470 = vrot.slane %v6445, %v6469
        %v6471 = vlaneseq
        %v6472 = vshrl.u32 %v6471, 7
        %v6473 = vsub.s32 6, %v6472
        %v6474 = vrot.slane %v6445, %v6473
        %v6475 = vlaneseq
        %v6476 = vshrl.u32 %v6475, 7
        %v6477 = vsub.s32 7, %v6476
        %v6478 = vrot.slane %v6445, %v6477
        %v6491 = vunpack.c.l.b16 %v6441
        %v6492 = vunpack.c.h.b16 %v6441
        %v6493 = vunpack.c.l.b16 %v6442
        %v6494 = vunpack.c.h.b16 %v6442
        %v6495 = vunpack.c.l.b16 %v6443
        %v6496 = vunpack.c.h.b16 %v6443
        %v6497 = vunpack.c.l.b16 %v6444
        %v6498 = vunpack.c.h.b16 %v6444
        %v6499 = vpack.c.b16 %v6491, %v6491
        %v6500 = vpack.c.b16 %v6492, %v6492
        %v6501 = vpack.c.b16 %v6493, %v6493
        %v6502 = vpack.c.b16 %v6494, %v6494
        %v6503 = vpack.c.b16 %v6495, %v6495
        %v6504 = vpack.c.b16 %v6496, %v6496
        %v6505 = vpack.c.b16 %v6497, %v6497
        %v6506 = vpack.c.b16 %v6498, %v6498
        %v6508 = vsel %vm904, %v6440, 0
        %v6511 = vsel %vm914, %v6499, 0
        %v6514 = vsel %vm914, %v6500, 0
        %v6517 = vsel %vm914, %v6501, 0
        %v6520 = vsel %vm914, %v6502, 0
        %v6523 = vsel %vm914, %v6503, 0
        %v6526 = vsel %vm914, %v6504, 0
        %v6529 = vsel %vm914, %v6505, 0
        %v6532 = vsel %vm914, %v6506, 0
        %6534 = vmatprep.subr.bf16.mxu0 %v6514
        %6535 = vmatpush1.bf16.msra.mxu0 %v6511
        %6536 = vmatprep.subr.bf16.mxu0 0
        %6537 = vmatpush1.bf16.msra.mxu0 0
        %6538 = vmatprep.subr.bf16.mxu0 0
        %6539 = vmatpush1.bf16.msra.mxu0 0
        %6540 = vmatprep.subr.bf16.mxu0 0
        %6541 = vmatpush1.bf16.msra.mxu0 0
        %6542 = vmatprep.subr.bf16.mxu0 0
        %6543 = vmatpush1.bf16.msra.mxu0 0
        %6544 = vmatprep.subr.bf16.mxu0 0
        %6545 = vmatpush1.bf16.msra.mxu0 0
        %6546 = vmatprep.subr.bf16.mxu0 0
        %6547 = vmatpush1.bf16.msra.mxu0 0
        %6548 = vmatprep.subr.bf16.mxu0 0
        %6549 = vmatpush1.bf16.msra.mxu0 0
        %6550 = vmatprep.subr.bf16.mxu0 0
        %6551 = vmatpush1.bf16.msra.mxu0 0
        %6552 = vmatprep.subr.bf16.mxu0 0
        %6553 = vmatpush1.bf16.msra.mxu0 0
        %6554 = vmatprep.subr.bf16.mxu0 0
        %6555 = vmatpush1.bf16.msra.mxu0 0
        %6556 = vmatprep.subr.bf16.mxu0 0
        %6557 = vmatpush1.bf16.msra.mxu0 0
        %6558 = vmatprep.subr.bf16.mxu0 0
        %6559 = vmatpush1.bf16.msra.mxu0 0
        %6560 = vmatprep.subr.bf16.mxu0 0
        %6561 = vmatpush1.bf16.msra.mxu0 0
        %6562 = vmatprep.subr.bf16.mxu0 0
        %6563 = vmatpush1.bf16.msra.mxu0 0
        %6564 = vmatprep.subr.bf16.mxu0 0
        %6565 = vmatpush1.bf16.msra.mxu0 0
        %6566 = vmatprep.mubr.bf16.mxu0 0
        %6567 = vmatmul.mubr.bf16.gmra.mrb[0].mxu0 %v6508
        %v6568 = vpop.f32.mrb[0].mxu0
        %v6569 = vadd.f32 %v6450, %v6568
        %v6570 = vpop.f32.mrb[0].mxu0
        %v6571 = vadd.f32 %v6454, %v6570
        %v6572 = vpop.f32.mrb[0].mxu0
        %v6573 = vadd.f32 %v6450, %v6572
        %v6574 = vpop.f32.mrb[0].mxu0
        %v6575 = vadd.f32 %v6454, %v6574
        %6576 = vdwg.mxu0
        %6577 = vmatprep.subr.bf16.mxu0 %v6520
        %6578 = vmatpush1.bf16.msra.mxu0 %v6517
        %6579 = vmatprep.subr.bf16.mxu0 0
        %6580 = vmatpush1.bf16.msra.mxu0 0
        %6581 = vmatprep.subr.bf16.mxu0 0
        %6582 = vmatpush1.bf16.msra.mxu0 0
        %6583 = vmatprep.subr.bf16.mxu0 0
        %6584 = vmatpush1.bf16.msra.mxu0 0
        %6585 = vmatprep.subr.bf16.mxu0 0
        %6586 = vmatpush1.bf16.msra.mxu0 0
        %6587 = vmatprep.subr.bf16.mxu0 0
        %6588 = vmatpush1.bf16.msra.mxu0 0
        %6589 = vmatprep.subr.bf16.mxu0 0
        %6590 = vmatpush1.bf16.msra.mxu0 0
        %6591 = vmatprep.subr.bf16.mxu0 0
        %6592 = vmatpush1.bf16.msra.mxu0 0
        %6593 = vmatprep.subr.bf16.mxu0 0
        %6594 = vmatpush1.bf16.msra.mxu0 0
        %6595 = vmatprep.subr.bf16.mxu0 0
        %6596 = vmatpush1.bf16.msra.mxu0 0
        %6597 = vmatprep.subr.bf16.mxu0 0
        %6598 = vmatpush1.bf16.msra.mxu0 0
        %6599 = vmatprep.subr.bf16.mxu0 0
        %6600 = vmatpush1.bf16.msra.mxu0 0
        %6601 = vmatprep.subr.bf16.mxu0 0
        %6602 = vmatpush1.bf16.msra.mxu0 0
        %6603 = vmatprep.subr.bf16.mxu0 0
        %6604 = vmatpush1.bf16.msra.mxu0 0
        %6605 = vmatprep.subr.bf16.mxu0 0
        %6606 = vmatpush1.bf16.msra.mxu0 0
        %6607 = vmatprep.subr.bf16.mxu0 0
        %6608 = vmatpush1.bf16.msra.mxu0 0
        %6609 = vmatprep.mubr.bf16.mxu0 0
        %6610 = vmatmul.mubr.bf16.gmra.mrb[0].mxu0 %v6508
        %v6611 = vpop.f32.mrb[0].mxu0
        %v6612 = vadd.f32 %v6458, %v6611
        %v6613 = vpop.f32.mrb[0].mxu0
        %v6614 = vadd.f32 %v6462, %v6613
        %v6615 = vpop.f32.mrb[0].mxu0
        %v6616 = vadd.f32 %v6458, %v6615
        %v6617 = vpop.f32.mrb[0].mxu0
        %v6618 = vadd.f32 %v6462, %v6617
        %6619 = vdwg.mxu0
        %6620 = vmatprep.subr.bf16.mxu0 %v6526
        %6621 = vmatpush1.bf16.msra.mxu0 %v6523
        %6622 = vmatprep.subr.bf16.mxu0 0
        %6623 = vmatpush1.bf16.msra.mxu0 0
        %6624 = vmatprep.subr.bf16.mxu0 0
        %6625 = vmatpush1.bf16.msra.mxu0 0
        %6626 = vmatprep.subr.bf16.mxu0 0
        %6627 = vmatpush1.bf16.msra.mxu0 0
        %6628 = vmatprep.subr.bf16.mxu0 0
        %6629 = vmatpush1.bf16.msra.mxu0 0
        %6630 = vmatprep.subr.bf16.mxu0 0
        %6631 = vmatpush1.bf16.msra.mxu0 0
        %6632 = vmatprep.subr.bf16.mxu0 0
        %6633 = vmatpush1.bf16.msra.mxu0 0
        %6634 = vmatprep.subr.bf16.mxu0 0
        %6635 = vmatpush1.bf16.msra.mxu0 0
        %6636 = vmatprep.subr.bf16.mxu0 0
        %6637 = vmatpush1.bf16.msra.mxu0 0
        %6638 = vmatprep.subr.bf16.mxu0 0
        %6639 = vmatpush1.bf16.msra.mxu0 0
        %6640 = vmatprep.subr.bf16.mxu0 0
        %6641 = vmatpush1.bf16.msra.mxu0 0
        %6642 = vmatprep.subr.bf16.mxu0 0
        %6643 = vmatpush1.bf16.msra.mxu0 0
        %6644 = vmatprep.subr.bf16.mxu0 0
        %6645 = vmatpush1.bf16.msra.mxu0 0
        %6646 = vmatprep.subr.bf16.mxu0 0
        %6647 = vmatpush1.bf16.msra.mxu0 0
        %6648 = vmatprep.subr.bf16.mxu0 0
        %6649 = vmatpush1.bf16.msra.mxu0 0
        %6650 = vmatprep.subr.bf16.mxu0 0
        %6651 = vmatpush1.bf16.msra.mxu0 0
        %6652 = vmatprep.mubr.bf16.mxu0 0
        %6653 = vmatmul.mubr.bf16.gmra.mrb[0].mxu0 %v6508
        %v6654 = vpop.f32.mrb[0].mxu0
        %v6655 = vadd.f32 %v6466, %v6654
        %v6656 = vpop.f32.mrb[0].mxu0
        %v6657 = vadd.f32 %v6470, %v6656
        %v6658 = vpop.f32.mrb[0].mxu0
        %v6659 = vadd.f32 %v6466, %v6658
        %v6660 = vpop.f32.mrb[0].mxu0
        %v6661 = vadd.f32 %v6470, %v6660
        %6662 = vdwg.mxu0
        %6663 = vmatprep.subr.bf16.mxu0 %v6532
        %6664 = vmatpush1.bf16.msra.mxu0 %v6529
        %6665 = vmatprep.subr.bf16.mxu0 0
        %6666 = vmatpush1.bf16.msra.mxu0 0
        %6667 = vmatprep.subr.bf16.mxu0 0
        %6668 = vmatpush1.bf16.msra.mxu0 0
        %6669 = vmatprep.subr.bf16.mxu0 0
        %6670 = vmatpush1.bf16.msra.mxu0 0
        %6671 = vmatprep.subr.bf16.mxu0 0
        %6672 = vmatpush1.bf16.msra.mxu0 0
        %6673 = vmatprep.subr.bf16.mxu0 0
        %6674 = vmatpush1.bf16.msra.mxu0 0
        %6675 = vmatprep.subr.bf16.mxu0 0
        %6676 = vmatpush1.bf16.msra.mxu0 0
        %6677 = vmatprep.subr.bf16.mxu0 0
        %6678 = vmatpush1.bf16.msra.mxu0 0
        %6679 = vmatprep.subr.bf16.mxu0 0
        %6680 = vmatpush1.bf16.msra.mxu0 0
        %6681 = vmatprep.subr.bf16.mxu0 0
        %6682 = vmatpush1.bf16.msra.mxu0 0
        %6683 = vmatprep.subr.bf16.mxu0 0
        %6684 = vmatpush1.bf16.msra.mxu0 0
        %6685 = vmatprep.subr.bf16.mxu0 0
        %6686 = vmatpush1.bf16.msra.mxu0 0
        %6687 = vmatprep.subr.bf16.mxu0 0
        %6688 = vmatpush1.bf16.msra.mxu0 0
        %6689 = vmatprep.subr.bf16.mxu0 0
        %6690 = vmatpush1.bf16.msra.mxu0 0
        %6691 = vmatprep.subr.bf16.mxu0 0
        %6692 = vmatpush1.bf16.msra.mxu0 0
        %6693 = vmatprep.subr.bf16.mxu0 0
        %6694 = vmatpush1.bf16.msra.mxu0 0
        %6695 = vmatprep.mubr.bf16.mxu0 0
        %6696 = vmatmul.mubr.bf16.gmra.mrb[0].mxu0 %v6508
        %v6697 = vpop.f32.mrb[0].mxu0
        %v6698 = vadd.f32 %v6474, %v6697
        %v6699 = vpop.f32.mrb[0].mxu0
        %v6700 = vadd.f32 %v6478, %v6699
        %v6701 = vpop.f32.mrb[0].mxu0
        %v6702 = vadd.f32 %v6474, %v6701
        %v6703 = vpop.f32.mrb[0].mxu0
        %v6704 = vadd.f32 %v6478, %v6703
        %6705 = vdwg.mxu0
        %v6706 = vmax.f32 %v6569, 0.0
        %v6707 = vmax.f32 %v6571, 0.0
        %v6708 = vmax.f32 %v6612, 0.0
        %v6709 = vmax.f32 %v6614, 0.0
        %v6710 = vmax.f32 %v6655, 0.0
        %v6711 = vmax.f32 %v6657, 0.0
        %v6712 = vmax.f32 %v6698, 0.0
        %v6713 = vmax.f32 %v6700, 0.0
        %v6714 = vmax.f32 %v6573, 0.0
        %v6715 = vmax.f32 %v6575, 0.0
        %v6716 = vmax.f32 %v6616, 0.0
        %v6717 = vmax.f32 %v6618, 0.0
        %v6718 = vmax.f32 %v6659, 0.0
        %v6719 = vmax.f32 %v6661, 0.0
        %v6720 = vmax.f32 %v6702, 0.0
        %v6721 = vmax.f32 %v6704, 0.0
        %v6722 = vpack.c.bf16 %v6714, %v6706
        %v6723 = vpack.c.bf16 %v6715, %v6707
        %v6724 = vpack.c.bf16 %v6716, %v6708
        %v6725 = vpack.c.bf16 %v6717, %v6709
        %v6726 = vpack.c.bf16 %v6718, %v6710
        %v6727 = vpack.c.bf16 %v6719, %v6711
        %v6728 = vpack.c.bf16 %v6720, %v6712
        %v6729 = vpack.c.bf16 %v6721, %v6713
        %v6730 = vld [vmem:[#allocation8] sm:$0xff]
        %v6731 = vld [vmem:[#allocation8 + $0x8] sm:$0xff]
        %v6732 = vld [vmem:[#allocation8 + $0x10] sm:$0xff]
        %v6733 = vld [vmem:[#allocation8 + $0x18] sm:$0xff]
        %v6734 = vld [vmem:[#allocation8 + $0x20] sm:$0xff]
        %v6735 = vld [vmem:[#allocation8 + $0x28] sm:$0xff]
        %v6736 = vld [vmem:[#allocation8 + $0x30] sm:$0xff]
        %v6737 = vld [vmem:[#allocation8 + $0x38] sm:$0xff]
        %v6738 = vld [vmem:[#allocation8 + $0x40] sm:$0xff]
        %v6739 = vld [vmem:[#allocation8 + $0x48] sm:$0xff]
        %v6740 = vld [vmem:[#allocation8 + $0x50] sm:$0xff]
        %v6741 = vld [vmem:[#allocation8 + $0x58] sm:$0xff]
        %v6742 = vld [vmem:[#allocation8 + $0x60] sm:$0xff]
        %v6743 = vld [vmem:[#allocation8 + $0x68] sm:$0xff]
        %v6744 = vld [vmem:[#allocation8 + $0x70] sm:$0xff]
        %v6745 = vld [vmem:[#allocation8 + $0x78] sm:$0xff]
        %v6746 = vld [vmem:[#allocation8 + $0x80] sm:$0xff]
        %v6747 = vld [vmem:[#allocation8 + $0x88] sm:$0xff]
        %v6748 = vld [vmem:[#allocation8 + $0x90] sm:$0xff]
        %v6749 = vld [vmem:[#allocation8 + $0x98] sm:$0xff]
        %v6750 = vld [vmem:[#allocation8 + $0xa0] sm:$0xff]
        %v6751 = vld [vmem:[#allocation8 + $0xa8] sm:$0xff]
        %v6752 = vld [vmem:[#allocation8 + $0xb0] sm:$0xff]
        %v6753 = vld [vmem:[#allocation8 + $0xb8] sm:$0xff]
        %v6754 = vld [vmem:[#allocation8 + $0xc0] sm:$0xff]
        %v6755 = vld [vmem:[#allocation8 + $0xc8] sm:$0xff]
        %v6756 = vld [vmem:[#allocation8 + $0xd0] sm:$0xff]
        %v6757 = vld [vmem:[#allocation8 + $0xd8] sm:$0xff]
        %v6758 = vld [vmem:[#allocation8 + $0xe0] sm:$0xff]
        %v6759 = vld [vmem:[#allocation8 + $0xe8] sm:$0xff]
        %v6760 = vld [vmem:[#allocation8 + $0xf0] sm:$0xff]
        %v6761 = vld [vmem:[#allocation8 + $0xf8] sm:$0xff]
        %v6762 = vld [vmem:[#allocation8 + $0x100] sm:$0xff]
        %v6763 = vld [vmem:[#allocation8 + $0x108] sm:$0xff]
        %v6764 = vld [vmem:[#allocation8 + $0x110] sm:$0xff]
        %v6765 = vld [vmem:[#allocation8 + $0x118] sm:$0xff]
        %v6766 = vld [vmem:[#allocation8 + $0x120] sm:$0xff]
        %v6767 = vld [vmem:[#allocation8 + $0x128] sm:$0xff]
        %v6768 = vld [vmem:[#allocation8 + $0x130] sm:$0xff]
        %v6769 = vld [vmem:[#allocation8 + $0x138] sm:$0xff]
        %v6770 = vld [vmem:[#allocation8 + $0x140] sm:$0xff]
        %v6771 = vld [vmem:[#allocation8 + $0x148] sm:$0xff]
        %v6772 = vld [vmem:[#allocation8 + $0x150] sm:$0xff]
        %v6773 = vld [vmem:[#allocation8 + $0x158] sm:$0xff]
        %v6774 = vld [vmem:[#allocation8 + $0x160] sm:$0xff]
        %v6775 = vld [vmem:[#allocation8 + $0x168] sm:$0xff]
        %v6776 = vld [vmem:[#allocation8 + $0x170] sm:$0xff]
        %v6777 = vld [vmem:[#allocation8 + $0x178] sm:$0xff]
        %v6778 = vld [vmem:[#allocation8 + $0x180] sm:$0xff]
        %v6779 = vld [vmem:[#allocation8 + $0x188] sm:$0xff]
        %v6780 = vld [vmem:[#allocation8 + $0x190] sm:$0xff]
        %v6781 = vld [vmem:[#allocation8 + $0x198] sm:$0xff]
        %v6782 = vld [vmem:[#allocation8 + $0x1a0] sm:$0xff]
        %v6783 = vld [vmem:[#allocation8 + $0x1a8] sm:$0xff]
        %v6784 = vld [vmem:[#allocation8 + $0x1b0] sm:$0xff]
        %v6785 = vld [vmem:[#allocation8 + $0x1b8] sm:$0xff]
        %v6786 = vld [vmem:[#allocation8 + $0x1c0] sm:$0xff]
        %v6787 = vld [vmem:[#allocation8 + $0x1c8] sm:$0xff]
        %v6788 = vld [vmem:[#allocation8 + $0x1d0] sm:$0xff]
        %v6789 = vld [vmem:[#allocation8 + $0x1d8] sm:$0xff]
        %v6790 = vld [vmem:[#allocation8 + $0x1e0] sm:$0xff]
        %v6791 = vld [vmem:[#allocation8 + $0x1e8] sm:$0xff]
        %v6792 = vld [vmem:[#allocation8 + $0x1f0] sm:$0xff]
        %v6793 = vld [vmem:[#allocation8 + $0x1f8] sm:$0xff]
        %v6794 = vld [vmem:[#allocation8 + $0x200] sm:$0xff]
        %v6795 = vld [vmem:[#allocation8 + $0x208] sm:$0xff]
        %v6796 = vld [vmem:[#allocation8 + $0x210] sm:$0xff]
        %v6797 = vld [vmem:[#allocation8 + $0x218] sm:$0xff]
        %v6798 = vld [vmem:[#allocation8 + $0x220] sm:$0xff]
        %v6799 = vld [vmem:[#allocation8 + $0x228] sm:$0xff]
        %v6800 = vld [vmem:[#allocation8 + $0x230] sm:$0xff]
        %v6801 = vld [vmem:[#allocation8 + $0x238] sm:$0xff]
        %v6802 = vld [vmem:[#allocation8 + $0x240] sm:$0xff]
        %v6803 = vld [vmem:[#allocation8 + $0x248] sm:$0xff]
        %v6804 = vld [vmem:[#allocation8 + $0x250] sm:$0xff]
        %v6805 = vld [vmem:[#allocation8 + $0x258] sm:$0xff]
        %v6806 = vld [vmem:[#allocation8 + $0x260] sm:$0xff]
        %v6807 = vld [vmem:[#allocation8 + $0x268] sm:$0xff]
        %v6808 = vld [vmem:[#allocation8 + $0x270] sm:$0xff]
        %v6809 = vld [vmem:[#allocation8 + $0x278] sm:$0xff]
        %v6810 = vld [vmem:[#allocation8 + $0x280] sm:$0xff]
        %v6811 = vld [vmem:[#allocation8 + $0x288] sm:$0xff]
        %v6812 = vld [vmem:[#allocation8 + $0x290] sm:$0xff]
        %v6813 = vld [vmem:[#allocation8 + $0x298] sm:$0xff]
        %v6814 = vld [vmem:[#allocation8 + $0x2a0] sm:$0xff]
        %v6815 = vld [vmem:[#allocation8 + $0x2a8] sm:$0xff]
        %v6816 = vld [vmem:[#allocation8 + $0x2b0] sm:$0xff]
        %v6817 = vld [vmem:[#allocation8 + $0x2b8] sm:$0xff]
        %v6818 = vld [vmem:[#allocation8 + $0x2c0] sm:$0xff]
        %v6819 = vld [vmem:[#allocation8 + $0x2c8] sm:$0xff]
        %v6820 = vld [vmem:[#allocation8 + $0x2d0] sm:$0xff]
        %v6821 = vld [vmem:[#allocation8 + $0x2d8] sm:$0xff]
        %v6822 = vld [vmem:[#allocation8 + $0x2e0] sm:$0xff]
        %v6823 = vld [vmem:[#allocation8 + $0x2e8] sm:$0xff]
        %v6824 = vld [vmem:[#allocation8 + $0x2f0] sm:$0xff]
        %v6825 = vld [vmem:[#allocation8 + $0x2f8] sm:$0xff]
        %v6826 = vld [vmem:[#allocation8 + $0x300] sm:$0xff]
        %v6827 = vld [vmem:[#allocation8 + $0x308] sm:$0xff]
        %v6828 = vld [vmem:[#allocation8 + $0x310] sm:$0xff]
        %v6829 = vld [vmem:[#allocation8 + $0x318] sm:$0xff]
        %v6830 = vld [vmem:[#allocation8 + $0x320] sm:$0xff]
        %v6831 = vld [vmem:[#allocation8 + $0x328] sm:$0xff]
        %v6832 = vld [vmem:[#allocation8 + $0x330] sm:$0xff]
        %v6833 = vld [vmem:[#allocation8 + $0x338] sm:$0xff]
        %v6834 = vld [vmem:[#allocation8 + $0x340] sm:$0xff]
        %v6835 = vld [vmem:[#allocation8 + $0x348] sm:$0xff]
        %v6836 = vld [vmem:[#allocation8 + $0x350] sm:$0xff]
        %v6837 = vld [vmem:[#allocation8 + $0x358] sm:$0xff]
        %v6838 = vld [vmem:[#allocation8 + $0x360] sm:$0xff]
        %v6839 = vld [vmem:[#allocation8 + $0x368] sm:$0xff]
        %v6840 = vld [vmem:[#allocation8 + $0x370] sm:$0xff]
        %v6841 = vld [vmem:[#allocation8 + $0x378] sm:$0xff]
        %v6842 = vld [vmem:[#allocation8 + $0x380] sm:$0xff]
        %v6843 = vld [vmem:[#allocation8 + $0x388] sm:$0xff]
        %v6844 = vld [vmem:[#allocation8 + $0x390] sm:$0xff]
        %v6845 = vld [vmem:[#allocation8 + $0x398] sm:$0xff]
        %v6846 = vld [vmem:[#allocation8 + $0x3a0] sm:$0xff]
        %v6847 = vld [vmem:[#allocation8 + $0x3a8] sm:$0xff]
        %v6848 = vld [vmem:[#allocation8 + $0x3b0] sm:$0xff]
        %v6849 = vld [vmem:[#allocation8 + $0x3b8] sm:$0xff]
        %v6850 = vld [vmem:[#allocation8 + $0x3c0] sm:$0xff]
        %v6851 = vld [vmem:[#allocation8 + $0x3c8] sm:$0xff]
        %v6852 = vld [vmem:[#allocation8 + $0x3d0] sm:$0xff]
        %v6853 = vld [vmem:[#allocation8 + $0x3d8] sm:$0xff]
        %v6854 = vld [vmem:[#allocation8 + $0x3e0] sm:$0xff]
        %v6855 = vld [vmem:[#allocation8 + $0x3e8] sm:$0xff]
        %v6856 = vld [vmem:[#allocation8 + $0x3f0] sm:$0xff]
        %v6857 = vld [vmem:[#allocation8 + $0x3f8] sm:$0xff]
        %v6858 = vld [vmem:[#allocation8 + $0x400] sm:$0xff]
        %v6859 = vld [vmem:[#allocation8 + $0x408] sm:$0xff]
        %v6860 = vld [vmem:[#allocation8 + $0x410] sm:$0xff]
        %v6861 = vld [vmem:[#allocation8 + $0x418] sm:$0xff]
        %v6862 = vld [vmem:[#allocation8 + $0x420] sm:$0xff]
        %v6863 = vld [vmem:[#allocation8 + $0x428] sm:$0xff]
        %v6864 = vld [vmem:[#allocation8 + $0x430] sm:$0xff]
        %v6865 = vld [vmem:[#allocation8 + $0x438] sm:$0xff]
        %v6866 = vld [vmem:[#allocation8 + $0x440] sm:$0xff]
        %v6867 = vld [vmem:[#allocation8 + $0x448] sm:$0xff]
        %v6868 = vld [vmem:[#allocation8 + $0x450] sm:$0xff]
        %v6869 = vld [vmem:[#allocation8 + $0x458] sm:$0xff]
        %v6870 = vld [vmem:[#allocation8 + $0x460] sm:$0xff]
        %v6871 = vld [vmem:[#allocation8 + $0x468] sm:$0xff]
        %v6872 = vld [vmem:[#allocation8 + $0x470] sm:$0xff]
        %v6873 = vld [vmem:[#allocation8 + $0x478] sm:$0xff]
        %v6874 = vld [vmem:[#allocation8 + $0x480] sm:$0xff]
        %v6875 = vld [vmem:[#allocation8 + $0x488] sm:$0xff]
        %v6876 = vld [vmem:[#allocation8 + $0x490] sm:$0xff]
        %v6877 = vld [vmem:[#allocation8 + $0x498] sm:$0xff]
        %v6878 = vld [vmem:[#allocation8 + $0x4a0] sm:$0xff]
        %v6879 = vld [vmem:[#allocation8 + $0x4a8] sm:$0xff]
        %v6880 = vld [vmem:[#allocation8 + $0x4b0] sm:$0xff]
        %v6881 = vld [vmem:[#allocation8 + $0x4b8] sm:$0xff]
        %v6882 = vld [vmem:[#allocation8 + $0x4c0] sm:$0xff]
        %v6883 = vld [vmem:[#allocation8 + $0x4c8] sm:$0xff]
        %v6884 = vld [vmem:[#allocation8 + $0x4d0] sm:$0xff]
        %v6885 = vld [vmem:[#allocation8 + $0x4d8] sm:$0xff]
        %v6886 = vld [vmem:[#allocation8 + $0x4e0] sm:$0xff]
        %v6887 = vld [vmem:[#allocation8 + $0x4e8] sm:$0xff]
        %v6888 = vld [vmem:[#allocation8 + $0x4f0] sm:$0xff]
        %v6889 = vld [vmem:[#allocation8 + $0x4f8] sm:$0xff]
        %v6890 = vld [vmem:[#allocation8 + $0x500] sm:$0xff]
        %v6891 = vld [vmem:[#allocation8 + $0x508] sm:$0xff]
        %v6892 = vld [vmem:[#allocation8 + $0x510] sm:$0xff]
        %v6893 = vld [vmem:[#allocation8 + $0x518] sm:$0xff]
        %v6894 = vld [vmem:[#allocation8 + $0x520] sm:$0xff]
        %v6895 = vld [vmem:[#allocation8 + $0x528] sm:$0xff]
        %v6896 = vld [vmem:[#allocation8 + $0x530] sm:$0xff]
        %v6897 = vld [vmem:[#allocation8 + $0x538] sm:$0xff]
        %v6898 = vld [vmem:[#allocation8 + $0x540] sm:$0xff]
        %v6899 = vld [vmem:[#allocation8 + $0x548] sm:$0xff]
        %v6900 = vld [vmem:[#allocation8 + $0x550] sm:$0xff]
        %v6901 = vld [vmem:[#allocation8 + $0x558] sm:$0xff]
        %v6902 = vld [vmem:[#allocation8 + $0x560] sm:$0xff]
        %v6903 = vld [vmem:[#allocation8 + $0x568] sm:$0xff]
        %v6904 = vld [vmem:[#allocation8 + $0x570] sm:$0xff]
        %v6905 = vld [vmem:[#allocation8 + $0x578] sm:$0xff]
        %v6906 = vld [vmem:[#allocation8 + $0x580] sm:$0xff]
        %v6907 = vld [vmem:[#allocation8 + $0x588] sm:$0xff]
        %v6908 = vld [vmem:[#allocation8 + $0x590] sm:$0xff]
        %v6909 = vld [vmem:[#allocation8 + $0x598] sm:$0xff]
        %v6910 = vld [vmem:[#allocation8 + $0x5a0] sm:$0xff]
        %v6911 = vld [vmem:[#allocation8 + $0x5a8] sm:$0xff]
        %v6912 = vld [vmem:[#allocation8 + $0x5b0] sm:$0xff]
        %v6913 = vld [vmem:[#allocation8 + $0x5b8] sm:$0xff]
        %v6914 = vld [vmem:[#allocation8 + $0x5c0] sm:$0xff]
        %v6915 = vld [vmem:[#allocation8 + $0x5c8] sm:$0xff]
        %v6916 = vld [vmem:[#allocation8 + $0x5d0] sm:$0xff]
        %v6917 = vld [vmem:[#allocation8 + $0x5d8] sm:$0xff]
        %v6918 = vld [vmem:[#allocation8 + $0x5e0] sm:$0xff]
        %v6919 = vld [vmem:[#allocation8 + $0x5e8] sm:$0xff]
        %v6920 = vld [vmem:[#allocation8 + $0x5f0] sm:$0xff]
        %v6921 = vld [vmem:[#allocation8 + $0x5f8] sm:$0xff]
        %v6922 = vld [vmem:[#allocation8 + $0x600] sm:$0xff]
        %v6923 = vld [vmem:[#allocation8 + $0x608] sm:$0xff]
        %v6924 = vld [vmem:[#allocation8 + $0x610] sm:$0xff]
        %v6925 = vld [vmem:[#allocation8 + $0x618] sm:$0xff]
        %v6926 = vld [vmem:[#allocation8 + $0x620] sm:$0xff]
        %v6927 = vld [vmem:[#allocation8 + $0x628] sm:$0xff]
        %v6928 = vld [vmem:[#allocation8 + $0x630] sm:$0xff]
        %v6929 = vld [vmem:[#allocation8 + $0x638] sm:$0xff]
        %v6930 = vld [vmem:[#allocation8 + $0x640] sm:$0xff]
        %v6931 = vld [vmem:[#allocation8 + $0x648] sm:$0xff]
        %v6932 = vld [vmem:[#allocation8 + $0x650] sm:$0xff]
        %v6933 = vld [vmem:[#allocation8 + $0x658] sm:$0xff]
        %v6934 = vld [vmem:[#allocation8 + $0x660] sm:$0xff]
        %v6935 = vld [vmem:[#allocation8 + $0x668] sm:$0xff]
        %v6936 = vld [vmem:[#allocation8 + $0x670] sm:$0xff]
        %v6937 = vld [vmem:[#allocation8 + $0x678] sm:$0xff]
        %v6938 = vld [vmem:[#allocation8 + $0x680] sm:$0xff]
        %v6939 = vld [vmem:[#allocation8 + $0x688] sm:$0xff]
        %v6940 = vld [vmem:[#allocation8 + $0x690] sm:$0xff]
        %v6941 = vld [vmem:[#allocation8 + $0x698] sm:$0xff]
        %v6942 = vld [vmem:[#allocation8 + $0x6a0] sm:$0xff]
        %v6943 = vld [vmem:[#allocation8 + $0x6a8] sm:$0xff]
        %v6944 = vld [vmem:[#allocation8 + $0x6b0] sm:$0xff]
        %v6945 = vld [vmem:[#allocation8 + $0x6b8] sm:$0xff]
        %v6946 = vld [vmem:[#allocation8 + $0x6c0] sm:$0xff]
        %v6947 = vld [vmem:[#allocation8 + $0x6c8] sm:$0xff]
        %v6948 = vld [vmem:[#allocation8 + $0x6d0] sm:$0xff]
        %v6949 = vld [vmem:[#allocation8 + $0x6d8] sm:$0xff]
        %v6950 = vld [vmem:[#allocation8 + $0x6e0] sm:$0xff]
        %v6951 = vld [vmem:[#allocation8 + $0x6e8] sm:$0xff]
        %v6952 = vld [vmem:[#allocation8 + $0x6f0] sm:$0xff]
        %v6953 = vld [vmem:[#allocation8 + $0x6f8] sm:$0xff]
        %v6954 = vld [vmem:[#allocation8 + $0x700] sm:$0xff]
        %v6955 = vld [vmem:[#allocation8 + $0x708] sm:$0xff]
        %v6956 = vld [vmem:[#allocation8 + $0x710] sm:$0xff]
        %v6957 = vld [vmem:[#allocation8 + $0x718] sm:$0xff]
        %v6958 = vld [vmem:[#allocation8 + $0x720] sm:$0xff]
        %v6959 = vld [vmem:[#allocation8 + $0x728] sm:$0xff]
        %v6960 = vld [vmem:[#allocation8 + $0x730] sm:$0xff]
        %v6961 = vld [vmem:[#allocation8 + $0x738] sm:$0xff]
        %v6962 = vld [vmem:[#allocation8 + $0x740] sm:$0xff]
        %v6963 = vld [vmem:[#allocation8 + $0x748] sm:$0xff]
        %v6964 = vld [vmem:[#allocation8 + $0x750] sm:$0xff]
        %v6965 = vld [vmem:[#allocation8 + $0x758] sm:$0xff]
        %v6966 = vld [vmem:[#allocation8 + $0x760] sm:$0xff]
        %v6967 = vld [vmem:[#allocation8 + $0x768] sm:$0xff]
        %v6968 = vld [vmem:[#allocation8 + $0x770] sm:$0xff]
        %v6969 = vld [vmem:[#allocation8 + $0x778] sm:$0xff]
        %v6970 = vld [vmem:[#allocation8 + $0x780] sm:$0xff]
        %v6971 = vld [vmem:[#allocation8 + $0x788] sm:$0xff]
        %v6972 = vld [vmem:[#allocation8 + $0x790] sm:$0xff]
        %v6973 = vld [vmem:[#allocation8 + $0x798] sm:$0xff]
        %v6974 = vld [vmem:[#allocation8 + $0x7a0] sm:$0xff]
        %v6975 = vld [vmem:[#allocation8 + $0x7a8] sm:$0xff]
        %v6976 = vld [vmem:[#allocation8 + $0x7b0] sm:$0xff]
        %v6977 = vld [vmem:[#allocation8 + $0x7b8] sm:$0xff]
        %v6978 = vld [vmem:[#allocation8 + $0x7c0] sm:$0xff]
        %v6979 = vld [vmem:[#allocation8 + $0x7c8] sm:$0xff]
        %v6980 = vld [vmem:[#allocation8 + $0x7d0] sm:$0xff]
        %v6981 = vld [vmem:[#allocation8 + $0x7d8] sm:$0xff]
        %v6982 = vld [vmem:[#allocation8 + $0x7e0] sm:$0xff]
        %v6983 = vld [vmem:[#allocation8 + $0x7e8] sm:$0xff]
        %v6984 = vld [vmem:[#allocation8 + $0x7f0] sm:$0xff]
        %v6985 = vld [vmem:[#allocation8 + $0x7f8] sm:$0xff]
        %v6986 = vld [vmem:[%s13] sm:$0xf]
        %v6988 = vlaneseq
        %v6989 = vshrl.u32 %v6988, 7
        %v6990 = vsub.s32 0, %v6989
        %v6991 = vrot.slane %v6986, %v6990
        %v6992 = vlaneseq
        %v6993 = vshrl.u32 %v6992, 7
        %v6994 = vsub.s32 1, %v6993
        %v6995 = vrot.slane %v6986, %v6994
        %v6996 = vlaneseq
        %v6997 = vshrl.u32 %v6996, 7
        %v6998 = vsub.s32 2, %v6997
        %v6999 = vrot.slane %v6986, %v6998
        %v7000 = vlaneseq
        %v7001 = vshrl.u32 %v7000, 7
        %v7002 = vsub.s32 3, %v7001
        %v7003 = vrot.slane %v6986, %v7002
        %v7264 = vunpack.c.l.b16 %v6730
        %v7265 = vunpack.c.h.b16 %v6730
        %v7266 = vunpack.c.l.b16 %v6731
        %v7267 = vunpack.c.h.b16 %v6731
        %v7268 = vunpack.c.l.b16 %v6732
        %v7269 = vunpack.c.h.b16 %v6732
        %v7270 = vunpack.c.l.b16 %v6733
        %v7271 = vunpack.c.h.b16 %v6733
        %v7272 = vunpack.c.l.b16 %v6734
        %v7273 = vunpack.c.h.b16 %v6734
        %v7274 = vunpack.c.l.b16 %v6735
        %v7275 = vunpack.c.h.b16 %v6735
        %v7276 = vunpack.c.l.b16 %v6736
        %v7277 = vunpack.c.h.b16 %v6736
        %v7278 = vunpack.c.l.b16 %v6737
        %v7279 = vunpack.c.h.b16 %v6737
        %v7280 = vunpack.c.l.b16 %v6738
        %v7281 = vunpack.c.h.b16 %v6738
        %v7282 = vunpack.c.l.b16 %v6739
        %v7283 = vunpack.c.h.b16 %v6739
        %v7284 = vunpack.c.l.b16 %v6740
        %v7285 = vunpack.c.h.b16 %v6740
        %v7286 = vunpack.c.l.b16 %v6741
        %v7287 = vunpack.c.h.b16 %v6741
        %v7288 = vunpack.c.l.b16 %v6742
        %v7289 = vunpack.c.h.b16 %v6742
        %v7290 = vunpack.c.l.b16 %v6743
        %v7291 = vunpack.c.h.b16 %v6743
        %v7292 = vunpack.c.l.b16 %v6744
        %v7293 = vunpack.c.h.b16 %v6744
        %v7294 = vunpack.c.l.b16 %v6745
        %v7295 = vunpack.c.h.b16 %v6745
        %v7296 = vunpack.c.l.b16 %v6746
        %v7297 = vunpack.c.h.b16 %v6746
        %v7298 = vunpack.c.l.b16 %v6747
        %v7299 = vunpack.c.h.b16 %v6747
        %v7300 = vunpack.c.l.b16 %v6748
        %v7301 = vunpack.c.h.b16 %v6748
        %v7302 = vunpack.c.l.b16 %v6749
        %v7303 = vunpack.c.h.b16 %v6749
        %v7304 = vunpack.c.l.b16 %v6750
        %v7305 = vunpack.c.h.b16 %v6750
        %v7306 = vunpack.c.l.b16 %v6751
        %v7307 = vunpack.c.h.b16 %v6751
        %v7308 = vunpack.c.l.b16 %v6752
        %v7309 = vunpack.c.h.b16 %v6752
        %v7310 = vunpack.c.l.b16 %v6753
        %v7311 = vunpack.c.h.b16 %v6753
        %v7312 = vunpack.c.l.b16 %v6754
        %v7313 = vunpack.c.h.b16 %v6754
        %v7314 = vunpack.c.l.b16 %v6755
        %v7315 = vunpack.c.h.b16 %v6755
        %v7316 = vunpack.c.l.b16 %v6756
        %v7317 = vunpack.c.h.b16 %v6756
        %v7318 = vunpack.c.l.b16 %v6757
        %v7319 = vunpack.c.h.b16 %v6757
        %v7320 = vunpack.c.l.b16 %v6758
        %v7321 = vunpack.c.h.b16 %v6758
        %v7322 = vunpack.c.l.b16 %v6759
        %v7323 = vunpack.c.h.b16 %v6759
        %v7324 = vunpack.c.l.b16 %v6760
        %v7325 = vunpack.c.h.b16 %v6760
        %v7326 = vunpack.c.l.b16 %v6761
        %v7327 = vunpack.c.h.b16 %v6761
        %v7328 = vunpack.c.l.b16 %v6762
        %v7329 = vunpack.c.h.b16 %v6762
        %v7330 = vunpack.c.l.b16 %v6763
        %v7331 = vunpack.c.h.b16 %v6763
        %v7332 = vunpack.c.l.b16 %v6764
        %v7333 = vunpack.c.h.b16 %v6764
        %v7334 = vunpack.c.l.b16 %v6765
        %v7335 = vunpack.c.h.b16 %v6765
        %v7336 = vunpack.c.l.b16 %v6766
        %v7337 = vunpack.c.h.b16 %v6766
        %v7338 = vunpack.c.l.b16 %v6767
        %v7339 = vunpack.c.h.b16 %v6767
        %v7340 = vunpack.c.l.b16 %v6768
        %v7341 = vunpack.c.h.b16 %v6768
        %v7342 = vunpack.c.l.b16 %v6769
        %v7343 = vunpack.c.h.b16 %v6769
        %v7344 = vunpack.c.l.b16 %v6770
        %v7345 = vunpack.c.h.b16 %v6770
        %v7346 = vunpack.c.l.b16 %v6771
        %v7347 = vunpack.c.h.b16 %v6771
        %v7348 = vunpack.c.l.b16 %v6772
        %v7349 = vunpack.c.h.b16 %v6772
        %v7350 = vunpack.c.l.b16 %v6773
        %v7351 = vunpack.c.h.b16 %v6773
        %v7352 = vunpack.c.l.b16 %v6774
        %v7353 = vunpack.c.h.b16 %v6774
        %v7354 = vunpack.c.l.b16 %v6775
        %v7355 = vunpack.c.h.b16 %v6775
        %v7356 = vunpack.c.l.b16 %v6776
        %v7357 = vunpack.c.h.b16 %v6776
        %v7358 = vunpack.c.l.b16 %v6777
        %v7359 = vunpack.c.h.b16 %v6777
        %v7360 = vunpack.c.l.b16 %v6778
        %v7361 = vunpack.c.h.b16 %v6778
        %v7362 = vunpack.c.l.b16 %v6779
        %v7363 = vunpack.c.h.b16 %v6779
        %v7364 = vunpack.c.l.b16 %v6780
        %v7365 = vunpack.c.h.b16 %v6780
        %v7366 = vunpack.c.l.b16 %v6781
        %v7367 = vunpack.c.h.b16 %v6781
        %v7368 = vunpack.c.l.b16 %v6782
        %v7369 = vunpack.c.h.b16 %v6782
        %v7370 = vunpack.c.l.b16 %v6783
        %v7371 = vunpack.c.h.b16 %v6783
        %v7372 = vunpack.c.l.b16 %v6784
        %v7373 = vunpack.c.h.b16 %v6784
        %v7374 = vunpack.c.l.b16 %v6785
        %v7375 = vunpack.c.h.b16 %v6785
        %v7376 = vunpack.c.l.b16 %v6786
        %v7377 = vunpack.c.h.b16 %v6786
        %v7378 = vunpack.c.l.b16 %v6787
        %v7379 = vunpack.c.h.b16 %v6787
        %v7380 = vunpack.c.l.b16 %v6788
        %v7381 = vunpack.c.h.b16 %v6788
        %v7382 = vunpack.c.l.b16 %v6789
        %v7383 = vunpack.c.h.b16 %v6789
        %v7384 = vunpack.c.l.b16 %v6790
        %v7385 = vunpack.c.h.b16 %v6790
        %v7386 = vunpack.c.l.b16 %v6791
        %v7387 = vunpack.c.h.b16 %v6791
        %v7388 = vunpack.c.l.b16 %v6792
        %v7389 = vunpack.c.h.b16 %v6792
        %v7390 = vunpack.c.l.b16 %v6793
        %v7391 = vunpack.c.h.b16 %v6793
        %v7392 = vunpack.c.l.b16 %v6794
        %v7393 = vunpack.c.h.b16 %v6794
        %v7394 = vunpack.c.l.b16 %v6795
        %v7395 = vunpack.c.h.b16 %v6795
        %v7396 = vunpack.c.l.b16 %v6796
        %v7397 = vunpack.c.h.b16 %v6796
        %v7398 = vunpack.c.l.b16 %v6797
        %v7399 = vunpack.c.h.b16 %v6797
        %v7400 = vunpack.c.l.b16 %v6798
        %v7401 = vunpack.c.h.b16 %v6798
        %v7402 = vunpack.c.l.b16 %v6799
        %v7403 = vunpack.c.h.b16 %v6799
        %v7404 = vunpack.c.l.b16 %v6800
        %v7405 = vunpack.c.h.b16 %v6800
        %v7406 = vunpack.c.l.b16 %v6801
        %v7407 = vunpack.c.h.b16 %v6801
        %v7408 = vunpack.c.l.b16 %v6802
        %v7409 = vunpack.c.h.b16 %v6802
        %v7410 = vunpack.c.l.b16 %v6803
        %v7411 = vunpack.c.h.b16 %v6803
        %v7412 = vunpack.c.l.b16 %v6804
        %v7413 = vunpack.c.h.b16 %v6804
        %v7414 = vunpack.c.l.b16 %v6805
        %v7415 = vunpack.c.h.b16 %v6805
        %v7416 = vunpack.c.l.b16 %v6806
        %v7417 = vunpack.c.h.b16 %v6806
        %v7418 = vunpack.c.l.b16 %v6807
        %v7419 = vunpack.c.h.b16 %v6807
        %v7420 = vunpack.c.l.b16 %v6808
        %v7421 = vunpack.c.h.b16 %v6808
        %v7422 = vunpack.c.l.b16 %v6809
        %v7423 = vunpack.c.h.b16 %v6809
        %v7424 = vunpack.c.l.b16 %v6810
        %v7425 = vunpack.c.h.b16 %v6810
        %v7426 = vunpack.c.l.b16 %v6811
        %v7427 = vunpack.c.h.b16 %v6811
        %v7428 = vunpack.c.l.b16 %v6812
        %v7429 = vunpack.c.h.b16 %v6812
        %v7430 = vunpack.c.l.b16 %v6813
        %v7431 = vunpack.c.h.b16 %v6813
        %v7432 = vunpack.c.l.b16 %v6814
        %v7433 = vunpack.c.h.b16 %v6814
        %v7434 = vunpack.c.l.b16 %v6815
        %v7435 = vunpack.c.h.b16 %v6815
        %v7436 = vunpack.c.l.b16 %v6816
        %v7437 = vunpack.c.h.b16 %v6816
        %v7438 = vunpack.c.l.b16 %v6817
        %v7439 = vunpack.c.h.b16 %v6817
        %v7440 = vunpack.c.l.b16 %v6818
        %v7441 = vunpack.c.h.b16 %v6818
        %v7442 = vunpack.c.l.b16 %v6819
        %v7443 = vunpack.c.h.b16 %v6819
        %v7444 = vunpack.c.l.b16 %v6820
        %v7445 = vunpack.c.h.b16 %v6820
        %v7446 = vunpack.c.l.b16 %v6821
        %v7447 = vunpack.c.h.b16 %v6821
        %v7448 = vunpack.c.l.b16 %v6822
        %v7449 = vunpack.c.h.b16 %v6822
        %v7450 = vunpack.c.l.b16 %v6823
        %v7451 = vunpack.c.h.b16 %v6823
        %v7452 = vunpack.c.l.b16 %v6824
        %v7453 = vunpack.c.h.b16 %v6824
        %v7454 = vunpack.c.l.b16 %v6825
        %v7455 = vunpack.c.h.b16 %v6825
        %v7456 = vunpack.c.l.b16 %v6826
        %v7457 = vunpack.c.h.b16 %v6826
        %v7458 = vunpack.c.l.b16 %v6827
        %v7459 = vunpack.c.h.b16 %v6827
        %v7460 = vunpack.c.l.b16 %v6828
        %v7461 = vunpack.c.h.b16 %v6828
        %v7462 = vunpack.c.l.b16 %v6829
        %v7463 = vunpack.c.h.b16 %v6829
        %v7464 = vunpack.c.l.b16 %v6830
        %v7465 = vunpack.c.h.b16 %v6830
        %v7466 = vunpack.c.l.b16 %v6831
        %v7467 = vunpack.c.h.b16 %v6831
        %v7468 = vunpack.c.l.b16 %v6832
        %v7469 = vunpack.c.h.b16 %v6832
        %v7470 = vunpack.c.l.b16 %v6833
        %v7471 = vunpack.c.h.b16 %v6833
        %v7472 = vunpack.c.l.b16 %v6834
        %v7473 = vunpack.c.h.b16 %v6834
        %v7474 = vunpack.c.l.b16 %v6835
        %v7475 = vunpack.c.h.b16 %v6835
        %v7476 = vunpack.c.l.b16 %v6836
        %v7477 = vunpack.c.h.b16 %v6836
        %v7478 = vunpack.c.l.b16 %v6837
        %v7479 = vunpack.c.h.b16 %v6837
        %v7480 = vunpack.c.l.b16 %v6838
        %v7481 = vunpack.c.h.b16 %v6838
        %v7482 = vunpack.c.l.b16 %v6839
        %v7483 = vunpack.c.h.b16 %v6839
        %v7484 = vunpack.c.l.b16 %v6840
        %v7485 = vunpack.c.h.b16 %v6840
        %v7486 = vunpack.c.l.b16 %v6841
        %v7487 = vunpack.c.h.b16 %v6841
        %v7488 = vunpack.c.l.b16 %v6842
        %v7489 = vunpack.c.h.b16 %v6842
        %v7490 = vunpack.c.l.b16 %v6843
        %v7491 = vunpack.c.h.b16 %v6843
        %v7492 = vunpack.c.l.b16 %v6844
        %v7493 = vunpack.c.h.b16 %v6844
        %v7494 = vunpack.c.l.b16 %v6845
        %v7495 = vunpack.c.h.b16 %v6845
        %v7496 = vunpack.c.l.b16 %v6846
        %v7497 = vunpack.c.h.b16 %v6846
        %v7498 = vunpack.c.l.b16 %v6847
        %v7499 = vunpack.c.h.b16 %v6847
        %v7500 = vunpack.c.l.b16 %v6848
        %v7501 = vunpack.c.h.b16 %v6848
        %v7502 = vunpack.c.l.b16 %v6849
        %v7503 = vunpack.c.h.b16 %v6849
        %v7504 = vunpack.c.l.b16 %v6850
        %v7505 = vunpack.c.h.b16 %v6850
        %v7506 = vunpack.c.l.b16 %v6851
        %v7507 = vunpack.c.h.b16 %v6851
        %v7508 = vunpack.c.l.b16 %v6852
        %v7509 = vunpack.c.h.b16 %v6852
        %v7510 = vunpack.c.l.b16 %v6853
        %v7511 = vunpack.c.h.b16 %v6853
        %v7512 = vunpack.c.l.b16 %v6854
        %v7513 = vunpack.c.h.b16 %v6854
        %v7514 = vunpack.c.l.b16 %v6855
        %v7515 = vunpack.c.h.b16 %v6855
        %v7516 = vunpack.c.l.b16 %v6856
        %v7517 = vunpack.c.h.b16 %v6856
        %v7518 = vunpack.c.l.b16 %v6857
        %v7519 = vunpack.c.h.b16 %v6857
        %v7520 = vunpack.c.l.b16 %v6858
        %v7521 = vunpack.c.h.b16 %v6858
        %v7522 = vunpack.c.l.b16 %v6859
        %v7523 = vunpack.c.h.b16 %v6859
        %v7524 = vunpack.c.l.b16 %v6860
        %v7525 = vunpack.c.h.b16 %v6860
        %v7526 = vunpack.c.l.b16 %v6861
        %v7527 = vunpack.c.h.b16 %v6861
        %v7528 = vunpack.c.l.b16 %v6862
        %v7529 = vunpack.c.h.b16 %v6862
        %v7530 = vunpack.c.l.b16 %v6863
        %v7531 = vunpack.c.h.b16 %v6863
        %v7532 = vunpack.c.l.b16 %v6864
        %v7533 = vunpack.c.h.b16 %v6864
        %v7534 = vunpack.c.l.b16 %v6865
        %v7535 = vunpack.c.h.b16 %v6865
        %v7536 = vunpack.c.l.b16 %v6866
        %v7537 = vunpack.c.h.b16 %v6866
        %v7538 = vunpack.c.l.b16 %v6867
        %v7539 = vunpack.c.h.b16 %v6867
        %v7540 = vunpack.c.l.b16 %v6868
        %v7541 = vunpack.c.h.b16 %v6868
        %v7542 = vunpack.c.l.b16 %v6869
        %v7543 = vunpack.c.h.b16 %v6869
        %v7544 = vunpack.c.l.b16 %v6870
        %v7545 = vunpack.c.h.b16 %v6870
        %v7546 = vunpack.c.l.b16 %v6871
        %v7547 = vunpack.c.h.b16 %v6871
        %v7548 = vunpack.c.l.b16 %v6872
        %v7549 = vunpack.c.h.b16 %v6872
        %v7550 = vunpack.c.l.b16 %v6873
        %v7551 = vunpack.c.h.b16 %v6873
        %v7552 = vunpack.c.l.b16 %v6874
        %v7553 = vunpack.c.h.b16 %v6874
        %v7554 = vunpack.c.l.b16 %v6875
        %v7555 = vunpack.c.h.b16 %v6875
        %v7556 = vunpack.c.l.b16 %v6876
        %v7557 = vunpack.c.h.b16 %v6876
        %v7558 = vunpack.c.l.b16 %v6877
        %v7559 = vunpack.c.h.b16 %v6877
        %v7560 = vunpack.c.l.b16 %v6878
        %v7561 = vunpack.c.h.b16 %v6878
        %v7562 = vunpack.c.l.b16 %v6879
        %v7563 = vunpack.c.h.b16 %v6879
        %v7564 = vunpack.c.l.b16 %v6880
        %v7565 = vunpack.c.h.b16 %v6880
        %v7566 = vunpack.c.l.b16 %v6881
        %v7567 = vunpack.c.h.b16 %v6881
        %v7568 = vunpack.c.l.b16 %v6882
        %v7569 = vunpack.c.h.b16 %v6882
        %v7570 = vunpack.c.l.b16 %v6883
        %v7571 = vunpack.c.h.b16 %v6883
        %v7572 = vunpack.c.l.b16 %v6884
        %v7573 = vunpack.c.h.b16 %v6884
        %v7574 = vunpack.c.l.b16 %v6885
        %v7575 = vunpack.c.h.b16 %v6885
        %v7576 = vunpack.c.l.b16 %v6886
        %v7577 = vunpack.c.h.b16 %v6886
        %v7578 = vunpack.c.l.b16 %v6887
        %v7579 = vunpack.c.h.b16 %v6887
        %v7580 = vunpack.c.l.b16 %v6888
        %v7581 = vunpack.c.h.b16 %v6888
        %v7582 = vunpack.c.l.b16 %v6889
        %v7583 = vunpack.c.h.b16 %v6889
        %v7584 = vunpack.c.l.b16 %v6890
        %v7585 = vunpack.c.h.b16 %v6890
        %v7586 = vunpack.c.l.b16 %v6891
        %v7587 = vunpack.c.h.b16 %v6891
        %v7588 = vunpack.c.l.b16 %v6892
        %v7589 = vunpack.c.h.b16 %v6892
        %v7590 = vunpack.c.l.b16 %v6893
        %v7591 = vunpack.c.h.b16 %v6893
        %v7592 = vunpack.c.l.b16 %v6894
        %v7593 = vunpack.c.h.b16 %v6894
        %v7594 = vunpack.c.l.b16 %v6895
        %v7595 = vunpack.c.h.b16 %v6895
        %v7596 = vunpack.c.l.b16 %v6896
        %v7597 = vunpack.c.h.b16 %v6896
        %v7598 = vunpack.c.l.b16 %v6897
        %v7599 = vunpack.c.h.b16 %v6897
        %v7600 = vunpack.c.l.b16 %v6898
        %v7601 = vunpack.c.h.b16 %v6898
        %v7602 = vunpack.c.l.b16 %v6899
        %v7603 = vunpack.c.h.b16 %v6899
        %v7604 = vunpack.c.l.b16 %v6900
        %v7605 = vunpack.c.h.b16 %v6900
        %v7606 = vunpack.c.l.b16 %v6901
        %v7607 = vunpack.c.h.b16 %v6901
        %v7608 = vunpack.c.l.b16 %v6902
        %v7609 = vunpack.c.h.b16 %v6902
        %v7610 = vunpack.c.l.b16 %v6903
        %v7611 = vunpack.c.h.b16 %v6903
        %v7612 = vunpack.c.l.b16 %v6904
        %v7613 = vunpack.c.h.b16 %v6904
        %v7614 = vunpack.c.l.b16 %v6905
        %v7615 = vunpack.c.h.b16 %v6905
        %v7616 = vunpack.c.l.b16 %v6906
        %v7617 = vunpack.c.h.b16 %v6906
        %v7618 = vunpack.c.l.b16 %v6907
        %v7619 = vunpack.c.h.b16 %v6907
        %v7620 = vunpack.c.l.b16 %v6908
        %v7621 = vunpack.c.h.b16 %v6908
        %v7622 = vunpack.c.l.b16 %v6909
        %v7623 = vunpack.c.h.b16 %v6909
        %v7624 = vunpack.c.l.b16 %v6910
        %v7625 = vunpack.c.h.b16 %v6910
        %v7626 = vunpack.c.l.b16 %v6911
        %v7627 = vunpack.c.h.b16 %v6911
        %v7628 = vunpack.c.l.b16 %v6912
        %v7629 = vunpack.c.h.b16 %v6912
        %v7630 = vunpack.c.l.b16 %v6913
        %v7631 = vunpack.c.h.b16 %v6913
        %v7632 = vunpack.c.l.b16 %v6914
        %v7633 = vunpack.c.h.b16 %v6914
        %v7634 = vunpack.c.l.b16 %v6915
        %v7635 = vunpack.c.h.b16 %v6915
        %v7636 = vunpack.c.l.b16 %v6916
        %v7637 = vunpack.c.h.b16 %v6916
        %v7638 = vunpack.c.l.b16 %v6917
        %v7639 = vunpack.c.h.b16 %v6917
        %v7640 = vunpack.c.l.b16 %v6918
        %v7641 = vunpack.c.h.b16 %v6918
        %v7642 = vunpack.c.l.b16 %v6919
        %v7643 = vunpack.c.h.b16 %v6919
        %v7644 = vunpack.c.l.b16 %v6920
        %v7645 = vunpack.c.h.b16 %v6920
        %v7646 = vunpack.c.l.b16 %v6921
        %v7647 = vunpack.c.h.b16 %v6921
        %v7648 = vunpack.c.l.b16 %v6922
        %v7649 = vunpack.c.h.b16 %v6922
        %v7650 = vunpack.c.l.b16 %v6923
        %v7651 = vunpack.c.h.b16 %v6923
        %v7652 = vunpack.c.l.b16 %v6924
        %v7653 = vunpack.c.h.b16 %v6924
        %v7654 = vunpack.c.l.b16 %v6925
        %v7655 = vunpack.c.h.b16 %v6925
        %v7656 = vunpack.c.l.b16 %v6926
        %v7657 = vunpack.c.h.b16 %v6926
        %v7658 = vunpack.c.l.b16 %v6927
        %v7659 = vunpack.c.h.b16 %v6927
        %v7660 = vunpack.c.l.b16 %v6928
        %v7661 = vunpack.c.h.b16 %v6928
        %v7662 = vunpack.c.l.b16 %v6929
        %v7663 = vunpack.c.h.b16 %v6929
        %v7664 = vunpack.c.l.b16 %v6930
        %v7665 = vunpack.c.h.b16 %v6930
        %v7666 = vunpack.c.l.b16 %v6931
        %v7667 = vunpack.c.h.b16 %v6931
        %v7668 = vunpack.c.l.b16 %v6932
        %v7669 = vunpack.c.h.b16 %v6932
        %v7670 = vunpack.c.l.b16 %v6933
        %v7671 = vunpack.c.h.b16 %v6933
        %v7672 = vunpack.c.l.b16 %v6934
        %v7673 = vunpack.c.h.b16 %v6934
        %v7674 = vunpack.c.l.b16 %v6935
        %v7675 = vunpack.c.h.b16 %v6935
        %v7676 = vunpack.c.l.b16 %v6936
        %v7677 = vunpack.c.h.b16 %v6936
        %v7678 = vunpack.c.l.b16 %v6937
        %v7679 = vunpack.c.h.b16 %v6937
        %v7680 = vunpack.c.l.b16 %v6938
        %v7681 = vunpack.c.h.b16 %v6938
        %v7682 = vunpack.c.l.b16 %v6939
        %v7683 = vunpack.c.h.b16 %v6939
        %v7684 = vunpack.c.l.b16 %v6940
        %v7685 = vunpack.c.h.b16 %v6940
        %v7686 = vunpack.c.l.b16 %v6941
        %v7687 = vunpack.c.h.b16 %v6941
        %v7688 = vunpack.c.l.b16 %v6942
        %v7689 = vunpack.c.h.b16 %v6942
        %v7690 = vunpack.c.l.b16 %v6943
        %v7691 = vunpack.c.h.b16 %v6943
        %v7692 = vunpack.c.l.b16 %v6944
        %v7693 = vunpack.c.h.b16 %v6944
        %v7694 = vunpack.c.l.b16 %v6945
        %v7695 = vunpack.c.h.b16 %v6945
        %v7696 = vunpack.c.l.b16 %v6946
        %v7697 = vunpack.c.h.b16 %v6946
        %v7698 = vunpack.c.l.b16 %v6947
        %v7699 = vunpack.c.h.b16 %v6947
        %v7700 = vunpack.c.l.b16 %v6948
        %v7701 = vunpack.c.h.b16 %v6948
        %v7702 = vunpack.c.l.b16 %v6949
        %v7703 = vunpack.c.h.b16 %v6949
        %v7704 = vunpack.c.l.b16 %v6950
        %v7705 = vunpack.c.h.b16 %v6950
        %v7706 = vunpack.c.l.b16 %v6951
        %v7707 = vunpack.c.h.b16 %v6951
        %v7708 = vunpack.c.l.b16 %v6952
        %v7709 = vunpack.c.h.b16 %v6952
        %v7710 = vunpack.c.l.b16 %v6953
        %v7711 = vunpack.c.h.b16 %v6953
        %v7712 = vunpack.c.l.b16 %v6954
        %v7713 = vunpack.c.h.b16 %v6954
        %v7714 = vunpack.c.l.b16 %v6955
        %v7715 = vunpack.c.h.b16 %v6955
        %v7716 = vunpack.c.l.b16 %v6956
        %v7717 = vunpack.c.h.b16 %v6956
        %v7718 = vunpack.c.l.b16 %v6957
        %v7719 = vunpack.c.h.b16 %v6957
        %v7720 = vunpack.c.l.b16 %v6958
        %v7721 = vunpack.c.h.b16 %v6958
        %v7722 = vunpack.c.l.b16 %v6959
        %v7723 = vunpack.c.h.b16 %v6959
        %v7724 = vunpack.c.l.b16 %v6960
        %v7725 = vunpack.c.h.b16 %v6960
        %v7726 = vunpack.c.l.b16 %v6961
        %v7727 = vunpack.c.h.b16 %v6961
        %v7728 = vunpack.c.l.b16 %v6962
        %v7729 = vunpack.c.h.b16 %v6962
        %v7730 = vunpack.c.l.b16 %v6963
        %v7731 = vunpack.c.h.b16 %v6963
        %v7732 = vunpack.c.l.b16 %v6964
        %v7733 = vunpack.c.h.b16 %v6964
        %v7734 = vunpack.c.l.b16 %v6965
        %v7735 = vunpack.c.h.b16 %v6965
        %v7736 = vunpack.c.l.b16 %v6966
        %v7737 = vunpack.c.h.b16 %v6966
        %v7738 = vunpack.c.l.b16 %v6967
        %v7739 = vunpack.c.h.b16 %v6967
        %v7740 = vunpack.c.l.b16 %v6968
        %v7741 = vunpack.c.h.b16 %v6968
        %v7742 = vunpack.c.l.b16 %v6969
        %v7743 = vunpack.c.h.b16 %v6969
        %v7744 = vunpack.c.l.b16 %v6970
        %v7745 = vunpack.c.h.b16 %v6970
        %v7746 = vunpack.c.l.b16 %v6971
        %v7747 = vunpack.c.h.b16 %v6971
        %v7748 = vunpack.c.l.b16 %v6972
        %v7749 = vunpack.c.h.b16 %v6972
        %v7750 = vunpack.c.l.b16 %v6973
        %v7751 = vunpack.c.h.b16 %v6973
        %v7752 = vunpack.c.l.b16 %v6974
        %v7753 = vunpack.c.h.b16 %v6974
        %v7754 = vunpack.c.l.b16 %v6975
        %v7755 = vunpack.c.h.b16 %v6975
        %v7756 = vunpack.c.l.b16 %v6976
        %v7757 = vunpack.c.h.b16 %v6976
        %v7758 = vunpack.c.l.b16 %v6977
        %v7759 = vunpack.c.h.b16 %v6977
        %v7760 = vunpack.c.l.b16 %v6978
        %v7761 = vunpack.c.h.b16 %v6978
        %v7762 = vunpack.c.l.b16 %v6979
        %v7763 = vunpack.c.h.b16 %v6979
        %v7764 = vunpack.c.l.b16 %v6980
        %v7765 = vunpack.c.h.b16 %v6980
        %v7766 = vunpack.c.l.b16 %v6981
        %v7767 = vunpack.c.h.b16 %v6981
        %v7768 = vunpack.c.l.b16 %v6982
        %v7769 = vunpack.c.h.b16 %v6982
        %v7770 = vunpack.c.l.b16 %v6983
        %v7771 = vunpack.c.h.b16 %v6983
        %v7772 = vunpack.c.l.b16 %v6984
        %v7773 = vunpack.c.h.b16 %v6984
        %v7774 = vunpack.c.l.b16 %v6985
        %v7775 = vunpack.c.h.b16 %v6985
        %v7776 = vpack.c.b16 %v7268, %v7264
        %v7777 = vpack.c.b16 %v7269, %v7265
        %v7778 = vpack.c.b16 %v7270, %v7266
        %v7779 = vpack.c.b16 %v7271, %v7267
        %v7780 = vpack.c.b16 %v7276, %v7272
        %v7781 = vpack.c.b16 %v7277, %v7273
        %v7782 = vpack.c.b16 %v7278, %v7274
        %v7783 = vpack.c.b16 %v7279, %v7275
        %v7784 = vpack.c.b16 %v7284, %v7280
        %v7785 = vpack.c.b16 %v7285, %v7281
        %v7786 = vpack.c.b16 %v7286, %v7282
        %v7787 = vpack.c.b16 %v7287, %v7283
        %v7788 = vpack.c.b16 %v7292, %v7288
        %v7789 = vpack.c.b16 %v7293, %v7289
        %v7790 = vpack.c.b16 %v7294, %v7290
        %v7791 = vpack.c.b16 %v7295, %v7291
        %v7792 = vpack.c.b16 %v7300, %v7296
        %v7793 = vpack.c.b16 %v7301, %v7297
        %v7794 = vpack.c.b16 %v7302, %v7298
        %v7795 = vpack.c.b16 %v7303, %v7299
        %v7796 = vpack.c.b16 %v7308, %v7304
        %v7797 = vpack.c.b16 %v7309, %v7305
        %v7798 = vpack.c.b16 %v7310, %v7306
        %v7799 = vpack.c.b16 %v7311, %v7307
        %v7800 = vpack.c.b16 %v7316, %v7312
        %v7801 = vpack.c.b16 %v7317, %v7313
        %v7802 = vpack.c.b16 %v7318, %v7314
        %v7803 = vpack.c.b16 %v7319, %v7315
        %v7804 = vpack.c.b16 %v7324, %v7320
        %v7805 = vpack.c.b16 %v7325, %v7321
        %v7806 = vpack.c.b16 %v7326, %v7322
        %v7807 = vpack.c.b16 %v7327, %v7323
        %v7808 = vpack.c.b16 %v7332, %v7328
        %v7809 = vpack.c.b16 %v7333, %v7329
        %v7810 = vpack.c.b16 %v7334, %v7330
        %v7811 = vpack.c.b16 %v7335, %v7331
        %v7812 = vpack.c.b16 %v7340, %v7336
        %v7813 = vpack.c.b16 %v7341, %v7337
        %v7814 = vpack.c.b16 %v7342, %v7338
        %v7815 = vpack.c.b16 %v7343, %v7339
        %v7816 = vpack.c.b16 %v7348, %v7344
        %v7817 = vpack.c.b16 %v7349, %v7345
        %v7818 = vpack.c.b16 %v7350, %v7346
        %v7819 = vpack.c.b16 %v7351, %v7347
        %v7820 = vpack.c.b16 %v7356, %v7352
        %v7821 = vpack.c.b16 %v7357, %v7353
        %v7822 = vpack.c.b16 %v7358, %v7354
        %v7823 = vpack.c.b16 %v7359, %v7355
        %v7824 = vpack.c.b16 %v7364, %v7360
        %v7825 = vpack.c.b16 %v7365, %v7361
        %v7826 = vpack.c.b16 %v7366, %v7362
        %v7827 = vpack.c.b16 %v7367, %v7363
        %v7828 = vpack.c.b16 %v7372, %v7368
        %v7829 = vpack.c.b16 %v7373, %v7369
        %v7830 = vpack.c.b16 %v7374, %v7370
        %v7831 = vpack.c.b16 %v7375, %v7371
        %v7832 = vpack.c.b16 %v7380, %v7376
        %v7833 = vpack.c.b16 %v7381, %v7377
        %v7834 = vpack.c.b16 %v7382, %v7378
        %v7835 = vpack.c.b16 %v7383, %v7379
        %v7836 = vpack.c.b16 %v7388, %v7384
        %v7837 = vpack.c.b16 %v7389, %v7385
        %v7838 = vpack.c.b16 %v7390, %v7386
        %v7839 = vpack.c.b16 %v7391, %v7387
        %v7840 = vpack.c.b16 %v7396, %v7392
        %v7841 = vpack.c.b16 %v7397, %v7393
        %v7842 = vpack.c.b16 %v7398, %v7394
        %v7843 = vpack.c.b16 %v7399, %v7395
        %v7844 = vpack.c.b16 %v7404, %v7400
        %v7845 = vpack.c.b16 %v7405, %v7401
        %v7846 = vpack.c.b16 %v7406, %v7402
        %v7847 = vpack.c.b16 %v7407, %v7403
        %v7848 = vpack.c.b16 %v7412, %v7408
        %v7849 = vpack.c.b16 %v7413, %v7409
        %v7850 = vpack.c.b16 %v7414, %v7410
        %v7851 = vpack.c.b16 %v7415, %v7411
        %v7852 = vpack.c.b16 %v7420, %v7416
        %v7853 = vpack.c.b16 %v7421, %v7417
        %v7854 = vpack.c.b16 %v7422, %v7418
        %v7855 = vpack.c.b16 %v7423, %v7419
        %v7856 = vpack.c.b16 %v7428, %v7424
        %v7857 = vpack.c.b16 %v7429, %v7425
        %v7858 = vpack.c.b16 %v7430, %v7426
        %v7859 = vpack.c.b16 %v7431, %v7427
        %v7860 = vpack.c.b16 %v7436, %v7432
        %v7861 = vpack.c.b16 %v7437, %v7433
        %v7862 = vpack.c.b16 %v7438, %v7434
        %v7863 = vpack.c.b16 %v7439, %v7435
        %v7864 = vpack.c.b16 %v7444, %v7440
        %v7865 = vpack.c.b16 %v7445, %v7441
        %v7866 = vpack.c.b16 %v7446, %v7442
        %v7867 = vpack.c.b16 %v7447, %v7443
        %v7868 = vpack.c.b16 %v7452, %v7448
        %v7869 = vpack.c.b16 %v7453, %v7449
        %v7870 = vpack.c.b16 %v7454, %v7450
        %v7871 = vpack.c.b16 %v7455, %v7451
        %v7872 = vpack.c.b16 %v7460, %v7456
        %v7873 = vpack.c.b16 %v7461, %v7457
        %v7874 = vpack.c.b16 %v7462, %v7458
        %v7875 = vpack.c.b16 %v7463, %v7459
        %v7876 = vpack.c.b16 %v7468, %v7464
        %v7877 = vpack.c.b16 %v7469, %v7465
        %v7878 = vpack.c.b16 %v7470, %v7466
        %v7879 = vpack.c.b16 %v7471, %v7467
        %v7880 = vpack.c.b16 %v7476, %v7472
        %v7881 = vpack.c.b16 %v7477, %v7473
        %v7882 = vpack.c.b16 %v7478, %v7474
        %v7883 = vpack.c.b16 %v7479, %v7475
        %v7884 = vpack.c.b16 %v7484, %v7480
        %v7885 = vpack.c.b16 %v7485, %v7481
        %v7886 = vpack.c.b16 %v7486, %v7482
        %v7887 = vpack.c.b16 %v7487, %v7483
        %v7888 = vpack.c.b16 %v7492, %v7488
        %v7889 = vpack.c.b16 %v7493, %v7489
        %v7890 = vpack.c.b16 %v7494, %v7490
        %v7891 = vpack.c.b16 %v7495, %v7491
        %v7892 = vpack.c.b16 %v7500, %v7496
        %v7893 = vpack.c.b16 %v7501, %v7497
        %v7894 = vpack.c.b16 %v7502, %v7498
        %v7895 = vpack.c.b16 %v7503, %v7499
        %v7896 = vpack.c.b16 %v7508, %v7504
        %v7897 = vpack.c.b16 %v7509, %v7505
        %v7898 = vpack.c.b16 %v7510, %v7506
        %v7899 = vpack.c.b16 %v7511, %v7507
        %v7900 = vpack.c.b16 %v7516, %v7512
        %v7901 = vpack.c.b16 %v7517, %v7513
        %v7902 = vpack.c.b16 %v7518, %v7514
        %v7903 = vpack.c.b16 %v7519, %v7515
        %v7904 = vpack.c.b16 %v7524, %v7520
        %v7905 = vpack.c.b16 %v7525, %v7521
        %v7906 = vpack.c.b16 %v7526, %v7522
        %v7907 = vpack.c.b16 %v7527, %v7523
        %v7908 = vpack.c.b16 %v7532, %v7528
        %v7909 = vpack.c.b16 %v7533, %v7529
        %v7910 = vpack.c.b16 %v7534, %v7530
        %v7911 = vpack.c.b16 %v7535, %v7531
        %v7912 = vpack.c.b16 %v7540, %v7536
        %v7913 = vpack.c.b16 %v7541, %v7537
        %v7914 = vpack.c.b16 %v7542, %v7538
        %v7915 = vpack.c.b16 %v7543, %v7539
        %v7916 = vpack.c.b16 %v7548, %v7544
        %v7917 = vpack.c.b16 %v7549, %v7545
        %v7918 = vpack.c.b16 %v7550, %v7546
        %v7919 = vpack.c.b16 %v7551, %v7547
        %v7920 = vpack.c.b16 %v7556, %v7552
        %v7921 = vpack.c.b16 %v7557, %v7553
        %v7922 = vpack.c.b16 %v7558, %v7554
        %v7923 = vpack.c.b16 %v7559, %v7555
        %v7924 = vpack.c.b16 %v7564, %v7560
        %v7925 = vpack.c.b16 %v7565, %v7561
        %v7926 = vpack.c.b16 %v7566, %v7562
        %v7927 = vpack.c.b16 %v7567, %v7563
        %v7928 = vpack.c.b16 %v7572, %v7568
        %v7929 = vpack.c.b16 %v7573, %v7569
        %v7930 = vpack.c.b16 %v7574, %v7570
        %v7931 = vpack.c.b16 %v7575, %v7571
        %v7932 = vpack.c.b16 %v7580, %v7576
        %v7933 = vpack.c.b16 %v7581, %v7577
        %v7934 = vpack.c.b16 %v7582, %v7578
        %v7935 = vpack.c.b16 %v7583, %v7579
        %v7936 = vpack.c.b16 %v7588, %v7584
        %v7937 = vpack.c.b16 %v7589, %v7585
        %v7938 = vpack.c.b16 %v7590, %v7586
        %v7939 = vpack.c.b16 %v7591, %v7587
        %v7940 = vpack.c.b16 %v7596, %v7592
        %v7941 = vpack.c.b16 %v7597, %v7593
        %v7942 = vpack.c.b16 %v7598, %v7594
        %v7943 = vpack.c.b16 %v7599, %v7595
        %v7944 = vpack.c.b16 %v7604, %v7600
        %v7945 = vpack.c.b16 %v7605, %v7601
        %v7946 = vpack.c.b16 %v7606, %v7602
        %v7947 = vpack.c.b16 %v7607, %v7603
        %v7948 = vpack.c.b16 %v7612, %v7608
        %v7949 = vpack.c.b16 %v7613, %v7609
        %v7950 = vpack.c.b16 %v7614, %v7610
        %v7951 = vpack.c.b16 %v7615, %v7611
        %v7952 = vpack.c.b16 %v7620, %v7616
        %v7953 = vpack.c.b16 %v7621, %v7617
        %v7954 = vpack.c.b16 %v7622, %v7618
        %v7955 = vpack.c.b16 %v7623, %v7619
        %v7956 = vpack.c.b16 %v7628, %v7624
        %v7957 = vpack.c.b16 %v7629, %v7625
        %v7958 = vpack.c.b16 %v7630, %v7626
        %v7959 = vpack.c.b16 %v7631, %v7627
        %v7960 = vpack.c.b16 %v7636, %v7632
        %v7961 = vpack.c.b16 %v7637, %v7633
        %v7962 = vpack.c.b16 %v7638, %v7634
        %v7963 = vpack.c.b16 %v7639, %v7635
        %v7964 = vpack.c.b16 %v7644, %v7640
        %v7965 = vpack.c.b16 %v7645, %v7641
        %v7966 = vpack.c.b16 %v7646, %v7642
        %v7967 = vpack.c.b16 %v7647, %v7643
        %v7968 = vpack.c.b16 %v7652, %v7648
        %v7969 = vpack.c.b16 %v7653, %v7649
        %v7970 = vpack.c.b16 %v7654, %v7650
        %v7971 = vpack.c.b16 %v7655, %v7651
        %v7972 = vpack.c.b16 %v7660, %v7656
        %v7973 = vpack.c.b16 %v7661, %v7657
        %v7974 = vpack.c.b16 %v7662, %v7658
        %v7975 = vpack.c.b16 %v7663, %v7659
        %v7976 = vpack.c.b16 %v7668, %v7664
        %v7977 = vpack.c.b16 %v7669, %v7665
        %v7978 = vpack.c.b16 %v7670, %v7666
        %v7979 = vpack.c.b16 %v7671, %v7667
        %v7980 = vpack.c.b16 %v7676, %v7672
        %v7981 = vpack.c.b16 %v7677, %v7673
        %v7982 = vpack.c.b16 %v7678, %v7674
        %v7983 = vpack.c.b16 %v7679, %v7675
        %v7984 = vpack.c.b16 %v7684, %v7680
        %v7985 = vpack.c.b16 %v7685, %v7681
        %v7986 = vpack.c.b16 %v7686, %v7682
        %v7987 = vpack.c.b16 %v7687, %v7683
        %v7988 = vpack.c.b16 %v7692, %v7688
        %v7989 = vpack.c.b16 %v7693, %v7689
        %v7990 = vpack.c.b16 %v7694, %v7690
        %v7991 = vpack.c.b16 %v7695, %v7691
        %v7992 = vpack.c.b16 %v7700, %v7696
        %v7993 = vpack.c.b16 %v7701, %v7697
        %v7994 = vpack.c.b16 %v7702, %v7698
        %v7995 = vpack.c.b16 %v7703, %v7699
        %v7996 = vpack.c.b16 %v7708, %v7704
        %v7997 = vpack.c.b16 %v7709, %v7705
        %v7998 = vpack.c.b16 %v7710, %v7706
        %v7999 = vpack.c.b16 %v7711, %v7707
        %v8000 = vpack.c.b16 %v7716, %v7712
        %v8001 = vpack.c.b16 %v7717, %v7713
        %v8002 = vpack.c.b16 %v7718, %v7714
        %v8003 = vpack.c.b16 %v7719, %v7715
        %v8004 = vpack.c.b16 %v7724, %v7720
        %v8005 = vpack.c.b16 %v7725, %v7721
        %v8006 = vpack.c.b16 %v7726, %v7722
        %v8007 = vpack.c.b16 %v7727, %v7723
        %v8008 = vpack.c.b16 %v7732, %v7728
        %v8009 = vpack.c.b16 %v7733, %v7729
        %v8010 = vpack.c.b16 %v7734, %v7730
        %v8011 = vpack.c.b16 %v7735, %v7731
        %v8012 = vpack.c.b16 %v7740, %v7736
        %v8013 = vpack.c.b16 %v7741, %v7737
        %v8014 = vpack.c.b16 %v7742, %v7738
        %v8015 = vpack.c.b16 %v7743, %v7739
        %v8016 = vpack.c.b16 %v7748, %v7744
        %v8017 = vpack.c.b16 %v7749, %v7745
        %v8018 = vpack.c.b16 %v7750, %v7746
        %v8019 = vpack.c.b16 %v7751, %v7747
        %v8020 = vpack.c.b16 %v7756, %v7752
        %v8021 = vpack.c.b16 %v7757, %v7753
        %v8022 = vpack.c.b16 %v7758, %v7754
        %v8023 = vpack.c.b16 %v7759, %v7755
        %v8024 = vpack.c.b16 %v7764, %v7760
        %v8025 = vpack.c.b16 %v7765, %v7761
        %v8026 = vpack.c.b16 %v7766, %v7762
        %v8027 = vpack.c.b16 %v7767, %v7763
        %v8028 = vpack.c.b16 %v7772, %v7768
        %v8029 = vpack.c.b16 %v7773, %v7769
        %v8030 = vpack.c.b16 %v7774, %v7770
        %v8031 = vpack.c.b16 %v7775, %v7771
        %8288 = vmatprep.subr.bf16.mxu0 %v7777
        %8289 = vmatpush1.bf16.msra.mxu0 %v7776
        %8290 = vmatprep.subr.bf16.mxu0 %v7781
        %8291 = vmatpush1.bf16.msra.mxu0 %v7780
        %8292 = vmatprep.subr.bf16.mxu0 %v7785
        %8293 = vmatpush1.bf16.msra.mxu0 %v7784
        %8294 = vmatprep.subr.bf16.mxu0 %v7789
        %8295 = vmatpush1.bf16.msra.mxu0 %v7788
        %8296 = vmatprep.subr.bf16.mxu0 %v7793
        %8297 = vmatpush1.bf16.msra.mxu0 %v7792
        %8298 = vmatprep.subr.bf16.mxu0 %v7797
        %8299 = vmatpush1.bf16.msra.mxu0 %v7796
        %8300 = vmatprep.subr.bf16.mxu0 %v7801
        %8301 = vmatpush1.bf16.msra.mxu0 %v7800
        %8302 = vmatprep.subr.bf16.mxu0 %v7805
        %8303 = vmatpush1.bf16.msra.mxu0 %v7804
        %8304 = vmatprep.subr.bf16.mxu0 %v7809
        %8305 = vmatpush1.bf16.msra.mxu0 %v7808
        %8306 = vmatprep.subr.bf16.mxu0 %v7813
        %8307 = vmatpush1.bf16.msra.mxu0 %v7812
        %8308 = vmatprep.subr.bf16.mxu0 %v7817
        %8309 = vmatpush1.bf16.msra.mxu0 %v7816
        %8310 = vmatprep.subr.bf16.mxu0 %v7821
        %8311 = vmatpush1.bf16.msra.mxu0 %v7820
        %8312 = vmatprep.subr.bf16.mxu0 %v7825
        %8313 = vmatpush1.bf16.msra.mxu0 %v7824
        %8314 = vmatprep.subr.bf16.mxu0 %v7829
        %8315 = vmatpush1.bf16.msra.mxu0 %v7828
        %8316 = vmatprep.subr.bf16.mxu0 %v7833
        %8317 = vmatpush1.bf16.msra.mxu0 %v7832
        %8318 = vmatprep.subr.bf16.mxu0 %v7837
        %8319 = vmatpush1.bf16.msra.mxu0 %v7836
        %8320 = vmatprep.mubr.bf16.mxu0 %v6723
        %8321 = vmatmul.mubr.bf16.gmra.mrb[0].mxu0 %v6722
        %v8322 = vpop.f32.mrb[0].mxu0
        %v8323 = vadd.f32 %v6991, %v8322
        %v8324 = vpop.f32.mrb[0].mxu0
        %v8325 = vadd.f32 %v6995, %v8324
        %v8326 = vpop.f32.mrb[0].mxu0
        %v8327 = vadd.f32 %v6991, %v8326
        %v8328 = vpop.f32.mrb[0].mxu0
        %v8329 = vadd.f32 %v6995, %v8328
        %8330 = vdwg.mxu0
        %8331 = vmatprep.subr.bf16.mxu0 %v7841
        %8332 = vmatpush1.bf16.msra.mxu0 %v7840
        %8333 = vmatprep.subr.bf16.mxu0 %v7845
        %8334 = vmatpush1.bf16.msra.mxu0 %v7844
        %8335 = vmatprep.subr.bf16.mxu0 %v7849
        %8336 = vmatpush1.bf16.msra.mxu0 %v7848
        %8337 = vmatprep.subr.bf16.mxu0 %v7853
        %8338 = vmatpush1.bf16.msra.mxu0 %v7852
        %8339 = vmatprep.subr.bf16.mxu0 %v7857
        %8340 = vmatpush1.bf16.msra.mxu0 %v7856
        %8341 = vmatprep.subr.bf16.mxu0 %v7861
        %8342 = vmatpush1.bf16.msra.mxu0 %v7860
        %8343 = vmatprep.subr.bf16.mxu0 %v7865
        %8344 = vmatpush1.bf16.msra.mxu0 %v7864
        %8345 = vmatprep.subr.bf16.mxu0 %v7869
        %8346 = vmatpush1.bf16.msra.mxu0 %v7868
        %8347 = vmatprep.subr.bf16.mxu0 %v7873
        %8348 = vmatpush1.bf16.msra.mxu0 %v7872
        %8349 = vmatprep.subr.bf16.mxu0 %v7877
        %8350 = vmatpush1.bf16.msra.mxu0 %v7876
        %8351 = vmatprep.subr.bf16.mxu0 %v7881
        %8352 = vmatpush1.bf16.msra.mxu0 %v7880
        %8353 = vmatprep.subr.bf16.mxu0 %v7885
        %8354 = vmatpush1.bf16.msra.mxu0 %v7884
        %8355 = vmatprep.subr.bf16.mxu0 %v7889
        %8356 = vmatpush1.bf16.msra.mxu0 %v7888
        %8357 = vmatprep.subr.bf16.mxu0 %v7893
        %8358 = vmatpush1.bf16.msra.mxu0 %v7892
        %8359 = vmatprep.subr.bf16.mxu0 %v7897
        %8360 = vmatpush1.bf16.msra.mxu0 %v7896
        %8361 = vmatprep.subr.bf16.mxu0 %v7901
        %8362 = vmatpush1.bf16.msra.mxu0 %v7900
        %8363 = vmatprep.mubr.bf16.mxu0 %v6725
        %8364 = vmatmul.mubr.bf16.gmra.mrb[0].mxu0 %v6724
        %v8365 = vpop.f32.mrb[0].mxu0
        %v8366 = vadd.f32 %v8323, %v8365
        %v8367 = vpop.f32.mrb[0].mxu0
        %v8368 = vadd.f32 %v8325, %v8367
        %v8369 = vpop.f32.mrb[0].mxu0
        %v8370 = vadd.f32 %v8327, %v8369
        %v8371 = vpop.f32.mrb[0].mxu0
        %v8372 = vadd.f32 %v8329, %v8371
        %8373 = vdwg.mxu0
        %8374 = vmatprep.subr.bf16.mxu0 %v7905
        %8375 = vmatpush1.bf16.msra.mxu0 %v7904
        %8376 = vmatprep.subr.bf16.mxu0 %v7909
        %8377 = vmatpush1.bf16.msra.mxu0 %v7908
        %8378 = vmatprep.subr.bf16.mxu0 %v7913
        %8379 = vmatpush1.bf16.msra.mxu0 %v7912
        %8380 = vmatprep.subr.bf16.mxu0 %v7917
        %8381 = vmatpush1.bf16.msra.mxu0 %v7916
        %8382 = vmatprep.subr.bf16.mxu0 %v7921
        %8383 = vmatpush1.bf16.msra.mxu0 %v7920
        %8384 = vmatprep.subr.bf16.mxu0 %v7925
        %8385 = vmatpush1.bf16.msra.mxu0 %v7924
        %8386 = vmatprep.subr.bf16.mxu0 %v7929
        %8387 = vmatpush1.bf16.msra.mxu0 %v7928
        %8388 = vmatprep.subr.bf16.mxu0 %v7933
        %8389 = vmatpush1.bf16.msra.mxu0 %v7932
        %8390 = vmatprep.subr.bf16.mxu0 %v7937
        %8391 = vmatpush1.bf16.msra.mxu0 %v7936
        %8392 = vmatprep.subr.bf16.mxu0 %v7941
        %8393 = vmatpush1.bf16.msra.mxu0 %v7940
        %8394 = vmatprep.subr.bf16.mxu0 %v7945
        %8395 = vmatpush1.bf16.msra.mxu0 %v7944
        %8396 = vmatprep.subr.bf16.mxu0 %v7949
        %8397 = vmatpush1.bf16.msra.mxu0 %v7948
        %8398 = vmatprep.subr.bf16.mxu0 %v7953
        %8399 = vmatpush1.bf16.msra.mxu0 %v7952
        %8400 = vmatprep.subr.bf16.mxu0 %v7957
        %8401 = vmatpush1.bf16.msra.mxu0 %v7956
        %8402 = vmatprep.subr.bf16.mxu0 %v7961
        %8403 = vmatpush1.bf16.msra.mxu0 %v7960
        %8404 = vmatprep.subr.bf16.mxu0 %v7965
        %8405 = vmatpush1.bf16.msra.mxu0 %v7964
        %8406 = vmatprep.mubr.bf16.mxu0 %v6727
        %8407 = vmatmul.mubr.bf16.gmra.mrb[0].mxu0 %v6726
        %v8408 = vpop.f32.mrb[0].mxu0
        %v8409 = vadd.f32 %v8366, %v8408
        %v8410 = vpop.f32.mrb[0].mxu0
        %v8411 = vadd.f32 %v8368, %v8410
        %v8412 = vpop.f32.mrb[0].mxu0
        %v8413 = vadd.f32 %v8370, %v8412
        %v8414 = vpop.f32.mrb[0].mxu0
        %v8415 = vadd.f32 %v8372, %v8414
        %8416 = vdwg.mxu0
        %8417 = vmatprep.subr.bf16.mxu0 %v7969
        %8418 = vmatpush1.bf16.msra.mxu0 %v7968
        %8419 = vmatprep.subr.bf16.mxu0 %v7973
        %8420 = vmatpush1.bf16.msra.mxu0 %v7972
        %8421 = vmatprep.subr.bf16.mxu0 %v7977
        %8422 = vmatpush1.bf16.msra.mxu0 %v7976
        %8423 = vmatprep.subr.bf16.mxu0 %v7981
        %8424 = vmatpush1.bf16.msra.mxu0 %v7980
        %8425 = vmatprep.subr.bf16.mxu0 %v7985
        %8426 = vmatpush1.bf16.msra.mxu0 %v7984
        %8427 = vmatprep.subr.bf16.mxu0 %v7989
        %8428 = vmatpush1.bf16.msra.mxu0 %v7988
        %8429 = vmatprep.subr.bf16.mxu0 %v7993
        %8430 = vmatpush1.bf16.msra.mxu0 %v7992
        %8431 = vmatprep.subr.bf16.mxu0 %v7997
        %8432 = vmatpush1.bf16.msra.mxu0 %v7996
        %8433 = vmatprep.subr.bf16.mxu0 %v8001
        %8434 = vmatpush1.bf16.msra.mxu0 %v8000
        %8435 = vmatprep.subr.bf16.mxu0 %v8005
        %8436 = vmatpush1.bf16.msra.mxu0 %v8004
        %8437 = vmatprep.subr.bf16.mxu0 %v8009
        %8438 = vmatpush1.bf16.msra.mxu0 %v8008
        %8439 = vmatprep.subr.bf16.mxu0 %v8013
        %8440 = vmatpush1.bf16.msra.mxu0 %v8012
        %8441 = vmatprep.subr.bf16.mxu0 %v8017
        %8442 = vmatpush1.bf16.msra.mxu0 %v8016
        %8443 = vmatprep.subr.bf16.mxu0 %v8021
        %8444 = vmatpush1.bf16.msra.mxu0 %v8020
        %8445 = vmatprep.subr.bf16.mxu0 %v8025
        %8446 = vmatpush1.bf16.msra.mxu0 %v8024
        %8447 = vmatprep.subr.bf16.mxu0 %v8029
        %8448 = vmatpush1.bf16.msra.mxu0 %v8028
        %8449 = vmatprep.mubr.bf16.mxu0 %v6729
        %8450 = vmatmul.mubr.bf16.gmra.mrb[0].mxu0 %v6728
        %v8451 = vpop.f32.mrb[0].mxu0
        %v8452 = vadd.f32 %v8409, %v8451
        %v8453 = vpop.f32.mrb[0].mxu0
        %v8454 = vadd.f32 %v8411, %v8453
        %v8455 = vpop.f32.mrb[0].mxu0
        %v8456 = vadd.f32 %v8413, %v8455
        %v8457 = vpop.f32.mrb[0].mxu0
        %v8458 = vadd.f32 %v8415, %v8457
        %8459 = vdwg.mxu0
        %8460 = vmatprep.subr.bf16.mxu0 %v7779
        %8461 = vmatpush1.bf16.msra.mxu0 %v7778
        %8462 = vmatprep.subr.bf16.mxu0 %v7783
        %8463 = vmatpush1.bf16.msra.mxu0 %v7782
        %8464 = vmatprep.subr.bf16.mxu0 %v7787
        %8465 = vmatpush1.bf16.msra.mxu0 %v7786
        %8466 = vmatprep.subr.bf16.mxu0 %v7791
        %8467 = vmatpush1.bf16.msra.mxu0 %v7790
        %8468 = vmatprep.subr.bf16.mxu0 %v7795
        %8469 = vmatpush1.bf16.msra.mxu0 %v7794
        %8470 = vmatprep.subr.bf16.mxu0 %v7799
        %8471 = vmatpush1.bf16.msra.mxu0 %v7798
        %8472 = vmatprep.subr.bf16.mxu0 %v7803
        %8473 = vmatpush1.bf16.msra.mxu0 %v7802
        %8474 = vmatprep.subr.bf16.mxu0 %v7807
        %8475 = vmatpush1.bf16.msra.mxu0 %v7806
        %8476 = vmatprep.subr.bf16.mxu0 %v7811
        %8477 = vmatpush1.bf16.msra.mxu0 %v7810
        %8478 = vmatprep.subr.bf16.mxu0 %v7815
        %8479 = vmatpush1.bf16.msra.mxu0 %v7814
        %8480 = vmatprep.subr.bf16.mxu0 %v7819
        %8481 = vmatpush1.bf16.msra.mxu0 %v7818
        %8482 = vmatprep.subr.bf16.mxu0 %v7823
        %8483 = vmatpush1.bf16.msra.mxu0 %v7822
        %8484 = vmatprep.subr.bf16.mxu0 %v7827
        %8485 = vmatpush1.bf16.msra.mxu0 %v7826
        %8486 = vmatprep.subr.bf16.mxu0 %v7831
        %8487 = vmatpush1.bf16.msra.mxu0 %v7830
        %8488 = vmatprep.subr.bf16.mxu0 %v7835
        %8489 = vmatpush1.bf16.msra.mxu0 %v7834
        %8490 = vmatprep.subr.bf16.mxu0 %v7839
        %8491 = vmatpush1.bf16.msra.mxu0 %v7838
        %8492 = vmatprep.mubr.bf16.mxu0 %v6723
        %8493 = vmatmul.mubr.bf16.gmra.mrb[0].mxu0 %v6722
        %v8494 = vpop.f32.mrb[0].mxu0
        %v8495 = vadd.f32 %v6999, %v8494
        %v8496 = vpop.f32.mrb[0].mxu0
        %v8497 = vadd.f32 %v7003, %v8496
        %v8498 = vpop.f32.mrb[0].mxu0
        %v8499 = vadd.f32 %v6999, %v8498
        %v8500 = vpop.f32.mrb[0].mxu0
        %v8501 = vadd.f32 %v7003, %v8500
        %8502 = vdwg.mxu0
        %8503 = vmatprep.subr.bf16.mxu0 %v7843
        %8504 = vmatpush1.bf16.msra.mxu0 %v7842
        %8505 = vmatprep.subr.bf16.mxu0 %v7847
        %8506 = vmatpush1.bf16.msra.mxu0 %v7846
        %8507 = vmatprep.subr.bf16.mxu0 %v7851
        %8508 = vmatpush1.bf16.msra.mxu0 %v7850
        %8509 = vmatprep.subr.bf16.mxu0 %v7855
        %8510 = vmatpush1.bf16.msra.mxu0 %v7854
        %8511 = vmatprep.subr.bf16.mxu0 %v7859
        %8512 = vmatpush1.bf16.msra.mxu0 %v7858
        %8513 = vmatprep.subr.bf16.mxu0 %v7863
        %8514 = vmatpush1.bf16.msra.mxu0 %v7862
        %8515 = vmatprep.subr.bf16.mxu0 %v7867
        %8516 = vmatpush1.bf16.msra.mxu0 %v7866
        %8517 = vmatprep.subr.bf16.mxu0 %v7871
        %8518 = vmatpush1.bf16.msra.mxu0 %v7870
        %8519 = vmatprep.subr.bf16.mxu0 %v7875
        %8520 = vmatpush1.bf16.msra.mxu0 %v7874
        %8521 = vmatprep.subr.bf16.mxu0 %v7879
        %8522 = vmatpush1.bf16.msra.mxu0 %v7878
        %8523 = vmatprep.subr.bf16.mxu0 %v7883
        %8524 = vmatpush1.bf16.msra.mxu0 %v7882
        %8525 = vmatprep.subr.bf16.mxu0 %v7887
        %8526 = vmatpush1.bf16.msra.mxu0 %v7886
        %8527 = vmatprep.subr.bf16.mxu0 %v7891
        %8528 = vmatpush1.bf16.msra.mxu0 %v7890
        %8529 = vmatprep.subr.bf16.mxu0 %v7895
        %8530 = vmatpush1.bf16.msra.mxu0 %v7894
        %8531 = vmatprep.subr.bf16.mxu0 %v7899
        %8532 = vmatpush1.bf16.msra.mxu0 %v7898
        %8533 = vmatprep.subr.bf16.mxu0 %v7903
        %8534 = vmatpush1.bf16.msra.mxu0 %v7902
        %8535 = vmatprep.mubr.bf16.mxu0 %v6725
        %8536 = vmatmul.mubr.bf16.gmra.mrb[0].mxu0 %v6724
        %v8537 = vpop.f32.mrb[0].mxu0
        %v8538 = vadd.f32 %v8495, %v8537
        %v8539 = vpop.f32.mrb[0].mxu0
        %v8540 = vadd.f32 %v8497, %v8539
        %v8541 = vpop.f32.mrb[0].mxu0
        %v8542 = vadd.f32 %v8499, %v8541
        %v8543 = vpop.f32.mrb[0].mxu0
        %v8544 = vadd.f32 %v8501, %v8543
        %8545 = vdwg.mxu0
        %8546 = vmatprep.subr.bf16.mxu0 %v7907
        %8547 = vmatpush1.bf16.msra.mxu0 %v7906
        %8548 = vmatprep.subr.bf16.mxu0 %v7911
        %8549 = vmatpush1.bf16.msra.mxu0 %v7910
        %8550 = vmatprep.subr.bf16.mxu0 %v7915
        %8551 = vmatpush1.bf16.msra.mxu0 %v7914
        %8552 = vmatprep.subr.bf16.mxu0 %v7919
        %8553 = vmatpush1.bf16.msra.mxu0 %v7918
        %8554 = vmatprep.subr.bf16.mxu0 %v7923
        %8555 = vmatpush1.bf16.msra.mxu0 %v7922
        %8556 = vmatprep.subr.bf16.mxu0 %v7927
        %8557 = vmatpush1.bf16.msra.mxu0 %v7926
        %8558 = vmatprep.subr.bf16.mxu0 %v7931
        %8559 = vmatpush1.bf16.msra.mxu0 %v7930
        %8560 = vmatprep.subr.bf16.mxu0 %v7935
        %8561 = vmatpush1.bf16.msra.mxu0 %v7934
        %8562 = vmatprep.subr.bf16.mxu0 %v7939
        %8563 = vmatpush1.bf16.msra.mxu0 %v7938
        %8564 = vmatprep.subr.bf16.mxu0 %v7943
        %8565 = vmatpush1.bf16.msra.mxu0 %v7942
        %8566 = vmatprep.subr.bf16.mxu0 %v7947
        %8567 = vmatpush1.bf16.msra.mxu0 %v7946
        %8568 = vmatprep.subr.bf16.mxu0 %v7951
        %8569 = vmatpush1.bf16.msra.mxu0 %v7950
        %8570 = vmatprep.subr.bf16.mxu0 %v7955
        %8571 = vmatpush1.bf16.msra.mxu0 %v7954
        %8572 = vmatprep.subr.bf16.mxu0 %v7959
        %8573 = vmatpush1.bf16.msra.mxu0 %v7958
        %8574 = vmatprep.subr.bf16.mxu0 %v7963
        %8575 = vmatpush1.bf16.msra.mxu0 %v7962
        %8576 = vmatprep.subr.bf16.mxu0 %v7967
        %8577 = vmatpush1.bf16.msra.mxu0 %v7966
        %8578 = vmatprep.mubr.bf16.mxu0 %v6727
        %8579 = vmatmul.mubr.bf16.gmra.mrb[0].mxu0 %v6726
        %v8580 = vpop.f32.mrb[0].mxu0
        %v8581 = vadd.f32 %v8538, %v8580
        %v8582 = vpop.f32.mrb[0].mxu0
        %v8583 = vadd.f32 %v8540, %v8582
        %v8584 = vpop.f32.mrb[0].mxu0
        %v8585 = vadd.f32 %v8542, %v8584
        %v8586 = vpop.f32.mrb[0].mxu0
        %v8587 = vadd.f32 %v8544, %v8586
        %8588 = vdwg.mxu0
        %8589 = vmatprep.subr.bf16.mxu0 %v7971
        %8590 = vmatpush1.bf16.msra.mxu0 %v7970
        %8591 = vmatprep.subr.bf16.mxu0 %v7975
        %8592 = vmatpush1.bf16.msra.mxu0 %v7974
        %8593 = vmatprep.subr.bf16.mxu0 %v7979
        %8594 = vmatpush1.bf16.msra.mxu0 %v7978
        %8595 = vmatprep.subr.bf16.mxu0 %v7983
        %8596 = vmatpush1.bf16.msra.mxu0 %v7982
        %8597 = vmatprep.subr.bf16.mxu0 %v7987
        %8598 = vmatpush1.bf16.msra.mxu0 %v7986
        %8599 = vmatprep.subr.bf16.mxu0 %v7991
        %8600 = vmatpush1.bf16.msra.mxu0 %v7990
        %8601 = vmatprep.subr.bf16.mxu0 %v7995
        %8602 = vmatpush1.bf16.msra.mxu0 %v7994
        %8603 = vmatprep.subr.bf16.mxu0 %v7999
        %8604 = vmatpush1.bf16.msra.mxu0 %v7998
        %8605 = vmatprep.subr.bf16.mxu0 %v8003
        %8606 = vmatpush1.bf16.msra.mxu0 %v8002
        %8607 = vmatprep.subr.bf16.mxu0 %v8007
        %8608 = vmatpush1.bf16.msra.mxu0 %v8006
        %8609 = vmatprep.subr.bf16.mxu0 %v8011
        %8610 = vmatpush1.bf16.msra.mxu0 %v8010
        %8611 = vmatprep.subr.bf16.mxu0 %v8015
        %8612 = vmatpush1.bf16.msra.mxu0 %v8014
        %8613 = vmatprep.subr.bf16.mxu0 %v8019
        %8614 = vmatpush1.bf16.msra.mxu0 %v8018
        %8615 = vmatprep.subr.bf16.mxu0 %v8023
        %8616 = vmatpush1.bf16.msra.mxu0 %v8022
        %8617 = vmatprep.subr.bf16.mxu0 %v8027
        %8618 = vmatpush1.bf16.msra.mxu0 %v8026
        %8619 = vmatprep.subr.bf16.mxu0 %v8031
        %8620 = vmatpush1.bf16.msra.mxu0 %v8030
        %8621 = vmatprep.mubr.bf16.mxu0 %v6729
        %8622 = vmatmul.mubr.bf16.gmra.mrb[0].mxu0 %v6728
        %v8623 = vpop.f32.mrb[0].mxu0
        %v8624 = vadd.f32 %v8581, %v8623
        %v8625 = vpop.f32.mrb[0].mxu0
        %v8626 = vadd.f32 %v8583, %v8625
        %v8627 = vpop.f32.mrb[0].mxu0
        %v8628 = vadd.f32 %v8585, %v8627
        %v8629 = vpop.f32.mrb[0].mxu0
        %v8630 = vadd.f32 %v8587, %v8629
        %8631 = vdwg.mxu0
        %v8632 = vmax.f32 %v8452, 0.0
        %v8633 = vmax.f32 %v8454, 0.0
        %v8634 = vmax.f32 %v8624, 0.0
        %v8635 = vmax.f32 %v8626, 0.0
        %v8636 = vmax.f32 %v8456, 0.0
        %v8637 = vmax.f32 %v8458, 0.0
        %v8638 = vmax.f32 %v8628, 0.0
        %v8639 = vmax.f32 %v8630, 0.0
        %v8640 = vpack.c.bf16 %v8636, %v8632
        %v8641 = vpack.c.bf16 %v8637, %v8633
        %v8642 = vpack.c.bf16 %v8638, %v8634
        %v8643 = vpack.c.bf16 %v8639, %v8635
        %v8644 = vld [vmem:[#allocation10] sm:$0xf]
        %v8645 = vld [vmem:[#allocation10 + $0x4] sm:$0xf]
        %v8646 = vld [vmem:[#allocation10 + $0x8] sm:$0xf]
        %v8647 = vld [vmem:[#allocation10 + $0xc] sm:$0xf]
        %v8648 = vld [vmem:[#allocation10 + $0x10] sm:$0xf]
        %v8649 = vld [vmem:[#allocation10 + $0x14] sm:$0xf]
        %v8650 = vld [vmem:[#allocation10 + $0x18] sm:$0xf]
        %v8651 = vld [vmem:[#allocation10 + $0x1c] sm:$0xf]
        %v8652 = vld [vmem:[#allocation10 + $0x20] sm:$0xf]
        %v8653 = vld [vmem:[#allocation10 + $0x24] sm:$0xf]
        %v8654 = vld [vmem:[#allocation10 + $0x28] sm:$0xf]
        %v8655 = vld [vmem:[#allocation10 + $0x2c] sm:$0xf]
        %v8656 = vld [vmem:[#allocation10 + $0x30] sm:$0xf]
        %v8657 = vld [vmem:[#allocation10 + $0x34] sm:$0xf]
        %v8658 = vld [vmem:[#allocation10 + $0x38] sm:$0xf]
        %v8659 = vld [vmem:[#allocation10 + $0x3c] sm:$0xf]
        %v8660 = vld [vmem:[#allocation10 + $0x40] sm:$0xf]
        %v8661 = vld [vmem:[#allocation10 + $0x44] sm:$0xf]
        %v8662 = vld [vmem:[#allocation10 + $0x48] sm:$0xf]
        %v8663 = vld [vmem:[#allocation10 + $0x4c] sm:$0xf]
        %v8664 = vld [vmem:[#allocation10 + $0x50] sm:$0xf]
        %v8665 = vld [vmem:[#allocation10 + $0x54] sm:$0xf]
        %v8666 = vld [vmem:[#allocation10 + $0x58] sm:$0xf]
        %v8667 = vld [vmem:[#allocation10 + $0x5c] sm:$0xf]
        %v8668 = vld [vmem:[#allocation10 + $0x60] sm:$0xf]
        %v8669 = vld [vmem:[#allocation10 + $0x64] sm:$0xf]
        %v8670 = vld [vmem:[#allocation10 + $0x68] sm:$0xf]
        %v8671 = vld [vmem:[#allocation10 + $0x6c] sm:$0xf]
        %v8672 = vld [vmem:[#allocation10 + $0x70] sm:$0xf]
        %v8673 = vld [vmem:[#allocation10 + $0x74] sm:$0xf]
        %v8674 = vld [vmem:[#allocation10 + $0x78] sm:$0xf]
        %v8675 = vld [vmem:[#allocation10 + $0x7c] sm:$0xf]
        %v8676 = vld [vmem:[#allocation10 + $0x80] sm:$0xf]
        %v8677 = vld [vmem:[#allocation10 + $0x84] sm:$0xf]
        %v8678 = vld [vmem:[#allocation10 + $0x88] sm:$0xf]
        %v8679 = vld [vmem:[#allocation10 + $0x8c] sm:$0xf]
        %v8680 = vld [vmem:[#allocation10 + $0x90] sm:$0xf]
        %v8681 = vld [vmem:[#allocation10 + $0x94] sm:$0xf]
        %v8682 = vld [vmem:[#allocation10 + $0x98] sm:$0xf]
        %v8683 = vld [vmem:[#allocation10 + $0x9c] sm:$0xf]
        %v8684 = vld [vmem:[#allocation10 + $0xa0] sm:$0xf]
        %v8685 = vld [vmem:[#allocation10 + $0xa4] sm:$0xf]
        %v8686 = vld [vmem:[#allocation10 + $0xa8] sm:$0xf]
        %v8687 = vld [vmem:[#allocation10 + $0xac] sm:$0xf]
        %v8688 = vld [vmem:[#allocation10 + $0xb0] sm:$0xf]
        %v8689 = vld [vmem:[#allocation10 + $0xb4] sm:$0xf]
        %v8690 = vld [vmem:[#allocation10 + $0xb8] sm:$0xf]
        %v8691 = vld [vmem:[#allocation10 + $0xbc] sm:$0xf]
        %v8692 = vld [vmem:[#allocation10 + $0xc0] sm:$0xf]
        %v8693 = vld [vmem:[#allocation10 + $0xc4] sm:$0xf]
        %v8694 = vld [vmem:[#allocation10 + $0xc8] sm:$0xf]
        %v8695 = vld [vmem:[#allocation10 + $0xcc] sm:$0xf]
        %v8696 = vld [vmem:[#allocation10 + $0xd0] sm:$0xf]
        %v8697 = vld [vmem:[#allocation10 + $0xd4] sm:$0xf]
        %v8698 = vld [vmem:[#allocation10 + $0xd8] sm:$0xf]
        %v8699 = vld [vmem:[#allocation10 + $0xdc] sm:$0xf]
        %v8700 = vld [vmem:[#allocation10 + $0xe0] sm:$0xf]
        %v8701 = vld [vmem:[#allocation10 + $0xe4] sm:$0xf]
        %v8702 = vld [vmem:[#allocation10 + $0xe8] sm:$0xf]
        %v8703 = vld [vmem:[#allocation10 + $0xec] sm:$0xf]
        %v8704 = vld [vmem:[#allocation10 + $0xf0] sm:$0xf]
        %v8705 = vld [vmem:[#allocation10 + $0xf4] sm:$0xf]
        %v8706 = vld [vmem:[#allocation10 + $0xf8] sm:$0xf]
        %v8707 = vld [vmem:[#allocation10 + $0xfc] sm:$0xf]
        %s8708 = scalar_lea.vmem [#allocation10], 256
        %v8709 = vld [vmem:[%s8708] sm:$0xf]
        %v8710 = vld [vmem:[%s8708 + $0x4] sm:$0xf]
        %v8711 = vld [vmem:[%s8708 + $0x8] sm:$0xf]
        %v8712 = vld [vmem:[%s8708 + $0xc] sm:$0xf]
        %v8713 = vld [vmem:[%s8708 + $0x10] sm:$0xf]
        %v8714 = vld [vmem:[%s8708 + $0x14] sm:$0xf]
        %v8715 = vld [vmem:[%s8708 + $0x18] sm:$0xf]
        %v8716 = vld [vmem:[%s8708 + $0x1c] sm:$0xf]
        %v8717 = vld [vmem:[%s8708 + $0x20] sm:$0xf]
        %v8718 = vld [vmem:[%s8708 + $0x24] sm:$0xf]
        %v8719 = vld [vmem:[%s8708 + $0x28] sm:$0xf]
        %v8720 = vld [vmem:[%s8708 + $0x2c] sm:$0xf]
        %v8721 = vld [vmem:[%s8708 + $0x30] sm:$0xf]
        %v8722 = vld [vmem:[%s8708 + $0x34] sm:$0xf]
        %v8723 = vld [vmem:[%s8708 + $0x38] sm:$0xf]
        %v8724 = vld [vmem:[%s8708 + $0x3c] sm:$0xf]
        %v8725 = vld [vmem:[%s8708 + $0x40] sm:$0xf]
        %v8726 = vld [vmem:[%s8708 + $0x44] sm:$0xf]
        %v8727 = vld [vmem:[%s8708 + $0x48] sm:$0xf]
        %v8728 = vld [vmem:[%s8708 + $0x4c] sm:$0xf]
        %v8729 = vld [vmem:[%s8708 + $0x50] sm:$0xf]
        %v8730 = vld [vmem:[%s8708 + $0x54] sm:$0xf]
        %v8731 = vld [vmem:[%s8708 + $0x58] sm:$0xf]
        %v8732 = vld [vmem:[%s8708 + $0x5c] sm:$0xf]
        %v8733 = vld [vmem:[%s8708 + $0x60] sm:$0xf]
        %v8734 = vld [vmem:[%s8708 + $0x64] sm:$0xf]
        %v8735 = vld [vmem:[%s8708 + $0x68] sm:$0xf]
        %v8736 = vld [vmem:[%s8708 + $0x6c] sm:$0xf]
        %v8737 = vld [vmem:[%s8708 + $0x70] sm:$0xf]
        %v8738 = vld [vmem:[%s8708 + $0x74] sm:$0xf]
        %v8739 = vld [vmem:[%s8708 + $0x78] sm:$0xf]
        %v8740 = vld [vmem:[%s8708 + $0x7c] sm:$0xf]
        %v8741 = vld [vmem:[%s8708 + $0x80] sm:$0xf]
        %v8742 = vld [vmem:[%s8708 + $0x84] sm:$0xf]
        %v8743 = vld [vmem:[%s8708 + $0x88] sm:$0xf]
        %v8744 = vld [vmem:[%s8708 + $0x8c] sm:$0xf]
        %v8745 = vld [vmem:[%s8708 + $0x90] sm:$0xf]
        %v8746 = vld [vmem:[%s8708 + $0x94] sm:$0xf]
        %v8747 = vld [vmem:[%s8708 + $0x98] sm:$0xf]
        %v8748 = vld [vmem:[%s8708 + $0x9c] sm:$0xf]
        %v8749 = vld [vmem:[%s8708 + $0xa0] sm:$0xf]
        %v8750 = vld [vmem:[%s8708 + $0xa4] sm:$0xf]
        %v8751 = vld [vmem:[%s8708 + $0xa8] sm:$0xf]
        %v8752 = vld [vmem:[%s8708 + $0xac] sm:$0xf]
        %v8753 = vld [vmem:[%s8708 + $0xb0] sm:$0xf]
        %v8754 = vld [vmem:[%s8708 + $0xb4] sm:$0xf]
        %v8755 = vld [vmem:[%s8708 + $0xb8] sm:$0xf]
        %v8756 = vld [vmem:[%s8708 + $0xbc] sm:$0xf]
        %v8757 = vld [vmem:[%s8708 + $0xc0] sm:$0xf]
        %v8758 = vld [vmem:[%s8708 + $0xc4] sm:$0xf]
        %v8759 = vld [vmem:[%s8708 + $0xc8] sm:$0xf]
        %v8760 = vld [vmem:[%s8708 + $0xcc] sm:$0xf]
        %v8761 = vld [vmem:[%s8708 + $0xd0] sm:$0xf]
        %v8762 = vld [vmem:[%s8708 + $0xd4] sm:$0xf]
        %v8763 = vld [vmem:[%s8708 + $0xd8] sm:$0xf]
        %v8764 = vld [vmem:[%s8708 + $0xdc] sm:$0xf]
        %v8765 = vld [vmem:[%s8708 + $0xe0] sm:$0xf]
        %v8766 = vld [vmem:[%s8708 + $0xe4] sm:$0xf]
        %v8767 = vld [vmem:[%s8708 + $0xe8] sm:$0xf]
        %v8768 = vld [vmem:[%s8708 + $0xec] sm:$0xf]
        %v8769 = vld [vmem:[%s8708 + $0xf0] sm:$0xf]
        %v8770 = vld [vmem:[%s8708 + $0xf4] sm:$0xf]
        %v8771 = vld [vmem:[%s8708 + $0xf8] sm:$0xf]
        %v8772 = vld [vmem:[%s8708 + $0xfc] sm:$0xf]
        %v8777 = vrot.slane %v8640, 4
        %v8778 = vrot.slane %v8641, 4
        %v8779 = vrot.slane %v8642, 4
        %v8780 = vrot.slane %v8643, 4
        %v8849 = vunpack.c.l.b16 %v8709
        %v8850 = vunpack.c.l.b16 %v8710
        %v8851 = vunpack.c.l.b16 %v8711
        %v8852 = vunpack.c.l.b16 %v8712
        %v8853 = vunpack.c.l.b16 %v8713
        %v8854 = vunpack.c.l.b16 %v8714
        %v8855 = vunpack.c.l.b16 %v8715
        %v8856 = vunpack.c.l.b16 %v8716
        %v8857 = vunpack.c.l.b16 %v8717
        %v8858 = vunpack.c.l.b16 %v8718
        %v8859 = vunpack.c.l.b16 %v8719
        %v8860 = vunpack.c.l.b16 %v8720
        %v8861 = vunpack.c.l.b16 %v8721
        %v8862 = vunpack.c.l.b16 %v8722
        %v8863 = vunpack.c.l.b16 %v8723
        %v8864 = vunpack.c.l.b16 %v8724
        %v8865 = vunpack.c.l.b16 %v8725
        %v8866 = vunpack.c.l.b16 %v8726
        %v8867 = vunpack.c.l.b16 %v8727
        %v8868 = vunpack.c.l.b16 %v8728
        %v8869 = vunpack.c.l.b16 %v8729
        %v8870 = vunpack.c.l.b16 %v8730
        %v8871 = vunpack.c.l.b16 %v8731
        %v8872 = vunpack.c.l.b16 %v8732
        %v8873 = vunpack.c.l.b16 %v8733
        %v8874 = vunpack.c.l.b16 %v8734
        %v8875 = vunpack.c.l.b16 %v8735
        %v8876 = vunpack.c.l.b16 %v8736
        %v8877 = vunpack.c.l.b16 %v8737
        %v8878 = vunpack.c.l.b16 %v8738
        %v8879 = vunpack.c.l.b16 %v8739
        %v8880 = vunpack.c.l.b16 %v8740
        %v8881 = vunpack.c.l.b16 %v8741
        %v8882 = vunpack.c.l.b16 %v8742
        %v8883 = vunpack.c.l.b16 %v8743
        %v8884 = vunpack.c.l.b16 %v8744
        %v8885 = vunpack.c.l.b16 %v8745
        %v8886 = vunpack.c.l.b16 %v8746
        %v8887 = vunpack.c.l.b16 %v8747
        %v8888 = vunpack.c.l.b16 %v8748
        %v8889 = vunpack.c.l.b16 %v8749
        %v8890 = vunpack.c.l.b16 %v8750
        %v8891 = vunpack.c.l.b16 %v8751
        %v8892 = vunpack.c.l.b16 %v8752
        %v8893 = vunpack.c.l.b16 %v8753
        %v8894 = vunpack.c.l.b16 %v8754
        %v8895 = vunpack.c.l.b16 %v8755
        %v8896 = vunpack.c.l.b16 %v8756
        %v8897 = vunpack.c.l.b16 %v8757
        %v8898 = vunpack.c.l.b16 %v8758
        %v8899 = vunpack.c.l.b16 %v8759
        %v8900 = vunpack.c.l.b16 %v8760
        %v8901 = vunpack.c.l.b16 %v8761
        %v8902 = vunpack.c.l.b16 %v8762
        %v8903 = vunpack.c.l.b16 %v8763
        %v8904 = vunpack.c.l.b16 %v8764
        %v8905 = vunpack.c.l.b16 %v8765
        %v8906 = vunpack.c.l.b16 %v8766
        %v8907 = vunpack.c.l.b16 %v8767
        %v8908 = vunpack.c.l.b16 %v8768
        %v8909 = vunpack.c.l.b16 %v8769
        %v8910 = vunpack.c.l.b16 %v8770
        %v8911 = vunpack.c.l.b16 %v8771
        %v8912 = vunpack.c.l.b16 %v8772
        %v8913 = vpack.c.b16 %v8850, %v8849
        %v8914 = vpack.c.b16 %v8852, %v8851
        %v8915 = vpack.c.b16 %v8854, %v8853
        %v8916 = vpack.c.b16 %v8856, %v8855
        %v8917 = vpack.c.b16 %v8858, %v8857
        %v8918 = vpack.c.b16 %v8860, %v8859
        %v8919 = vpack.c.b16 %v8862, %v8861
        %v8920 = vpack.c.b16 %v8864, %v8863
        %v8921 = vpack.c.b16 %v8866, %v8865
        %v8922 = vpack.c.b16 %v8868, %v8867
        %v8923 = vpack.c.b16 %v8870, %v8869
        %v8924 = vpack.c.b16 %v8872, %v8871
        %v8925 = vpack.c.b16 %v8874, %v8873
        %v8926 = vpack.c.b16 %v8876, %v8875
        %v8927 = vpack.c.b16 %v8878, %v8877
        %v8928 = vpack.c.b16 %v8880, %v8879
        %v8929 = vpack.c.b16 %v8882, %v8881
        %v8930 = vpack.c.b16 %v8884, %v8883
        %v8931 = vpack.c.b16 %v8886, %v8885
        %v8932 = vpack.c.b16 %v8888, %v8887
        %v8933 = vpack.c.b16 %v8890, %v8889
        %v8934 = vpack.c.b16 %v8892, %v8891
        %v8935 = vpack.c.b16 %v8894, %v8893
        %v8936 = vpack.c.b16 %v8896, %v8895
        %v8937 = vpack.c.b16 %v8898, %v8897
        %v8938 = vpack.c.b16 %v8900, %v8899
        %v8939 = vpack.c.b16 %v8902, %v8901
        %v8940 = vpack.c.b16 %v8904, %v8903
        %v8941 = vpack.c.b16 %v8906, %v8905
        %v8942 = vpack.c.b16 %v8908, %v8907
        %v8943 = vpack.c.b16 %v8910, %v8909
        %v8944 = vpack.c.b16 %v8912, %v8911
        %8977 = vmatprep.subr.bf16.mxu0 0
        %8978 = vmatpush1.bf16.msra.mxu0 %v8913
        %8979 = vmatprep.subr.bf16.mxu0 0
        %8980 = vmatpush1.bf16.msra.mxu0 %v8914
        %8981 = vmatprep.subr.bf16.mxu0 0
        %8982 = vmatpush1.bf16.msra.mxu0 %v8915
        %8983 = vmatprep.subr.bf16.mxu0 0
        %8984 = vmatpush1.bf16.msra.mxu0 %v8916
        %8985 = vmatprep.subr.bf16.mxu0 0
        %8986 = vmatpush1.bf16.msra.mxu0 %v8917
        %8987 = vmatprep.subr.bf16.mxu0 0
        %8988 = vmatpush1.bf16.msra.mxu0 %v8918
        %8989 = vmatprep.subr.bf16.mxu0 0
        %8990 = vmatpush1.bf16.msra.mxu0 %v8919
        %8991 = vmatprep.subr.bf16.mxu0 0
        %8992 = vmatpush1.bf16.msra.mxu0 %v8920
        %8993 = vmatprep.subr.bf16.mxu0 0
        %8994 = vmatpush1.bf16.msra.mxu0 %v8921
        %8995 = vmatprep.subr.bf16.mxu0 0
        %8996 = vmatpush1.bf16.msra.mxu0 %v8922
        %8997 = vmatprep.subr.bf16.mxu0 0
        %8998 = vmatpush1.bf16.msra.mxu0 %v8923
        %8999 = vmatprep.subr.bf16.mxu0 0
        %9000 = vmatpush1.bf16.msra.mxu0 %v8924
        %9001 = vmatprep.subr.bf16.mxu0 0
        %9002 = vmatpush1.bf16.msra.mxu0 %v8925
        %9003 = vmatprep.subr.bf16.mxu0 0
        %9004 = vmatpush1.bf16.msra.mxu0 %v8926
        %9005 = vmatprep.subr.bf16.mxu0 0
        %9006 = vmatpush1.bf16.msra.mxu0 %v8927
        %9007 = vmatprep.subr.bf16.mxu0 0
        %9008 = vmatpush1.bf16.msra.mxu0 %v8928
        %9009 = vmatprep.mubr.bf16.mxu0 %v8778
        %9010 = vmatmul.mubr.bf16.gmra.mrb[0].mxu0 %v8777
        %v9011 = vpop.f32.mrb[0].mxu0
        %v9012 = vadd.f32 0.0, %v9011
        %v9013 = vpop.f32.mrb[0].mxu0
        %v9014 = vpop.f32.mrb[0].mxu0
        %v9015 = vpop.f32.mrb[0].mxu0
        %9016 = vdwg.mxu0
        %9017 = vmatprep.subr.bf16.mxu0 0
        %9018 = vmatpush1.bf16.msra.mxu0 %v8929
        %9019 = vmatprep.subr.bf16.mxu0 0
        %9020 = vmatpush1.bf16.msra.mxu0 %v8930
        %9021 = vmatprep.subr.bf16.mxu0 0
        %9022 = vmatpush1.bf16.msra.mxu0 %v8931
        %9023 = vmatprep.subr.bf16.mxu0 0
        %9024 = vmatpush1.bf16.msra.mxu0 %v8932
        %9025 = vmatprep.subr.bf16.mxu0 0
        %9026 = vmatpush1.bf16.msra.mxu0 %v8933
        %9027 = vmatprep.subr.bf16.mxu0 0
        %9028 = vmatpush1.bf16.msra.mxu0 %v8934
        %9029 = vmatprep.subr.bf16.mxu0 0
        %9030 = vmatpush1.bf16.msra.mxu0 %v8935
        %9031 = vmatprep.subr.bf16.mxu0 0
        %9032 = vmatpush1.bf16.msra.mxu0 %v8936
        %9033 = vmatprep.subr.bf16.mxu0 0
        %9034 = vmatpush1.bf16.msra.mxu0 %v8937
        %9035 = vmatprep.subr.bf16.mxu0 0
        %9036 = vmatpush1.bf16.msra.mxu0 %v8938
        %9037 = vmatprep.subr.bf16.mxu0 0
        %9038 = vmatpush1.bf16.msra.mxu0 %v8939
        %9039 = vmatprep.subr.bf16.mxu0 0
        %9040 = vmatpush1.bf16.msra.mxu0 %v8940
        %9041 = vmatprep.subr.bf16.mxu0 0
        %9042 = vmatpush1.bf16.msra.mxu0 %v8941
        %9043 = vmatprep.subr.bf16.mxu0 0
        %9044 = vmatpush1.bf16.msra.mxu0 %v8942
        %9045 = vmatprep.subr.bf16.mxu0 0
        %9046 = vmatpush1.bf16.msra.mxu0 %v8943
        %9047 = vmatprep.subr.bf16.mxu0 0
        %9048 = vmatpush1.bf16.msra.mxu0 %v8944
        %9049 = vmatprep.mubr.bf16.mxu0 %v8780
        %9050 = vmatmul.mubr.bf16.gmra.mrb[0].mxu0 %v8779
        %v9051 = vpop.f32.mrb[0].mxu0
        %v9052 = vadd.f32 %v9012, %v9051
        %v9053 = vpop.f32.mrb[0].mxu0
        %v9054 = vpop.f32.mrb[0].mxu0
        %v9055 = vpop.f32.mrb[0].mxu0
        %9056 = vdwg.mxu0
        %v9121 = vunpack.c.l.b16 %v8644
        %v9122 = vunpack.c.l.b16 %v8645
        %v9123 = vunpack.c.l.b16 %v8646
        %v9124 = vunpack.c.l.b16 %v8647
        %v9125 = vunpack.c.l.b16 %v8648
        %v9126 = vunpack.c.l.b16 %v8649
        %v9127 = vunpack.c.l.b16 %v8650
        %v9128 = vunpack.c.l.b16 %v8651
        %v9129 = vunpack.c.l.b16 %v8652
        %v9130 = vunpack.c.l.b16 %v8653
        %v9131 = vunpack.c.l.b16 %v8654
        %v9132 = vunpack.c.l.b16 %v8655
        %v9133 = vunpack.c.l.b16 %v8656
        %v9134 = vunpack.c.l.b16 %v8657
        %v9135 = vunpack.c.l.b16 %v8658
        %v9136 = vunpack.c.l.b16 %v8659
        %v9137 = vunpack.c.l.b16 %v8660
        %v9138 = vunpack.c.l.b16 %v8661
        %v9139 = vunpack.c.l.b16 %v8662
        %v9140 = vunpack.c.l.b16 %v8663
        %v9141 = vunpack.c.l.b16 %v8664
        %v9142 = vunpack.c.l.b16 %v8665
        %v9143 = vunpack.c.l.b16 %v8666
        %v9144 = vunpack.c.l.b16 %v8667
        %v9145 = vunpack.c.l.b16 %v8668
        %v9146 = vunpack.c.l.b16 %v8669
        %v9147 = vunpack.c.l.b16 %v8670
        %v9148 = vunpack.c.l.b16 %v8671
        %v9149 = vunpack.c.l.b16 %v8672
        %v9150 = vunpack.c.l.b16 %v8673
        %v9151 = vunpack.c.l.b16 %v8674
        %v9152 = vunpack.c.l.b16 %v8675
        %v9153 = vunpack.c.l.b16 %v8676
        %v9154 = vunpack.c.l.b16 %v8677
        %v9155 = vunpack.c.l.b16 %v8678
        %v9156 = vunpack.c.l.b16 %v8679
        %v9157 = vunpack.c.l.b16 %v8680
        %v9158 = vunpack.c.l.b16 %v8681
        %v9159 = vunpack.c.l.b16 %v8682
        %v9160 = vunpack.c.l.b16 %v8683
        %v9161 = vunpack.c.l.b16 %v8684
        %v9162 = vunpack.c.l.b16 %v8685
        %v9163 = vunpack.c.l.b16 %v8686
        %v9164 = vunpack.c.l.b16 %v8687
        %v9165 = vunpack.c.l.b16 %v8688
        %v9166 = vunpack.c.l.b16 %v8689
        %v9167 = vunpack.c.l.b16 %v8690
        %v9168 = vunpack.c.l.b16 %v8691
        %v9169 = vunpack.c.l.b16 %v8692
        %v9170 = vunpack.c.l.b16 %v8693
        %v9171 = vunpack.c.l.b16 %v8694
        %v9172 = vunpack.c.l.b16 %v8695
        %v9173 = vunpack.c.l.b16 %v8696
        %v9174 = vunpack.c.l.b16 %v8697
        %v9175 = vunpack.c.l.b16 %v8698
        %v9176 = vunpack.c.l.b16 %v8699
        %v9177 = vunpack.c.l.b16 %v8700
        %v9178 = vunpack.c.l.b16 %v8701
        %v9179 = vunpack.c.l.b16 %v8702
        %v9180 = vunpack.c.l.b16 %v8703
        %v9181 = vunpack.c.l.b16 %v8704
        %v9182 = vunpack.c.l.b16 %v8705
        %v9183 = vunpack.c.l.b16 %v8706
        %v9184 = vunpack.c.l.b16 %v8707
        %v9185 = vpack.c.b16 %v9122, %v9121
        %v9186 = vpack.c.b16 %v9124, %v9123
        %v9187 = vpack.c.b16 %v9126, %v9125
        %v9188 = vpack.c.b16 %v9128, %v9127
        %v9189 = vpack.c.b16 %v9130, %v9129
        %v9190 = vpack.c.b16 %v9132, %v9131
        %v9191 = vpack.c.b16 %v9134, %v9133
        %v9192 = vpack.c.b16 %v9136, %v9135
        %v9193 = vpack.c.b16 %v9138, %v9137
        %v9194 = vpack.c.b16 %v9140, %v9139
        %v9195 = vpack.c.b16 %v9142, %v9141
        %v9196 = vpack.c.b16 %v9144, %v9143
        %v9197 = vpack.c.b16 %v9146, %v9145
        %v9198 = vpack.c.b16 %v9148, %v9147
        %v9199 = vpack.c.b16 %v9150, %v9149
        %v9200 = vpack.c.b16 %v9152, %v9151
        %v9201 = vpack.c.b16 %v9154, %v9153
        %v9202 = vpack.c.b16 %v9156, %v9155
        %v9203 = vpack.c.b16 %v9158, %v9157
        %v9204 = vpack.c.b16 %v9160, %v9159
        %v9205 = vpack.c.b16 %v9162, %v9161
        %v9206 = vpack.c.b16 %v9164, %v9163
        %v9207 = vpack.c.b16 %v9166, %v9165
        %v9208 = vpack.c.b16 %v9168, %v9167
        %v9209 = vpack.c.b16 %v9170, %v9169
        %v9210 = vpack.c.b16 %v9172, %v9171
        %v9211 = vpack.c.b16 %v9174, %v9173
        %v9212 = vpack.c.b16 %v9176, %v9175
        %v9213 = vpack.c.b16 %v9178, %v9177
        %v9214 = vpack.c.b16 %v9180, %v9179
        %v9215 = vpack.c.b16 %v9182, %v9181
        %v9216 = vpack.c.b16 %v9184, %v9183
        %9249 = vmatprep.subr.bf16.mxu0 0
        %9250 = vmatpush1.bf16.msra.mxu0 %v9185
        %9251 = vmatprep.subr.bf16.mxu0 0
        %9252 = vmatpush1.bf16.msra.mxu0 %v9186
        %9253 = vmatprep.subr.bf16.mxu0 0
        %9254 = vmatpush1.bf16.msra.mxu0 %v9187
        %9255 = vmatprep.subr.bf16.mxu0 0
        %9256 = vmatpush1.bf16.msra.mxu0 %v9188
        %9257 = vmatprep.subr.bf16.mxu0 0
        %9258 = vmatpush1.bf16.msra.mxu0 %v9189
        %9259 = vmatprep.subr.bf16.mxu0 0
        %9260 = vmatpush1.bf16.msra.mxu0 %v9190
        %9261 = vmatprep.subr.bf16.mxu0 0
        %9262 = vmatpush1.bf16.msra.mxu0 %v9191
        %9263 = vmatprep.subr.bf16.mxu0 0
        %9264 = vmatpush1.bf16.msra.mxu0 %v9192
        %9265 = vmatprep.subr.bf16.mxu0 0
        %9266 = vmatpush1.bf16.msra.mxu0 %v9193
        %9267 = vmatprep.subr.bf16.mxu0 0
        %9268 = vmatpush1.bf16.msra.mxu0 %v9194
        %9269 = vmatprep.subr.bf16.mxu0 0
        %9270 = vmatpush1.bf16.msra.mxu0 %v9195
        %9271 = vmatprep.subr.bf16.mxu0 0
        %9272 = vmatpush1.bf16.msra.mxu0 %v9196
        %9273 = vmatprep.subr.bf16.mxu0 0
        %9274 = vmatpush1.bf16.msra.mxu0 %v9197
        %9275 = vmatprep.subr.bf16.mxu0 0
        %9276 = vmatpush1.bf16.msra.mxu0 %v9198
        %9277 = vmatprep.subr.bf16.mxu0 0
        %9278 = vmatpush1.bf16.msra.mxu0 %v9199
        %9279 = vmatprep.subr.bf16.mxu0 0
        %9280 = vmatpush1.bf16.msra.mxu0 %v9200
        %9281 = vmatprep.mubr.bf16.mxu0 %v8641
        %9282 = vmatmul.mubr.bf16.gmra.mrb[0].mxu0 %v8640
        %v9283 = vpop.f32.mrb[0].mxu0
        %v9284 = vadd.f32 %v9052, %v9283
        %v9285 = vpop.f32.mrb[0].mxu0
        %v9286 = vpop.f32.mrb[0].mxu0
        %v9287 = vpop.f32.mrb[0].mxu0
        %9288 = vdwg.mxu0
        %9289 = vmatprep.subr.bf16.mxu0 0
        %9290 = vmatpush1.bf16.msra.mxu0 %v9201
        %9291 = vmatprep.subr.bf16.mxu0 0
        %9292 = vmatpush1.bf16.msra.mxu0 %v9202
        %9293 = vmatprep.subr.bf16.mxu0 0
        %9294 = vmatpush1.bf16.msra.mxu0 %v9203
        %9295 = vmatprep.subr.bf16.mxu0 0
        %9296 = vmatpush1.bf16.msra.mxu0 %v9204
        %9297 = vmatprep.subr.bf16.mxu0 0
        %9298 = vmatpush1.bf16.msra.mxu0 %v9205
        %9299 = vmatprep.subr.bf16.mxu0 0
        %9300 = vmatpush1.bf16.msra.mxu0 %v9206
        %9301 = vmatprep.subr.bf16.mxu0 0
        %9302 = vmatpush1.bf16.msra.mxu0 %v9207
        %9303 = vmatprep.subr.bf16.mxu0 0
        %9304 = vmatpush1.bf16.msra.mxu0 %v9208
        %9305 = vmatprep.subr.bf16.mxu0 0
        %9306 = vmatpush1.bf16.msra.mxu0 %v9209
        %9307 = vmatprep.subr.bf16.mxu0 0
        %9308 = vmatpush1.bf16.msra.mxu0 %v9210
        %9309 = vmatprep.subr.bf16.mxu0 0
        %9310 = vmatpush1.bf16.msra.mxu0 %v9211
        %9311 = vmatprep.subr.bf16.mxu0 0
        %9312 = vmatpush1.bf16.msra.mxu0 %v9212
        %9313 = vmatprep.subr.bf16.mxu0 0
        %9314 = vmatpush1.bf16.msra.mxu0 %v9213
        %9315 = vmatprep.subr.bf16.mxu0 0
        %9316 = vmatpush1.bf16.msra.mxu0 %v9214
        %9317 = vmatprep.subr.bf16.mxu0 0
        %9318 = vmatpush1.bf16.msra.mxu0 %v9215
        %9319 = vmatprep.subr.bf16.mxu0 0
        %9320 = vmatpush1.bf16.msra.mxu0 %v9216
        %9321 = vmatprep.mubr.bf16.mxu0 %v8643
        %9322 = vmatmul.mubr.bf16.gmra.mrb[0].mxu0 %v8642
        %v9323 = vpop.f32.mrb[0].mxu0
        %v9324 = vadd.f32 %v9284, %v9323
        %v9325 = vpop.f32.mrb[0].mxu0
        %v9326 = vpop.f32.mrb[0].mxu0
        %v9327 = vpop.f32.mrb[0].mxu0
        %9328 = vdwg.mxu0
        %v9329 = vld [vmem:[%s15] sm:$0x1]
        %v9331 = vlaneseq
        %v9332 = vshrl.u32 %v9331, 7
        %v9333 = vsub.s32 0, %v9332
        %v9334 = vrot.slane %v9329, %v9333
        %v9336 = vadd.f32 %v9324, %v9334
        %v9337 = vmax.f32 %v9336, 0.0
        %v9338 = vpack.c.bf16 %v9337, %v9337
        %v9339 = vld [vmem:[%s16] sm:$0xf]
        %v9340 = vld [vmem:[%s16 + $0x4] sm:$0xf]
        %v9341 = vld [vmem:[%s16 + $0x8] sm:$0xf]
        %v9342 = vld [vmem:[%s16 + $0xc] sm:$0xf]
        %v9343 = vld [vmem:[%s16 + $0x10] sm:$0xf]
        %v9344 = vld [vmem:[%s16 + $0x14] sm:$0xf]
        %v9345 = vld [vmem:[%s16 + $0x18] sm:$0xf]
        %v9346 = vld [vmem:[%s16 + $0x1c] sm:$0xf]
        %v9347 = vld [vmem:[%s16 + $0x20] sm:$0xf]
        %v9348 = vld [vmem:[%s16 + $0x24] sm:$0xf]
        %v9349 = vld [vmem:[%s16 + $0x28] sm:$0xf]
        %v9350 = vld [vmem:[%s16 + $0x2c] sm:$0xf]
        %v9351 = vld [vmem:[%s16 + $0x30] sm:$0xf]
        %v9352 = vld [vmem:[%s16 + $0x34] sm:$0xf]
        %v9353 = vld [vmem:[%s16 + $0x38] sm:$0xf]
        %v9354 = vld [vmem:[%s16 + $0x3c] sm:$0xf]
        %v9355 = vld [vmem:[%s17] sm:$0x1]
        %v9357 = vlaneseq
        %v9358 = vshrl.u32 %v9357, 7
        %v9359 = vsub.s32 0, %v9358
        %v9360 = vrot.slane %v9355, %v9359
        %v9378 = vunpack.c.l.b16 %v9339
        %v9379 = vunpack.c.l.b16 %v9340
        %v9380 = vunpack.c.l.b16 %v9341
        %v9381 = vunpack.c.l.b16 %v9342
        %v9382 = vunpack.c.l.b16 %v9343
        %v9383 = vunpack.c.l.b16 %v9344
        %v9384 = vunpack.c.l.b16 %v9345
        %v9385 = vunpack.c.l.b16 %v9346
        %v9386 = vunpack.c.l.b16 %v9347
        %v9387 = vunpack.c.l.b16 %v9348
        %v9388 = vunpack.c.l.b16 %v9349
        %v9389 = vunpack.c.l.b16 %v9350
        %v9390 = vunpack.c.l.b16 %v9351
        %v9391 = vunpack.c.l.b16 %v9352
        %v9392 = vunpack.c.l.b16 %v9353
        %v9393 = vunpack.c.l.b16 %v9354
        %v9394 = vpack.c.b16 %v9379, %v9378
        %v9395 = vpack.c.b16 %v9381, %v9380
        %v9396 = vpack.c.b16 %v9383, %v9382
        %v9397 = vpack.c.b16 %v9385, %v9384
        %v9398 = vpack.c.b16 %v9387, %v9386
        %v9399 = vpack.c.b16 %v9389, %v9388
        %v9400 = vpack.c.b16 %v9391, %v9390
        %v9401 = vpack.c.b16 %v9393, %v9392
        %9410 = vmatprep.subr.bf16.mxu0 0
        %9411 = vmatpush1.bf16.msra.mxu0 %v9394
        %9412 = vmatprep.subr.bf16.mxu0 0
        %9413 = vmatpush1.bf16.msra.mxu0 %v9395
        %9414 = vmatprep.subr.bf16.mxu0 0
        %9415 = vmatpush1.bf16.msra.mxu0 %v9396
        %9416 = vmatprep.subr.bf16.mxu0 0
        %9417 = vmatpush1.bf16.msra.mxu0 %v9397
        %9418 = vmatprep.subr.bf16.mxu0 0
        %9419 = vmatpush1.bf16.msra.mxu0 %v9398
        %9420 = vmatprep.subr.bf16.mxu0 0
        %9421 = vmatpush1.bf16.msra.mxu0 %v9399
        %9422 = vmatprep.subr.bf16.mxu0 0
        %9423 = vmatpush1.bf16.msra.mxu0 %v9400
        %9424 = vmatprep.subr.bf16.mxu0 0
        %9425 = vmatpush1.bf16.msra.mxu0 %v9401
        %9426 = vmatprep.subr.bf16.mxu0 0
        %9427 = vmatpush1.bf16.msra.mxu0 0
        %9428 = vmatprep.subr.bf16.mxu0 0
        %9429 = vmatpush1.bf16.msra.mxu0 0
        %9430 = vmatprep.subr.bf16.mxu0 0
        %9431 = vmatpush1.bf16.msra.mxu0 0
        %9432 = vmatprep.subr.bf16.mxu0 0
        %9433 = vmatpush1.bf16.msra.mxu0 0
        %9434 = vmatprep.subr.bf16.mxu0 0
        %9435 = vmatpush1.bf16.msra.mxu0 0
        %9436 = vmatprep.subr.bf16.mxu0 0
        %9437 = vmatpush1.bf16.msra.mxu0 0
        %9438 = vmatprep.subr.bf16.mxu0 0
        %9439 = vmatpush1.bf16.msra.mxu0 0
        %9440 = vmatprep.subr.bf16.mxu0 0
        %9441 = vmatpush1.bf16.msra.mxu0 0
        %9442 = vmatprep.mubr.bf16.mxu0 0
        %9443 = vmatmul.mubr.bf16.gmra.mrb[0].mxu0 %v9338
        %v9444 = vpop.f32.mrb[0].mxu0
        %v9445 = vadd.f32 %v9360, %v9444
        %v9446 = vpop.f32.mrb[0].mxu0
        %v9447 = vpop.f32.mrb[0].mxu0
        %v9448 = vpop.f32.mrb[0].mxu0
        %9449 = vdwg.mxu0
        %v9450 = vmax.f32 %v9445, 0.0
        %9452 = vrot.lane.b32.xlu0 %v6437, 64
        %v9453 = vpop.permute.xlu0 %9452
        %vm9455 = vcmask 523264
        %v9456 = vsel %vm9455, %v6436, %v9453
        %v9457 = vpack.c.bf16 %v9456, %v9456
        %v9458 = vpack.c.bf16 %v9450, %v9450
        %v9459 = vld [vmem:[#allocation11] sm:$0xff]
        %v9460 = vld [vmem:[#allocation11 + $0x8] sm:$0xff]
        %v9461 = vld [vmem:[#allocation11 + $0x10] sm:$0xff]
        %v9462 = vld [vmem:[#allocation11 + $0x18] sm:$0xff]
        %v9463 = vld [vmem:[#allocation11 + $0x20] sm:$0xff]
        %v9464 = vld [vmem:[#allocation11 + $0x28] sm:$0xff]
        %v9465 = vld [vmem:[#allocation11 + $0x30] sm:$0xff]
        %v9466 = vld [vmem:[#allocation11 + $0x38] sm:$0xff]
        %v9467 = vld [vmem:[#allocation11 + $0x40] sm:$0xff]
        %v9468 = vld [vmem:[#allocation11 + $0x48] sm:$0xff]
        %v9469 = vld [vmem:[#allocation11 + $0x50] sm:$0xff]
        %v9470 = vld [vmem:[#allocation11 + $0x58] sm:$0xff]
        %v9471 = vld [vmem:[#allocation11 + $0x60] sm:$0xff]
        %v9472 = vld [vmem:[#allocation11 + $0x68] sm:$0xff]
        %v9473 = vld [vmem:[#allocation11 + $0x70] sm:$0xff]
        %v9474 = vld [vmem:[#allocation11 + $0x78] sm:$0xff]
        %v9475 = vld [vmem:[#allocation11 + $0x80] sm:$0xff]
        %v9476 = vld [vmem:[#allocation11 + $0x88] sm:$0xff]
        %v9477 = vld [vmem:[#allocation11 + $0x90] sm:$0xff]
        %v9478 = vld [vmem:[#allocation11 + $0x98] sm:$0xff]
        %v9479 = vld [vmem:[#allocation11 + $0xa0] sm:$0xff]
        %v9480 = vld [vmem:[#allocation11 + $0xa8] sm:$0xff]
        %v9481 = vld [vmem:[#allocation11 + $0xb0] sm:$0xff]
        %v9482 = vld [vmem:[#allocation11 + $0xb8] sm:$0xff]
        %v9483 = vld [vmem:[#allocation11 + $0xc0] sm:$0xff]
        %v9484 = vld [vmem:[#allocation11 + $0xc8] sm:$0xff]
        %v9485 = vld [vmem:[#allocation11 + $0xd0] sm:$0xff]
        %v9486 = vld [vmem:[#allocation11 + $0xd8] sm:$0xff]
        %v9487 = vld [vmem:[#allocation11 + $0xe0] sm:$0xff]
        %v9488 = vld [vmem:[#allocation11 + $0xe8] sm:$0xff]
        %v9489 = vld [vmem:[#allocation11 + $0xf0] sm:$0xff]
        %v9490 = vld [vmem:[#allocation11 + $0xf8] sm:$0xff]
        %v9491 = vld [vmem:[#allocation11 + $0x100] sm:$0xff]
        %v9492 = vld [vmem:[#allocation11 + $0x108] sm:$0xff]
        %v9493 = vld [vmem:[#allocation11 + $0x110] sm:$0xff]
        %v9494 = vld [vmem:[#allocation11 + $0x118] sm:$0xff]
        %v9495 = vld [vmem:[#allocation11 + $0x120] sm:$0xff]
        %v9496 = vld [vmem:[#allocation11 + $0x128] sm:$0xff]
        %v9497 = vld [vmem:[#allocation11 + $0x130] sm:$0xff]
        %v9498 = vld [vmem:[#allocation11 + $0x138] sm:$0xff]
        %v9499 = vld [vmem:[#allocation11 + $0x140] sm:$0xff]
        %v9500 = vld [vmem:[#allocation11 + $0x148] sm:$0xff]
        %v9501 = vld [vmem:[#allocation11 + $0x150] sm:$0xff]
        %v9502 = vld [vmem:[#allocation11 + $0x158] sm:$0xff]
        %v9503 = vld [vmem:[#allocation11 + $0x160] sm:$0xff]
        %v9504 = vld [vmem:[#allocation11 + $0x168] sm:$0xff]
        %v9505 = vld [vmem:[#allocation11 + $0x170] sm:$0xff]
        %v9506 = vld [vmem:[#allocation11 + $0x178] sm:$0xff]
        %v9507 = vld [vmem:[#allocation11 + $0x180] sm:$0xff]
        %v9508 = vld [vmem:[#allocation11 + $0x188] sm:$0xff]
        %v9509 = vld [vmem:[#allocation11 + $0x190] sm:$0xff]
        %v9510 = vld [vmem:[#allocation11 + $0x198] sm:$0xff]
        %v9511 = vld [vmem:[#allocation11 + $0x1a0] sm:$0xff]
        %v9512 = vld [vmem:[#allocation11 + $0x1a8] sm:$0xff]
        %v9513 = vld [vmem:[#allocation11 + $0x1b0] sm:$0xff]
        %v9514 = vld [vmem:[#allocation11 + $0x1b8] sm:$0xff]
        %v9515 = vld [vmem:[#allocation11 + $0x1c0] sm:$0xff]
        %v9516 = vld [vmem:[#allocation11 + $0x1c8] sm:$0xff]
        %v9517 = vld [vmem:[#allocation11 + $0x1d0] sm:$0xff]
        %v9518 = vld [vmem:[#allocation11 + $0x1d8] sm:$0xff]
        %v9519 = vld [vmem:[#allocation11 + $0x1e0] sm:$0xff]
        %v9520 = vld [vmem:[#allocation11 + $0x1e8] sm:$0xff]
        %v9521 = vld [vmem:[#allocation11 + $0x1f0] sm:$0xff]
        %v9522 = vld [vmem:[#allocation11 + $0x1f8] sm:$0xff]
        %v9523 = vld [vmem:[#allocation11 + $0x200] sm:$0xff]
        %v9524 = vld [vmem:[#allocation11 + $0x208] sm:$0xff]
        %v9525 = vld [vmem:[#allocation11 + $0x210] sm:$0xff]
        %v9526 = vld [vmem:[#allocation11 + $0x218] sm:$0xff]
        %v9527 = vld [vmem:[#allocation11 + $0x220] sm:$0xff]
        %v9528 = vld [vmem:[#allocation11 + $0x228] sm:$0xff]
        %v9529 = vld [vmem:[#allocation11 + $0x230] sm:$0xff]
        %v9530 = vld [vmem:[#allocation11 + $0x238] sm:$0xff]
        %v9531 = vld [vmem:[#allocation11 + $0x240] sm:$0xff]
        %v9532 = vld [vmem:[#allocation11 + $0x248] sm:$0xff]
        %v9533 = vld [vmem:[#allocation11 + $0x250] sm:$0xff]
        %v9534 = vld [vmem:[#allocation11 + $0x258] sm:$0xff]
        %v9535 = vld [vmem:[#allocation11 + $0x260] sm:$0xff]
        %v9536 = vld [vmem:[#allocation11 + $0x268] sm:$0xff]
        %v9537 = vld [vmem:[#allocation11 + $0x270] sm:$0xff]
        %v9538 = vld [vmem:[#allocation11 + $0x278] sm:$0xff]
        %v9539 = vld [vmem:[#allocation11 + $0x280] sm:$0xff]
        %v9540 = vld [vmem:[#allocation11 + $0x288] sm:$0xff]
        %v9541 = vld [vmem:[#allocation11 + $0x290] sm:$0xff]
        %v9542 = vld [vmem:[#allocation11 + $0x298] sm:$0xff]
        %v9543 = vld [vmem:[#allocation11 + $0x2a0] sm:$0xff]
        %v9544 = vld [vmem:[#allocation11 + $0x2a8] sm:$0xff]
        %v9545 = vld [vmem:[#allocation11 + $0x2b0] sm:$0xff]
        %v9546 = vld [vmem:[#allocation11 + $0x2b8] sm:$0xff]
        %v9547 = vld [vmem:[#allocation11 + $0x2c0] sm:$0xff]
        %v9548 = vld [vmem:[#allocation11 + $0x2c8] sm:$0xff]
        %v9549 = vld [vmem:[#allocation11 + $0x2d0] sm:$0xff]
        %v9550 = vld [vmem:[#allocation11 + $0x2d8] sm:$0xff]
        %v9551 = vld [vmem:[#allocation11 + $0x2e0] sm:$0xff]
        %v9552 = vld [vmem:[#allocation11 + $0x2e8] sm:$0xff]
        %v9553 = vld [vmem:[#allocation11 + $0x2f0] sm:$0xff]
        %v9554 = vld [vmem:[#allocation11 + $0x2f8] sm:$0xff]
        %v9555 = vld [vmem:[%s19] sm:$0xff]
        %v9557 = vlaneseq
        %v9558 = vshrl.u32 %v9557, 7
        %v9559 = vsub.s32 0, %v9558
        %v9560 = vrot.slane %v9555, %v9559
        %v9561 = vlaneseq
        %v9562 = vshrl.u32 %v9561, 7
        %v9563 = vsub.s32 1, %v9562
        %v9564 = vrot.slane %v9555, %v9563
        %v9565 = vlaneseq
        %v9566 = vshrl.u32 %v9565, 7
        %v9567 = vsub.s32 2, %v9566
        %v9568 = vrot.slane %v9555, %v9567
        %v9569 = vlaneseq
        %v9570 = vshrl.u32 %v9569, 7
        %v9571 = vsub.s32 3, %v9570
        %v9572 = vrot.slane %v9555, %v9571
        %v9573 = vlaneseq
        %v9574 = vshrl.u32 %v9573, 7
        %v9575 = vsub.s32 4, %v9574
        %v9576 = vrot.slane %v9555, %v9575
        %v9577 = vlaneseq
        %v9578 = vshrl.u32 %v9577, 7
        %v9579 = vsub.s32 5, %v9578
        %v9580 = vrot.slane %v9555, %v9579
        %v9581 = vlaneseq
        %v9582 = vshrl.u32 %v9581, 7
        %v9583 = vsub.s32 6, %v9582
        %v9584 = vrot.slane %v9555, %v9583
        %v9585 = vlaneseq
        %v9586 = vshrl.u32 %v9585, 7
        %v9587 = vsub.s32 7, %v9586
        %v9588 = vrot.slane %v9555, %v9587
        %v9693 = vunpack.c.l.b16 %v9459
        %v9694 = vunpack.c.h.b16 %v9459
        %v9695 = vunpack.c.l.b16 %v9460
        %v9696 = vunpack.c.h.b16 %v9460
        %v9697 = vunpack.c.l.b16 %v9461
        %v9698 = vunpack.c.h.b16 %v9461
        %v9699 = vunpack.c.l.b16 %v9462
        %v9700 = vunpack.c.h.b16 %v9462
        %v9701 = vunpack.c.l.b16 %v9463
        %v9702 = vunpack.c.h.b16 %v9463
        %v9703 = vunpack.c.l.b16 %v9464
        %v9704 = vunpack.c.h.b16 %v9464
        %v9705 = vunpack.c.l.b16 %v9465
        %v9706 = vunpack.c.h.b16 %v9465
        %v9707 = vunpack.c.l.b16 %v9466
        %v9708 = vunpack.c.h.b16 %v9466
        %v9709 = vunpack.c.l.b16 %v9467
        %v9710 = vunpack.c.h.b16 %v9467
        %v9711 = vunpack.c.l.b16 %v9468
        %v9712 = vunpack.c.h.b16 %v9468
        %v9713 = vunpack.c.l.b16 %v9469
        %v9714 = vunpack.c.h.b16 %v9469
        %v9715 = vunpack.c.l.b16 %v9470
        %v9716 = vunpack.c.h.b16 %v9470
        %v9717 = vunpack.c.l.b16 %v9471
        %v9718 = vunpack.c.h.b16 %v9471
        %v9719 = vunpack.c.l.b16 %v9472
        %v9720 = vunpack.c.h.b16 %v9472
        %v9721 = vunpack.c.l.b16 %v9473
        %v9722 = vunpack.c.h.b16 %v9473
        %v9723 = vunpack.c.l.b16 %v9474
        %v9724 = vunpack.c.h.b16 %v9474
        %v9725 = vunpack.c.l.b16 %v9475
        %v9726 = vunpack.c.h.b16 %v9475
        %v9727 = vunpack.c.l.b16 %v9476
        %v9728 = vunpack.c.h.b16 %v9476
        %v9729 = vunpack.c.l.b16 %v9477
        %v9730 = vunpack.c.h.b16 %v9477
        %v9731 = vunpack.c.l.b16 %v9478
        %v9732 = vunpack.c.h.b16 %v9478
        %v9733 = vunpack.c.l.b16 %v9479
        %v9734 = vunpack.c.h.b16 %v9479
        %v9735 = vunpack.c.l.b16 %v9480
        %v9736 = vunpack.c.h.b16 %v9480
        %v9737 = vunpack.c.l.b16 %v9481
        %v9738 = vunpack.c.h.b16 %v9481
        %v9739 = vunpack.c.l.b16 %v9482
        %v9740 = vunpack.c.h.b16 %v9482
        %v9741 = vunpack.c.l.b16 %v9483
        %v9742 = vunpack.c.h.b16 %v9483
        %v9743 = vunpack.c.l.b16 %v9484
        %v9744 = vunpack.c.h.b16 %v9484
        %v9745 = vunpack.c.l.b16 %v9485
        %v9746 = vunpack.c.h.b16 %v9485
        %v9747 = vunpack.c.l.b16 %v9486
        %v9748 = vunpack.c.h.b16 %v9486
        %v9749 = vunpack.c.l.b16 %v9487
        %v9750 = vunpack.c.h.b16 %v9487
        %v9751 = vunpack.c.l.b16 %v9488
        %v9752 = vunpack.c.h.b16 %v9488
        %v9753 = vunpack.c.l.b16 %v9489
        %v9754 = vunpack.c.h.b16 %v9489
        %v9755 = vunpack.c.l.b16 %v9490
        %v9756 = vunpack.c.h.b16 %v9490
        %v9757 = vunpack.c.l.b16 %v9491
        %v9758 = vunpack.c.h.b16 %v9491
        %v9759 = vunpack.c.l.b16 %v9492
        %v9760 = vunpack.c.h.b16 %v9492
        %v9761 = vunpack.c.l.b16 %v9493
        %v9762 = vunpack.c.h.b16 %v9493
        %v9763 = vunpack.c.l.b16 %v9494
        %v9764 = vunpack.c.h.b16 %v9494
        %v9765 = vunpack.c.l.b16 %v9495
        %v9766 = vunpack.c.h.b16 %v9495
        %v9767 = vunpack.c.l.b16 %v9496
        %v9768 = vunpack.c.h.b16 %v9496
        %v9769 = vunpack.c.l.b16 %v9497
        %v9770 = vunpack.c.h.b16 %v9497
        %v9771 = vunpack.c.l.b16 %v9498
        %v9772 = vunpack.c.h.b16 %v9498
        %v9773 = vunpack.c.l.b16 %v9499
        %v9774 = vunpack.c.h.b16 %v9499
        %v9775 = vunpack.c.l.b16 %v9500
        %v9776 = vunpack.c.h.b16 %v9500
        %v9777 = vunpack.c.l.b16 %v9501
        %v9778 = vunpack.c.h.b16 %v9501
        %v9779 = vunpack.c.l.b16 %v9502
        %v9780 = vunpack.c.h.b16 %v9502
        %v9781 = vunpack.c.l.b16 %v9503
        %v9782 = vunpack.c.h.b16 %v9503
        %v9783 = vunpack.c.l.b16 %v9504
        %v9784 = vunpack.c.h.b16 %v9504
        %v9785 = vunpack.c.l.b16 %v9505
        %v9786 = vunpack.c.h.b16 %v9505
        %v9787 = vunpack.c.l.b16 %v9506
        %v9788 = vunpack.c.h.b16 %v9506
        %v9789 = vunpack.c.l.b16 %v9507
        %v9790 = vunpack.c.h.b16 %v9507
        %v9791 = vunpack.c.l.b16 %v9508
        %v9792 = vunpack.c.h.b16 %v9508
        %v9793 = vunpack.c.l.b16 %v9509
        %v9794 = vunpack.c.h.b16 %v9509
        %v9795 = vunpack.c.l.b16 %v9510
        %v9796 = vunpack.c.h.b16 %v9510
        %v9797 = vunpack.c.l.b16 %v9511
        %v9798 = vunpack.c.h.b16 %v9511
        %v9799 = vunpack.c.l.b16 %v9512
        %v9800 = vunpack.c.h.b16 %v9512
        %v9801 = vunpack.c.l.b16 %v9513
        %v9802 = vunpack.c.h.b16 %v9513
        %v9803 = vunpack.c.l.b16 %v9514
        %v9804 = vunpack.c.h.b16 %v9514
        %v9805 = vunpack.c.l.b16 %v9515
        %v9806 = vunpack.c.h.b16 %v9515
        %v9807 = vunpack.c.l.b16 %v9516
        %v9808 = vunpack.c.h.b16 %v9516
        %v9809 = vunpack.c.l.b16 %v9517
        %v9810 = vunpack.c.h.b16 %v9517
        %v9811 = vunpack.c.l.b16 %v9518
        %v9812 = vunpack.c.h.b16 %v9518
        %v9813 = vunpack.c.l.b16 %v9519
        %v9814 = vunpack.c.h.b16 %v9519
        %v9815 = vunpack.c.l.b16 %v9520
        %v9816 = vunpack.c.h.b16 %v9520
        %v9817 = vunpack.c.l.b16 %v9521
        %v9818 = vunpack.c.h.b16 %v9521
        %v9819 = vunpack.c.l.b16 %v9522
        %v9820 = vunpack.c.h.b16 %v9522
        %v9821 = vunpack.c.l.b16 %v9523
        %v9822 = vunpack.c.h.b16 %v9523
        %v9823 = vunpack.c.l.b16 %v9524
        %v9824 = vunpack.c.h.b16 %v9524
        %v9825 = vunpack.c.l.b16 %v9525
        %v9826 = vunpack.c.h.b16 %v9525
        %v9827 = vunpack.c.l.b16 %v9526
        %v9828 = vunpack.c.h.b16 %v9526
        %v9829 = vunpack.c.l.b16 %v9527
        %v9830 = vunpack.c.h.b16 %v9527
        %v9831 = vunpack.c.l.b16 %v9528
        %v9832 = vunpack.c.h.b16 %v9528
        %v9833 = vunpack.c.l.b16 %v9529
        %v9834 = vunpack.c.h.b16 %v9529
        %v9835 = vunpack.c.l.b16 %v9530
        %v9836 = vunpack.c.h.b16 %v9530
        %v9837 = vunpack.c.l.b16 %v9531
        %v9838 = vunpack.c.h.b16 %v9531
        %v9839 = vunpack.c.l.b16 %v9532
        %v9840 = vunpack.c.h.b16 %v9532
        %v9841 = vunpack.c.l.b16 %v9533
        %v9842 = vunpack.c.h.b16 %v9533
        %v9843 = vunpack.c.l.b16 %v9534
        %v9844 = vunpack.c.h.b16 %v9534
        %v9845 = vunpack.c.l.b16 %v9535
        %v9846 = vunpack.c.h.b16 %v9535
        %v9847 = vunpack.c.l.b16 %v9536
        %v9848 = vunpack.c.h.b16 %v9536
        %v9849 = vunpack.c.l.b16 %v9537
        %v9850 = vunpack.c.h.b16 %v9537
        %v9851 = vunpack.c.l.b16 %v9538
        %v9852 = vunpack.c.h.b16 %v9538
        %v9853 = vunpack.c.l.b16 %v9539
        %v9854 = vunpack.c.h.b16 %v9539
        %v9855 = vunpack.c.l.b16 %v9540
        %v9856 = vunpack.c.h.b16 %v9540
        %v9857 = vunpack.c.l.b16 %v9541
        %v9858 = vunpack.c.h.b16 %v9541
        %v9859 = vunpack.c.l.b16 %v9542
        %v9860 = vunpack.c.h.b16 %v9542
        %v9861 = vunpack.c.l.b16 %v9543
        %v9862 = vunpack.c.h.b16 %v9543
        %v9863 = vunpack.c.l.b16 %v9544
        %v9864 = vunpack.c.h.b16 %v9544
        %v9865 = vunpack.c.l.b16 %v9545
        %v9866 = vunpack.c.h.b16 %v9545
        %v9867 = vunpack.c.l.b16 %v9546
        %v9868 = vunpack.c.h.b16 %v9546
        %v9869 = vunpack.c.l.b16 %v9547
        %v9870 = vunpack.c.h.b16 %v9547
        %v9871 = vunpack.c.l.b16 %v9548
        %v9872 = vunpack.c.h.b16 %v9548
        %v9873 = vunpack.c.l.b16 %v9549
        %v9874 = vunpack.c.h.b16 %v9549
        %v9875 = vunpack.c.l.b16 %v9550
        %v9876 = vunpack.c.h.b16 %v9550
        %v9877 = vunpack.c.l.b16 %v9551
        %v9878 = vunpack.c.h.b16 %v9551
        %v9879 = vunpack.c.l.b16 %v9552
        %v9880 = vunpack.c.h.b16 %v9552
        %v9881 = vunpack.c.l.b16 %v9553
        %v9882 = vunpack.c.h.b16 %v9553
        %v9883 = vunpack.c.l.b16 %v9554
        %v9884 = vunpack.c.h.b16 %v9554
        %v9885 = vpack.c.b16 %v9701, %v9693
        %v9886 = vpack.c.b16 %v9702, %v9694
        %v9887 = vpack.c.b16 %v9703, %v9695
        %v9888 = vpack.c.b16 %v9704, %v9696
        %v9889 = vpack.c.b16 %v9705, %v9697
        %v9890 = vpack.c.b16 %v9706, %v9698
        %v9891 = vpack.c.b16 %v9707, %v9699
        %v9892 = vpack.c.b16 %v9708, %v9700
        %v9893 = vpack.c.b16 %v9717, %v9709
        %v9894 = vpack.c.b16 %v9718, %v9710
        %v9895 = vpack.c.b16 %v9719, %v9711
        %v9896 = vpack.c.b16 %v9720, %v9712
        %v9897 = vpack.c.b16 %v9721, %v9713
        %v9898 = vpack.c.b16 %v9722, %v9714
        %v9899 = vpack.c.b16 %v9723, %v9715
        %v9900 = vpack.c.b16 %v9724, %v9716
        %v9901 = vpack.c.b16 %v9733, %v9725
        %v9902 = vpack.c.b16 %v9734, %v9726
        %v9903 = vpack.c.b16 %v9735, %v9727
        %v9904 = vpack.c.b16 %v9736, %v9728
        %v9905 = vpack.c.b16 %v9737, %v9729
        %v9906 = vpack.c.b16 %v9738, %v9730
        %v9907 = vpack.c.b16 %v9739, %v9731
        %v9908 = vpack.c.b16 %v9740, %v9732
        %v9909 = vpack.c.b16 %v9749, %v9741
        %v9910 = vpack.c.b16 %v9750, %v9742
        %v9911 = vpack.c.b16 %v9751, %v9743
        %v9912 = vpack.c.b16 %v9752, %v9744
        %v9913 = vpack.c.b16 %v9753, %v9745
        %v9914 = vpack.c.b16 %v9754, %v9746
        %v9915 = vpack.c.b16 %v9755, %v9747
        %v9916 = vpack.c.b16 %v9756, %v9748
        %v9917 = vpack.c.b16 %v9765, %v9757
        %v9918 = vpack.c.b16 %v9766, %v9758
        %v9919 = vpack.c.b16 %v9767, %v9759
        %v9920 = vpack.c.b16 %v9768, %v9760
        %v9921 = vpack.c.b16 %v9769, %v9761
        %v9922 = vpack.c.b16 %v9770, %v9762
        %v9923 = vpack.c.b16 %v9771, %v9763
        %v9924 = vpack.c.b16 %v9772, %v9764
        %v9925 = vpack.c.b16 %v9781, %v9773
        %v9926 = vpack.c.b16 %v9782, %v9774
        %v9927 = vpack.c.b16 %v9783, %v9775
        %v9928 = vpack.c.b16 %v9784, %v9776
        %v9929 = vpack.c.b16 %v9785, %v9777
        %v9930 = vpack.c.b16 %v9786, %v9778
        %v9931 = vpack.c.b16 %v9787, %v9779
        %v9932 = vpack.c.b16 %v9788, %v9780
        %v9933 = vpack.c.b16 %v9797, %v9789
        %v9934 = vpack.c.b16 %v9798, %v9790
        %v9935 = vpack.c.b16 %v9799, %v9791
        %v9936 = vpack.c.b16 %v9800, %v9792
        %v9937 = vpack.c.b16 %v9801, %v9793
        %v9938 = vpack.c.b16 %v9802, %v9794
        %v9939 = vpack.c.b16 %v9803, %v9795
        %v9940 = vpack.c.b16 %v9804, %v9796
        %v9941 = vpack.c.b16 %v9813, %v9805
        %v9942 = vpack.c.b16 %v9814, %v9806
        %v9943 = vpack.c.b16 %v9815, %v9807
        %v9944 = vpack.c.b16 %v9816, %v9808
        %v9945 = vpack.c.b16 %v9817, %v9809
        %v9946 = vpack.c.b16 %v9818, %v9810
        %v9947 = vpack.c.b16 %v9819, %v9811
        %v9948 = vpack.c.b16 %v9820, %v9812
        %v9949 = vpack.c.b16 %v9829, %v9821
        %v9950 = vpack.c.b16 %v9830, %v9822
        %v9951 = vpack.c.b16 %v9831, %v9823
        %v9952 = vpack.c.b16 %v9832, %v9824
        %v9953 = vpack.c.b16 %v9833, %v9825
        %v9954 = vpack.c.b16 %v9834, %v9826
        %v9955 = vpack.c.b16 %v9835, %v9827
        %v9956 = vpack.c.b16 %v9836, %v9828
        %v9957 = vpack.c.b16 %v9845, %v9837
        %v9958 = vpack.c.b16 %v9846, %v9838
        %v9959 = vpack.c.b16 %v9847, %v9839
        %v9960 = vpack.c.b16 %v9848, %v9840
        %v9961 = vpack.c.b16 %v9849, %v9841
        %v9962 = vpack.c.b16 %v9850, %v9842
        %v9963 = vpack.c.b16 %v9851, %v9843
        %v9964 = vpack.c.b16 %v9852, %v9844
        %v9965 = vpack.c.b16 %v9861, %v9853
        %v9966 = vpack.c.b16 %v9862, %v9854
        %v9967 = vpack.c.b16 %v9863, %v9855
        %v9968 = vpack.c.b16 %v9864, %v9856
        %v9969 = vpack.c.b16 %v9865, %v9857
        %v9970 = vpack.c.b16 %v9866, %v9858
        %v9971 = vpack.c.b16 %v9867, %v9859
        %v9972 = vpack.c.b16 %v9868, %v9860
        %v9973 = vpack.c.b16 %v9877, %v9869
        %v9974 = vpack.c.b16 %v9878, %v9870
        %v9975 = vpack.c.b16 %v9879, %v9871
        %v9976 = vpack.c.b16 %v9880, %v9872
        %v9977 = vpack.c.b16 %v9881, %v9873
        %v9978 = vpack.c.b16 %v9882, %v9874
        %v9979 = vpack.c.b16 %v9883, %v9875
        %v9980 = vpack.c.b16 %v9884, %v9876
        %v10078 = vsel %vm9455, %v9458, 0
        %10080 = vmatprep.subr.bf16.mxu0 %v9886
        %10081 = vmatpush1.bf16.msra.mxu0 %v9885
        %10082 = vmatprep.subr.bf16.mxu0 %v9894
        %10083 = vmatpush1.bf16.msra.mxu0 %v9893
        %10084 = vmatprep.subr.bf16.mxu0 %v9902
        %10085 = vmatpush1.bf16.msra.mxu0 %v9901
        %10086 = vmatprep.subr.bf16.mxu0 %v9910
        %10087 = vmatpush1.bf16.msra.mxu0 %v9909
        %10088 = vmatprep.subr.bf16.mxu0 %v9918
        %10089 = vmatpush1.bf16.msra.mxu0 %v9917
        %10090 = vmatprep.subr.bf16.mxu0 %v9926
        %10091 = vmatpush1.bf16.msra.mxu0 %v9925
        %10092 = vmatprep.subr.bf16.mxu0 %v9934
        %10093 = vmatpush1.bf16.msra.mxu0 %v9933
        %10094 = vmatprep.subr.bf16.mxu0 %v9942
        %10095 = vmatpush1.bf16.msra.mxu0 %v9941
        %10096 = vmatprep.subr.bf16.mxu0 %v9950
        %10097 = vmatpush1.bf16.msra.mxu0 %v9949
        %10098 = vmatprep.subr.bf16.mxu0 %v9958
        %10099 = vmatpush1.bf16.msra.mxu0 %v9957
        %10100 = vmatprep.subr.bf16.mxu0 %v9966
        %10101 = vmatpush1.bf16.msra.mxu0 %v9965
        %10102 = vmatprep.subr.bf16.mxu0 %v9974
        %10103 = vmatpush1.bf16.msra.mxu0 %v9973
        %10104 = vmatprep.subr.bf16.mxu0 0
        %10105 = vmatpush1.bf16.msra.mxu0 0
        %10106 = vmatprep.subr.bf16.mxu0 0
        %10107 = vmatpush1.bf16.msra.mxu0 0
        %10108 = vmatprep.subr.bf16.mxu0 0
        %10109 = vmatpush1.bf16.msra.mxu0 0
        %10110 = vmatprep.subr.bf16.mxu0 0
        %10111 = vmatpush1.bf16.msra.mxu0 0
        %10112 = vmatprep.mubr.bf16.mxu0 %v10078
        %10113 = vmatmul.mubr.bf16.gmra.mrb[0].mxu0 %v9457
        %v10114 = vpop.f32.mrb[0].mxu0
        %v10115 = vadd.f32 %v9560, %v10114
        %v10116 = vpop.f32.mrb[0].mxu0
        %v10117 = vadd.f32 %v9564, %v10116
        %v10118 = vpop.f32.mrb[0].mxu0
        %v10119 = vpop.f32.mrb[0].mxu0
        %10120 = vdwg.mxu0
        %10121 = vmatprep.subr.bf16.mxu0 %v9888
        %10122 = vmatpush1.bf16.msra.mxu0 %v9887
        %10123 = vmatprep.subr.bf16.mxu0 %v9896
        %10124 = vmatpush1.bf16.msra.mxu0 %v9895
        %10125 = vmatprep.subr.bf16.mxu0 %v9904
        %10126 = vmatpush1.bf16.msra.mxu0 %v9903
        %10127 = vmatprep.subr.bf16.mxu0 %v9912
        %10128 = vmatpush1.bf16.msra.mxu0 %v9911
        %10129 = vmatprep.subr.bf16.mxu0 %v9920
        %10130 = vmatpush1.bf16.msra.mxu0 %v9919
        %10131 = vmatprep.subr.bf16.mxu0 %v9928
        %10132 = vmatpush1.bf16.msra.mxu0 %v9927
        %10133 = vmatprep.subr.bf16.mxu0 %v9936
        %10134 = vmatpush1.bf16.msra.mxu0 %v9935
        %10135 = vmatprep.subr.bf16.mxu0 %v9944
        %10136 = vmatpush1.bf16.msra.mxu0 %v9943
        %10137 = vmatprep.subr.bf16.mxu0 %v9952
        %10138 = vmatpush1.bf16.msra.mxu0 %v9951
        %10139 = vmatprep.subr.bf16.mxu0 %v9960
        %10140 = vmatpush1.bf16.msra.mxu0 %v9959
        %10141 = vmatprep.subr.bf16.mxu0 %v9968
        %10142 = vmatpush1.bf16.msra.mxu0 %v9967
        %10143 = vmatprep.subr.bf16.mxu0 %v9976
        %10144 = vmatpush1.bf16.msra.mxu0 %v9975
        %10145 = vmatprep.subr.bf16.mxu0 0
        %10146 = vmatpush1.bf16.msra.mxu0 0
        %10147 = vmatprep.subr.bf16.mxu0 0
        %10148 = vmatpush1.bf16.msra.mxu0 0
        %10149 = vmatprep.subr.bf16.mxu0 0
        %10150 = vmatpush1.bf16.msra.mxu0 0
        %10151 = vmatprep.subr.bf16.mxu0 0
        %10152 = vmatpush1.bf16.msra.mxu0 0
        %10153 = vmatprep.mubr.bf16.mxu0 %v10078
        %10154 = vmatmul.mubr.bf16.gmra.mrb[0].mxu0 %v9457
        %v10155 = vpop.f32.mrb[0].mxu0
        %v10156 = vadd.f32 %v9568, %v10155
        %v10157 = vpop.f32.mrb[0].mxu0
        %v10158 = vadd.f32 %v9572, %v10157
        %v10159 = vpop.f32.mrb[0].mxu0
        %v10160 = vpop.f32.mrb[0].mxu0
        %10161 = vdwg.mxu0
        %10162 = vmatprep.subr.bf16.mxu0 %v9890
        %10163 = vmatpush1.bf16.msra.mxu0 %v9889
        %10164 = vmatprep.subr.bf16.mxu0 %v9898
        %10165 = vmatpush1.bf16.msra.mxu0 %v9897
        %10166 = vmatprep.subr.bf16.mxu0 %v9906
        %10167 = vmatpush1.bf16.msra.mxu0 %v9905
        %10168 = vmatprep.subr.bf16.mxu0 %v9914
        %10169 = vmatpush1.bf16.msra.mxu0 %v9913
        %10170 = vmatprep.subr.bf16.mxu0 %v9922
        %10171 = vmatpush1.bf16.msra.mxu0 %v9921
        %10172 = vmatprep.subr.bf16.mxu0 %v9930
        %10173 = vmatpush1.bf16.msra.mxu0 %v9929
        %10174 = vmatprep.subr.bf16.mxu0 %v9938
        %10175 = vmatpush1.bf16.msra.mxu0 %v9937
        %10176 = vmatprep.subr.bf16.mxu0 %v9946
        %10177 = vmatpush1.bf16.msra.mxu0 %v9945
        %10178 = vmatprep.subr.bf16.mxu0 %v9954
        %10179 = vmatpush1.bf16.msra.mxu0 %v9953
        %10180 = vmatprep.subr.bf16.mxu0 %v9962
        %10181 = vmatpush1.bf16.msra.mxu0 %v9961
        %10182 = vmatprep.subr.bf16.mxu0 %v9970
        %10183 = vmatpush1.bf16.msra.mxu0 %v9969
        %10184 = vmatprep.subr.bf16.mxu0 %v9978
        %10185 = vmatpush1.bf16.msra.mxu0 %v9977
        %10186 = vmatprep.subr.bf16.mxu0 0
        %10187 = vmatpush1.bf16.msra.mxu0 0
        %10188 = vmatprep.subr.bf16.mxu0 0
        %10189 = vmatpush1.bf16.msra.mxu0 0
        %10190 = vmatprep.subr.bf16.mxu0 0
        %10191 = vmatpush1.bf16.msra.mxu0 0
        %10192 = vmatprep.subr.bf16.mxu0 0
        %10193 = vmatpush1.bf16.msra.mxu0 0
        %10194 = vmatprep.mubr.bf16.mxu0 %v10078
        %10195 = vmatmul.mubr.bf16.gmra.mrb[0].mxu0 %v9457
        %v10196 = vpop.f32.mrb[0].mxu0
        %v10197 = vadd.f32 %v9576, %v10196
        %v10198 = vpop.f32.mrb[0].mxu0
        %v10199 = vadd.f32 %v9580, %v10198
        %v10200 = vpop.f32.mrb[0].mxu0
        %v10201 = vpop.f32.mrb[0].mxu0
        %10202 = vdwg.mxu0
        %10203 = vmatprep.subr.bf16.mxu0 %v9892
        %10204 = vmatpush1.bf16.msra.mxu0 %v9891
        %10205 = vmatprep.subr.bf16.mxu0 %v9900
        %10206 = vmatpush1.bf16.msra.mxu0 %v9899
        %10207 = vmatprep.subr.bf16.mxu0 %v9908
        %10208 = vmatpush1.bf16.msra.mxu0 %v9907
        %10209 = vmatprep.subr.bf16.mxu0 %v9916
        %10210 = vmatpush1.bf16.msra.mxu0 %v9915
        %10211 = vmatprep.subr.bf16.mxu0 %v9924
        %10212 = vmatpush1.bf16.msra.mxu0 %v9923
        %10213 = vmatprep.subr.bf16.mxu0 %v9932
        %10214 = vmatpush1.bf16.msra.mxu0 %v9931
        %10215 = vmatprep.subr.bf16.mxu0 %v9940
        %10216 = vmatpush1.bf16.msra.mxu0 %v9939
        %10217 = vmatprep.subr.bf16.mxu0 %v9948
        %10218 = vmatpush1.bf16.msra.mxu0 %v9947
        %10219 = vmatprep.subr.bf16.mxu0 %v9956
        %10220 = vmatpush1.bf16.msra.mxu0 %v9955
        %10221 = vmatprep.subr.bf16.mxu0 %v9964
        %10222 = vmatpush1.bf16.msra.mxu0 %v9963
        %10223 = vmatprep.subr.bf16.mxu0 %v9972
        %10224 = vmatpush1.bf16.msra.mxu0 %v9971
        %10225 = vmatprep.subr.bf16.mxu0 %v9980
        %10226 = vmatpush1.bf16.msra.mxu0 %v9979
        %10227 = vmatprep.subr.bf16.mxu0 0
        %10228 = vmatpush1.bf16.msra.mxu0 0
        %10229 = vmatprep.subr.bf16.mxu0 0
        %10230 = vmatpush1.bf16.msra.mxu0 0
        %10231 = vmatprep.subr.bf16.mxu0 0
        %10232 = vmatpush1.bf16.msra.mxu0 0
        %10233 = vmatprep.subr.bf16.mxu0 0
        %10234 = vmatpush1.bf16.msra.mxu0 0
        %10235 = vmatprep.mubr.bf16.mxu0 %v10078
        %10236 = vmatmul.mubr.bf16.gmra.mrb[0].mxu0 %v9457
        %v10237 = vpop.f32.mrb[0].mxu0
        %v10238 = vadd.f32 %v9584, %v10237
        %v10239 = vpop.f32.mrb[0].mxu0
        %v10240 = vadd.f32 %v9588, %v10239
        %v10241 = vpop.f32.mrb[0].mxu0
        %v10242 = vpop.f32.mrb[0].mxu0
        %10243 = vdwg.mxu0
        %v10244 = vmax.f32 %v10115, 0.0
        %v10245 = vmax.f32 %v10117, 0.0
        %v10246 = vmax.f32 %v10156, 0.0
        %v10247 = vmax.f32 %v10158, 0.0
        %v10248 = vmax.f32 %v10197, 0.0
        %v10249 = vmax.f32 %v10199, 0.0
        %v10250 = vmax.f32 %v10238, 0.0
        %v10251 = vmax.f32 %v10240, 0.0
        %v10252 = vpack.c.bf16 %v10244, %v10244
        %v10253 = vpack.c.bf16 %v10245, %v10245
        %v10254 = vpack.c.bf16 %v10246, %v10246
        %v10255 = vpack.c.bf16 %v10247, %v10247
        %v10256 = vpack.c.bf16 %v10248, %v10248
        %v10257 = vpack.c.bf16 %v10249, %v10249
        %v10258 = vpack.c.bf16 %v10250, %v10250
        %v10259 = vpack.c.bf16 %v10251, %v10251
        %v10260 = vld [vmem:[#allocation13] sm:$0xff]
        %v10261 = vld [vmem:[#allocation13 + $0x8] sm:$0xff]
        %v10262 = vld [vmem:[#allocation13 + $0x10] sm:$0xff]
        %v10263 = vld [vmem:[#allocation13 + $0x18] sm:$0xff]
        %v10264 = vld [vmem:[#allocation13 + $0x20] sm:$0xff]
        %v10265 = vld [vmem:[#allocation13 + $0x28] sm:$0xff]
        %v10266 = vld [vmem:[#allocation13 + $0x30] sm:$0xff]
        %v10267 = vld [vmem:[#allocation13 + $0x38] sm:$0xff]
        %v10268 = vld [vmem:[#allocation13 + $0x40] sm:$0xff]
        %v10269 = vld [vmem:[#allocation13 + $0x48] sm:$0xff]
        %v10270 = vld [vmem:[#allocation13 + $0x50] sm:$0xff]
        %v10271 = vld [vmem:[#allocation13 + $0x58] sm:$0xff]
        %v10272 = vld [vmem:[#allocation13 + $0x60] sm:$0xff]
        %v10273 = vld [vmem:[#allocation13 + $0x68] sm:$0xff]
        %v10274 = vld [vmem:[#allocation13 + $0x70] sm:$0xff]
        %v10275 = vld [vmem:[#allocation13 + $0x78] sm:$0xff]
        %v10276 = vld [vmem:[#allocation13 + $0x80] sm:$0xff]
        %v10277 = vld [vmem:[#allocation13 + $0x88] sm:$0xff]
        %v10278 = vld [vmem:[#allocation13 + $0x90] sm:$0xff]
        %v10279 = vld [vmem:[#allocation13 + $0x98] sm:$0xff]
        %v10280 = vld [vmem:[#allocation13 + $0xa0] sm:$0xff]
        %v10281 = vld [vmem:[#allocation13 + $0xa8] sm:$0xff]
        %v10282 = vld [vmem:[#allocation13 + $0xb0] sm:$0xff]
        %v10283 = vld [vmem:[#allocation13 + $0xb8] sm:$0xff]
        %v10284 = vld [vmem:[#allocation13 + $0xc0] sm:$0xff]
        %v10285 = vld [vmem:[#allocation13 + $0xc8] sm:$0xff]
        %v10286 = vld [vmem:[#allocation13 + $0xd0] sm:$0xff]
        %v10287 = vld [vmem:[#allocation13 + $0xd8] sm:$0xff]
        %v10288 = vld [vmem:[#allocation13 + $0xe0] sm:$0xff]
        %v10289 = vld [vmem:[#allocation13 + $0xe8] sm:$0xff]
        %v10290 = vld [vmem:[#allocation13 + $0xf0] sm:$0xff]
        %v10291 = vld [vmem:[#allocation13 + $0xf8] sm:$0xff]
        %v10292 = vld [vmem:[#allocation13 + $0x100] sm:$0xff]
        %v10293 = vld [vmem:[#allocation13 + $0x108] sm:$0xff]
        %v10294 = vld [vmem:[#allocation13 + $0x110] sm:$0xff]
        %v10295 = vld [vmem:[#allocation13 + $0x118] sm:$0xff]
        %v10296 = vld [vmem:[#allocation13 + $0x120] sm:$0xff]
        %v10297 = vld [vmem:[#allocation13 + $0x128] sm:$0xff]
        %v10298 = vld [vmem:[#allocation13 + $0x130] sm:$0xff]
        %v10299 = vld [vmem:[#allocation13 + $0x138] sm:$0xff]
        %v10300 = vld [vmem:[#allocation13 + $0x140] sm:$0xff]
        %v10301 = vld [vmem:[#allocation13 + $0x148] sm:$0xff]
        %v10302 = vld [vmem:[#allocation13 + $0x150] sm:$0xff]
        %v10303 = vld [vmem:[#allocation13 + $0x158] sm:$0xff]
        %v10304 = vld [vmem:[#allocation13 + $0x160] sm:$0xff]
        %v10305 = vld [vmem:[#allocation13 + $0x168] sm:$0xff]
        %v10306 = vld [vmem:[#allocation13 + $0x170] sm:$0xff]
        %v10307 = vld [vmem:[#allocation13 + $0x178] sm:$0xff]
        %v10308 = vld [vmem:[#allocation13 + $0x180] sm:$0xff]
        %v10309 = vld [vmem:[#allocation13 + $0x188] sm:$0xff]
        %v10310 = vld [vmem:[#allocation13 + $0x190] sm:$0xff]
        %v10311 = vld [vmem:[#allocation13 + $0x198] sm:$0xff]
        %v10312 = vld [vmem:[#allocation13 + $0x1a0] sm:$0xff]
        %v10313 = vld [vmem:[#allocation13 + $0x1a8] sm:$0xff]
        %v10314 = vld [vmem:[#allocation13 + $0x1b0] sm:$0xff]
        %v10315 = vld [vmem:[#allocation13 + $0x1b8] sm:$0xff]
        %v10316 = vld [vmem:[#allocation13 + $0x1c0] sm:$0xff]
        %v10317 = vld [vmem:[#allocation13 + $0x1c8] sm:$0xff]
        %v10318 = vld [vmem:[#allocation13 + $0x1d0] sm:$0xff]
        %v10319 = vld [vmem:[#allocation13 + $0x1d8] sm:$0xff]
        %v10320 = vld [vmem:[#allocation13 + $0x1e0] sm:$0xff]
        %v10321 = vld [vmem:[#allocation13 + $0x1e8] sm:$0xff]
        %v10322 = vld [vmem:[#allocation13 + $0x1f0] sm:$0xff]
        %v10323 = vld [vmem:[#allocation13 + $0x1f8] sm:$0xff]
        %v10324 = vld [vmem:[#allocation13 + $0x200] sm:$0xff]
        %v10325 = vld [vmem:[#allocation13 + $0x208] sm:$0xff]
        %v10326 = vld [vmem:[#allocation13 + $0x210] sm:$0xff]
        %v10327 = vld [vmem:[#allocation13 + $0x218] sm:$0xff]
        %v10328 = vld [vmem:[#allocation13 + $0x220] sm:$0xff]
        %v10329 = vld [vmem:[#allocation13 + $0x228] sm:$0xff]
        %v10330 = vld [vmem:[#allocation13 + $0x230] sm:$0xff]
        %v10331 = vld [vmem:[#allocation13 + $0x238] sm:$0xff]
        %v10332 = vld [vmem:[#allocation13 + $0x240] sm:$0xff]
        %v10333 = vld [vmem:[#allocation13 + $0x248] sm:$0xff]
        %v10334 = vld [vmem:[#allocation13 + $0x250] sm:$0xff]
        %v10335 = vld [vmem:[#allocation13 + $0x258] sm:$0xff]
        %v10336 = vld [vmem:[#allocation13 + $0x260] sm:$0xff]
        %v10337 = vld [vmem:[#allocation13 + $0x268] sm:$0xff]
        %v10338 = vld [vmem:[#allocation13 + $0x270] sm:$0xff]
        %v10339 = vld [vmem:[#allocation13 + $0x278] sm:$0xff]
        %v10340 = vld [vmem:[#allocation13 + $0x280] sm:$0xff]
        %v10341 = vld [vmem:[#allocation13 + $0x288] sm:$0xff]
        %v10342 = vld [vmem:[#allocation13 + $0x290] sm:$0xff]
        %v10343 = vld [vmem:[#allocation13 + $0x298] sm:$0xff]
        %v10344 = vld [vmem:[#allocation13 + $0x2a0] sm:$0xff]
        %v10345 = vld [vmem:[#allocation13 + $0x2a8] sm:$0xff]
        %v10346 = vld [vmem:[#allocation13 + $0x2b0] sm:$0xff]
        %v10347 = vld [vmem:[#allocation13 + $0x2b8] sm:$0xff]
        %v10348 = vld [vmem:[#allocation13 + $0x2c0] sm:$0xff]
        %v10349 = vld [vmem:[#allocation13 + $0x2c8] sm:$0xff]
        %v10350 = vld [vmem:[#allocation13 + $0x2d0] sm:$0xff]
        %v10351 = vld [vmem:[#allocation13 + $0x2d8] sm:$0xff]
        %v10352 = vld [vmem:[#allocation13 + $0x2e0] sm:$0xff]
        %v10353 = vld [vmem:[#allocation13 + $0x2e8] sm:$0xff]
        %v10354 = vld [vmem:[#allocation13 + $0x2f0] sm:$0xff]
        %v10355 = vld [vmem:[#allocation13 + $0x2f8] sm:$0xff]
        %v10356 = vld [vmem:[#allocation13 + $0x300] sm:$0xff]
        %v10357 = vld [vmem:[#allocation13 + $0x308] sm:$0xff]
        %v10358 = vld [vmem:[#allocation13 + $0x310] sm:$0xff]
        %v10359 = vld [vmem:[#allocation13 + $0x318] sm:$0xff]
        %v10360 = vld [vmem:[#allocation13 + $0x320] sm:$0xff]
        %v10361 = vld [vmem:[#allocation13 + $0x328] sm:$0xff]
        %v10362 = vld [vmem:[#allocation13 + $0x330] sm:$0xff]
        %v10363 = vld [vmem:[#allocation13 + $0x338] sm:$0xff]
        %v10364 = vld [vmem:[#allocation13 + $0x340] sm:$0xff]
        %v10365 = vld [vmem:[#allocation13 + $0x348] sm:$0xff]
        %v10366 = vld [vmem:[#allocation13 + $0x350] sm:$0xff]
        %v10367 = vld [vmem:[#allocation13 + $0x358] sm:$0xff]
        %v10368 = vld [vmem:[#allocation13 + $0x360] sm:$0xff]
        %v10369 = vld [vmem:[#allocation13 + $0x368] sm:$0xff]
        %v10370 = vld [vmem:[#allocation13 + $0x370] sm:$0xff]
        %v10371 = vld [vmem:[#allocation13 + $0x378] sm:$0xff]
        %v10372 = vld [vmem:[#allocation13 + $0x380] sm:$0xff]
        %v10373 = vld [vmem:[#allocation13 + $0x388] sm:$0xff]
        %v10374 = vld [vmem:[#allocation13 + $0x390] sm:$0xff]
        %v10375 = vld [vmem:[#allocation13 + $0x398] sm:$0xff]
        %v10376 = vld [vmem:[#allocation13 + $0x3a0] sm:$0xff]
        %v10377 = vld [vmem:[#allocation13 + $0x3a8] sm:$0xff]
        %v10378 = vld [vmem:[#allocation13 + $0x3b0] sm:$0xff]
        %v10379 = vld [vmem:[#allocation13 + $0x3b8] sm:$0xff]
        %v10380 = vld [vmem:[#allocation13 + $0x3c0] sm:$0xff]
        %v10381 = vld [vmem:[#allocation13 + $0x3c8] sm:$0xff]
        %v10382 = vld [vmem:[#allocation13 + $0x3d0] sm:$0xff]
        %v10383 = vld [vmem:[#allocation13 + $0x3d8] sm:$0xff]
        %v10384 = vld [vmem:[#allocation13 + $0x3e0] sm:$0xff]
        %v10385 = vld [vmem:[#allocation13 + $0x3e8] sm:$0xff]
        %v10386 = vld [vmem:[#allocation13 + $0x3f0] sm:$0xff]
        %v10387 = vld [vmem:[#allocation13 + $0x3f8] sm:$0xff]
        %v10388 = vld [vmem:[#allocation13 + $0x400] sm:$0xff]
        %v10389 = vld [vmem:[#allocation13 + $0x408] sm:$0xff]
        %v10390 = vld [vmem:[#allocation13 + $0x410] sm:$0xff]
        %v10391 = vld [vmem:[#allocation13 + $0x418] sm:$0xff]
        %v10392 = vld [vmem:[#allocation13 + $0x420] sm:$0xff]
        %v10393 = vld [vmem:[#allocation13 + $0x428] sm:$0xff]
        %v10394 = vld [vmem:[#allocation13 + $0x430] sm:$0xff]
        %v10395 = vld [vmem:[#allocation13 + $0x438] sm:$0xff]
        %v10396 = vld [vmem:[#allocation13 + $0x440] sm:$0xff]
        %v10397 = vld [vmem:[#allocation13 + $0x448] sm:$0xff]
        %v10398 = vld [vmem:[#allocation13 + $0x450] sm:$0xff]
        %v10399 = vld [vmem:[#allocation13 + $0x458] sm:$0xff]
        %v10400 = vld [vmem:[#allocation13 + $0x460] sm:$0xff]
        %v10401 = vld [vmem:[#allocation13 + $0x468] sm:$0xff]
        %v10402 = vld [vmem:[#allocation13 + $0x470] sm:$0xff]
        %v10403 = vld [vmem:[#allocation13 + $0x478] sm:$0xff]
        %v10404 = vld [vmem:[#allocation13 + $0x480] sm:$0xff]
        %v10405 = vld [vmem:[#allocation13 + $0x488] sm:$0xff]
        %v10406 = vld [vmem:[#allocation13 + $0x490] sm:$0xff]
        %v10407 = vld [vmem:[#allocation13 + $0x498] sm:$0xff]
        %v10408 = vld [vmem:[#allocation13 + $0x4a0] sm:$0xff]
        %v10409 = vld [vmem:[#allocation13 + $0x4a8] sm:$0xff]
        %v10410 = vld [vmem:[#allocation13 + $0x4b0] sm:$0xff]
        %v10411 = vld [vmem:[#allocation13 + $0x4b8] sm:$0xff]
        %v10412 = vld [vmem:[#allocation13 + $0x4c0] sm:$0xff]
        %v10413 = vld [vmem:[#allocation13 + $0x4c8] sm:$0xff]
        %v10414 = vld [vmem:[#allocation13 + $0x4d0] sm:$0xff]
        %v10415 = vld [vmem:[#allocation13 + $0x4d8] sm:$0xff]
        %v10416 = vld [vmem:[#allocation13 + $0x4e0] sm:$0xff]
        %v10417 = vld [vmem:[#allocation13 + $0x4e8] sm:$0xff]
        %v10418 = vld [vmem:[#allocation13 + $0x4f0] sm:$0xff]
        %v10419 = vld [vmem:[#allocation13 + $0x4f8] sm:$0xff]
        %v10420 = vld [vmem:[#allocation13 + $0x500] sm:$0xff]
        %v10421 = vld [vmem:[#allocation13 + $0x508] sm:$0xff]
        %v10422 = vld [vmem:[#allocation13 + $0x510] sm:$0xff]
        %v10423 = vld [vmem:[#allocation13 + $0x518] sm:$0xff]
        %v10424 = vld [vmem:[#allocation13 + $0x520] sm:$0xff]
        %v10425 = vld [vmem:[#allocation13 + $0x528] sm:$0xff]
        %v10426 = vld [vmem:[#allocation13 + $0x530] sm:$0xff]
        %v10427 = vld [vmem:[#allocation13 + $0x538] sm:$0xff]
        %v10428 = vld [vmem:[#allocation13 + $0x540] sm:$0xff]
        %v10429 = vld [vmem:[#allocation13 + $0x548] sm:$0xff]
        %v10430 = vld [vmem:[#allocation13 + $0x550] sm:$0xff]
        %v10431 = vld [vmem:[#allocation13 + $0x558] sm:$0xff]
        %v10432 = vld [vmem:[#allocation13 + $0x560] sm:$0xff]
        %v10433 = vld [vmem:[#allocation13 + $0x568] sm:$0xff]
        %v10434 = vld [vmem:[#allocation13 + $0x570] sm:$0xff]
        %v10435 = vld [vmem:[#allocation13 + $0x578] sm:$0xff]
        %v10436 = vld [vmem:[#allocation13 + $0x580] sm:$0xff]
        %v10437 = vld [vmem:[#allocation13 + $0x588] sm:$0xff]
        %v10438 = vld [vmem:[#allocation13 + $0x590] sm:$0xff]
        %v10439 = vld [vmem:[#allocation13 + $0x598] sm:$0xff]
        %v10440 = vld [vmem:[#allocation13 + $0x5a0] sm:$0xff]
        %v10441 = vld [vmem:[#allocation13 + $0x5a8] sm:$0xff]
        %v10442 = vld [vmem:[#allocation13 + $0x5b0] sm:$0xff]
        %v10443 = vld [vmem:[#allocation13 + $0x5b8] sm:$0xff]
        %v10444 = vld [vmem:[#allocation13 + $0x5c0] sm:$0xff]
        %v10445 = vld [vmem:[#allocation13 + $0x5c8] sm:$0xff]
        %v10446 = vld [vmem:[#allocation13 + $0x5d0] sm:$0xff]
        %v10447 = vld [vmem:[#allocation13 + $0x5d8] sm:$0xff]
        %v10448 = vld [vmem:[#allocation13 + $0x5e0] sm:$0xff]
        %v10449 = vld [vmem:[#allocation13 + $0x5e8] sm:$0xff]
        %v10450 = vld [vmem:[#allocation13 + $0x5f0] sm:$0xff]
        %v10451 = vld [vmem:[#allocation13 + $0x5f8] sm:$0xff]
        %v10452 = vld [vmem:[#allocation13 + $0x600] sm:$0xff]
        %v10453 = vld [vmem:[#allocation13 + $0x608] sm:$0xff]
        %v10454 = vld [vmem:[#allocation13 + $0x610] sm:$0xff]
        %v10455 = vld [vmem:[#allocation13 + $0x618] sm:$0xff]
        %v10456 = vld [vmem:[#allocation13 + $0x620] sm:$0xff]
        %v10457 = vld [vmem:[#allocation13 + $0x628] sm:$0xff]
        %v10458 = vld [vmem:[#allocation13 + $0x630] sm:$0xff]
        %v10459 = vld [vmem:[#allocation13 + $0x638] sm:$0xff]
        %v10460 = vld [vmem:[#allocation13 + $0x640] sm:$0xff]
        %v10461 = vld [vmem:[#allocation13 + $0x648] sm:$0xff]
        %v10462 = vld [vmem:[#allocation13 + $0x650] sm:$0xff]
        %v10463 = vld [vmem:[#allocation13 + $0x658] sm:$0xff]
        %v10464 = vld [vmem:[#allocation13 + $0x660] sm:$0xff]
        %v10465 = vld [vmem:[#allocation13 + $0x668] sm:$0xff]
        %v10466 = vld [vmem:[#allocation13 + $0x670] sm:$0xff]
        %v10467 = vld [vmem:[#allocation13 + $0x678] sm:$0xff]
        %v10468 = vld [vmem:[#allocation13 + $0x680] sm:$0xff]
        %v10469 = vld [vmem:[#allocation13 + $0x688] sm:$0xff]
        %v10470 = vld [vmem:[#allocation13 + $0x690] sm:$0xff]
        %v10471 = vld [vmem:[#allocation13 + $0x698] sm:$0xff]
        %v10472 = vld [vmem:[#allocation13 + $0x6a0] sm:$0xff]
        %v10473 = vld [vmem:[#allocation13 + $0x6a8] sm:$0xff]
        %v10474 = vld [vmem:[#allocation13 + $0x6b0] sm:$0xff]
        %v10475 = vld [vmem:[#allocation13 + $0x6b8] sm:$0xff]
        %v10476 = vld [vmem:[#allocation13 + $0x6c0] sm:$0xff]
        %v10477 = vld [vmem:[#allocation13 + $0x6c8] sm:$0xff]
        %v10478 = vld [vmem:[#allocation13 + $0x6d0] sm:$0xff]
        %v10479 = vld [vmem:[#allocation13 + $0x6d8] sm:$0xff]
        %v10480 = vld [vmem:[#allocation13 + $0x6e0] sm:$0xff]
        %v10481 = vld [vmem:[#allocation13 + $0x6e8] sm:$0xff]
        %v10482 = vld [vmem:[#allocation13 + $0x6f0] sm:$0xff]
        %v10483 = vld [vmem:[#allocation13 + $0x6f8] sm:$0xff]
        %v10484 = vld [vmem:[#allocation13 + $0x700] sm:$0xff]
        %v10485 = vld [vmem:[#allocation13 + $0x708] sm:$0xff]
        %v10486 = vld [vmem:[#allocation13 + $0x710] sm:$0xff]
        %v10487 = vld [vmem:[#allocation13 + $0x718] sm:$0xff]
        %v10488 = vld [vmem:[#allocation13 + $0x720] sm:$0xff]
        %v10489 = vld [vmem:[#allocation13 + $0x728] sm:$0xff]
        %v10490 = vld [vmem:[#allocation13 + $0x730] sm:$0xff]
        %v10491 = vld [vmem:[#allocation13 + $0x738] sm:$0xff]
        %v10492 = vld [vmem:[#allocation13 + $0x740] sm:$0xff]
        %v10493 = vld [vmem:[#allocation13 + $0x748] sm:$0xff]
        %v10494 = vld [vmem:[#allocation13 + $0x750] sm:$0xff]
        %v10495 = vld [vmem:[#allocation13 + $0x758] sm:$0xff]
        %v10496 = vld [vmem:[#allocation13 + $0x760] sm:$0xff]
        %v10497 = vld [vmem:[#allocation13 + $0x768] sm:$0xff]
        %v10498 = vld [vmem:[#allocation13 + $0x770] sm:$0xff]
        %v10499 = vld [vmem:[#allocation13 + $0x778] sm:$0xff]
        %v10500 = vld [vmem:[#allocation13 + $0x780] sm:$0xff]
        %v10501 = vld [vmem:[#allocation13 + $0x788] sm:$0xff]
        %v10502 = vld [vmem:[#allocation13 + $0x790] sm:$0xff]
        %v10503 = vld [vmem:[#allocation13 + $0x798] sm:$0xff]
        %v10504 = vld [vmem:[#allocation13 + $0x7a0] sm:$0xff]
        %v10505 = vld [vmem:[#allocation13 + $0x7a8] sm:$0xff]
        %v10506 = vld [vmem:[#allocation13 + $0x7b0] sm:$0xff]
        %v10507 = vld [vmem:[#allocation13 + $0x7b8] sm:$0xff]
        %v10508 = vld [vmem:[#allocation13 + $0x7c0] sm:$0xff]
        %v10509 = vld [vmem:[#allocation13 + $0x7c8] sm:$0xff]
        %v10510 = vld [vmem:[#allocation13 + $0x7d0] sm:$0xff]
        %v10511 = vld [vmem:[#allocation13 + $0x7d8] sm:$0xff]
        %v10512 = vld [vmem:[#allocation13 + $0x7e0] sm:$0xff]
        %v10513 = vld [vmem:[#allocation13 + $0x7e8] sm:$0xff]
        %v10514 = vld [vmem:[#allocation13 + $0x7f0] sm:$0xff]
        %v10515 = vld [vmem:[#allocation13 + $0x7f8] sm:$0xff]
        %v10516 = vld [vmem:[%s21] sm:$0xf]
        %v10518 = vlaneseq
        %v10519 = vshrl.u32 %v10518, 7
        %v10520 = vsub.s32 0, %v10519
        %v10521 = vrot.slane %v10516, %v10520
        %v10522 = vlaneseq
        %v10523 = vshrl.u32 %v10522, 7
        %v10524 = vsub.s32 1, %v10523
        %v10525 = vrot.slane %v10516, %v10524
        %v10526 = vlaneseq
        %v10527 = vshrl.u32 %v10526, 7
        %v10528 = vsub.s32 2, %v10527
        %v10529 = vrot.slane %v10516, %v10528
        %v10530 = vlaneseq
        %v10531 = vshrl.u32 %v10530, 7
        %v10532 = vsub.s32 3, %v10531
        %v10533 = vrot.slane %v10516, %v10532
        %v10794 = vunpack.c.l.b16 %v10260
        %v10795 = vunpack.c.h.b16 %v10260
        %v10796 = vunpack.c.l.b16 %v10261
        %v10797 = vunpack.c.h.b16 %v10261
        %v10798 = vunpack.c.l.b16 %v10262
        %v10799 = vunpack.c.h.b16 %v10262
        %v10800 = vunpack.c.l.b16 %v10263
        %v10801 = vunpack.c.h.b16 %v10263
        %v10802 = vunpack.c.l.b16 %v10264
        %v10803 = vunpack.c.h.b16 %v10264
        %v10804 = vunpack.c.l.b16 %v10265
        %v10805 = vunpack.c.h.b16 %v10265
        %v10806 = vunpack.c.l.b16 %v10266
        %v10807 = vunpack.c.h.b16 %v10266
        %v10808 = vunpack.c.l.b16 %v10267
        %v10809 = vunpack.c.h.b16 %v10267
        %v10810 = vunpack.c.l.b16 %v10268
        %v10811 = vunpack.c.h.b16 %v10268
        %v10812 = vunpack.c.l.b16 %v10269
        %v10813 = vunpack.c.h.b16 %v10269
        %v10814 = vunpack.c.l.b16 %v10270
        %v10815 = vunpack.c.h.b16 %v10270
        %v10816 = vunpack.c.l.b16 %v10271
        %v10817 = vunpack.c.h.b16 %v10271
        %v10818 = vunpack.c.l.b16 %v10272
        %v10819 = vunpack.c.h.b16 %v10272
        %v10820 = vunpack.c.l.b16 %v10273
        %v10821 = vunpack.c.h.b16 %v10273
        %v10822 = vunpack.c.l.b16 %v10274
        %v10823 = vunpack.c.h.b16 %v10274
        %v10824 = vunpack.c.l.b16 %v10275
        %v10825 = vunpack.c.h.b16 %v10275
        %v10826 = vunpack.c.l.b16 %v10276
        %v10827 = vunpack.c.h.b16 %v10276
        %v10828 = vunpack.c.l.b16 %v10277
        %v10829 = vunpack.c.h.b16 %v10277
        %v10830 = vunpack.c.l.b16 %v10278
        %v10831 = vunpack.c.h.b16 %v10278
        %v10832 = vunpack.c.l.b16 %v10279
        %v10833 = vunpack.c.h.b16 %v10279
        %v10834 = vunpack.c.l.b16 %v10280
        %v10835 = vunpack.c.h.b16 %v10280
        %v10836 = vunpack.c.l.b16 %v10281
        %v10837 = vunpack.c.h.b16 %v10281
        %v10838 = vunpack.c.l.b16 %v10282
        %v10839 = vunpack.c.h.b16 %v10282
        %v10840 = vunpack.c.l.b16 %v10283
        %v10841 = vunpack.c.h.b16 %v10283
        %v10842 = vunpack.c.l.b16 %v10284
        %v10843 = vunpack.c.h.b16 %v10284
        %v10844 = vunpack.c.l.b16 %v10285
        %v10845 = vunpack.c.h.b16 %v10285
        %v10846 = vunpack.c.l.b16 %v10286
        %v10847 = vunpack.c.h.b16 %v10286
        %v10848 = vunpack.c.l.b16 %v10287
        %v10849 = vunpack.c.h.b16 %v10287
        %v10850 = vunpack.c.l.b16 %v10288
        %v10851 = vunpack.c.h.b16 %v10288
        %v10852 = vunpack.c.l.b16 %v10289
        %v10853 = vunpack.c.h.b16 %v10289
        %v10854 = vunpack.c.l.b16 %v10290
        %v10855 = vunpack.c.h.b16 %v10290
        %v10856 = vunpack.c.l.b16 %v10291
        %v10857 = vunpack.c.h.b16 %v10291
        %v10858 = vunpack.c.l.b16 %v10292
        %v10859 = vunpack.c.h.b16 %v10292
        %v10860 = vunpack.c.l.b16 %v10293
        %v10861 = vunpack.c.h.b16 %v10293
        %v10862 = vunpack.c.l.b16 %v10294
        %v10863 = vunpack.c.h.b16 %v10294
        %v10864 = vunpack.c.l.b16 %v10295
        %v10865 = vunpack.c.h.b16 %v10295
        %v10866 = vunpack.c.l.b16 %v10296
        %v10867 = vunpack.c.h.b16 %v10296
        %v10868 = vunpack.c.l.b16 %v10297
        %v10869 = vunpack.c.h.b16 %v10297
        %v10870 = vunpack.c.l.b16 %v10298
        %v10871 = vunpack.c.h.b16 %v10298
        %v10872 = vunpack.c.l.b16 %v10299
        %v10873 = vunpack.c.h.b16 %v10299
        %v10874 = vunpack.c.l.b16 %v10300
        %v10875 = vunpack.c.h.b16 %v10300
        %v10876 = vunpack.c.l.b16 %v10301
        %v10877 = vunpack.c.h.b16 %v10301
        %v10878 = vunpack.c.l.b16 %v10302
        %v10879 = vunpack.c.h.b16 %v10302
        %v10880 = vunpack.c.l.b16 %v10303
        %v10881 = vunpack.c.h.b16 %v10303
        %v10882 = vunpack.c.l.b16 %v10304
        %v10883 = vunpack.c.h.b16 %v10304
        %v10884 = vunpack.c.l.b16 %v10305
        %v10885 = vunpack.c.h.b16 %v10305
        %v10886 = vunpack.c.l.b16 %v10306
        %v10887 = vunpack.c.h.b16 %v10306
        %v10888 = vunpack.c.l.b16 %v10307
        %v10889 = vunpack.c.h.b16 %v10307
        %v10890 = vunpack.c.l.b16 %v10308
        %v10891 = vunpack.c.h.b16 %v10308
        %v10892 = vunpack.c.l.b16 %v10309
        %v10893 = vunpack.c.h.b16 %v10309
        %v10894 = vunpack.c.l.b16 %v10310
        %v10895 = vunpack.c.h.b16 %v10310
        %v10896 = vunpack.c.l.b16 %v10311
        %v10897 = vunpack.c.h.b16 %v10311
        %v10898 = vunpack.c.l.b16 %v10312
        %v10899 = vunpack.c.h.b16 %v10312
        %v10900 = vunpack.c.l.b16 %v10313
        %v10901 = vunpack.c.h.b16 %v10313
        %v10902 = vunpack.c.l.b16 %v10314
        %v10903 = vunpack.c.h.b16 %v10314
        %v10904 = vunpack.c.l.b16 %v10315
        %v10905 = vunpack.c.h.b16 %v10315
        %v10906 = vunpack.c.l.b16 %v10316
        %v10907 = vunpack.c.h.b16 %v10316
        %v10908 = vunpack.c.l.b16 %v10317
        %v10909 = vunpack.c.h.b16 %v10317
        %v10910 = vunpack.c.l.b16 %v10318
        %v10911 = vunpack.c.h.b16 %v10318
        %v10912 = vunpack.c.l.b16 %v10319
        %v10913 = vunpack.c.h.b16 %v10319
        %v10914 = vunpack.c.l.b16 %v10320
        %v10915 = vunpack.c.h.b16 %v10320
        %v10916 = vunpack.c.l.b16 %v10321
        %v10917 = vunpack.c.h.b16 %v10321
        %v10918 = vunpack.c.l.b16 %v10322
        %v10919 = vunpack.c.h.b16 %v10322
        %v10920 = vunpack.c.l.b16 %v10323
        %v10921 = vunpack.c.h.b16 %v10323
        %v10922 = vunpack.c.l.b16 %v10324
        %v10923 = vunpack.c.h.b16 %v10324
        %v10924 = vunpack.c.l.b16 %v10325
        %v10925 = vunpack.c.h.b16 %v10325
        %v10926 = vunpack.c.l.b16 %v10326
        %v10927 = vunpack.c.h.b16 %v10326
        %v10928 = vunpack.c.l.b16 %v10327
        %v10929 = vunpack.c.h.b16 %v10327
        %v10930 = vunpack.c.l.b16 %v10328
        %v10931 = vunpack.c.h.b16 %v10328
        %v10932 = vunpack.c.l.b16 %v10329
        %v10933 = vunpack.c.h.b16 %v10329
        %v10934 = vunpack.c.l.b16 %v10330
        %v10935 = vunpack.c.h.b16 %v10330
        %v10936 = vunpack.c.l.b16 %v10331
        %v10937 = vunpack.c.h.b16 %v10331
        %v10938 = vunpack.c.l.b16 %v10332
        %v10939 = vunpack.c.h.b16 %v10332
        %v10940 = vunpack.c.l.b16 %v10333
        %v10941 = vunpack.c.h.b16 %v10333
        %v10942 = vunpack.c.l.b16 %v10334
        %v10943 = vunpack.c.h.b16 %v10334
        %v10944 = vunpack.c.l.b16 %v10335
        %v10945 = vunpack.c.h.b16 %v10335
        %v10946 = vunpack.c.l.b16 %v10336
        %v10947 = vunpack.c.h.b16 %v10336
        %v10948 = vunpack.c.l.b16 %v10337
        %v10949 = vunpack.c.h.b16 %v10337
        %v10950 = vunpack.c.l.b16 %v10338
        %v10951 = vunpack.c.h.b16 %v10338
        %v10952 = vunpack.c.l.b16 %v10339
        %v10953 = vunpack.c.h.b16 %v10339
        %v10954 = vunpack.c.l.b16 %v10340
        %v10955 = vunpack.c.h.b16 %v10340
        %v10956 = vunpack.c.l.b16 %v10341
        %v10957 = vunpack.c.h.b16 %v10341
        %v10958 = vunpack.c.l.b16 %v10342
        %v10959 = vunpack.c.h.b16 %v10342
        %v10960 = vunpack.c.l.b16 %v10343
        %v10961 = vunpack.c.h.b16 %v10343
        %v10962 = vunpack.c.l.b16 %v10344
        %v10963 = vunpack.c.h.b16 %v10344
        %v10964 = vunpack.c.l.b16 %v10345
        %v10965 = vunpack.c.h.b16 %v10345
        %v10966 = vunpack.c.l.b16 %v10346
        %v10967 = vunpack.c.h.b16 %v10346
        %v10968 = vunpack.c.l.b16 %v10347
        %v10969 = vunpack.c.h.b16 %v10347
        %v10970 = vunpack.c.l.b16 %v10348
        %v10971 = vunpack.c.h.b16 %v10348
        %v10972 = vunpack.c.l.b16 %v10349
        %v10973 = vunpack.c.h.b16 %v10349
        %v10974 = vunpack.c.l.b16 %v10350
        %v10975 = vunpack.c.h.b16 %v10350
        %v10976 = vunpack.c.l.b16 %v10351
        %v10977 = vunpack.c.h.b16 %v10351
        %v10978 = vunpack.c.l.b16 %v10352
        %v10979 = vunpack.c.h.b16 %v10352
        %v10980 = vunpack.c.l.b16 %v10353
        %v10981 = vunpack.c.h.b16 %v10353
        %v10982 = vunpack.c.l.b16 %v10354
        %v10983 = vunpack.c.h.b16 %v10354
        %v10984 = vunpack.c.l.b16 %v10355
        %v10985 = vunpack.c.h.b16 %v10355
        %v10986 = vunpack.c.l.b16 %v10356
        %v10987 = vunpack.c.h.b16 %v10356
        %v10988 = vunpack.c.l.b16 %v10357
        %v10989 = vunpack.c.h.b16 %v10357
        %v10990 = vunpack.c.l.b16 %v10358
        %v10991 = vunpack.c.h.b16 %v10358
        %v10992 = vunpack.c.l.b16 %v10359
        %v10993 = vunpack.c.h.b16 %v10359
        %v10994 = vunpack.c.l.b16 %v10360
        %v10995 = vunpack.c.h.b16 %v10360
        %v10996 = vunpack.c.l.b16 %v10361
        %v10997 = vunpack.c.h.b16 %v10361
        %v10998 = vunpack.c.l.b16 %v10362
        %v10999 = vunpack.c.h.b16 %v10362
        %v11000 = vunpack.c.l.b16 %v10363
        %v11001 = vunpack.c.h.b16 %v10363
        %v11002 = vunpack.c.l.b16 %v10364
        %v11003 = vunpack.c.h.b16 %v10364
        %v11004 = vunpack.c.l.b16 %v10365
        %v11005 = vunpack.c.h.b16 %v10365
        %v11006 = vunpack.c.l.b16 %v10366
        %v11007 = vunpack.c.h.b16 %v10366
        %v11008 = vunpack.c.l.b16 %v10367
        %v11009 = vunpack.c.h.b16 %v10367
        %v11010 = vunpack.c.l.b16 %v10368
        %v11011 = vunpack.c.h.b16 %v10368
        %v11012 = vunpack.c.l.b16 %v10369
        %v11013 = vunpack.c.h.b16 %v10369
        %v11014 = vunpack.c.l.b16 %v10370
        %v11015 = vunpack.c.h.b16 %v10370
        %v11016 = vunpack.c.l.b16 %v10371
        %v11017 = vunpack.c.h.b16 %v10371
        %v11018 = vunpack.c.l.b16 %v10372
        %v11019 = vunpack.c.h.b16 %v10372
        %v11020 = vunpack.c.l.b16 %v10373
        %v11021 = vunpack.c.h.b16 %v10373
        %v11022 = vunpack.c.l.b16 %v10374
        %v11023 = vunpack.c.h.b16 %v10374
        %v11024 = vunpack.c.l.b16 %v10375
        %v11025 = vunpack.c.h.b16 %v10375
        %v11026 = vunpack.c.l.b16 %v10376
        %v11027 = vunpack.c.h.b16 %v10376
        %v11028 = vunpack.c.l.b16 %v10377
        %v11029 = vunpack.c.h.b16 %v10377
        %v11030 = vunpack.c.l.b16 %v10378
        %v11031 = vunpack.c.h.b16 %v10378
        %v11032 = vunpack.c.l.b16 %v10379
        %v11033 = vunpack.c.h.b16 %v10379
        %v11034 = vunpack.c.l.b16 %v10380
        %v11035 = vunpack.c.h.b16 %v10380
        %v11036 = vunpack.c.l.b16 %v10381
        %v11037 = vunpack.c.h.b16 %v10381
        %v11038 = vunpack.c.l.b16 %v10382
        %v11039 = vunpack.c.h.b16 %v10382
        %v11040 = vunpack.c.l.b16 %v10383
        %v11041 = vunpack.c.h.b16 %v10383
        %v11042 = vunpack.c.l.b16 %v10384
        %v11043 = vunpack.c.h.b16 %v10384
        %v11044 = vunpack.c.l.b16 %v10385
        %v11045 = vunpack.c.h.b16 %v10385
        %v11046 = vunpack.c.l.b16 %v10386
        %v11047 = vunpack.c.h.b16 %v10386
        %v11048 = vunpack.c.l.b16 %v10387
        %v11049 = vunpack.c.h.b16 %v10387
        %v11050 = vunpack.c.l.b16 %v10388
        %v11051 = vunpack.c.h.b16 %v10388
        %v11052 = vunpack.c.l.b16 %v10389
        %v11053 = vunpack.c.h.b16 %v10389
        %v11054 = vunpack.c.l.b16 %v10390
        %v11055 = vunpack.c.h.b16 %v10390
        %v11056 = vunpack.c.l.b16 %v10391
        %v11057 = vunpack.c.h.b16 %v10391
        %v11058 = vunpack.c.l.b16 %v10392
        %v11059 = vunpack.c.h.b16 %v10392
        %v11060 = vunpack.c.l.b16 %v10393
        %v11061 = vunpack.c.h.b16 %v10393
        %v11062 = vunpack.c.l.b16 %v10394
        %v11063 = vunpack.c.h.b16 %v10394
        %v11064 = vunpack.c.l.b16 %v10395
        %v11065 = vunpack.c.h.b16 %v10395
        %v11066 = vunpack.c.l.b16 %v10396
        %v11067 = vunpack.c.h.b16 %v10396
        %v11068 = vunpack.c.l.b16 %v10397
        %v11069 = vunpack.c.h.b16 %v10397
        %v11070 = vunpack.c.l.b16 %v10398
        %v11071 = vunpack.c.h.b16 %v10398
        %v11072 = vunpack.c.l.b16 %v10399
        %v11073 = vunpack.c.h.b16 %v10399
        %v11074 = vunpack.c.l.b16 %v10400
        %v11075 = vunpack.c.h.b16 %v10400
        %v11076 = vunpack.c.l.b16 %v10401
        %v11077 = vunpack.c.h.b16 %v10401
        %v11078 = vunpack.c.l.b16 %v10402
        %v11079 = vunpack.c.h.b16 %v10402
        %v11080 = vunpack.c.l.b16 %v10403
        %v11081 = vunpack.c.h.b16 %v10403
        %v11082 = vunpack.c.l.b16 %v10404
        %v11083 = vunpack.c.h.b16 %v10404
        %v11084 = vunpack.c.l.b16 %v10405
        %v11085 = vunpack.c.h.b16 %v10405
        %v11086 = vunpack.c.l.b16 %v10406
        %v11087 = vunpack.c.h.b16 %v10406
        %v11088 = vunpack.c.l.b16 %v10407
        %v11089 = vunpack.c.h.b16 %v10407
        %v11090 = vunpack.c.l.b16 %v10408
        %v11091 = vunpack.c.h.b16 %v10408
        %v11092 = vunpack.c.l.b16 %v10409
        %v11093 = vunpack.c.h.b16 %v10409
        %v11094 = vunpack.c.l.b16 %v10410
        %v11095 = vunpack.c.h.b16 %v10410
        %v11096 = vunpack.c.l.b16 %v10411
        %v11097 = vunpack.c.h.b16 %v10411
        %v11098 = vunpack.c.l.b16 %v10412
        %v11099 = vunpack.c.h.b16 %v10412
        %v11100 = vunpack.c.l.b16 %v10413
        %v11101 = vunpack.c.h.b16 %v10413
        %v11102 = vunpack.c.l.b16 %v10414
        %v11103 = vunpack.c.h.b16 %v10414
        %v11104 = vunpack.c.l.b16 %v10415
        %v11105 = vunpack.c.h.b16 %v10415
        %v11106 = vunpack.c.l.b16 %v10416
        %v11107 = vunpack.c.h.b16 %v10416
        %v11108 = vunpack.c.l.b16 %v10417
        %v11109 = vunpack.c.h.b16 %v10417
        %v11110 = vunpack.c.l.b16 %v10418
        %v11111 = vunpack.c.h.b16 %v10418
        %v11112 = vunpack.c.l.b16 %v10419
        %v11113 = vunpack.c.h.b16 %v10419
        %v11114 = vunpack.c.l.b16 %v10420
        %v11115 = vunpack.c.h.b16 %v10420
        %v11116 = vunpack.c.l.b16 %v10421
        %v11117 = vunpack.c.h.b16 %v10421
        %v11118 = vunpack.c.l.b16 %v10422
        %v11119 = vunpack.c.h.b16 %v10422
        %v11120 = vunpack.c.l.b16 %v10423
        %v11121 = vunpack.c.h.b16 %v10423
        %v11122 = vunpack.c.l.b16 %v10424
        %v11123 = vunpack.c.h.b16 %v10424
        %v11124 = vunpack.c.l.b16 %v10425
        %v11125 = vunpack.c.h.b16 %v10425
        %v11126 = vunpack.c.l.b16 %v10426
        %v11127 = vunpack.c.h.b16 %v10426
        %v11128 = vunpack.c.l.b16 %v10427
        %v11129 = vunpack.c.h.b16 %v10427
        %v11130 = vunpack.c.l.b16 %v10428
        %v11131 = vunpack.c.h.b16 %v10428
        %v11132 = vunpack.c.l.b16 %v10429
        %v11133 = vunpack.c.h.b16 %v10429
        %v11134 = vunpack.c.l.b16 %v10430
        %v11135 = vunpack.c.h.b16 %v10430
        %v11136 = vunpack.c.l.b16 %v10431
        %v11137 = vunpack.c.h.b16 %v10431
        %v11138 = vunpack.c.l.b16 %v10432
        %v11139 = vunpack.c.h.b16 %v10432
        %v11140 = vunpack.c.l.b16 %v10433
        %v11141 = vunpack.c.h.b16 %v10433
        %v11142 = vunpack.c.l.b16 %v10434
        %v11143 = vunpack.c.h.b16 %v10434
        %v11144 = vunpack.c.l.b16 %v10435
        %v11145 = vunpack.c.h.b16 %v10435
        %v11146 = vunpack.c.l.b16 %v10436
        %v11147 = vunpack.c.h.b16 %v10436
        %v11148 = vunpack.c.l.b16 %v10437
        %v11149 = vunpack.c.h.b16 %v10437
        %v11150 = vunpack.c.l.b16 %v10438
        %v11151 = vunpack.c.h.b16 %v10438
        %v11152 = vunpack.c.l.b16 %v10439
        %v11153 = vunpack.c.h.b16 %v10439
        %v11154 = vunpack.c.l.b16 %v10440
        %v11155 = vunpack.c.h.b16 %v10440
        %v11156 = vunpack.c.l.b16 %v10441
        %v11157 = vunpack.c.h.b16 %v10441
        %v11158 = vunpack.c.l.b16 %v10442
        %v11159 = vunpack.c.h.b16 %v10442
        %v11160 = vunpack.c.l.b16 %v10443
        %v11161 = vunpack.c.h.b16 %v10443
        %v11162 = vunpack.c.l.b16 %v10444
        %v11163 = vunpack.c.h.b16 %v10444
        %v11164 = vunpack.c.l.b16 %v10445
        %v11165 = vunpack.c.h.b16 %v10445
        %v11166 = vunpack.c.l.b16 %v10446
        %v11167 = vunpack.c.h.b16 %v10446
        %v11168 = vunpack.c.l.b16 %v10447
        %v11169 = vunpack.c.h.b16 %v10447
        %v11170 = vunpack.c.l.b16 %v10448
        %v11171 = vunpack.c.h.b16 %v10448
        %v11172 = vunpack.c.l.b16 %v10449
        %v11173 = vunpack.c.h.b16 %v10449
        %v11174 = vunpack.c.l.b16 %v10450
        %v11175 = vunpack.c.h.b16 %v10450
        %v11176 = vunpack.c.l.b16 %v10451
        %v11177 = vunpack.c.h.b16 %v10451
        %v11178 = vunpack.c.l.b16 %v10452
        %v11179 = vunpack.c.h.b16 %v10452
        %v11180 = vunpack.c.l.b16 %v10453
        %v11181 = vunpack.c.h.b16 %v10453
        %v11182 = vunpack.c.l.b16 %v10454
        %v11183 = vunpack.c.h.b16 %v10454
        %v11184 = vunpack.c.l.b16 %v10455
        %v11185 = vunpack.c.h.b16 %v10455
        %v11186 = vunpack.c.l.b16 %v10456
        %v11187 = vunpack.c.h.b16 %v10456
        %v11188 = vunpack.c.l.b16 %v10457
        %v11189 = vunpack.c.h.b16 %v10457
        %v11190 = vunpack.c.l.b16 %v10458
        %v11191 = vunpack.c.h.b16 %v10458
        %v11192 = vunpack.c.l.b16 %v10459
        %v11193 = vunpack.c.h.b16 %v10459
        %v11194 = vunpack.c.l.b16 %v10460
        %v11195 = vunpack.c.h.b16 %v10460
        %v11196 = vunpack.c.l.b16 %v10461
        %v11197 = vunpack.c.h.b16 %v10461
        %v11198 = vunpack.c.l.b16 %v10462
        %v11199 = vunpack.c.h.b16 %v10462
        %v11200 = vunpack.c.l.b16 %v10463
        %v11201 = vunpack.c.h.b16 %v10463
        %v11202 = vunpack.c.l.b16 %v10464
        %v11203 = vunpack.c.h.b16 %v10464
        %v11204 = vunpack.c.l.b16 %v10465
        %v11205 = vunpack.c.h.b16 %v10465
        %v11206 = vunpack.c.l.b16 %v10466
        %v11207 = vunpack.c.h.b16 %v10466
        %v11208 = vunpack.c.l.b16 %v10467
        %v11209 = vunpack.c.h.b16 %v10467
        %v11210 = vunpack.c.l.b16 %v10468
        %v11211 = vunpack.c.h.b16 %v10468
        %v11212 = vunpack.c.l.b16 %v10469
        %v11213 = vunpack.c.h.b16 %v10469
        %v11214 = vunpack.c.l.b16 %v10470
        %v11215 = vunpack.c.h.b16 %v10470
        %v11216 = vunpack.c.l.b16 %v10471
        %v11217 = vunpack.c.h.b16 %v10471
        %v11218 = vunpack.c.l.b16 %v10472
        %v11219 = vunpack.c.h.b16 %v10472
        %v11220 = vunpack.c.l.b16 %v10473
        %v11221 = vunpack.c.h.b16 %v10473
        %v11222 = vunpack.c.l.b16 %v10474
        %v11223 = vunpack.c.h.b16 %v10474
        %v11224 = vunpack.c.l.b16 %v10475
        %v11225 = vunpack.c.h.b16 %v10475
        %v11226 = vunpack.c.l.b16 %v10476
        %v11227 = vunpack.c.h.b16 %v10476
        %v11228 = vunpack.c.l.b16 %v10477
        %v11229 = vunpack.c.h.b16 %v10477
        %v11230 = vunpack.c.l.b16 %v10478
        %v11231 = vunpack.c.h.b16 %v10478
        %v11232 = vunpack.c.l.b16 %v10479
        %v11233 = vunpack.c.h.b16 %v10479
        %v11234 = vunpack.c.l.b16 %v10480
        %v11235 = vunpack.c.h.b16 %v10480
        %v11236 = vunpack.c.l.b16 %v10481
        %v11237 = vunpack.c.h.b16 %v10481
        %v11238 = vunpack.c.l.b16 %v10482
        %v11239 = vunpack.c.h.b16 %v10482
        %v11240 = vunpack.c.l.b16 %v10483
        %v11241 = vunpack.c.h.b16 %v10483
        %v11242 = vunpack.c.l.b16 %v10484
        %v11243 = vunpack.c.h.b16 %v10484
        %v11244 = vunpack.c.l.b16 %v10485
        %v11245 = vunpack.c.h.b16 %v10485
        %v11246 = vunpack.c.l.b16 %v10486
        %v11247 = vunpack.c.h.b16 %v10486
        %v11248 = vunpack.c.l.b16 %v10487
        %v11249 = vunpack.c.h.b16 %v10487
        %v11250 = vunpack.c.l.b16 %v10488
        %v11251 = vunpack.c.h.b16 %v10488
        %v11252 = vunpack.c.l.b16 %v10489
        %v11253 = vunpack.c.h.b16 %v10489
        %v11254 = vunpack.c.l.b16 %v10490
        %v11255 = vunpack.c.h.b16 %v10490
        %v11256 = vunpack.c.l.b16 %v10491
        %v11257 = vunpack.c.h.b16 %v10491
        %v11258 = vunpack.c.l.b16 %v10492
        %v11259 = vunpack.c.h.b16 %v10492
        %v11260 = vunpack.c.l.b16 %v10493
        %v11261 = vunpack.c.h.b16 %v10493
        %v11262 = vunpack.c.l.b16 %v10494
        %v11263 = vunpack.c.h.b16 %v10494
        %v11264 = vunpack.c.l.b16 %v10495
        %v11265 = vunpack.c.h.b16 %v10495
        %v11266 = vunpack.c.l.b16 %v10496
        %v11267 = vunpack.c.h.b16 %v10496
        %v11268 = vunpack.c.l.b16 %v10497
        %v11269 = vunpack.c.h.b16 %v10497
        %v11270 = vunpack.c.l.b16 %v10498
        %v11271 = vunpack.c.h.b16 %v10498
        %v11272 = vunpack.c.l.b16 %v10499
        %v11273 = vunpack.c.h.b16 %v10499
        %v11274 = vunpack.c.l.b16 %v10500
        %v11275 = vunpack.c.h.b16 %v10500
        %v11276 = vunpack.c.l.b16 %v10501
        %v11277 = vunpack.c.h.b16 %v10501
        %v11278 = vunpack.c.l.b16 %v10502
        %v11279 = vunpack.c.h.b16 %v10502
        %v11280 = vunpack.c.l.b16 %v10503
        %v11281 = vunpack.c.h.b16 %v10503
        %v11282 = vunpack.c.l.b16 %v10504
        %v11283 = vunpack.c.h.b16 %v10504
        %v11284 = vunpack.c.l.b16 %v10505
        %v11285 = vunpack.c.h.b16 %v10505
        %v11286 = vunpack.c.l.b16 %v10506
        %v11287 = vunpack.c.h.b16 %v10506
        %v11288 = vunpack.c.l.b16 %v10507
        %v11289 = vunpack.c.h.b16 %v10507
        %v11290 = vunpack.c.l.b16 %v10508
        %v11291 = vunpack.c.h.b16 %v10508
        %v11292 = vunpack.c.l.b16 %v10509
        %v11293 = vunpack.c.h.b16 %v10509
        %v11294 = vunpack.c.l.b16 %v10510
        %v11295 = vunpack.c.h.b16 %v10510
        %v11296 = vunpack.c.l.b16 %v10511
        %v11297 = vunpack.c.h.b16 %v10511
        %v11298 = vunpack.c.l.b16 %v10512
        %v11299 = vunpack.c.h.b16 %v10512
        %v11300 = vunpack.c.l.b16 %v10513
        %v11301 = vunpack.c.h.b16 %v10513
        %v11302 = vunpack.c.l.b16 %v10514
        %v11303 = vunpack.c.h.b16 %v10514
        %v11304 = vunpack.c.l.b16 %v10515
        %v11305 = vunpack.c.h.b16 %v10515
        %v11306 = vpack.c.b16 %v10798, %v10794
        %v11307 = vpack.c.b16 %v10799, %v10795
        %v11308 = vpack.c.b16 %v10800, %v10796
        %v11309 = vpack.c.b16 %v10801, %v10797
        %v11310 = vpack.c.b16 %v10806, %v10802
        %v11311 = vpack.c.b16 %v10807, %v10803
        %v11312 = vpack.c.b16 %v10808, %v10804
        %v11313 = vpack.c.b16 %v10809, %v10805
        %v11314 = vpack.c.b16 %v10814, %v10810
        %v11315 = vpack.c.b16 %v10815, %v10811
        %v11316 = vpack.c.b16 %v10816, %v10812
        %v11317 = vpack.c.b16 %v10817, %v10813
        %v11318 = vpack.c.b16 %v10822, %v10818
        %v11319 = vpack.c.b16 %v10823, %v10819
        %v11320 = vpack.c.b16 %v10824, %v10820
        %v11321 = vpack.c.b16 %v10825, %v10821
        %v11322 = vpack.c.b16 %v10830, %v10826
        %v11323 = vpack.c.b16 %v10831, %v10827
        %v11324 = vpack.c.b16 %v10832, %v10828
        %v11325 = vpack.c.b16 %v10833, %v10829
        %v11326 = vpack.c.b16 %v10838, %v10834
        %v11327 = vpack.c.b16 %v10839, %v10835
        %v11328 = vpack.c.b16 %v10840, %v10836
        %v11329 = vpack.c.b16 %v10841, %v10837
        %v11330 = vpack.c.b16 %v10846, %v10842
        %v11331 = vpack.c.b16 %v10847, %v10843
        %v11332 = vpack.c.b16 %v10848, %v10844
        %v11333 = vpack.c.b16 %v10849, %v10845
        %v11334 = vpack.c.b16 %v10854, %v10850
        %v11335 = vpack.c.b16 %v10855, %v10851
        %v11336 = vpack.c.b16 %v10856, %v10852
        %v11337 = vpack.c.b16 %v10857, %v10853
        %v11338 = vpack.c.b16 %v10862, %v10858
        %v11339 = vpack.c.b16 %v10863, %v10859
        %v11340 = vpack.c.b16 %v10864, %v10860
        %v11341 = vpack.c.b16 %v10865, %v10861
        %v11342 = vpack.c.b16 %v10870, %v10866
        %v11343 = vpack.c.b16 %v10871, %v10867
        %v11344 = vpack.c.b16 %v10872, %v10868
        %v11345 = vpack.c.b16 %v10873, %v10869
        %v11346 = vpack.c.b16 %v10878, %v10874
        %v11347 = vpack.c.b16 %v10879, %v10875
        %v11348 = vpack.c.b16 %v10880, %v10876
        %v11349 = vpack.c.b16 %v10881, %v10877
        %v11350 = vpack.c.b16 %v10886, %v10882
        %v11351 = vpack.c.b16 %v10887, %v10883
        %v11352 = vpack.c.b16 %v10888, %v10884
        %v11353 = vpack.c.b16 %v10889, %v10885
        %v11354 = vpack.c.b16 %v10894, %v10890
        %v11355 = vpack.c.b16 %v10895, %v10891
        %v11356 = vpack.c.b16 %v10896, %v10892
        %v11357 = vpack.c.b16 %v10897, %v10893
        %v11358 = vpack.c.b16 %v10902, %v10898
        %v11359 = vpack.c.b16 %v10903, %v10899
        %v11360 = vpack.c.b16 %v10904, %v10900
        %v11361 = vpack.c.b16 %v10905, %v10901
        %v11362 = vpack.c.b16 %v10910, %v10906
        %v11363 = vpack.c.b16 %v10911, %v10907
        %v11364 = vpack.c.b16 %v10912, %v10908
        %v11365 = vpack.c.b16 %v10913, %v10909
        %v11366 = vpack.c.b16 %v10918, %v10914
        %v11367 = vpack.c.b16 %v10919, %v10915
        %v11368 = vpack.c.b16 %v10920, %v10916
        %v11369 = vpack.c.b16 %v10921, %v10917
        %v11370 = vpack.c.b16 %v10926, %v10922
        %v11371 = vpack.c.b16 %v10927, %v10923
        %v11372 = vpack.c.b16 %v10928, %v10924
        %v11373 = vpack.c.b16 %v10929, %v10925
        %v11374 = vpack.c.b16 %v10934, %v10930
        %v11375 = vpack.c.b16 %v10935, %v10931
        %v11376 = vpack.c.b16 %v10936, %v10932
        %v11377 = vpack.c.b16 %v10937, %v10933
        %v11378 = vpack.c.b16 %v10942, %v10938
        %v11379 = vpack.c.b16 %v10943, %v10939
        %v11380 = vpack.c.b16 %v10944, %v10940
        %v11381 = vpack.c.b16 %v10945, %v10941
        %v11382 = vpack.c.b16 %v10950, %v10946
        %v11383 = vpack.c.b16 %v10951, %v10947
        %v11384 = vpack.c.b16 %v10952, %v10948
        %v11385 = vpack.c.b16 %v10953, %v10949
        %v11386 = vpack.c.b16 %v10958, %v10954
        %v11387 = vpack.c.b16 %v10959, %v10955
        %v11388 = vpack.c.b16 %v10960, %v10956
        %v11389 = vpack.c.b16 %v10961, %v10957
        %v11390 = vpack.c.b16 %v10966, %v10962
        %v11391 = vpack.c.b16 %v10967, %v10963
        %v11392 = vpack.c.b16 %v10968, %v10964
        %v11393 = vpack.c.b16 %v10969, %v10965
        %v11394 = vpack.c.b16 %v10974, %v10970
        %v11395 = vpack.c.b16 %v10975, %v10971
        %v11396 = vpack.c.b16 %v10976, %v10972
        %v11397 = vpack.c.b16 %v10977, %v10973
        %v11398 = vpack.c.b16 %v10982, %v10978
        %v11399 = vpack.c.b16 %v10983, %v10979
        %v11400 = vpack.c.b16 %v10984, %v10980
        %v11401 = vpack.c.b16 %v10985, %v10981
        %v11402 = vpack.c.b16 %v10990, %v10986
        %v11403 = vpack.c.b16 %v10991, %v10987
        %v11404 = vpack.c.b16 %v10992, %v10988
        %v11405 = vpack.c.b16 %v10993, %v10989
        %v11406 = vpack.c.b16 %v10998, %v10994
        %v11407 = vpack.c.b16 %v10999, %v10995
        %v11408 = vpack.c.b16 %v11000, %v10996
        %v11409 = vpack.c.b16 %v11001, %v10997
        %v11410 = vpack.c.b16 %v11006, %v11002
        %v11411 = vpack.c.b16 %v11007, %v11003
        %v11412 = vpack.c.b16 %v11008, %v11004
        %v11413 = vpack.c.b16 %v11009, %v11005
        %v11414 = vpack.c.b16 %v11014, %v11010
        %v11415 = vpack.c.b16 %v11015, %v11011
        %v11416 = vpack.c.b16 %v11016, %v11012
        %v11417 = vpack.c.b16 %v11017, %v11013
        %v11418 = vpack.c.b16 %v11022, %v11018
        %v11419 = vpack.c.b16 %v11023, %v11019
        %v11420 = vpack.c.b16 %v11024, %v11020
        %v11421 = vpack.c.b16 %v11025, %v11021
        %v11422 = vpack.c.b16 %v11030, %v11026
        %v11423 = vpack.c.b16 %v11031, %v11027
        %v11424 = vpack.c.b16 %v11032, %v11028
        %v11425 = vpack.c.b16 %v11033, %v11029
        %v11426 = vpack.c.b16 %v11038, %v11034
        %v11427 = vpack.c.b16 %v11039, %v11035
        %v11428 = vpack.c.b16 %v11040, %v11036
        %v11429 = vpack.c.b16 %v11041, %v11037
        %v11430 = vpack.c.b16 %v11046, %v11042
        %v11431 = vpack.c.b16 %v11047, %v11043
        %v11432 = vpack.c.b16 %v11048, %v11044
        %v11433 = vpack.c.b16 %v11049, %v11045
        %v11434 = vpack.c.b16 %v11054, %v11050
        %v11435 = vpack.c.b16 %v11055, %v11051
        %v11436 = vpack.c.b16 %v11056, %v11052
        %v11437 = vpack.c.b16 %v11057, %v11053
        %v11438 = vpack.c.b16 %v11062, %v11058
        %v11439 = vpack.c.b16 %v11063, %v11059
        %v11440 = vpack.c.b16 %v11064, %v11060
        %v11441 = vpack.c.b16 %v11065, %v11061
        %v11442 = vpack.c.b16 %v11070, %v11066
        %v11443 = vpack.c.b16 %v11071, %v11067
        %v11444 = vpack.c.b16 %v11072, %v11068
        %v11445 = vpack.c.b16 %v11073, %v11069
        %v11446 = vpack.c.b16 %v11078, %v11074
        %v11447 = vpack.c.b16 %v11079, %v11075
        %v11448 = vpack.c.b16 %v11080, %v11076
        %v11449 = vpack.c.b16 %v11081, %v11077
        %v11450 = vpack.c.b16 %v11086, %v11082
        %v11451 = vpack.c.b16 %v11087, %v11083
        %v11452 = vpack.c.b16 %v11088, %v11084
        %v11453 = vpack.c.b16 %v11089, %v11085
        %v11454 = vpack.c.b16 %v11094, %v11090
        %v11455 = vpack.c.b16 %v11095, %v11091
        %v11456 = vpack.c.b16 %v11096, %v11092
        %v11457 = vpack.c.b16 %v11097, %v11093
        %v11458 = vpack.c.b16 %v11102, %v11098
        %v11459 = vpack.c.b16 %v11103, %v11099
        %v11460 = vpack.c.b16 %v11104, %v11100
        %v11461 = vpack.c.b16 %v11105, %v11101
        %v11462 = vpack.c.b16 %v11110, %v11106
        %v11463 = vpack.c.b16 %v11111, %v11107
        %v11464 = vpack.c.b16 %v11112, %v11108
        %v11465 = vpack.c.b16 %v11113, %v11109
        %v11466 = vpack.c.b16 %v11118, %v11114
        %v11467 = vpack.c.b16 %v11119, %v11115
        %v11468 = vpack.c.b16 %v11120, %v11116
        %v11469 = vpack.c.b16 %v11121, %v11117
        %v11470 = vpack.c.b16 %v11126, %v11122
        %v11471 = vpack.c.b16 %v11127, %v11123
        %v11472 = vpack.c.b16 %v11128, %v11124
        %v11473 = vpack.c.b16 %v11129, %v11125
        %v11474 = vpack.c.b16 %v11134, %v11130
        %v11475 = vpack.c.b16 %v11135, %v11131
        %v11476 = vpack.c.b16 %v11136, %v11132
        %v11477 = vpack.c.b16 %v11137, %v11133
        %v11478 = vpack.c.b16 %v11142, %v11138
        %v11479 = vpack.c.b16 %v11143, %v11139
        %v11480 = vpack.c.b16 %v11144, %v11140
        %v11481 = vpack.c.b16 %v11145, %v11141
        %v11482 = vpack.c.b16 %v11150, %v11146
        %v11483 = vpack.c.b16 %v11151, %v11147
        %v11484 = vpack.c.b16 %v11152, %v11148
        %v11485 = vpack.c.b16 %v11153, %v11149
        %v11486 = vpack.c.b16 %v11158, %v11154
        %v11487 = vpack.c.b16 %v11159, %v11155
        %v11488 = vpack.c.b16 %v11160, %v11156
        %v11489 = vpack.c.b16 %v11161, %v11157
        %v11490 = vpack.c.b16 %v11166, %v11162
        %v11491 = vpack.c.b16 %v11167, %v11163
        %v11492 = vpack.c.b16 %v11168, %v11164
        %v11493 = vpack.c.b16 %v11169, %v11165
        %v11494 = vpack.c.b16 %v11174, %v11170
        %v11495 = vpack.c.b16 %v11175, %v11171
        %v11496 = vpack.c.b16 %v11176, %v11172
        %v11497 = vpack.c.b16 %v11177, %v11173
        %v11498 = vpack.c.b16 %v11182, %v11178
        %v11499 = vpack.c.b16 %v11183, %v11179
        %v11500 = vpack.c.b16 %v11184, %v11180
        %v11501 = vpack.c.b16 %v11185, %v11181
        %v11502 = vpack.c.b16 %v11190, %v11186
        %v11503 = vpack.c.b16 %v11191, %v11187
        %v11504 = vpack.c.b16 %v11192, %v11188
        %v11505 = vpack.c.b16 %v11193, %v11189
        %v11506 = vpack.c.b16 %v11198, %v11194
        %v11507 = vpack.c.b16 %v11199, %v11195
        %v11508 = vpack.c.b16 %v11200, %v11196
        %v11509 = vpack.c.b16 %v11201, %v11197
        %v11510 = vpack.c.b16 %v11206, %v11202
        %v11511 = vpack.c.b16 %v11207, %v11203
        %v11512 = vpack.c.b16 %v11208, %v11204
        %v11513 = vpack.c.b16 %v11209, %v11205
        %v11514 = vpack.c.b16 %v11214, %v11210
        %v11515 = vpack.c.b16 %v11215, %v11211
        %v11516 = vpack.c.b16 %v11216, %v11212
        %v11517 = vpack.c.b16 %v11217, %v11213
        %v11518 = vpack.c.b16 %v11222, %v11218
        %v11519 = vpack.c.b16 %v11223, %v11219
        %v11520 = vpack.c.b16 %v11224, %v11220
        %v11521 = vpack.c.b16 %v11225, %v11221
        %v11522 = vpack.c.b16 %v11230, %v11226
        %v11523 = vpack.c.b16 %v11231, %v11227
        %v11524 = vpack.c.b16 %v11232, %v11228
        %v11525 = vpack.c.b16 %v11233, %v11229
        %v11526 = vpack.c.b16 %v11238, %v11234
        %v11527 = vpack.c.b16 %v11239, %v11235
        %v11528 = vpack.c.b16 %v11240, %v11236
        %v11529 = vpack.c.b16 %v11241, %v11237
        %v11530 = vpack.c.b16 %v11246, %v11242
        %v11531 = vpack.c.b16 %v11247, %v11243
        %v11532 = vpack.c.b16 %v11248, %v11244
        %v11533 = vpack.c.b16 %v11249, %v11245
        %v11534 = vpack.c.b16 %v11254, %v11250
        %v11535 = vpack.c.b16 %v11255, %v11251
        %v11536 = vpack.c.b16 %v11256, %v11252
        %v11537 = vpack.c.b16 %v11257, %v11253
        %v11538 = vpack.c.b16 %v11262, %v11258
        %v11539 = vpack.c.b16 %v11263, %v11259
        %v11540 = vpack.c.b16 %v11264, %v11260
        %v11541 = vpack.c.b16 %v11265, %v11261
        %v11542 = vpack.c.b16 %v11270, %v11266
        %v11543 = vpack.c.b16 %v11271, %v11267
        %v11544 = vpack.c.b16 %v11272, %v11268
        %v11545 = vpack.c.b16 %v11273, %v11269
        %v11546 = vpack.c.b16 %v11278, %v11274
        %v11547 = vpack.c.b16 %v11279, %v11275
        %v11548 = vpack.c.b16 %v11280, %v11276
        %v11549 = vpack.c.b16 %v11281, %v11277
        %v11550 = vpack.c.b16 %v11286, %v11282
        %v11551 = vpack.c.b16 %v11287, %v11283
        %v11552 = vpack.c.b16 %v11288, %v11284
        %v11553 = vpack.c.b16 %v11289, %v11285
        %v11554 = vpack.c.b16 %v11294, %v11290
        %v11555 = vpack.c.b16 %v11295, %v11291
        %v11556 = vpack.c.b16 %v11296, %v11292
        %v11557 = vpack.c.b16 %v11297, %v11293
        %v11558 = vpack.c.b16 %v11302, %v11298
        %v11559 = vpack.c.b16 %v11303, %v11299
        %v11560 = vpack.c.b16 %v11304, %v11300
        %v11561 = vpack.c.b16 %v11305, %v11301
        %11818 = vmatprep.subr.bf16.mxu0 %v11307
        %11819 = vmatpush1.bf16.msra.mxu0 %v11306
        %11820 = vmatprep.subr.bf16.mxu0 %v11311
        %11821 = vmatpush1.bf16.msra.mxu0 %v11310
        %11822 = vmatprep.subr.bf16.mxu0 %v11315
        %11823 = vmatpush1.bf16.msra.mxu0 %v11314
        %11824 = vmatprep.subr.bf16.mxu0 %v11319
        %11825 = vmatpush1.bf16.msra.mxu0 %v11318
        %11826 = vmatprep.subr.bf16.mxu0 %v11323
        %11827 = vmatpush1.bf16.msra.mxu0 %v11322
        %11828 = vmatprep.subr.bf16.mxu0 %v11327
        %11829 = vmatpush1.bf16.msra.mxu0 %v11326
        %11830 = vmatprep.subr.bf16.mxu0 %v11331
        %11831 = vmatpush1.bf16.msra.mxu0 %v11330
        %11832 = vmatprep.subr.bf16.mxu0 %v11335
        %11833 = vmatpush1.bf16.msra.mxu0 %v11334
        %11834 = vmatprep.subr.bf16.mxu0 %v11339
        %11835 = vmatpush1.bf16.msra.mxu0 %v11338
        %11836 = vmatprep.subr.bf16.mxu0 %v11343
        %11837 = vmatpush1.bf16.msra.mxu0 %v11342
        %11838 = vmatprep.subr.bf16.mxu0 %v11347
        %11839 = vmatpush1.bf16.msra.mxu0 %v11346
        %11840 = vmatprep.subr.bf16.mxu0 %v11351
        %11841 = vmatpush1.bf16.msra.mxu0 %v11350
        %11842 = vmatprep.subr.bf16.mxu0 %v11355
        %11843 = vmatpush1.bf16.msra.mxu0 %v11354
        %11844 = vmatprep.subr.bf16.mxu0 %v11359
        %11845 = vmatpush1.bf16.msra.mxu0 %v11358
        %11846 = vmatprep.subr.bf16.mxu0 %v11363
        %11847 = vmatpush1.bf16.msra.mxu0 %v11362
        %11848 = vmatprep.subr.bf16.mxu0 %v11367
        %11849 = vmatpush1.bf16.msra.mxu0 %v11366
        %11850 = vmatprep.mubr.bf16.mxu0 %v10253
        %11851 = vmatmul.mubr.bf16.gmra.mrb[0].mxu0 %v10252
        %v11852 = vpop.f32.mrb[0].mxu0
        %v11853 = vadd.f32 %v10521, %v11852
        %v11854 = vpop.f32.mrb[0].mxu0
        %v11855 = vadd.f32 %v10525, %v11854
        %v11856 = vpop.f32.mrb[0].mxu0
        %v11857 = vpop.f32.mrb[0].mxu0
        %11858 = vdwg.mxu0
        %11859 = vmatprep.subr.bf16.mxu0 %v11371
        %11860 = vmatpush1.bf16.msra.mxu0 %v11370
        %11861 = vmatprep.subr.bf16.mxu0 %v11375
        %11862 = vmatpush1.bf16.msra.mxu0 %v11374
        %11863 = vmatprep.subr.bf16.mxu0 %v11379
        %11864 = vmatpush1.bf16.msra.mxu0 %v11378
        %11865 = vmatprep.subr.bf16.mxu0 %v11383
        %11866 = vmatpush1.bf16.msra.mxu0 %v11382
        %11867 = vmatprep.subr.bf16.mxu0 %v11387
        %11868 = vmatpush1.bf16.msra.mxu0 %v11386
        %11869 = vmatprep.subr.bf16.mxu0 %v11391
        %11870 = vmatpush1.bf16.msra.mxu0 %v11390
        %11871 = vmatprep.subr.bf16.mxu0 %v11395
        %11872 = vmatpush1.bf16.msra.mxu0 %v11394
        %11873 = vmatprep.subr.bf16.mxu0 %v11399
        %11874 = vmatpush1.bf16.msra.mxu0 %v11398
        %11875 = vmatprep.subr.bf16.mxu0 %v11403
        %11876 = vmatpush1.bf16.msra.mxu0 %v11402
        %11877 = vmatprep.subr.bf16.mxu0 %v11407
        %11878 = vmatpush1.bf16.msra.mxu0 %v11406
        %11879 = vmatprep.subr.bf16.mxu0 %v11411
        %11880 = vmatpush1.bf16.msra.mxu0 %v11410
        %11881 = vmatprep.subr.bf16.mxu0 %v11415
        %11882 = vmatpush1.bf16.msra.mxu0 %v11414
        %11883 = vmatprep.subr.bf16.mxu0 %v11419
        %11884 = vmatpush1.bf16.msra.mxu0 %v11418
        %11885 = vmatprep.subr.bf16.mxu0 %v11423
        %11886 = vmatpush1.bf16.msra.mxu0 %v11422
        %11887 = vmatprep.subr.bf16.mxu0 %v11427
        %11888 = vmatpush1.bf16.msra.mxu0 %v11426
        %11889 = vmatprep.subr.bf16.mxu0 %v11431
        %11890 = vmatpush1.bf16.msra.mxu0 %v11430
        %11891 = vmatprep.mubr.bf16.mxu0 %v10255
        %11892 = vmatmul.mubr.bf16.gmra.mrb[0].mxu0 %v10254
        %v11893 = vpop.f32.mrb[0].mxu0
        %v11894 = vadd.f32 %v11853, %v11893
        %v11895 = vpop.f32.mrb[0].mxu0
        %v11896 = vadd.f32 %v11855, %v11895
        %v11897 = vpop.f32.mrb[0].mxu0
        %v11898 = vpop.f32.mrb[0].mxu0
        %11899 = vdwg.mxu0
        %11900 = vmatprep.subr.bf16.mxu0 %v11435
        %11901 = vmatpush1.bf16.msra.mxu0 %v11434
        %11902 = vmatprep.subr.bf16.mxu0 %v11439
        %11903 = vmatpush1.bf16.msra.mxu0 %v11438
        %11904 = vmatprep.subr.bf16.mxu0 %v11443
        %11905 = vmatpush1.bf16.msra.mxu0 %v11442
        %11906 = vmatprep.subr.bf16.mxu0 %v11447
        %11907 = vmatpush1.bf16.msra.mxu0 %v11446
        %11908 = vmatprep.subr.bf16.mxu0 %v11451
        %11909 = vmatpush1.bf16.msra.mxu0 %v11450
        %11910 = vmatprep.subr.bf16.mxu0 %v11455
        %11911 = vmatpush1.bf16.msra.mxu0 %v11454
        %11912 = vmatprep.subr.bf16.mxu0 %v11459
        %11913 = vmatpush1.bf16.msra.mxu0 %v11458
        %11914 = vmatprep.subr.bf16.mxu0 %v11463
        %11915 = vmatpush1.bf16.msra.mxu0 %v11462
        %11916 = vmatprep.subr.bf16.mxu0 %v11467
        %11917 = vmatpush1.bf16.msra.mxu0 %v11466
        %11918 = vmatprep.subr.bf16.mxu0 %v11471
        %11919 = vmatpush1.bf16.msra.mxu0 %v11470
        %11920 = vmatprep.subr.bf16.mxu0 %v11475
        %11921 = vmatpush1.bf16.msra.mxu0 %v11474
        %11922 = vmatprep.subr.bf16.mxu0 %v11479
        %11923 = vmatpush1.bf16.msra.mxu0 %v11478
        %11924 = vmatprep.subr.bf16.mxu0 %v11483
        %11925 = vmatpush1.bf16.msra.mxu0 %v11482
        %11926 = vmatprep.subr.bf16.mxu0 %v11487
        %11927 = vmatpush1.bf16.msra.mxu0 %v11486
        %11928 = vmatprep.subr.bf16.mxu0 %v11491
        %11929 = vmatpush1.bf16.msra.mxu0 %v11490
        %11930 = vmatprep.subr.bf16.mxu0 %v11495
        %11931 = vmatpush1.bf16.msra.mxu0 %v11494
        %11932 = vmatprep.mubr.bf16.mxu0 %v10257
        %11933 = vmatmul.mubr.bf16.gmra.mrb[0].mxu0 %v10256
        %v11934 = vpop.f32.mrb[0].mxu0
        %v11935 = vadd.f32 %v11894, %v11934
        %v11936 = vpop.f32.mrb[0].mxu0
        %v11937 = vadd.f32 %v11896, %v11936
        %v11938 = vpop.f32.mrb[0].mxu0
        %v11939 = vpop.f32.mrb[0].mxu0
        %11940 = vdwg.mxu0
        %11941 = vmatprep.subr.bf16.mxu0 %v11499
        %11942 = vmatpush1.bf16.msra.mxu0 %v11498
        %11943 = vmatprep.subr.bf16.mxu0 %v11503
        %11944 = vmatpush1.bf16.msra.mxu0 %v11502
        %11945 = vmatprep.subr.bf16.mxu0 %v11507
        %11946 = vmatpush1.bf16.msra.mxu0 %v11506
        %11947 = vmatprep.subr.bf16.mxu0 %v11511
        %11948 = vmatpush1.bf16.msra.mxu0 %v11510
        %11949 = vmatprep.subr.bf16.mxu0 %v11515
        %11950 = vmatpush1.bf16.msra.mxu0 %v11514
        %11951 = vmatprep.subr.bf16.mxu0 %v11519
        %11952 = vmatpush1.bf16.msra.mxu0 %v11518
        %11953 = vmatprep.subr.bf16.mxu0 %v11523
        %11954 = vmatpush1.bf16.msra.mxu0 %v11522
        %11955 = vmatprep.subr.bf16.mxu0 %v11527
        %11956 = vmatpush1.bf16.msra.mxu0 %v11526
        %11957 = vmatprep.subr.bf16.mxu0 %v11531
        %11958 = vmatpush1.bf16.msra.mxu0 %v11530
        %11959 = vmatprep.subr.bf16.mxu0 %v11535
        %11960 = vmatpush1.bf16.msra.mxu0 %v11534
        %11961 = vmatprep.subr.bf16.mxu0 %v11539
        %11962 = vmatpush1.bf16.msra.mxu0 %v11538
        %11963 = vmatprep.subr.bf16.mxu0 %v11543
        %11964 = vmatpush1.bf16.msra.mxu0 %v11542
        %11965 = vmatprep.subr.bf16.mxu0 %v11547
        %11966 = vmatpush1.bf16.msra.mxu0 %v11546
        %11967 = vmatprep.subr.bf16.mxu0 %v11551
        %11968 = vmatpush1.bf16.msra.mxu0 %v11550
        %11969 = vmatprep.subr.bf16.mxu0 %v11555
        %11970 = vmatpush1.bf16.msra.mxu0 %v11554
        %11971 = vmatprep.subr.bf16.mxu0 %v11559
        %11972 = vmatpush1.bf16.msra.mxu0 %v11558
        %11973 = vmatprep.mubr.bf16.mxu0 %v10259
        %11974 = vmatmul.mubr.bf16.gmra.mrb[0].mxu0 %v10258
        %v11975 = vpop.f32.mrb[0].mxu0
        %v11976 = vadd.f32 %v11935, %v11975
        %v11977 = vpop.f32.mrb[0].mxu0
        %v11978 = vadd.f32 %v11937, %v11977
        %v11979 = vpop.f32.mrb[0].mxu0
        %v11980 = vpop.f32.mrb[0].mxu0
        %11981 = vdwg.mxu0
        %11982 = vmatprep.subr.bf16.mxu0 %v11309
        %11983 = vmatpush1.bf16.msra.mxu0 %v11308
        %11984 = vmatprep.subr.bf16.mxu0 %v11313
        %11985 = vmatpush1.bf16.msra.mxu0 %v11312
        %11986 = vmatprep.subr.bf16.mxu0 %v11317
        %11987 = vmatpush1.bf16.msra.mxu0 %v11316
        %11988 = vmatprep.subr.bf16.mxu0 %v11321
        %11989 = vmatpush1.bf16.msra.mxu0 %v11320
        %11990 = vmatprep.subr.bf16.mxu0 %v11325
        %11991 = vmatpush1.bf16.msra.mxu0 %v11324
        %11992 = vmatprep.subr.bf16.mxu0 %v11329
        %11993 = vmatpush1.bf16.msra.mxu0 %v11328
        %11994 = vmatprep.subr.bf16.mxu0 %v11333
        %11995 = vmatpush1.bf16.msra.mxu0 %v11332
        %11996 = vmatprep.subr.bf16.mxu0 %v11337
        %11997 = vmatpush1.bf16.msra.mxu0 %v11336
        %11998 = vmatprep.subr.bf16.mxu0 %v11341
        %11999 = vmatpush1.bf16.msra.mxu0 %v11340
        %12000 = vmatprep.subr.bf16.mxu0 %v11345
        %12001 = vmatpush1.bf16.msra.mxu0 %v11344
        %12002 = vmatprep.subr.bf16.mxu0 %v11349
        %12003 = vmatpush1.bf16.msra.mxu0 %v11348
        %12004 = vmatprep.subr.bf16.mxu0 %v11353
        %12005 = vmatpush1.bf16.msra.mxu0 %v11352
        %12006 = vmatprep.subr.bf16.mxu0 %v11357
        %12007 = vmatpush1.bf16.msra.mxu0 %v11356
        %12008 = vmatprep.subr.bf16.mxu0 %v11361
        %12009 = vmatpush1.bf16.msra.mxu0 %v11360
        %12010 = vmatprep.subr.bf16.mxu0 %v11365
        %12011 = vmatpush1.bf16.msra.mxu0 %v11364
        %12012 = vmatprep.subr.bf16.mxu0 %v11369
        %12013 = vmatpush1.bf16.msra.mxu0 %v11368
        %12014 = vmatprep.mubr.bf16.mxu0 %v10253
        %12015 = vmatmul.mubr.bf16.gmra.mrb[0].mxu0 %v10252
        %v12016 = vpop.f32.mrb[0].mxu0
        %v12017 = vadd.f32 %v10529, %v12016
        %v12018 = vpop.f32.mrb[0].mxu0
        %v12019 = vadd.f32 %v10533, %v12018
        %v12020 = vpop.f32.mrb[0].mxu0
        %v12021 = vpop.f32.mrb[0].mxu0
        %12022 = vdwg.mxu0
        %12023 = vmatprep.subr.bf16.mxu0 %v11373
        %12024 = vmatpush1.bf16.msra.mxu0 %v11372
        %12025 = vmatprep.subr.bf16.mxu0 %v11377
        %12026 = vmatpush1.bf16.msra.mxu0 %v11376
        %12027 = vmatprep.subr.bf16.mxu0 %v11381
        %12028 = vmatpush1.bf16.msra.mxu0 %v11380
        %12029 = vmatprep.subr.bf16.mxu0 %v11385
        %12030 = vmatpush1.bf16.msra.mxu0 %v11384
        %12031 = vmatprep.subr.bf16.mxu0 %v11389
        %12032 = vmatpush1.bf16.msra.mxu0 %v11388
        %12033 = vmatprep.subr.bf16.mxu0 %v11393
        %12034 = vmatpush1.bf16.msra.mxu0 %v11392
        %12035 = vmatprep.subr.bf16.mxu0 %v11397
        %12036 = vmatpush1.bf16.msra.mxu0 %v11396
        %12037 = vmatprep.subr.bf16.mxu0 %v11401
        %12038 = vmatpush1.bf16.msra.mxu0 %v11400
        %12039 = vmatprep.subr.bf16.mxu0 %v11405
        %12040 = vmatpush1.bf16.msra.mxu0 %v11404
        %12041 = vmatprep.subr.bf16.mxu0 %v11409
        %12042 = vmatpush1.bf16.msra.mxu0 %v11408
        %12043 = vmatprep.subr.bf16.mxu0 %v11413
        %12044 = vmatpush1.bf16.msra.mxu0 %v11412
        %12045 = vmatprep.subr.bf16.mxu0 %v11417
        %12046 = vmatpush1.bf16.msra.mxu0 %v11416
        %12047 = vmatprep.subr.bf16.mxu0 %v11421
        %12048 = vmatpush1.bf16.msra.mxu0 %v11420
        %12049 = vmatprep.subr.bf16.mxu0 %v11425
        %12050 = vmatpush1.bf16.msra.mxu0 %v11424
        %12051 = vmatprep.subr.bf16.mxu0 %v11429
        %12052 = vmatpush1.bf16.msra.mxu0 %v11428
        %12053 = vmatprep.subr.bf16.mxu0 %v11433
        %12054 = vmatpush1.bf16.msra.mxu0 %v11432
        %12055 = vmatprep.mubr.bf16.mxu0 %v10255
        %12056 = vmatmul.mubr.bf16.gmra.mrb[0].mxu0 %v10254
        %v12057 = vpop.f32.mrb[0].mxu0
        %v12058 = vadd.f32 %v12017, %v12057
        %v12059 = vpop.f32.mrb[0].mxu0
        %v12060 = vadd.f32 %v12019, %v12059
        %v12061 = vpop.f32.mrb[0].mxu0
        %v12062 = vpop.f32.mrb[0].mxu0
        %12063 = vdwg.mxu0
        %12064 = vmatprep.subr.bf16.mxu0 %v11437
        %12065 = vmatpush1.bf16.msra.mxu0 %v11436
        %12066 = vmatprep.subr.bf16.mxu0 %v11441
        %12067 = vmatpush1.bf16.msra.mxu0 %v11440
        %12068 = vmatprep.subr.bf16.mxu0 %v11445
        %12069 = vmatpush1.bf16.msra.mxu0 %v11444
        %12070 = vmatprep.subr.bf16.mxu0 %v11449
        %12071 = vmatpush1.bf16.msra.mxu0 %v11448
        %12072 = vmatprep.subr.bf16.mxu0 %v11453
        %12073 = vmatpush1.bf16.msra.mxu0 %v11452
        %12074 = vmatprep.subr.bf16.mxu0 %v11457
        %12075 = vmatpush1.bf16.msra.mxu0 %v11456
        %12076 = vmatprep.subr.bf16.mxu0 %v11461
        %12077 = vmatpush1.bf16.msra.mxu0 %v11460
        %12078 = vmatprep.subr.bf16.mxu0 %v11465
        %12079 = vmatpush1.bf16.msra.mxu0 %v11464
        %12080 = vmatprep.subr.bf16.mxu0 %v11469
        %12081 = vmatpush1.bf16.msra.mxu0 %v11468
        %12082 = vmatprep.subr.bf16.mxu0 %v11473
        %12083 = vmatpush1.bf16.msra.mxu0 %v11472
        %12084 = vmatprep.subr.bf16.mxu0 %v11477
        %12085 = vmatpush1.bf16.msra.mxu0 %v11476
        %12086 = vmatprep.subr.bf16.mxu0 %v11481
        %12087 = vmatpush1.bf16.msra.mxu0 %v11480
        %12088 = vmatprep.subr.bf16.mxu0 %v11485
        %12089 = vmatpush1.bf16.msra.mxu0 %v11484
        %12090 = vmatprep.subr.bf16.mxu0 %v11489
        %12091 = vmatpush1.bf16.msra.mxu0 %v11488
        %12092 = vmatprep.subr.bf16.mxu0 %v11493
        %12093 = vmatpush1.bf16.msra.mxu0 %v11492
        %12094 = vmatprep.subr.bf16.mxu0 %v11497
        %12095 = vmatpush1.bf16.msra.mxu0 %v11496
        %12096 = vmatprep.mubr.bf16.mxu0 %v10257
        %12097 = vmatmul.mubr.bf16.gmra.mrb[0].mxu0 %v10256
        %v12098 = vpop.f32.mrb[0].mxu0
        %v12099 = vadd.f32 %v12058, %v12098
        %v12100 = vpop.f32.mrb[0].mxu0
        %v12101 = vadd.f32 %v12060, %v12100
        %v12102 = vpop.f32.mrb[0].mxu0
        %v12103 = vpop.f32.mrb[0].mxu0
        %12104 = vdwg.mxu0
        %12105 = vmatprep.subr.bf16.mxu0 %v11501
        %12106 = vmatpush1.bf16.msra.mxu0 %v11500
        %12107 = vmatprep.subr.bf16.mxu0 %v11505
        %12108 = vmatpush1.bf16.msra.mxu0 %v11504
        %12109 = vmatprep.subr.bf16.mxu0 %v11509
        %12110 = vmatpush1.bf16.msra.mxu0 %v11508
        %12111 = vmatprep.subr.bf16.mxu0 %v11513
        %12112 = vmatpush1.bf16.msra.mxu0 %v11512
        %12113 = vmatprep.subr.bf16.mxu0 %v11517
        %12114 = vmatpush1.bf16.msra.mxu0 %v11516
        %12115 = vmatprep.subr.bf16.mxu0 %v11521
        %12116 = vmatpush1.bf16.msra.mxu0 %v11520
        %12117 = vmatprep.subr.bf16.mxu0 %v11525
        %12118 = vmatpush1.bf16.msra.mxu0 %v11524
        %12119 = vmatprep.subr.bf16.mxu0 %v11529
        %12120 = vmatpush1.bf16.msra.mxu0 %v11528
        %12121 = vmatprep.subr.bf16.mxu0 %v11533
        %12122 = vmatpush1.bf16.msra.mxu0 %v11532
        %12123 = vmatprep.subr.bf16.mxu0 %v11537
        %12124 = vmatpush1.bf16.msra.mxu0 %v11536
        %12125 = vmatprep.subr.bf16.mxu0 %v11541
        %12126 = vmatpush1.bf16.msra.mxu0 %v11540
        %12127 = vmatprep.subr.bf16.mxu0 %v11545
        %12128 = vmatpush1.bf16.msra.mxu0 %v11544
        %12129 = vmatprep.subr.bf16.mxu0 %v11549
        %12130 = vmatpush1.bf16.msra.mxu0 %v11548
        %12131 = vmatprep.subr.bf16.mxu0 %v11553
        %12132 = vmatpush1.bf16.msra.mxu0 %v11552
        %12133 = vmatprep.subr.bf16.mxu0 %v11557
        %12134 = vmatpush1.bf16.msra.mxu0 %v11556
        %12135 = vmatprep.subr.bf16.mxu0 %v11561
        %12136 = vmatpush1.bf16.msra.mxu0 %v11560
        %12137 = vmatprep.mubr.bf16.mxu0 %v10259
        %12138 = vmatmul.mubr.bf16.gmra.mrb[0].mxu0 %v10258
        %v12139 = vpop.f32.mrb[0].mxu0
        %v12140 = vadd.f32 %v12099, %v12139
        %v12141 = vpop.f32.mrb[0].mxu0
        %v12142 = vadd.f32 %v12101, %v12141
        %v12143 = vpop.f32.mrb[0].mxu0
        %v12144 = vpop.f32.mrb[0].mxu0
        %12145 = vdwg.mxu0
        %v12146 = vmax.f32 %v11976, 0.0
        %v12147 = vmax.f32 %v11978, 0.0
        %v12148 = vmax.f32 %v12140, 0.0
        %v12149 = vmax.f32 %v12142, 0.0
        %v12150 = vld [vmem:[%s22] sm:$0xf]
        %v12152 = vlaneseq
        %v12153 = vshrl.u32 %v12152, 7
        %v12154 = vsub.s32 0, %v12153
        %v12155 = vrot.slane %v12150, %v12154
        %v12156 = vlaneseq
        %v12157 = vshrl.u32 %v12156, 7
        %v12158 = vsub.s32 1, %v12157
        %v12159 = vrot.slane %v12150, %v12158
        %v12160 = vlaneseq
        %v12161 = vshrl.u32 %v12160, 7
        %v12162 = vsub.s32 2, %v12161
        %v12163 = vrot.slane %v12150, %v12162
        %v12164 = vlaneseq
        %v12165 = vshrl.u32 %v12164, 7
        %v12166 = vsub.s32 3, %v12165
        %v12167 = vrot.slane %v12150, %v12166
        %v12172 = vmul.f32 %v12146, %v12155
        %v12173 = vmul.f32 %v12147, %v12159
        %v12174 = vmul.f32 %v12148, %v12163
        %v12175 = vmul.f32 %v12149, %v12167
        %v12176 = vadd.f32 %v12172, %v12173
        %v12177 = vadd.f32 %v12176, %v12174
        %v12178 = vadd.f32 %v12177, %v12175
        %12179 = vadd.xlane.f32.xlu0 %v12178
        %v12180 = vpop.xlane.xlu0 %12179
        %v12181 = vld [vmem:[#allocation2] sm:$0x1]
        %v12183 = vlaneseq
        %v12184 = vshrl.u32 %v12183, 7
        %v12185 = vsub.s32 0, %v12184
        %v12186 = vrot.slane %v12181, %v12185
        %v12188 = vadd.f32 %v12180, %v12186
        %vm12189 = vcmask 7168
        %12190 = vst.msk [vmem:[%s861] sm:$0xff] %vm12189, %v12188
        %p12191 = scmp.lt.s32.totalorder %s41, 3
        %s12192 = scalar_select %p12191, %s41, 3
        %s12193 = smul.addr %s12192, 8
        %s12194 = scalar_lea.vmem %s24, %s12193
        // Predicated region
        $region145: #{model_forward.1} parent=115 // pred_check
          %p12195 = pneg %p573
        $region146: #{model_forward.1} parent=115 // pred_check_branch
          %12197 = sbr.rel (%p12195) target = $region148
        $region147: #{model_forward.1} parent=115 // pred_region
          _
        $region148: #{model_forward.1} parent=115 // pred_fallthru
          _
      $region116: #{model_forward.1} parent=5 // pred_fallthru
        _
      %p12198 = scmp.le.s32.totalorder 2, %s36
      // Predicated region
      $region149: #{model_forward.1} parent=5 // pred_check
        %p12199 = pneg %p12198
      $region150: #{model_forward.1} parent=5 // pred_check_branch
        %12201 = sbr.rel (%p12199) target = $region152
      $region151: #{model_forward.1} parent=5 // pred_region
        %s12202 = ssub.s32 %s36, 2
        // Predicated region
        $region153: #{model_forward.1} parent=151 // pred_check
          %p12203 = pneg %p579
        $region154: #{model_forward.1} parent=151 // pred_check_branch
          %12205 = sbr.rel (%p12203) target = $region156
        $region155: #{model_forward.1} parent=151 // pred_region
          %p12206 = scmp.lt.s32.totalorder %s42, 3
          %s12207 = scalar_select %p12206, %s42, 3
          %s12208 = smul.addr %s12207, 8
          %s12209 = scalar_lea.vmem %s24, %s12208
        $region156: #{model_forward.1} parent=151 // pred_fallthru
          _
      $region152: #{model_forward.1} parent=5 // pred_fallthru
        _
    $region6: #{model_forward.1} parent=1 // loop_footer
      %s40 = sadd.s32 1, %s36
    $region7: #{model_forward.1} parent=1 // loop_footer_branch
      %35 = sbr.rel target = $region3
    $region8: #{model_forward.1} parent=1 // loop_exit
      _
    %12210 = vsyncpa [#allocation4], 1
    %s12211 = scalar_lea.sflag [#allocation4], 1
    %12212 = vsyncpa %s12211, 1
    %12213 = vsyncpa [#allocation6], 1
    %12214 = vsyncpa [#allocation9], 1
    %12215 = vsyncpa [#allocation12], 1

</llo_original>
